<compile_context>
chip_gen: v7x
topology: tpu7x:2x2x1
jax: 0.10.0
libtpu: 0.0.40
codegen_flags: <defaults>
</compile_context>

<pallas_src>
import functools

import jax
import jax.numpy as jnp
import numpy as np
from jax import lax
from jax.experimental import pallas as pl
from jax.experimental.pallas import tpu as pltpu


def _build_static_masks(H, W, P_pad, B, dilation, conv_k, sa_k):
    """Static per-lane border/validity masks (numpy, trace-time constants)."""
    P = H * W
    L = B * P_pad
    kc, ks = conv_k // 2, sa_k // 2

    # full packed-block lane geometry (periodic with period P_pad)
    q = np.arange(L) % P_pad
    valid = q < P
    r = np.where(valid, q // W, -10**6)
    c = np.where(valid, q % W, -10**6)
    conv_ok = np.zeros((conv_k * conv_k, 1, L), np.float32)
    for ki in range(conv_k):
        for kj in range(conv_k):
            di, dj = (ki - kc) * dilation, (kj - kc) * dilation
            ok = valid & (r + di >= 0) & (r + di < H) & (c + dj >= 0) & (c + dj < W)
            conv_ok[ki * conv_k + kj, 0] = ok

    # per-image (period-1) geometry for spatial attention / pooling helpers
    qp = np.arange(P_pad)
    validp = qp < P
    rp = np.where(validp, qp // W, -10**6)
    cp = np.where(validp, qp % W, -10**6)
    sa_ok = np.zeros((sa_k * sa_k, P_pad), np.float32)
    for ki in range(sa_k):
        for kj in range(sa_k):
            di, dj = ki - ks, kj - ks
            ok = validp & (rp + di >= 0) & (rp + di < H) & (cp + dj >= 0) & (cp + dj < W)
            sa_ok[ki * sa_k + kj] = ok
    padneg = np.where(validp, 0.0, -1e30).astype(np.float32)[None, :]   # (1, P_pad)
    return conv_ok, sa_ok, padneg


def _pconv_cbam_kernel(x_ref, wc_ref, wfc1_ref, wfc2_ref, cmask_ref, swmask_ref,
                       padneg_ref, o_ref, *, H, W, P_pad, B, C, Cdiv,
                       dilation, conv_k, sa_k, has_pad):
    L = B * P_pad
    d = dilation
    kc = conv_k // 2
    ks = sa_k // 2
    inv_P = 1.0 / float(H * W)
    inv_C = 1.0 / float(C)

    x1 = x_ref[:Cdiv, :]                               # conv half, input dtype
    x2f = x_ref[Cdiv:, :].astype(jnp.float32)          # untouched half, f32

    # ---- partial 3x3 conv: per-tap accumulation (no im2col scratch) --------
    acc_a = jnp.zeros((Cdiv, L), jnp.float32)
    acc_b = jnp.zeros((Cdiv, L), jnp.float32)
    for ki in range(conv_k):
        for kj in range(conv_k):
            t = ki * conv_k + kj
            s = (ki - kc) * d * W + (kj - kc) * d
            shifted = pltpu.roll(x1, (-s) % L, 1) if s % L != 0 else x1
            if s == 0 and not has_pad:
                masked = shifted                        # centre tap mask is all-ones
            else:
                masked = shifted * cmask_ref[t]         # (1, L) mask, input dtype
            tap = jnp.dot(wc_ref[t], masked, preferred_element_type=jnp.float32)
            if t % 2 == 0:
                acc_a = acc_a + tap
            else:
                acc_b = acc_b + tap
    y1 = acc_a + acc_b                                  # (Cdiv, L) f32

    w1 = wfc1_ref[...]                                  # (Cr, C)
    w2 = wfc2_ref[...]                                  # (C, Cr)
    pn = padneg_ref[...] if has_pad else None           # (1, P_pad): 0 / -1e30

    def mlp(p):                                         # (C, 1) -> (C, 1)
        h = jnp.maximum(jnp.dot(w1, p, preferred_element_type=jnp.float32), 0.0)
        return jnp.dot(w2, h, preferred_element_type=jnp.float32)

    # ---- per-image CBAM (channel attention, then spatial attention) --------
    for b in range(B):
        lo = b * P_pad
        hi = lo + P_pad
        y1s = y1[:, lo:hi]                              # (Cdiv, P_pad) f32
        x2s = x2f[:, lo:hi]                             # (Cu,   P_pad) f32

        # channel attention: per-half pools, no full-channel concat of maps
        avg_p = jnp.concatenate(
            [jnp.sum(y1s, axis=1, keepdims=True),
             jnp.sum(x2s, axis=1, keepdims=True)], axis=0) * inv_P      # (C, 1)
        if has_pad:
            mx_p = jnp.concatenate(
                [jnp.max(y1s + pn, axis=1, keepdims=True),
                 jnp.max(x2s + pn, axis=1, keepdims=True)], axis=0)     # (C, 1)
        else:
            mx_p = jnp.concatenate(
                [jnp.max(y1s, axis=1, keepdims=True),
                 jnp.max(x2s, axis=1, keepdims=True)], axis=0)
        ca = jax.nn.sigmoid(mlp(avg_p) + mlp(mx_p))                     # (C, 1)
        y1h = y1s * ca[:Cdiv, :]
        y2h = x2s * ca[Cdiv:, :]

        # spatial attention: stacked (2, P_pad) mean/max maps; 7x7 conv as 49
        # lane rolls with the conv weights pre-folded into the border masks.
        s_map = (jnp.sum(y1h, axis=0, keepdims=True)
                 + jnp.sum(y2h, axis=0, keepdims=True)) * inv_C         # (1, P_pad)
        m_map = jnp.maximum(jnp.max(y1h, axis=0, keepdims=True),
                            jnp.max(y2h, axis=0, keepdims=True))        # (1, P_pad)
        sm = jnp.concatenate([s_map, m_map], axis=0)                    # (2, P_pad)
        sa_a = jnp.zeros((2, P_pad), jnp.float32)
        sa_b = jnp.zeros((2, P_pad), jnp.float32)
        for ki in range(sa_k):
            for kj in range(sa_k):
                t = ki * sa_k + kj
                s = (ki - ks) * W + (kj - ks)
                r = pltpu.roll(sm, (-s) % P_pad, 1) if s % P_pad != 0 else sm
                contrib = r * swmask_ref[t]             # weight * border mask
                if t % 2 == 0:
                    sa_a = sa_a + contrib
                else:
                    sa_b = sa_b + contrib
        sa = jax.nn.sigmoid(jnp.sum(sa_a + sa_b, axis=0, keepdims=True))  # (1, P_pad)

        # lane-dense, 128-aligned row-range stores (no full-channel concat)
        o_ref[:Cdiv, lo:hi] = (y1h * sa).astype(o_ref.dtype)
        o_ref[Cdiv:, lo:hi] = (y2h * sa).astype(o_ref.dtype)


def pconv2d_cbam(x, w_conv, w_fc1, w_fc2, w_sa, *, n_div=2, dilation=1):
    N, C, H, W = x.shape
    Cdiv = C // n_div
    assert 0 < Cdiv < C, "n_div must leave both a conv'd and an untouched half"
    conv_k = w_conv.shape[-1]
    sa_k = w_sa.shape[-1]
    Cr = w_fc1.shape[0]

    P = H * W
    P_pad = ((P + 127) // 128) * 128                # lane-align each image
    has_pad = P_pad != P
    B = max(1, min(N, -(-1024 // P_pad), 8))        # images packed per grid step
    G = -(-N // B)
    N_pad = G * B
    L = B * P_pad

    # -- glue: reshape / pad / pack (only one small XLA transpose when B > 1) -
    x_p = x.reshape(N, C, P)
    if has_pad:
        x_p = jnp.pad(x_p, ((0, 0), (0, 0), (0, P_pad - P)))
    if N_pad != N:
        x_p = jnp.pad(x_p, ((0, N_pad - N), (0, 0), (0, 0)))
    if B > 1:
        x_p = x_p.reshape(G, B, C, P_pad).transpose(0, 2, 1, 3).reshape(G, C, L)
    else:
        x_p = x_p.reshape(G, C, L)

    # weights: (Cout,Cin,kh,kw) -> per-tap (kh*kw, Cout, Cin); MLP weights f32
    wc = jnp.transpose(w_conv, (2, 3, 0, 1)).reshape(
        conv_k * conv_k, Cdiv, Cdiv).astype(x.dtype)
    wfc1 = w_fc1.reshape(Cr, C).astype(jnp.float32)
    wfc2 = w_fc2.reshape(C, Cr).astype(jnp.float32)

    # static border / validity masks; SA conv weights folded into SA masks
    conv_ok, sa_ok, padneg_np = _build_static_masks(H, W, P_pad, B, dilation,
                                                    conv_k, sa_k)
    cmask = jnp.asarray(conv_ok).astype(x.dtype)                     # (9, 1, L)
    w_sa_flat = w_sa.reshape(2, sa_k * sa_k).astype(jnp.float32)     # (2, 49)
    swmask = (jnp.asarray(sa_ok)[:, None, :]
              * jnp.transpose(w_sa_flat)[:, :, None]).astype(jnp.float32)  # (49,2,P_pad)
    padneg = jnp.asarray(padneg_np)                                  # (1, P_pad)

    kernel = functools.partial(
        _pconv_cbam_kernel, H=H, W=W, P_pad=P_pad, B=B, C=C, Cdiv=Cdiv,
        dilation=dilation, conv_k=conv_k, sa_k=sa_k, has_pad=has_pad)

    nbytes = x.dtype.itemsize
    cost = pl.CostEstimate(
        flops=int(G * (2 * conv_k * conv_k * Cdiv * Cdiv * L
                       + B * 8 * Cr * C
                       + 4 * sa_k * sa_k * L
                       + 12 * C * L)),
        transcendentals=int(G * B * (C + P_pad)),
        bytes_accessed=int(2 * N_pad * C * P_pad * nbytes
                           + conv_k * conv_k * (Cdiv * Cdiv + L) * nbytes
                           + sa_k * sa_k * 2 * P_pad * 4
                           + 4 * Cr * C * 4))

    out_p = pl.pallas_call(
        kernel,
        out_shape=jax.ShapeDtypeStruct((G, C, L), x.dtype),
        grid=(G,),
        in_specs=[
            pl.BlockSpec((None, C, L), lambda g: (g, 0, 0)),            # x (packed)
            pl.BlockSpec((conv_k * conv_k, Cdiv, Cdiv), lambda g: (0, 0, 0)),
            pl.BlockSpec((Cr, C), lambda g: (0, 0)),
            pl.BlockSpec((C, Cr), lambda g: (0, 0)),
            pl.BlockSpec((conv_k * conv_k, 1, L), lambda g: (0, 0, 0)),  # conv masks
            pl.BlockSpec((sa_k * sa_k, 2, P_pad), lambda g: (0, 0, 0)),  # SA w*mask
            pl.BlockSpec((1, P_pad), lambda g: (0, 0)),                  # pad -inf row
        ],
        out_specs=pl.BlockSpec((None, C, L), lambda g: (g, 0, 0)),
        compiler_params=pltpu.CompilerParams(
            dimension_semantics=("parallel",)),      # v7x: shard grid over 2 TCs
        cost_estimate=cost,
    )(x_p, wc, wfc1, wfc2, cmask, swmask, padneg)

    # -- glue: unpack / crop back to NCHW -------------------------------------
    if B > 1:
        out_p = out_p.reshape(G, C, B, P_pad).transpose(0, 2, 1, 3).reshape(
            N_pad, C, P_pad)
    else:
        out_p = out_p.reshape(N_pad, C, P_pad)
    return out_p[:N, :, :P].reshape(N, C, H, W)


def reference(x, w_conv, w_fc1, w_fc2, w_sa, *, n_div=2, dilation=1):
    """Pure-JAX reference mirroring the PyTorch forward."""
    N, C, H, W = x.shape
    Cdiv = C // n_div
    Cr = w_fc1.shape[0]
    d = dilation
    x1, x2 = x[:, :Cdiv], x[:, Cdiv:]
    y1 = lax.conv_general_dilated(
        x1, w_conv, window_strides=(1, 1), padding=[(d, d), (d, d)],
        rhs_dilation=(d, d), dimension_numbers=("NCHW", "OIHW", "NCHW"),
        precision=lax.Precision.HIGHEST)
    xc = jnp.concatenate([y1, x2], axis=1)
    w1 = w_fc1.reshape(Cr, C)
    w2 = w_fc2.reshape(C, Cr)
    avg = jnp.mean(xc, axis=(2, 3))
    mx = jnp.max(xc, axis=(2, 3))
    mlp = lambda p: jnp.maximum(p @ w1.T, 0.0) @ w2.T
    ca = jax.nn.sigmoid(mlp(avg) + mlp(mx))                   # (N, C)
    y = xc * ca[:, :, None, None]
    sa_in = jnp.stack([jnp.mean(y, axis=1), jnp.max(y, axis=1)], axis=1)
    pad = w_sa.shape[-1] // 2
    sa = lax.conv_general_dilated(
        sa_in, w_sa, (1, 1), [(pad, pad), (pad, pad)],
        dimension_numbers=("NCHW", "OIHW", "NCHW"),
        precision=lax.Precision.HIGHEST)
    return y * jax.nn.sigmoid(sa)


if __name__ == "__main__":
    n_div, ratio, conv_k, sa_k, dil = 2, 16, 3, 7, 1

    def run_case(key, N, C, H, W):
        Cdiv = C // n_div
        Cr = max(C // ratio, 1)
        ks = jax.random.split(key, 5)
        x = jax.random.normal(ks[0], (N, C, H, W), jnp.float32)
        # deterministic synthetic parameters (module __init__ shapes, bias-free)
        w_conv = 0.1 * jax.random.normal(ks[1], (Cdiv, Cdiv, conv_k, conv_k),
                                         jnp.float32)
        w_fc1 = 0.2 * jax.random.normal(ks[2], (Cr, C, 1, 1), jnp.float32)
        w_fc2 = 0.2 * jax.random.normal(ks[3], (C, Cr, 1, 1), jnp.float32)
        w_sa = 0.1 * jax.random.normal(ks[4], (1, 2, sa_k, sa_k), jnp.float32)

        out = pconv2d_cbam(x, w_conv, w_fc1, w_fc2, w_sa,
                           n_div=n_div, dilation=dil)
        out = jax.block_until_ready(out)
        ref = reference(x, w_conv, w_fc1, w_fc2, w_sa, n_div=n_div, dilation=dil)
        np.testing.assert_allclose(np.asarray(out), np.asarray(ref),
                                   rtol=1e-2, atol=1e-2)

    # lane-aligned case (P = 256) and a padded case (P = 196 -> 256)
    run_case(jax.random.PRNGKey(0), N=2, C=32, H=16, W=16)
    run_case(jax.random.PRNGKey(1), N=2, C=32, H=14, W=14)
    print("KERNEL_OK")
</pallas_src>

<mosaic_0001>
module attributes {stable_mosaic.version = 11 : i64} {
  func.func @_pconv_cbam_kernel(%arg0: i32, %arg1: memref<1x32x512xf32, #tpu.memory_space<vmem>>, %arg2: memref<9x16x16xf32, #tpu.memory_space<vmem>>, %arg3: memref<2x32xf32, #tpu.memory_space<vmem>>, %arg4: memref<32x2xf32, #tpu.memory_space<vmem>>, %arg5: memref<9x1x512xf32, #tpu.memory_space<vmem>>, %arg6: memref<49x2x256xf32, #tpu.memory_space<vmem>>, %arg7: memref<1x256xf32, #tpu.memory_space<vmem>>, %arg8: memref<1x32x512xf32, #tpu.memory_space<vmem>>) attributes {dimension_semantics = [#tpu.dimension_semantics<parallel>], iteration_bounds = array<i64: 1>, scalar_prefetch = 0 : i64, scratch_operands = 0 : i64, tpu.core_type = #tpu.core_type<tc>, window_params = [{transform_indices = @transform_0, window_bounds = array<i64: 1, 32, 512>}, {pipeline_mode = #tpu.pipeline_mode<synchronous>, transform_indices = @transform_1, window_bounds = array<i64: 9, 16, 16>}, {pipeline_mode = #tpu.pipeline_mode<synchronous>, transform_indices = @transform_2, window_bounds = array<i64: 2, 32>}, {pipeline_mode = #tpu.pipeline_mode<synchronous>, transform_indices = @transform_3, window_bounds = array<i64: 32, 2>}, {pipeline_mode = #tpu.pipeline_mode<synchronous>, transform_indices = @transform_4, window_bounds = array<i64: 9, 1, 512>}, {pipeline_mode = #tpu.pipeline_mode<synchronous>, transform_indices = @transform_5, window_bounds = array<i64: 49, 2, 256>}, {pipeline_mode = #tpu.pipeline_mode<synchronous>, transform_indices = @transform_6, window_bounds = array<i64: 1, 256>}, {transform_indices = @transform_7, window_bounds = array<i64: 1, 32, 512>}]} {
    %c0 = arith.constant 0 : index
    %c0_0 = arith.constant 0 : index
    %c0_1 = arith.constant 0 : index
    %0 = vector.load %arg1[%c0, %c0_0, %c0_1] : memref<1x32x512xf32, #tpu.memory_space<vmem>>, vector<1x16x512xf32>
    %1 = vector.shape_cast %0 : vector<1x16x512xf32> to vector<16x512xf32>
    %c0_2 = arith.constant 0 : index
    %c16 = arith.constant 16 : index
    %c0_3 = arith.constant 0 : index
    %2 = vector.load %arg1[%c0_2, %c16, %c0_3] : memref<1x32x512xf32, #tpu.memory_space<vmem>>, vector<1x16x512xf32>
    %3 = vector.shape_cast %2 : vector<1x16x512xf32> to vector<16x512xf32>
    %cst = arith.constant 0.000000e+00 : f32
    %4 = vector.broadcast %cst : f32 to vector<16x512xf32>
    %cst_4 = arith.constant 0.000000e+00 : f32
    %5 = vector.broadcast %cst_4 : f32 to vector<16x512xf32>
    %c17_i32 = arith.constant 17 : i32
    %6 = tpu.dynamic_rotate %1 by %c17_i32 dim 1 : vector<16x512xf32>, i32 -> vector<16x512xf32>
    %c0_5 = arith.constant 0 : index
    %c0_6 = arith.constant 0 : index
    %c0_7 = arith.constant 0 : index
    %7 = vector.load %arg5[%c0_5, %c0_6, %c0_7] : memref<9x1x512xf32, #tpu.memory_space<vmem>>, vector<1x1x512xf32>
    %8 = vector.shape_cast %7 : vector<1x1x512xf32> to vector<1x512xf32>
    %9 = vector.broadcast %8 : vector<1x512xf32> to vector<16x512xf32>
    %10 = arith.mulf %6, %9 : vector<16x512xf32>
    %c0_8 = arith.constant 0 : index
    %c0_9 = arith.constant 0 : index
    %c0_10 = arith.constant 0 : index
    %11 = vector.load %arg2[%c0_8, %c0_9, %c0_10] : memref<9x16x16xf32, #tpu.memory_space<vmem>>, vector<1x16x16xf32>
    %12 = vector.shape_cast %11 : vector<1x16x16xf32> to vector<16x16xf32>
    %cst_11 = arith.constant dense<0.000000e+00> : vector<16x512xf32>
    %13 = tpu.matmul %12, %10, %cst_11 {dimension_numbers = #tpu.dot_dimension_numbers<[1], [0], [0], [1], [0, 0, 1, 1], [], []>} : vector<16x16xf32>, vector<16x512xf32>, vector<16x512xf32> -> vector<16x512xf32>
    %14 = arith.addf %4, %13 : vector<16x512xf32>
    %c16_i32 = arith.constant 16 : i32
    %15 = tpu.dynamic_rotate %1 by %c16_i32 dim 1 : vector<16x512xf32>, i32 -> vector<16x512xf32>
    %c1 = arith.constant 1 : index
    %c0_12 = arith.constant 0 : index
    %c0_13 = arith.constant 0 : index
    %16 = vector.load %arg5[%c1, %c0_12, %c0_13] : memref<9x1x512xf32, #tpu.memory_space<vmem>>, vector<1x1x512xf32>
    %17 = vector.shape_cast %16 : vector<1x1x512xf32> to vector<1x512xf32>
    %18 = vector.broadcast %17 : vector<1x512xf32> to vector<16x512xf32>
    %19 = arith.mulf %15, %18 : vector<16x512xf32>
    %c1_14 = arith.constant 1 : index
    %c0_15 = arith.constant 0 : index
    %c0_16 = arith.constant 0 : index
    %20 = vector.load %arg2[%c1_14, %c0_15, %c0_16] : memref<9x16x16xf32, #tpu.memory_space<vmem>>, vector<1x16x16xf32>
    %21 = vector.shape_cast %20 : vector<1x16x16xf32> to vector<16x16xf32>
    %cst_17 = arith.constant dense<0.000000e+00> : vector<16x512xf32>
    %22 = tpu.matmul %21, %19, %cst_17 {dimension_numbers = #tpu.dot_dimension_numbers<[1], [0], [0], [1], [0, 0, 1, 1], [], []>} : vector<16x16xf32>, vector<16x512xf32>, vector<16x512xf32> -> vector<16x512xf32>
    %23 = arith.addf %5, %22 : vector<16x512xf32>
    %c15_i32 = arith.constant 15 : i32
    %24 = tpu.dynamic_rotate %1 by %c15_i32 dim 1 : vector<16x512xf32>, i32 -> vector<16x512xf32>
    %c2 = arith.constant 2 : index
    %c0_18 = arith.constant 0 : index
    %c0_19 = arith.constant 0 : index
    %25 = vector.load %arg5[%c2, %c0_18, %c0_19] : memref<9x1x512xf32, #tpu.memory_space<vmem>>, vector<1x1x512xf32>
    %26 = vector.shape_cast %25 : vector<1x1x512xf32> to vector<1x512xf32>
    %27 = vector.broadcast %26 : vector<1x512xf32> to vector<16x512xf32>
    %28 = arith.mulf %24, %27 : vector<16x512xf32>
    %c2_20 = arith.constant 2 : index
    %c0_21 = arith.constant 0 : index
    %c0_22 = arith.constant 0 : index
    %29 = vector.load %arg2[%c2_20, %c0_21, %c0_22] : memref<9x16x16xf32, #tpu.memory_space<vmem>>, vector<1x16x16xf32>
    %30 = vector.shape_cast %29 : vector<1x16x16xf32> to vector<16x16xf32>
    %cst_23 = arith.constant dense<0.000000e+00> : vector<16x512xf32>
    %31 = tpu.matmul %30, %28, %cst_23 {dimension_numbers = #tpu.dot_dimension_numbers<[1], [0], [0], [1], [0, 0, 1, 1], [], []>} : vector<16x16xf32>, vector<16x512xf32>, vector<16x512xf32> -> vector<16x512xf32>
    %32 = arith.addf %14, %31 : vector<16x512xf32>
    %c1_i32 = arith.constant 1 : i32
    %33 = tpu.dynamic_rotate %1 by %c1_i32 dim 1 : vector<16x512xf32>, i32 -> vector<16x512xf32>
    %c3 = arith.constant 3 : index
    %c0_24 = arith.constant 0 : index
    %c0_25 = arith.constant 0 : index
    %34 = vector.load %arg5[%c3, %c0_24, %c0_25] : memref<9x1x512xf32, #tpu.memory_space<vmem>>, vector<1x1x512xf32>
    %35 = vector.shape_cast %34 : vector<1x1x512xf32> to vector<1x512xf32>
    %36 = vector.broadcast %35 : vector<1x512xf32> to vector<16x512xf32>
    %37 = arith.mulf %33, %36 : vector<16x512xf32>
    %c3_26 = arith.constant 3 : index
    %c0_27 = arith.constant 0 : index
    %c0_28 = arith.constant 0 : index
    %38 = vector.load %arg2[%c3_26, %c0_27, %c0_28] : memref<9x16x16xf32, #tpu.memory_space<vmem>>, vector<1x16x16xf32>
    %39 = vector.shape_cast %38 : vector<1x16x16xf32> to vector<16x16xf32>
    %cst_29 = arith.constant dense<0.000000e+00> : vector<16x512xf32>
    %40 = tpu.matmul %39, %37, %cst_29 {dimension_numbers = #tpu.dot_dimension_numbers<[1], [0], [0], [1], [0, 0, 1, 1], [], []>} : vector<16x16xf32>, vector<16x512xf32>, vector<16x512xf32> -> vector<16x512xf32>
    %41 = arith.addf %23, %40 : vector<16x512xf32>
    %c4 = arith.constant 4 : index
    %c0_30 = arith.constant 0 : index
    %c0_31 = arith.constant 0 : index
    %42 = vector.load %arg2[%c4, %c0_30, %c0_31] : memref<9x16x16xf32, #tpu.memory_space<vmem>>, vector<1x16x16xf32>
    %43 = vector.shape_cast %42 : vector<1x16x16xf32> to vector<16x16xf32>
    %cst_32 = arith.constant dense<0.000000e+00> : vector<16x512xf32>
    %44 = tpu.matmul %43, %1, %cst_32 {dimension_numbers = #tpu.dot_dimension_numbers<[1], [0], [0], [1], [0, 0, 1, 1], [], []>} : vector<16x16xf32>, vector<16x512xf32>, vector<16x512xf32> -> vector<16x512xf32>
    %45 = arith.addf %32, %44 : vector<16x512xf32>
    %c511_i32 = arith.constant 511 : i32
    %46 = tpu.dynamic_rotate %1 by %c511_i32 dim 1 : vector<16x512xf32>, i32 -> vector<16x512xf32>
    %c5 = arith.constant 5 : index
    %c0_33 = arith.constant 0 : index
    %c0_34 = arith.constant 0 : index
    %47 = vector.load %arg5[%c5, %c0_33, %c0_34] : memref<9x1x512xf32, #tpu.memory_space<vmem>>, vector<1x1x512xf32>
    %48 = vector.shape_cast %47 : vector<1x1x512xf32> to vector<1x512xf32>
    %49 = vector.broadcast %48 : vector<1x512xf32> to vector<16x512xf32>
    %50 = arith.mulf %46, %49 : vector<16x512xf32>
    %c5_35 = arith.constant 5 : index
    %c0_36 = arith.constant 0 : index
    %c0_37 = arith.constant 0 : index
    %51 = vector.load %arg2[%c5_35, %c0_36, %c0_37] : memref<9x16x16xf32, #tpu.memory_space<vmem>>, vector<1x16x16xf32>
    %52 = vector.shape_cast %51 : vector<1x16x16xf32> to vector<16x16xf32>
    %cst_38 = arith.constant dense<0.000000e+00> : vector<16x512xf32>
    %53 = tpu.matmul %52, %50, %cst_38 {dimension_numbers = #tpu.dot_dimension_numbers<[1], [0], [0], [1], [0, 0, 1, 1], [], []>} : vector<16x16xf32>, vector<16x512xf32>, vector<16x512xf32> -> vector<16x512xf32>
    %54 = arith.addf %41, %53 : vector<16x512xf32>
    %c497_i32 = arith.constant 497 : i32
    %55 = tpu.dynamic_rotate %1 by %c497_i32 dim 1 : vector<16x512xf32>, i32 -> vector<16x512xf32>
    %c6 = arith.constant 6 : index
    %c0_39 = arith.constant 0 : index
    %c0_40 = arith.constant 0 : index
    %56 = vector.load %arg5[%c6, %c0_39, %c0_40] : memref<9x1x512xf32, #tpu.memory_space<vmem>>, vector<1x1x512xf32>
    %57 = vector.shape_cast %56 : vector<1x1x512xf32> to vector<1x512xf32>
    %58 = vector.broadcast %57 : vector<1x512xf32> to vector<16x512xf32>
    %59 = arith.mulf %55, %58 : vector<16x512xf32>
    %c6_41 = arith.constant 6 : index
    %c0_42 = arith.constant 0 : index
    %c0_43 = arith.constant 0 : index
    %60 = vector.load %arg2[%c6_41, %c0_42, %c0_43] : memref<9x16x16xf32, #tpu.memory_space<vmem>>, vector<1x16x16xf32>
    %61 = vector.shape_cast %60 : vector<1x16x16xf32> to vector<16x16xf32>
    %cst_44 = arith.constant dense<0.000000e+00> : vector<16x512xf32>
    %62 = tpu.matmul %61, %59, %cst_44 {dimension_numbers = #tpu.dot_dimension_numbers<[1], [0], [0], [1], [0, 0, 1, 1], [], []>} : vector<16x16xf32>, vector<16x512xf32>, vector<16x512xf32> -> vector<16x512xf32>
    %63 = arith.addf %45, %62 : vector<16x512xf32>
    %c496_i32 = arith.constant 496 : i32
    %64 = tpu.dynamic_rotate %1 by %c496_i32 dim 1 : vector<16x512xf32>, i32 -> vector<16x512xf32>
    %c7 = arith.constant 7 : index
    %c0_45 = arith.constant 0 : index
    %c0_46 = arith.constant 0 : index
    %65 = vector.load %arg5[%c7, %c0_45, %c0_46] : memref<9x1x512xf32, #tpu.memory_space<vmem>>, vector<1x1x512xf32>
    %66 = vector.shape_cast %65 : vector<1x1x512xf32> to vector<1x512xf32>
    %67 = vector.broadcast %66 : vector<1x512xf32> to vector<16x512xf32>
    %68 = arith.mulf %64, %67 : vector<16x512xf32>
    %c7_47 = arith.constant 7 : index
    %c0_48 = arith.constant 0 : index
    %c0_49 = arith.constant 0 : index
    %69 = vector.load %arg2[%c7_47, %c0_48, %c0_49] : memref<9x16x16xf32, #tpu.memory_space<vmem>>, vector<1x16x16xf32>
    %70 = vector.shape_cast %69 : vector<1x16x16xf32> to vector<16x16xf32>
    %cst_50 = arith.constant dense<0.000000e+00> : vector<16x512xf32>
    %71 = tpu.matmul %70, %68, %cst_50 {dimension_numbers = #tpu.dot_dimension_numbers<[1], [0], [0], [1], [0, 0, 1, 1], [], []>} : vector<16x16xf32>, vector<16x512xf32>, vector<16x512xf32> -> vector<16x512xf32>
    %72 = arith.addf %54, %71 : vector<16x512xf32>
    %c495_i32 = arith.constant 495 : i32
    %73 = tpu.dynamic_rotate %1 by %c495_i32 dim 1 : vector<16x512xf32>, i32 -> vector<16x512xf32>
    %c8 = arith.constant 8 : index
    %c0_51 = arith.constant 0 : index
    %c0_52 = arith.constant 0 : index
    %74 = vector.load %arg5[%c8, %c0_51, %c0_52] : memref<9x1x512xf32, #tpu.memory_space<vmem>>, vector<1x1x512xf32>
    %75 = vector.shape_cast %74 : vector<1x1x512xf32> to vector<1x512xf32>
    %76 = vector.broadcast %75 : vector<1x512xf32> to vector<16x512xf32>
    %77 = arith.mulf %73, %76 : vector<16x512xf32>
    %c8_53 = arith.constant 8 : index
    %c0_54 = arith.constant 0 : index
    %c0_55 = arith.constant 0 : index
    %78 = vector.load %arg2[%c8_53, %c0_54, %c0_55] : memref<9x16x16xf32, #tpu.memory_space<vmem>>, vector<1x16x16xf32>
    %79 = vector.shape_cast %78 : vector<1x16x16xf32> to vector<16x16xf32>
    %cst_56 = arith.constant dense<0.000000e+00> : vector<16x512xf32>
    %80 = tpu.matmul %79, %77, %cst_56 {dimension_numbers = #tpu.dot_dimension_numbers<[1], [0], [0], [1], [0, 0, 1, 1], [], []>} : vector<16x16xf32>, vector<16x512xf32>, vector<16x512xf32> -> vector<16x512xf32>
    %81 = arith.addf %63, %80 : vector<16x512xf32>
    %82 = arith.addf %81, %72 : vector<16x512xf32>
    %c0_57 = arith.constant 0 : index
    %c0_58 = arith.constant 0 : index
    %83 = vector.load %arg3[%c0_57, %c0_58] : memref<2x32xf32, #tpu.memory_space<vmem>>, vector<2x32xf32>
    %c0_59 = arith.constant 0 : index
    %c0_60 = arith.constant 0 : index
    %84 = vector.load %arg4[%c0_59, %c0_60] : memref<32x2xf32, #tpu.memory_space<vmem>>, vector<32x2xf32>
    %85 = vector.extract_strided_slice %82 {offsets = [0, 0], sizes = [16, 256], strides = [1, 1]} : vector<16x512xf32> to vector<16x256xf32>
    %86 = vector.extract_strided_slice %3 {offsets = [0, 0], sizes = [16, 256], strides = [1, 1]} : vector<16x512xf32> to vector<16x256xf32>
    %cst_61 = arith.constant dense<0.000000e+00> : vector<16xf32>
    %87 = vector.multi_reduction <add>, %85, %cst_61 [1] : vector<16x256xf32> to vector<16xf32>
    %88 = vector.shape_cast %87 : vector<16xf32> to vector<16x1xf32>
    %cst_62 = arith.constant dense<0.000000e+00> : vector<16xf32>
    %89 = vector.multi_reduction <add>, %86, %cst_62 [1] : vector<16x256xf32> to vector<16xf32>
    %90 = vector.shape_cast %89 : vector<16xf32> to vector<16x1xf32>
    %91 = tpu.concatenate %88, %90 in 0 : vector<16x1xf32>, vector<16x1xf32> -> vector<32x1xf32>
    %cst_63 = arith.constant 3.906250e-03 : f32
    %92 = vector.broadcast %cst_63 : f32 to vector<32x1xf32>
    %93 = arith.mulf %91, %92 : vector<32x1xf32>
    %cst_64 = arith.constant dense<0xFF800000> : vector<16xf32>
    %94 = vector.multi_reduction <maximumf>, %85, %cst_64 [1] : vector<16x256xf32> to vector<16xf32>
    %95 = vector.shape_cast %94 : vector<16xf32> to vector<16x1xf32>
    %cst_65 = arith.constant dense<0xFF800000> : vector<16xf32>
    %96 = vector.multi_reduction <maximumf>, %86, %cst_65 [1] : vector<16x256xf32> to vector<16xf32>
    %97 = vector.shape_cast %96 : vector<16xf32> to vector<16x1xf32>
    %98 = tpu.concatenate %95, %97 in 0 : vector<16x1xf32>, vector<16x1xf32> -> vector<32x1xf32>
    %cst_66 = arith.constant dense<0.000000e+00> : vector<2x1xf32>
    %99 = tpu.matmul %83, %93, %cst_66 {dimension_numbers = #tpu.dot_dimension_numbers<[1], [0], [0], [1], [0, 0, 1, 1], [], []>} : vector<2x32xf32>, vector<32x1xf32>, vector<2x1xf32> -> vector<2x1xf32>
    %cst_67 = arith.constant 0.000000e+00 : f32
    %100 = vector.broadcast %cst_67 : f32 to vector<2x1xf32>
    %101 = arith.maximumf %99, %100 : vector<2x1xf32>
    %cst_68 = arith.constant dense<0.000000e+00> : vector<32x1xf32>
    %102 = tpu.matmul %84, %101, %cst_68 {dimension_numbers = #tpu.dot_dimension_numbers<[1], [0], [0], [1], [0, 0, 1, 1], [], []>} : vector<32x2xf32>, vector<2x1xf32>, vector<32x1xf32> -> vector<32x1xf32>
    %cst_69 = arith.constant dense<0.000000e+00> : vector<2x1xf32>
    %103 = tpu.matmul %83, %98, %cst_69 {dimension_numbers = #tpu.dot_dimension_numbers<[1], [0], [0], [1], [0, 0, 1, 1], [], []>} : vector<2x32xf32>, vector<32x1xf32>, vector<2x1xf32> -> vector<2x1xf32>
    %cst_70 = arith.constant 0.000000e+00 : f32
    %104 = vector.broadcast %cst_70 : f32 to vector<2x1xf32>
    %105 = arith.maximumf %103, %104 : vector<2x1xf32>
    %cst_71 = arith.constant dense<0.000000e+00> : vector<32x1xf32>
    %106 = tpu.matmul %84, %105, %cst_71 {dimension_numbers = #tpu.dot_dimension_numbers<[1], [0], [0], [1], [0, 0, 1, 1], [], []>} : vector<32x2xf32>, vector<2x1xf32>, vector<32x1xf32> -> vector<32x1xf32>
    %107 = arith.addf %102, %106 : vector<32x1xf32>
    %108 = arith.negf %107 : vector<32x1xf32>
    %109 = math.exp %108 : vector<32x1xf32>
    %cst_72 = arith.constant 1.000000e+00 : f32
    %110 = vector.broadcast %cst_72 : f32 to vector<32x1xf32>
    %111 = arith.addf %110, %109 : vector<32x1xf32>
    %112 = arith.divf %110, %111 : vector<32x1xf32>
    %113 = vector.extract_strided_slice %112 {offsets = [0, 0], sizes = [16, 1], strides = [1, 1]} : vector<32x1xf32> to vector<16x1xf32>
    %114 = vector.broadcast %113 : vector<16x1xf32> to vector<16x256xf32>
    %115 = arith.mulf %85, %114 : vector<16x256xf32>
    %116 = vector.extract_strided_slice %112 {offsets = [16, 0], sizes = [16, 1], strides = [1, 1]} : vector<32x1xf32> to vector<16x1xf32>
    %117 = vector.broadcast %116 : vector<16x1xf32> to vector<16x256xf32>
    %118 = arith.mulf %86, %117 : vector<16x256xf32>
    %cst_73 = arith.constant dense<0.000000e+00> : vector<256xf32>
    %119 = vector.multi_reduction <add>, %115, %cst_73 [0] : vector<16x256xf32> to vector<256xf32>
    %120 = vector.shape_cast %119 : vector<256xf32> to vector<1x256xf32>
    %cst_74 = arith.constant dense<0.000000e+00> : vector<256xf32>
    %121 = vector.multi_reduction <add>, %118, %cst_74 [0] : vector<16x256xf32> to vector<256xf32>
    %122 = vector.shape_cast %121 : vector<256xf32> to vector<1x256xf32>
    %123 = arith.addf %120, %122 : vector<1x256xf32>
    %cst_75 = arith.constant 3.125000e-02 : f32
    %124 = vector.broadcast %cst_75 : f32 to vector<1x256xf32>
    %125 = arith.mulf %123, %124 : vector<1x256xf32>
    %cst_76 = arith.constant dense<0xFF800000> : vector<256xf32>
    %126 = vector.multi_reduction <maximumf>, %115, %cst_76 [0] : vector<16x256xf32> to vector<256xf32>
    %127 = vector.shape_cast %126 : vector<256xf32> to vector<1x256xf32>
    %cst_77 = arith.constant dense<0xFF800000> : vector<256xf32>
    %128 = vector.multi_reduction <maximumf>, %118, %cst_77 [0] : vector<16x256xf32> to vector<256xf32>
    %129 = vector.shape_cast %128 : vector<256xf32> to vector<1x256xf32>
    %130 = arith.maximumf %127, %129 : vector<1x256xf32>
    %131 = tpu.concatenate %125, %130 in 0 : vector<1x256xf32>, vector<1x256xf32> -> vector<2x256xf32>
    %cst_78 = arith.constant 0.000000e+00 : f32
    %132 = vector.broadcast %cst_78 : f32 to vector<2x256xf32>
    %cst_79 = arith.constant 0.000000e+00 : f32
    %133 = vector.broadcast %cst_79 : f32 to vector<2x256xf32>
    %c51_i32 = arith.constant 51 : i32
    %134 = tpu.dynamic_rotate %131 by %c51_i32 dim 1 : vector<2x256xf32>, i32 -> vector<2x256xf32>
    %c0_80 = arith.constant 0 : index
    %c0_81 = arith.constant 0 : index
    %c0_82 = arith.constant 0 : index
    %135 = vector.load %arg6[%c0_80, %c0_81, %c0_82] : memref<49x2x256xf32, #tpu.memory_space<vmem>>, vector<1x2x256xf32>
    %136 = vector.shape_cast %135 : vector<1x2x256xf32> to vector<2x256xf32>
    %137 = arith.mulf %134, %136 : vector<2x256xf32>
    %138 = arith.addf %132, %137 : vector<2x256xf32>
    %c50_i32 = arith.constant 50 : i32
    %139 = tpu.dynamic_rotate %131 by %c50_i32 dim 1 : vector<2x256xf32>, i32 -> vector<2x256xf32>
    %c1_83 = arith.constant 1 : index
    %c0_84 = arith.constant 0 : index
    %c0_85 = arith.constant 0 : index
    %140 = vector.load %arg6[%c1_83, %c0_84, %c0_85] : memref<49x2x256xf32, #tpu.memory_space<vmem>>, vector<1x2x256xf32>
    %141 = vector.shape_cast %140 : vector<1x2x256xf32> to vector<2x256xf32>
    %142 = arith.mulf %139, %141 : vector<2x256xf32>
    %143 = arith.addf %133, %142 : vector<2x256xf32>
    %c49_i32 = arith.constant 49 : i32
    %144 = tpu.dynamic_rotate %131 by %c49_i32 dim 1 : vector<2x256xf32>, i32 -> vector<2x256xf32>
    %c2_86 = arith.constant 2 : index
    %c0_87 = arith.constant 0 : index
    %c0_88 = arith.constant 0 : index
    %145 = vector.load %arg6[%c2_86, %c0_87, %c0_88] : memref<49x2x256xf32, #tpu.memory_space<vmem>>, vector<1x2x256xf32>
    %146 = vector.shape_cast %145 : vector<1x2x256xf32> to vector<2x256xf32>
    %147 = arith.mulf %144, %146 : vector<2x256xf32>
    %148 = arith.addf %138, %147 : vector<2x256xf32>
    %c48_i32 = arith.constant 48 : i32
    %149 = tpu.dynamic_rotate %131 by %c48_i32 dim 1 : vector<2x256xf32>, i32 -> vector<2x256xf32>
    %c3_89 = arith.constant 3 : index
    %c0_90 = arith.constant 0 : index
    %c0_91 = arith.constant 0 : index
    %150 = vector.load %arg6[%c3_89, %c0_90, %c0_91] : memref<49x2x256xf32, #tpu.memory_space<vmem>>, vector<1x2x256xf32>
    %151 = vector.shape_cast %150 : vector<1x2x256xf32> to vector<2x256xf32>
    %152 = arith.mulf %149, %151 : vector<2x256xf32>
    %153 = arith.addf %143, %152 : vector<2x256xf32>
    %c47_i32 = arith.constant 47 : i32
    %154 = tpu.dynamic_rotate %131 by %c47_i32 dim 1 : vector<2x256xf32>, i32 -> vector<2x256xf32>
    %c4_92 = arith.constant 4 : index
    %c0_93 = arith.constant 0 : index
    %c0_94 = arith.constant 0 : index
    %155 = vector.load %arg6[%c4_92, %c0_93, %c0_94] : memref<49x2x256xf32, #tpu.memory_space<vmem>>, vector<1x2x256xf32>
    %156 = vector.shape_cast %155 : vector<1x2x256xf32> to vector<2x256xf32>
    %157 = arith.mulf %154, %156 : vector<2x256xf32>
    %158 = arith.addf %148, %157 : vector<2x256xf32>
    %c46_i32 = arith.constant 46 : i32
    %159 = tpu.dynamic_rotate %131 by %c46_i32 dim 1 : vector<2x256xf32>, i32 -> vector<2x256xf32>
    %c5_95 = arith.constant 5 : index
    %c0_96 = arith.constant 0 : index
    %c0_97 = arith.constant 0 : index
    %160 = vector.load %arg6[%c5_95, %c0_96, %c0_97] : memref<49x2x256xf32, #tpu.memory_space<vmem>>, vector<1x2x256xf32>
    %161 = vector.shape_cast %160 : vector<1x2x256xf32> to vector<2x256xf32>
    %162 = arith.mulf %159, %161 : vector<2x256xf32>
    %163 = arith.addf %153, %162 : vector<2x256xf32>
    %c45_i32 = arith.constant 45 : i32
    %164 = tpu.dynamic_rotate %131 by %c45_i32 dim 1 : vector<2x256xf32>, i32 -> vector<2x256xf32>
    %c6_98 = arith.constant 6 : index
    %c0_99 = arith.constant 0 : index
    %c0_100 = arith.constant 0 : index
    %165 = vector.load %arg6[%c6_98, %c0_99, %c0_100] : memref<49x2x256xf32, #tpu.memory_space<vmem>>, vector<1x2x256xf32>
    %166 = vector.shape_cast %165 : vector<1x2x256xf32> to vector<2x256xf32>
    %167 = arith.mulf %164, %166 : vector<2x256xf32>
    %168 = arith.addf %158, %167 : vector<2x256xf32>
    %c35_i32 = arith.constant 35 : i32
    %169 = tpu.dynamic_rotate %131 by %c35_i32 dim 1 : vector<2x256xf32>, i32 -> vector<2x256xf32>
    %c7_101 = arith.constant 7 : index
    %c0_102 = arith.constant 0 : index
    %c0_103 = arith.constant 0 : index
    %170 = vector.load %arg6[%c7_101, %c0_102, %c0_103] : memref<49x2x256xf32, #tpu.memory_space<vmem>>, vector<1x2x256xf32>
    %171 = vector.shape_cast %170 : vector<1x2x256xf32> to vector<2x256xf32>
    %172 = arith.mulf %169, %171 : vector<2x256xf32>
    %173 = arith.addf %163, %172 : vector<2x256xf32>
    %c34_i32 = arith.constant 34 : i32
    %174 = tpu.dynamic_rotate %131 by %c34_i32 dim 1 : vector<2x256xf32>, i32 -> vector<2x256xf32>
    %c8_104 = arith.constant 8 : index
    %c0_105 = arith.constant 0 : index
    %c0_106 = arith.constant 0 : index
    %175 = vector.load %arg6[%c8_104, %c0_105, %c0_106] : memref<49x2x256xf32, #tpu.memory_space<vmem>>, vector<1x2x256xf32>
    %176 = vector.shape_cast %175 : vector<1x2x256xf32> to vector<2x256xf32>
    %177 = arith.mulf %174, %176 : vector<2x256xf32>
    %178 = arith.addf %168, %177 : vector<2x256xf32>
    %c33_i32 = arith.constant 33 : i32
    %179 = tpu.dynamic_rotate %131 by %c33_i32 dim 1 : vector<2x256xf32>, i32 -> vector<2x256xf32>
    %c9 = arith.constant 9 : index
    %c0_107 = arith.constant 0 : index
    %c0_108 = arith.constant 0 : index
    %180 = vector.load %arg6[%c9, %c0_107, %c0_108] : memref<49x2x256xf32, #tpu.memory_space<vmem>>, vector<1x2x256xf32>
    %181 = vector.shape_cast %180 : vector<1x2x256xf32> to vector<2x256xf32>
    %182 = arith.mulf %179, %181 : vector<2x256xf32>
    %183 = arith.addf %173, %182 : vector<2x256xf32>
    %c32_i32 = arith.constant 32 : i32
    %184 = tpu.dynamic_rotate %131 by %c32_i32 dim 1 : vector<2x256xf32>, i32 -> vector<2x256xf32>
    %c10 = arith.constant 10 : index
    %c0_109 = arith.constant 0 : index
    %c0_110 = arith.constant 0 : index
    %185 = vector.load %arg6[%c10, %c0_109, %c0_110] : memref<49x2x256xf32, #tpu.memory_space<vmem>>, vector<1x2x256xf32>
    %186 = vector.shape_cast %185 : vector<1x2x256xf32> to vector<2x256xf32>
    %187 = arith.mulf %184, %186 : vector<2x256xf32>
    %188 = arith.addf %178, %187 : vector<2x256xf32>
    %c31_i32 = arith.constant 31 : i32
    %189 = tpu.dynamic_rotate %131 by %c31_i32 dim 1 : vector<2x256xf32>, i32 -> vector<2x256xf32>
    %c11 = arith.constant 11 : index
    %c0_111 = arith.constant 0 : index
    %c0_112 = arith.constant 0 : index
    %190 = vector.load %arg6[%c11, %c0_111, %c0_112] : memref<49x2x256xf32, #tpu.memory_space<vmem>>, vector<1x2x256xf32>
    %191 = vector.shape_cast %190 : vector<1x2x256xf32> to vector<2x256xf32>
    %192 = arith.mulf %189, %191 : vector<2x256xf32>
    %193 = arith.addf %183, %192 : vector<2x256xf32>
    %c30_i32 = arith.constant 30 : i32
    %194 = tpu.dynamic_rotate %131 by %c30_i32 dim 1 : vector<2x256xf32>, i32 -> vector<2x256xf32>
    %c12 = arith.constant 12 : index
    %c0_113 = arith.constant 0 : index
    %c0_114 = arith.constant 0 : index
    %195 = vector.load %arg6[%c12, %c0_113, %c0_114] : memref<49x2x256xf32, #tpu.memory_space<vmem>>, vector<1x2x256xf32>
    %196 = vector.shape_cast %195 : vector<1x2x256xf32> to vector<2x256xf32>
    %197 = arith.mulf %194, %196 : vector<2x256xf32>
    %198 = arith.addf %188, %197 : vector<2x256xf32>
    %c29_i32 = arith.constant 29 : i32
    %199 = tpu.dynamic_rotate %131 by %c29_i32 dim 1 : vector<2x256xf32>, i32 -> vector<2x256xf32>
    %c13 = arith.constant 13 : index
    %c0_115 = arith.constant 0 : index
    %c0_116 = arith.constant 0 : index
    %200 = vector.load %arg6[%c13, %c0_115, %c0_116] : memref<49x2x256xf32, #tpu.memory_space<vmem>>, vector<1x2x256xf32>
    %201 = vector.shape_cast %200 : vector<1x2x256xf32> to vector<2x256xf32>
    %202 = arith.mulf %199, %201 : vector<2x256xf32>
    %203 = arith.addf %193, %202 : vector<2x256xf32>
    %c19_i32 = arith.constant 19 : i32
    %204 = tpu.dynamic_rotate %131 by %c19_i32 dim 1 : vector<2x256xf32>, i32 -> vector<2x256xf32>
    %c14 = arith.constant 14 : index
    %c0_117 = arith.constant 0 : index
    %c0_118 = arith.constant 0 : index
    %205 = vector.load %arg6[%c14, %c0_117, %c0_118] : memref<49x2x256xf32, #tpu.memory_space<vmem>>, vector<1x2x256xf32>
    %206 = vector.shape_cast %205 : vector<1x2x256xf32> to vector<2x256xf32>
    %207 = arith.mulf %204, %206 : vector<2x256xf32>
    %208 = arith.addf %198, %207 : vector<2x256xf32>
    %c18_i32 = arith.constant 18 : i32
    %209 = tpu.dynamic_rotate %131 by %c18_i32 dim 1 : vector<2x256xf32>, i32 -> vector<2x256xf32>
    %c15 = arith.constant 15 : index
    %c0_119 = arith.constant 0 : index
    %c0_120 = arith.constant 0 : index
    %210 = vector.load %arg6[%c15, %c0_119, %c0_120] : memref<49x2x256xf32, #tpu.memory_space<vmem>>, vector<1x2x256xf32>
    %211 = vector.shape_cast %210 : vector<1x2x256xf32> to vector<2x256xf32>
    %212 = arith.mulf %209, %211 : vector<2x256xf32>
    %213 = arith.addf %203, %212 : vector<2x256xf32>
    %c17_i32_121 = arith.constant 17 : i32
    %214 = tpu.dynamic_rotate %131 by %c17_i32_121 dim 1 : vector<2x256xf32>, i32 -> vector<2x256xf32>
    %c16_122 = arith.constant 16 : index
    %c0_123 = arith.constant 0 : index
    %c0_124 = arith.constant 0 : index
    %215 = vector.load %arg6[%c16_122, %c0_123, %c0_124] : memref<49x2x256xf32, #tpu.memory_space<vmem>>, vector<1x2x256xf32>
    %216 = vector.shape_cast %215 : vector<1x2x256xf32> to vector<2x256xf32>
    %217 = arith.mulf %214, %216 : vector<2x256xf32>
    %218 = arith.addf %208, %217 : vector<2x256xf32>
    %c16_i32_125 = arith.constant 16 : i32
    %219 = tpu.dynamic_rotate %131 by %c16_i32_125 dim 1 : vector<2x256xf32>, i32 -> vector<2x256xf32>
    %c17 = arith.constant 17 : index
    %c0_126 = arith.constant 0 : index
    %c0_127 = arith.constant 0 : index
    %220 = vector.load %arg6[%c17, %c0_126, %c0_127] : memref<49x2x256xf32, #tpu.memory_space<vmem>>, vector<1x2x256xf32>
    %221 = vector.shape_cast %220 : vector<1x2x256xf32> to vector<2x256xf32>
    %222 = arith.mulf %219, %221 : vector<2x256xf32>
    %223 = arith.addf %213, %222 : vector<2x256xf32>
    %c15_i32_128 = arith.constant 15 : i32
    %224 = tpu.dynamic_rotate %131 by %c15_i32_128 dim 1 : vector<2x256xf32>, i32 -> vector<2x256xf32>
    %c18 = arith.constant 18 : index
    %c0_129 = arith.constant 0 : index
    %c0_130 = arith.constant 0 : index
    %225 = vector.load %arg6[%c18, %c0_129, %c0_130] : memref<49x2x256xf32, #tpu.memory_space<vmem>>, vector<1x2x256xf32>
    %226 = vector.shape_cast %225 : vector<1x2x256xf32> to vector<2x256xf32>
    %227 = arith.mulf %224, %226 : vector<2x256xf32>
    %228 = arith.addf %218, %227 : vector<2x256xf32>
    %c14_i32 = arith.constant 14 : i32
    %229 = tpu.dynamic_rotate %131 by %c14_i32 dim 1 : vector<2x256xf32>, i32 -> vector<2x256xf32>
    %c19 = arith.constant 19 : index
    %c0_131 = arith.constant 0 : index
    %c0_132 = arith.constant 0 : index
    %230 = vector.load %arg6[%c19, %c0_131, %c0_132] : memref<49x2x256xf32, #tpu.memory_space<vmem>>, vector<1x2x256xf32>
    %231 = vector.shape_cast %230 : vector<1x2x256xf32> to vector<2x256xf32>
    %232 = arith.mulf %229, %231 : vector<2x256xf32>
    %233 = arith.addf %223, %232 : vector<2x256xf32>
    %c13_i32 = arith.constant 13 : i32
    %234 = tpu.dynamic_rotate %131 by %c13_i32 dim 1 : vector<2x256xf32>, i32 -> vector<2x256xf32>
    %c20 = arith.constant 20 : index
    %c0_133 = arith.constant 0 : index
    %c0_134 = arith.constant 0 : index
    %235 = vector.load %arg6[%c20, %c0_133, %c0_134] : memref<49x2x256xf32, #tpu.memory_space<vmem>>, vector<1x2x256xf32>
    %236 = vector.shape_cast %235 : vector<1x2x256xf32> to vector<2x256xf32>
    %237 = arith.mulf %234, %236 : vector<2x256xf32>
    %238 = arith.addf %228, %237 : vector<2x256xf32>
    %c3_i32 = arith.constant 3 : i32
    %239 = tpu.dynamic_rotate %131 by %c3_i32 dim 1 : vector<2x256xf32>, i32 -> vector<2x256xf32>
    %c21 = arith.constant 21 : index
    %c0_135 = arith.constant 0 : index
    %c0_136 = arith.constant 0 : index
    %240 = vector.load %arg6[%c21, %c0_135, %c0_136] : memref<49x2x256xf32, #tpu.memory_space<vmem>>, vector<1x2x256xf32>
    %241 = vector.shape_cast %240 : vector<1x2x256xf32> to vector<2x256xf32>
    %242 = arith.mulf %239, %241 : vector<2x256xf32>
    %243 = arith.addf %233, %242 : vector<2x256xf32>
    %c2_i32 = arith.constant 2 : i32
    %244 = tpu.dynamic_rotate %131 by %c2_i32 dim 1 : vector<2x256xf32>, i32 -> vector<2x256xf32>
    %c22 = arith.constant 22 : index
    %c0_137 = arith.constant 0 : index
    %c0_138 = arith.constant 0 : index
    %245 = vector.load %arg6[%c22, %c0_137, %c0_138] : memref<49x2x256xf32, #tpu.memory_space<vmem>>, vector<1x2x256xf32>
    %246 = vector.shape_cast %245 : vector<1x2x256xf32> to vector<2x256xf32>
    %247 = arith.mulf %244, %246 : vector<2x256xf32>
    %248 = arith.addf %238, %247 : vector<2x256xf32>
    %c1_i32_139 = arith.constant 1 : i32
    %249 = tpu.dynamic_rotate %131 by %c1_i32_139 dim 1 : vector<2x256xf32>, i32 -> vector<2x256xf32>
    %c23 = arith.constant 23 : index
    %c0_140 = arith.constant 0 : index
    %c0_141 = arith.constant 0 : index
    %250 = vector.load %arg6[%c23, %c0_140, %c0_141] : memref<49x2x256xf32, #tpu.memory_space<vmem>>, vector<1x2x256xf32>
    %251 = vector.shape_cast %250 : vector<1x2x256xf32> to vector<2x256xf32>
    %252 = arith.mulf %249, %251 : vector<2x256xf32>
    %253 = arith.addf %243, %252 : vector<2x256xf32>
    %c24 = arith.constant 24 : index
    %c0_142 = arith.constant 0 : index
    %c0_143 = arith.constant 0 : index
    %254 = vector.load %arg6[%c24, %c0_142, %c0_143] : memref<49x2x256xf32, #tpu.memory_space<vmem>>, vector<1x2x256xf32>
    %255 = vector.shape_cast %254 : vector<1x2x256xf32> to vector<2x256xf32>
    %256 = arith.mulf %131, %255 : vector<2x256xf32>
    %257 = arith.addf %248, %256 : vector<2x256xf32>
    %c255_i32 = arith.constant 255 : i32
    %258 = tpu.dynamic_rotate %131 by %c255_i32 dim 1 : vector<2x256xf32>, i32 -> vector<2x256xf32>
    %c25 = arith.constant 25 : index
    %c0_144 = arith.constant 0 : index
    %c0_145 = arith.constant 0 : index
    %259 = vector.load %arg6[%c25, %c0_144, %c0_145] : memref<49x2x256xf32, #tpu.memory_space<vmem>>, vector<1x2x256xf32>
    %260 = vector.shape_cast %259 : vector<1x2x256xf32> to vector<2x256xf32>
    %261 = arith.mulf %258, %260 : vector<2x256xf32>
    %262 = arith.addf %253, %261 : vector<2x256xf32>
    %c254_i32 = arith.constant 254 : i32
    %263 = tpu.dynamic_rotate %131 by %c254_i32 dim 1 : vector<2x256xf32>, i32 -> vector<2x256xf32>
    %c26 = arith.constant 26 : index
    %c0_146 = arith.constant 0 : index
    %c0_147 = arith.constant 0 : index
    %264 = vector.load %arg6[%c26, %c0_146, %c0_147] : memref<49x2x256xf32, #tpu.memory_space<vmem>>, vector<1x2x256xf32>
    %265 = vector.shape_cast %264 : vector<1x2x256xf32> to vector<2x256xf32>
    %266 = arith.mulf %263, %265 : vector<2x256xf32>
    %267 = arith.addf %257, %266 : vector<2x256xf32>
    %c253_i32 = arith.constant 253 : i32
    %268 = tpu.dynamic_rotate %131 by %c253_i32 dim 1 : vector<2x256xf32>, i32 -> vector<2x256xf32>
    %c27 = arith.constant 27 : index
    %c0_148 = arith.constant 0 : index
    %c0_149 = arith.constant 0 : index
    %269 = vector.load %arg6[%c27, %c0_148, %c0_149] : memref<49x2x256xf32, #tpu.memory_space<vmem>>, vector<1x2x256xf32>
    %270 = vector.shape_cast %269 : vector<1x2x256xf32> to vector<2x256xf32>
    %271 = arith.mulf %268, %270 : vector<2x256xf32>
    %272 = arith.addf %262, %271 : vector<2x256xf32>
    %c243_i32 = arith.constant 243 : i32
    %273 = tpu.dynamic_rotate %131 by %c243_i32 dim 1 : vector<2x256xf32>, i32 -> vector<2x256xf32>
    %c28 = arith.constant 28 : index
    %c0_150 = arith.constant 0 : index
    %c0_151 = arith.constant 0 : index
    %274 = vector.load %arg6[%c28, %c0_150, %c0_151] : memref<49x2x256xf32, #tpu.memory_space<vmem>>, vector<1x2x256xf32>
    %275 = vector.shape_cast %274 : vector<1x2x256xf32> to vector<2x256xf32>
    %276 = arith.mulf %273, %275 : vector<2x256xf32>
    %277 = arith.addf %267, %276 : vector<2x256xf32>
    %c242_i32 = arith.constant 242 : i32
    %278 = tpu.dynamic_rotate %131 by %c242_i32 dim 1 : vector<2x256xf32>, i32 -> vector<2x256xf32>
    %c29 = arith.constant 29 : index
    %c0_152 = arith.constant 0 : index
    %c0_153 = arith.constant 0 : index
    %279 = vector.load %arg6[%c29, %c0_152, %c0_153] : memref<49x2x256xf32, #tpu.memory_space<vmem>>, vector<1x2x256xf32>
    %280 = vector.shape_cast %279 : vector<1x2x256xf32> to vector<2x256xf32>
    %281 = arith.mulf %278, %280 : vector<2x256xf32>
    %282 = arith.addf %272, %281 : vector<2x256xf32>
    %c241_i32 = arith.constant 241 : i32
    %283 = tpu.dynamic_rotate %131 by %c241_i32 dim 1 : vector<2x256xf32>, i32 -> vector<2x256xf32>
    %c30 = arith.constant 30 : index
    %c0_154 = arith.constant 0 : index
    %c0_155 = arith.constant 0 : index
    %284 = vector.load %arg6[%c30, %c0_154, %c0_155] : memref<49x2x256xf32, #tpu.memory_space<vmem>>, vector<1x2x256xf32>
    %285 = vector.shape_cast %284 : vector<1x2x256xf32> to vector<2x256xf32>
    %286 = arith.mulf %283, %285 : vector<2x256xf32>
    %287 = arith.addf %277, %286 : vector<2x256xf32>
    %c240_i32 = arith.constant 240 : i32
    %288 = tpu.dynamic_rotate %131 by %c240_i32 dim 1 : vector<2x256xf32>, i32 -> vector<2x256xf32>
    %c31 = arith.constant 31 : index
    %c0_156 = arith.constant 0 : index
    %c0_157 = arith.constant 0 : index
    %289 = vector.load %arg6[%c31, %c0_156, %c0_157] : memref<49x2x256xf32, #tpu.memory_space<vmem>>, vector<1x2x256xf32>
    %290 = vector.shape_cast %289 : vector<1x2x256xf32> to vector<2x256xf32>
    %291 = arith.mulf %288, %290 : vector<2x256xf32>
    %292 = arith.addf %282, %291 : vector<2x256xf32>
    %c239_i32 = arith.constant 239 : i32
    %293 = tpu.dynamic_rotate %131 by %c239_i32 dim 1 : vector<2x256xf32>, i32 -> vector<2x256xf32>
    %c32 = arith.constant 32 : index
    %c0_158 = arith.constant 0 : index
    %c0_159 = arith.constant 0 : index
    %294 = vector.load %arg6[%c32, %c0_158, %c0_159] : memref<49x2x256xf32, #tpu.memory_space<vmem>>, vector<1x2x256xf32>
    %295 = vector.shape_cast %294 : vector<1x2x256xf32> to vector<2x256xf32>
    %296 = arith.mulf %293, %295 : vector<2x256xf32>
    %297 = arith.addf %287, %296 : vector<2x256xf32>
    %c238_i32 = arith.constant 238 : i32
    %298 = tpu.dynamic_rotate %131 by %c238_i32 dim 1 : vector<2x256xf32>, i32 -> vector<2x256xf32>
    %c33 = arith.constant 33 : index
    %c0_160 = arith.constant 0 : index
    %c0_161 = arith.constant 0 : index
    %299 = vector.load %arg6[%c33, %c0_160, %c0_161] : memref<49x2x256xf32, #tpu.memory_space<vmem>>, vector<1x2x256xf32>
    %300 = vector.shape_cast %299 : vector<1x2x256xf32> to vector<2x256xf32>
    %301 = arith.mulf %298, %300 : vector<2x256xf32>
    %302 = arith.addf %292, %301 : vector<2x256xf32>
    %c237_i32 = arith.constant 237 : i32
    %303 = tpu.dynamic_rotate %131 by %c237_i32 dim 1 : vector<2x256xf32>, i32 -> vector<2x256xf32>
    %c34 = arith.constant 34 : index
    %c0_162 = arith.constant 0 : index
    %c0_163 = arith.constant 0 : index
    %304 = vector.load %arg6[%c34, %c0_162, %c0_163] : memref<49x2x256xf32, #tpu.memory_space<vmem>>, vector<1x2x256xf32>
    %305 = vector.shape_cast %304 : vector<1x2x256xf32> to vector<2x256xf32>
    %306 = arith.mulf %303, %305 : vector<2x256xf32>
    %307 = arith.addf %297, %306 : vector<2x256xf32>
    %c227_i32 = arith.constant 227 : i32
    %308 = tpu.dynamic_rotate %131 by %c227_i32 dim 1 : vector<2x256xf32>, i32 -> vector<2x256xf32>
    %c35 = arith.constant 35 : index
    %c0_164 = arith.constant 0 : index
    %c0_165 = arith.constant 0 : index
    %309 = vector.load %arg6[%c35, %c0_164, %c0_165] : memref<49x2x256xf32, #tpu.memory_space<vmem>>, vector<1x2x256xf32>
    %310 = vector.shape_cast %309 : vector<1x2x256xf32> to vector<2x256xf32>
    %311 = arith.mulf %308, %310 : vector<2x256xf32>
    %312 = arith.addf %302, %311 : vector<2x256xf32>
    %c226_i32 = arith.constant 226 : i32
    %313 = tpu.dynamic_rotate %131 by %c226_i32 dim 1 : vector<2x256xf32>, i32 -> vector<2x256xf32>
    %c36 = arith.constant 36 : index
    %c0_166 = arith.constant 0 : index
    %c0_167 = arith.constant 0 : index
    %314 = vector.load %arg6[%c36, %c0_166, %c0_167] : memref<49x2x256xf32, #tpu.memory_space<vmem>>, vector<1x2x256xf32>
    %315 = vector.shape_cast %314 : vector<1x2x256xf32> to vector<2x256xf32>
    %316 = arith.mulf %313, %315 : vector<2x256xf32>
    %317 = arith.addf %307, %316 : vector<2x256xf32>
    %c225_i32 = arith.constant 225 : i32
    %318 = tpu.dynamic_rotate %131 by %c225_i32 dim 1 : vector<2x256xf32>, i32 -> vector<2x256xf32>
    %c37 = arith.constant 37 : index
    %c0_168 = arith.constant 0 : index
    %c0_169 = arith.constant 0 : index
    %319 = vector.load %arg6[%c37, %c0_168, %c0_169] : memref<49x2x256xf32, #tpu.memory_space<vmem>>, vector<1x2x256xf32>
    %320 = vector.shape_cast %319 : vector<1x2x256xf32> to vector<2x256xf32>
    %321 = arith.mulf %318, %320 : vector<2x256xf32>
    %322 = arith.addf %312, %321 : vector<2x256xf32>
    %c224_i32 = arith.constant 224 : i32
    %323 = tpu.dynamic_rotate %131 by %c224_i32 dim 1 : vector<2x256xf32>, i32 -> vector<2x256xf32>
    %c38 = arith.constant 38 : index
    %c0_170 = arith.constant 0 : index
    %c0_171 = arith.constant 0 : index
    %324 = vector.load %arg6[%c38, %c0_170, %c0_171] : memref<49x2x256xf32, #tpu.memory_space<vmem>>, vector<1x2x256xf32>
    %325 = vector.shape_cast %324 : vector<1x2x256xf32> to vector<2x256xf32>
    %326 = arith.mulf %323, %325 : vector<2x256xf32>
    %327 = arith.addf %317, %326 : vector<2x256xf32>
    %c223_i32 = arith.constant 223 : i32
    %328 = tpu.dynamic_rotate %131 by %c223_i32 dim 1 : vector<2x256xf32>, i32 -> vector<2x256xf32>
    %c39 = arith.constant 39 : index
    %c0_172 = arith.constant 0 : index
    %c0_173 = arith.constant 0 : index
    %329 = vector.load %arg6[%c39, %c0_172, %c0_173] : memref<49x2x256xf32, #tpu.memory_space<vmem>>, vector<1x2x256xf32>
    %330 = vector.shape_cast %329 : vector<1x2x256xf32> to vector<2x256xf32>
    %331 = arith.mulf %328, %330 : vector<2x256xf32>
    %332 = arith.addf %322, %331 : vector<2x256xf32>
    %c222_i32 = arith.constant 222 : i32
    %333 = tpu.dynamic_rotate %131 by %c222_i32 dim 1 : vector<2x256xf32>, i32 -> vector<2x256xf32>
    %c40 = arith.constant 40 : index
    %c0_174 = arith.constant 0 : index
    %c0_175 = arith.constant 0 : index
    %334 = vector.load %arg6[%c40, %c0_174, %c0_175] : memref<49x2x256xf32, #tpu.memory_space<vmem>>, vector<1x2x256xf32>
    %335 = vector.shape_cast %334 : vector<1x2x256xf32> to vector<2x256xf32>
    %336 = arith.mulf %333, %335 : vector<2x256xf32>
    %337 = arith.addf %327, %336 : vector<2x256xf32>
    %c221_i32 = arith.constant 221 : i32
    %338 = tpu.dynamic_rotate %131 by %c221_i32 dim 1 : vector<2x256xf32>, i32 -> vector<2x256xf32>
    %c41 = arith.constant 41 : index
    %c0_176 = arith.constant 0 : index
    %c0_177 = arith.constant 0 : index
    %339 = vector.load %arg6[%c41, %c0_176, %c0_177] : memref<49x2x256xf32, #tpu.memory_space<vmem>>, vector<1x2x256xf32>
    %340 = vector.shape_cast %339 : vector<1x2x256xf32> to vector<2x256xf32>
    %341 = arith.mulf %338, %340 : vector<2x256xf32>
    %342 = arith.addf %332, %341 : vector<2x256xf32>
    %c211_i32 = arith.constant 211 : i32
    %343 = tpu.dynamic_rotate %131 by %c211_i32 dim 1 : vector<2x256xf32>, i32 -> vector<2x256xf32>
    %c42 = arith.constant 42 : index
    %c0_178 = arith.constant 0 : index
    %c0_179 = arith.constant 0 : index
    %344 = vector.load %arg6[%c42, %c0_178, %c0_179] : memref<49x2x256xf32, #tpu.memory_space<vmem>>, vector<1x2x256xf32>
    %345 = vector.shape_cast %344 : vector<1x2x256xf32> to vector<2x256xf32>
    %346 = arith.mulf %343, %345 : vector<2x256xf32>
    %347 = arith.addf %337, %346 : vector<2x256xf32>
    %c210_i32 = arith.constant 210 : i32
    %348 = tpu.dynamic_rotate %131 by %c210_i32 dim 1 : vector<2x256xf32>, i32 -> vector<2x256xf32>
    %c43 = arith.constant 43 : index
    %c0_180 = arith.constant 0 : index
    %c0_181 = arith.constant 0 : index
    %349 = vector.load %arg6[%c43, %c0_180, %c0_181] : memref<49x2x256xf32, #tpu.memory_space<vmem>>, vector<1x2x256xf32>
    %350 = vector.shape_cast %349 : vector<1x2x256xf32> to vector<2x256xf32>
    %351 = arith.mulf %348, %350 : vector<2x256xf32>
    %352 = arith.addf %342, %351 : vector<2x256xf32>
    %c209_i32 = arith.constant 209 : i32
    %353 = tpu.dynamic_rotate %131 by %c209_i32 dim 1 : vector<2x256xf32>, i32 -> vector<2x256xf32>
    %c44 = arith.constant 44 : index
    %c0_182 = arith.constant 0 : index
    %c0_183 = arith.constant 0 : index
    %354 = vector.load %arg6[%c44, %c0_182, %c0_183] : memref<49x2x256xf32, #tpu.memory_space<vmem>>, vector<1x2x256xf32>
    %355 = vector.shape_cast %354 : vector<1x2x256xf32> to vector<2x256xf32>
    %356 = arith.mulf %353, %355 : vector<2x256xf32>
    %357 = arith.addf %347, %356 : vector<2x256xf32>
    %c208_i32 = arith.constant 208 : i32
    %358 = tpu.dynamic_rotate %131 by %c208_i32 dim 1 : vector<2x256xf32>, i32 -> vector<2x256xf32>
    %c45 = arith.constant 45 : index
    %c0_184 = arith.constant 0 : index
    %c0_185 = arith.constant 0 : index
    %359 = vector.load %arg6[%c45, %c0_184, %c0_185] : memref<49x2x256xf32, #tpu.memory_space<vmem>>, vector<1x2x256xf32>
    %360 = vector.shape_cast %359 : vector<1x2x256xf32> to vector<2x256xf32>
    %361 = arith.mulf %358, %360 : vector<2x256xf32>
    %362 = arith.addf %352, %361 : vector<2x256xf32>
    %c207_i32 = arith.constant 207 : i32
    %363 = tpu.dynamic_rotate %131 by %c207_i32 dim 1 : vector<2x256xf32>, i32 -> vector<2x256xf32>
    %c46 = arith.constant 46 : index
    %c0_186 = arith.constant 0 : index
    %c0_187 = arith.constant 0 : index
    %364 = vector.load %arg6[%c46, %c0_186, %c0_187] : memref<49x2x256xf32, #tpu.memory_space<vmem>>, vector<1x2x256xf32>
    %365 = vector.shape_cast %364 : vector<1x2x256xf32> to vector<2x256xf32>
    %366 = arith.mulf %363, %365 : vector<2x256xf32>
    %367 = arith.addf %357, %366 : vector<2x256xf32>
    %c206_i32 = arith.constant 206 : i32
    %368 = tpu.dynamic_rotate %131 by %c206_i32 dim 1 : vector<2x256xf32>, i32 -> vector<2x256xf32>
    %c47 = arith.constant 47 : index
    %c0_188 = arith.constant 0 : index
    %c0_189 = arith.constant 0 : index
    %369 = vector.load %arg6[%c47, %c0_188, %c0_189] : memref<49x2x256xf32, #tpu.memory_space<vmem>>, vector<1x2x256xf32>
    %370 = vector.shape_cast %369 : vector<1x2x256xf32> to vector<2x256xf32>
    %371 = arith.mulf %368, %370 : vector<2x256xf32>
    %372 = arith.addf %362, %371 : vector<2x256xf32>
    %c205_i32 = arith.constant 205 : i32
    %373 = tpu.dynamic_rotate %131 by %c205_i32 dim 1 : vector<2x256xf32>, i32 -> vector<2x256xf32>
    %c48 = arith.constant 48 : index
    %c0_190 = arith.constant 0 : index
    %c0_191 = arith.constant 0 : index
    %374 = vector.load %arg6[%c48, %c0_190, %c0_191] : memref<49x2x256xf32, #tpu.memory_space<vmem>>, vector<1x2x256xf32>
    %375 = vector.shape_cast %374 : vector<1x2x256xf32> to vector<2x256xf32>
    %376 = arith.mulf %373, %375 : vector<2x256xf32>
    %377 = arith.addf %367, %376 : vector<2x256xf32>
    %378 = arith.addf %377, %372 : vector<2x256xf32>
    %cst_192 = arith.constant dense<0.000000e+00> : vector<256xf32>
    %379 = vector.multi_reduction <add>, %378, %cst_192 [0] : vector<2x256xf32> to vector<256xf32>
    %380 = vector.shape_cast %379 : vector<256xf32> to vector<1x256xf32>
    %381 = arith.negf %380 : vector<1x256xf32>
    %382 = math.exp %381 : vector<1x256xf32>
    %cst_193 = arith.constant 1.000000e+00 : f32
    %383 = vector.broadcast %cst_193 : f32 to vector<1x256xf32>
    %384 = arith.addf %383, %382 : vector<1x256xf32>
    %385 = arith.divf %383, %384 : vector<1x256xf32>
    %386 = vector.broadcast %385 : vector<1x256xf32> to vector<16x256xf32>
    %387 = arith.mulf %115, %386 : vector<16x256xf32>
    %c0_194 = arith.constant 0 : index
    %c0_195 = arith.constant 0 : index
    %c0_196 = arith.constant 0 : index
    %388 = vector.load %arg8[%c0_194, %c0_195, %c0_196] : memref<1x32x512xf32, #tpu.memory_space<vmem>>, vector<1x16x256xf32>
    %389 = vector.shape_cast %388 : vector<1x16x256xf32> to vector<16x256xf32>
    %390 = vector.shape_cast %387 : vector<16x256xf32> to vector<1x16x256xf32>
    tpu.vector_store %arg8[%c0_194, %c0_195, %c0_196], %390 {strides = array<i32>} : memref<1x32x512xf32, #tpu.memory_space<vmem>>, vector<1x16x256xf32>,
    %391 = vector.broadcast %385 : vector<1x256xf32> to vector<16x256xf32>
    %392 = arith.mulf %118, %391 : vector<16x256xf32>
    %c0_197 = arith.constant 0 : index
    %c16_198 = arith.constant 16 : index
    %c0_199 = arith.constant 0 : index
    %393 = vector.load %arg8[%c0_197, %c16_198, %c0_199] : memref<1x32x512xf32, #tpu.memory_space<vmem>>, vector<1x16x256xf32>
    %394 = vector.shape_cast %393 : vector<1x16x256xf32> to vector<16x256xf32>
    %395 = vector.shape_cast %392 : vector<16x256xf32> to vector<1x16x256xf32>
    tpu.vector_store %arg8[%c0_197, %c16_198, %c0_199], %395 {strides = array<i32>} : memref<1x32x512xf32, #tpu.memory_space<vmem>>, vector<1x16x256xf32>,
    %396 = vector.extract_strided_slice %82 {offsets = [0, 256], sizes = [16, 256], strides = [1, 1]} : vector<16x512xf32> to vector<16x256xf32>
    %397 = vector.extract_strided_slice %3 {offsets = [0, 256], sizes = [16, 256], strides = [1, 1]} : vector<16x512xf32> to vector<16x256xf32>
    %cst_200 = arith.constant dense<0.000000e+00> : vector<16xf32>
    %398 = vector.multi_reduction <add>, %396, %cst_200 [1] : vector<16x256xf32> to vector<16xf32>
    %399 = vector.shape_cast %398 : vector<16xf32> to vector<16x1xf32>
    %cst_201 = arith.constant dense<0.000000e+00> : vector<16xf32>
    %400 = vector.multi_reduction <add>, %397, %cst_201 [1] : vector<16x256xf32> to vector<16xf32>
    %401 = vector.shape_cast %400 : vector<16xf32> to vector<16x1xf32>
    %402 = tpu.concatenate %399, %401 in 0 : vector<16x1xf32>, vector<16x1xf32> -> vector<32x1xf32>
    %cst_202 = arith.constant 3.906250e-03 : f32
    %403 = vector.broadcast %cst_202 : f32 to vector<32x1xf32>
    %404 = arith.mulf %402, %403 : vector<32x1xf32>
    %cst_203 = arith.constant dense<0xFF800000> : vector<16xf32>
    %405 = vector.multi_reduction <maximumf>, %396, %cst_203 [1] : vector<16x256xf32> to vector<16xf32>
    %406 = vector.shape_cast %405 : vector<16xf32> to vector<16x1xf32>
    %cst_204 = arith.constant dense<0xFF800000> : vector<16xf32>
    %407 = vector.multi_reduction <maximumf>, %397, %cst_204 [1] : vector<16x256xf32> to vector<16xf32>
    %408 = vector.shape_cast %407 : vector<16xf32> to vector<16x1xf32>
    %409 = tpu.concatenate %406, %408 in 0 : vector<16x1xf32>, vector<16x1xf32> -> vector<32x1xf32>
    %cst_205 = arith.constant dense<0.000000e+00> : vector<2x1xf32>
    %410 = tpu.matmul %83, %404, %cst_205 {dimension_numbers = #tpu.dot_dimension_numbers<[1], [0], [0], [1], [0, 0, 1, 1], [], []>} : vector<2x32xf32>, vector<32x1xf32>, vector<2x1xf32> -> vector<2x1xf32>
    %cst_206 = arith.constant 0.000000e+00 : f32
    %411 = vector.broadcast %cst_206 : f32 to vector<2x1xf32>
    %412 = arith.maximumf %410, %411 : vector<2x1xf32>
    %cst_207 = arith.constant dense<0.000000e+00> : vector<32x1xf32>
    %413 = tpu.matmul %84, %412, %cst_207 {dimension_numbers = #tpu.dot_dimension_numbers<[1], [0], [0], [1], [0, 0, 1, 1], [], []>} : vector<32x2xf32>, vector<2x1xf32>, vector<32x1xf32> -> vector<32x1xf32>
    %cst_208 = arith.constant dense<0.000000e+00> : vector<2x1xf32>
    %414 = tpu.matmul %83, %409, %cst_208 {dimension_numbers = #tpu.dot_dimension_numbers<[1], [0], [0], [1], [0, 0, 1, 1], [], []>} : vector<2x32xf32>, vector<32x1xf32>, vector<2x1xf32> -> vector<2x1xf32>
    %cst_209 = arith.constant 0.000000e+00 : f32
    %415 = vector.broadcast %cst_209 : f32 to vector<2x1xf32>
    %416 = arith.maximumf %414, %415 : vector<2x1xf32>
    %cst_210 = arith.constant dense<0.000000e+00> : vector<32x1xf32>
    %417 = tpu.matmul %84, %416, %cst_210 {dimension_numbers = #tpu.dot_dimension_numbers<[1], [0], [0], [1], [0, 0, 1, 1], [], []>} : vector<32x2xf32>, vector<2x1xf32>, vector<32x1xf32> -> vector<32x1xf32>
    %418 = arith.addf %413, %417 : vector<32x1xf32>
    %419 = arith.negf %418 : vector<32x1xf32>
    %420 = math.exp %419 : vector<32x1xf32>
    %cst_211 = arith.constant 1.000000e+00 : f32
    %421 = vector.broadcast %cst_211 : f32 to vector<32x1xf32>
    %422 = arith.addf %421, %420 : vector<32x1xf32>
    %423 = arith.divf %421, %422 : vector<32x1xf32>
    %424 = vector.extract_strided_slice %423 {offsets = [0, 0], sizes = [16, 1], strides = [1, 1]} : vector<32x1xf32> to vector<16x1xf32>
    %425 = vector.broadcast %424 : vector<16x1xf32> to vector<16x256xf32>
    %426 = arith.mulf %396, %425 : vector<16x256xf32>
    %427 = vector.extract_strided_slice %423 {offsets = [16, 0], sizes = [16, 1], strides = [1, 1]} : vector<32x1xf32> to vector<16x1xf32>
    %428 = vector.broadcast %427 : vector<16x1xf32> to vector<16x256xf32>
    %429 = arith.mulf %397, %428 : vector<16x256xf32>
    %cst_212 = arith.constant dense<0.000000e+00> : vector<256xf32>
    %430 = vector.multi_reduction <add>, %426, %cst_212 [0] : vector<16x256xf32> to vector<256xf32>
    %431 = vector.shape_cast %430 : vector<256xf32> to vector<1x256xf32>
    %cst_213 = arith.constant dense<0.000000e+00> : vector<256xf32>
    %432 = vector.multi_reduction <add>, %429, %cst_213 [0] : vector<16x256xf32> to vector<256xf32>
    %433 = vector.shape_cast %432 : vector<256xf32> to vector<1x256xf32>
    %434 = arith.addf %431, %433 : vector<1x256xf32>
    %cst_214 = arith.constant 3.125000e-02 : f32
    %435 = vector.broadcast %cst_214 : f32 to vector<1x256xf32>
    %436 = arith.mulf %434, %435 : vector<1x256xf32>
    %cst_215 = arith.constant dense<0xFF800000> : vector<256xf32>
    %437 = vector.multi_reduction <maximumf>, %426, %cst_215 [0] : vector<16x256xf32> to vector<256xf32>
    %438 = vector.shape_cast %437 : vector<256xf32> to vector<1x256xf32>
    %cst_216 = arith.constant dense<0xFF800000> : vector<256xf32>
    %439 = vector.multi_reduction <maximumf>, %429, %cst_216 [0] : vector<16x256xf32> to vector<256xf32>
    %440 = vector.shape_cast %439 : vector<256xf32> to vector<1x256xf32>
    %441 = arith.maximumf %438, %440 : vector<1x256xf32>
    %442 = tpu.concatenate %436, %441 in 0 : vector<1x256xf32>, vector<1x256xf32> -> vector<2x256xf32>
    %cst_217 = arith.constant 0.000000e+00 : f32
    %443 = vector.broadcast %cst_217 : f32 to vector<2x256xf32>
    %cst_218 = arith.constant 0.000000e+00 : f32
    %444 = vector.broadcast %cst_218 : f32 to vector<2x256xf32>
    %c51_i32_219 = arith.constant 51 : i32
    %445 = tpu.dynamic_rotate %442 by %c51_i32_219 dim 1 : vector<2x256xf32>, i32 -> vector<2x256xf32>
    %c0_220 = arith.constant 0 : index
    %c0_221 = arith.constant 0 : index
    %c0_222 = arith.constant 0 : index
    %446 = vector.load %arg6[%c0_220, %c0_221, %c0_222] : memref<49x2x256xf32, #tpu.memory_space<vmem>>, vector<1x2x256xf32>
    %447 = vector.shape_cast %446 : vector<1x2x256xf32> to vector<2x256xf32>
    %448 = arith.mulf %445, %447 : vector<2x256xf32>
    %449 = arith.addf %443, %448 : vector<2x256xf32>
    %c50_i32_223 = arith.constant 50 : i32
    %450 = tpu.dynamic_rotate %442 by %c50_i32_223 dim 1 : vector<2x256xf32>, i32 -> vector<2x256xf32>
    %c1_224 = arith.constant 1 : index
    %c0_225 = arith.constant 0 : index
    %c0_226 = arith.constant 0 : index
    %451 = vector.load %arg6[%c1_224, %c0_225, %c0_226] : memref<49x2x256xf32, #tpu.memory_space<vmem>>, vector<1x2x256xf32>
    %452 = vector.shape_cast %451 : vector<1x2x256xf32> to vector<2x256xf32>
    %453 = arith.mulf %450, %452 : vector<2x256xf32>
    %454 = arith.addf %444, %453 : vector<2x256xf32>
    %c49_i32_227 = arith.constant 49 : i32
    %455 = tpu.dynamic_rotate %442 by %c49_i32_227 dim 1 : vector<2x256xf32>, i32 -> vector<2x256xf32>
    %c2_228 = arith.constant 2 : index
    %c0_229 = arith.constant 0 : index
    %c0_230 = arith.constant 0 : index
    %456 = vector.load %arg6[%c2_228, %c0_229, %c0_230] : memref<49x2x256xf32, #tpu.memory_space<vmem>>, vector<1x2x256xf32>
    %457 = vector.shape_cast %456 : vector<1x2x256xf32> to vector<2x256xf32>
    %458 = arith.mulf %455, %457 : vector<2x256xf32>
    %459 = arith.addf %449, %458 : vector<2x256xf32>
    %c48_i32_231 = arith.constant 48 : i32
    %460 = tpu.dynamic_rotate %442 by %c48_i32_231 dim 1 : vector<2x256xf32>, i32 -> vector<2x256xf32>
    %c3_232 = arith.constant 3 : index
    %c0_233 = arith.constant 0 : index
    %c0_234 = arith.constant 0 : index
    %461 = vector.load %arg6[%c3_232, %c0_233, %c0_234] : memref<49x2x256xf32, #tpu.memory_space<vmem>>, vector<1x2x256xf32>
    %462 = vector.shape_cast %461 : vector<1x2x256xf32> to vector<2x256xf32>
    %463 = arith.mulf %460, %462 : vector<2x256xf32>
    %464 = arith.addf %454, %463 : vector<2x256xf32>
    %c47_i32_235 = arith.constant 47 : i32
    %465 = tpu.dynamic_rotate %442 by %c47_i32_235 dim 1 : vector<2x256xf32>, i32 -> vector<2x256xf32>
    %c4_236 = arith.constant 4 : index
    %c0_237 = arith.constant 0 : index
    %c0_238 = arith.constant 0 : index
    %466 = vector.load %arg6[%c4_236, %c0_237, %c0_238] : memref<49x2x256xf32, #tpu.memory_space<vmem>>, vector<1x2x256xf32>
    %467 = vector.shape_cast %466 : vector<1x2x256xf32> to vector<2x256xf32>
    %468 = arith.mulf %465, %467 : vector<2x256xf32>
    %469 = arith.addf %459, %468 : vector<2x256xf32>
    %c46_i32_239 = arith.constant 46 : i32
    %470 = tpu.dynamic_rotate %442 by %c46_i32_239 dim 1 : vector<2x256xf32>, i32 -> vector<2x256xf32>
    %c5_240 = arith.constant 5 : index
    %c0_241 = arith.constant 0 : index
    %c0_242 = arith.constant 0 : index
    %471 = vector.load %arg6[%c5_240, %c0_241, %c0_242] : memref<49x2x256xf32, #tpu.memory_space<vmem>>, vector<1x2x256xf32>
    %472 = vector.shape_cast %471 : vector<1x2x256xf32> to vector<2x256xf32>
    %473 = arith.mulf %470, %472 : vector<2x256xf32>
    %474 = arith.addf %464, %473 : vector<2x256xf32>
    %c45_i32_243 = arith.constant 45 : i32
    %475 = tpu.dynamic_rotate %442 by %c45_i32_243 dim 1 : vector<2x256xf32>, i32 -> vector<2x256xf32>
    %c6_244 = arith.constant 6 : index
    %c0_245 = arith.constant 0 : index
    %c0_246 = arith.constant 0 : index
    %476 = vector.load %arg6[%c6_244, %c0_245, %c0_246] : memref<49x2x256xf32, #tpu.memory_space<vmem>>, vector<1x2x256xf32>
    %477 = vector.shape_cast %476 : vector<1x2x256xf32> to vector<2x256xf32>
    %478 = arith.mulf %475, %477 : vector<2x256xf32>
    %479 = arith.addf %469, %478 : vector<2x256xf32>
    %c35_i32_247 = arith.constant 35 : i32
    %480 = tpu.dynamic_rotate %442 by %c35_i32_247 dim 1 : vector<2x256xf32>, i32 -> vector<2x256xf32>
    %c7_248 = arith.constant 7 : index
    %c0_249 = arith.constant 0 : index
    %c0_250 = arith.constant 0 : index
    %481 = vector.load %arg6[%c7_248, %c0_249, %c0_250] : memref<49x2x256xf32, #tpu.memory_space<vmem>>, vector<1x2x256xf32>
    %482 = vector.shape_cast %481 : vector<1x2x256xf32> to vector<2x256xf32>
    %483 = arith.mulf %480, %482 : vector<2x256xf32>
    %484 = arith.addf %474, %483 : vector<2x256xf32>
    %c34_i32_251 = arith.constant 34 : i32
    %485 = tpu.dynamic_rotate %442 by %c34_i32_251 dim 1 : vector<2x256xf32>, i32 -> vector<2x256xf32>
    %c8_252 = arith.constant 8 : index
    %c0_253 = arith.constant 0 : index
    %c0_254 = arith.constant 0 : index
    %486 = vector.load %arg6[%c8_252, %c0_253, %c0_254] : memref<49x2x256xf32, #tpu.memory_space<vmem>>, vector<1x2x256xf32>
    %487 = vector.shape_cast %486 : vector<1x2x256xf32> to vector<2x256xf32>
    %488 = arith.mulf %485, %487 : vector<2x256xf32>
    %489 = arith.addf %479, %488 : vector<2x256xf32>
    %c33_i32_255 = arith.constant 33 : i32
    %490 = tpu.dynamic_rotate %442 by %c33_i32_255 dim 1 : vector<2x256xf32>, i32 -> vector<2x256xf32>
    %c9_256 = arith.constant 9 : index
    %c0_257 = arith.constant 0 : index
    %c0_258 = arith.constant 0 : index
    %491 = vector.load %arg6[%c9_256, %c0_257, %c0_258] : memref<49x2x256xf32, #tpu.memory_space<vmem>>, vector<1x2x256xf32>
    %492 = vector.shape_cast %491 : vector<1x2x256xf32> to vector<2x256xf32>
    %493 = arith.mulf %490, %492 : vector<2x256xf32>
    %494 = arith.addf %484, %493 : vector<2x256xf32>
    %c32_i32_259 = arith.constant 32 : i32
    %495 = tpu.dynamic_rotate %442 by %c32_i32_259 dim 1 : vector<2x256xf32>, i32 -> vector<2x256xf32>
    %c10_260 = arith.constant 10 : index
    %c0_261 = arith.constant 0 : index
    %c0_262 = arith.constant 0 : index
    %496 = vector.load %arg6[%c10_260, %c0_261, %c0_262] : memref<49x2x256xf32, #tpu.memory_space<vmem>>, vector<1x2x256xf32>
    %497 = vector.shape_cast %496 : vector<1x2x256xf32> to vector<2x256xf32>
    %498 = arith.mulf %495, %497 : vector<2x256xf32>
    %499 = arith.addf %489, %498 : vector<2x256xf32>
    %c31_i32_263 = arith.constant 31 : i32
    %500 = tpu.dynamic_rotate %442 by %c31_i32_263 dim 1 : vector<2x256xf32>, i32 -> vector<2x256xf32>
    %c11_264 = arith.constant 11 : index
    %c0_265 = arith.constant 0 : index
    %c0_266 = arith.constant 0 : index
    %501 = vector.load %arg6[%c11_264, %c0_265, %c0_266] : memref<49x2x256xf32, #tpu.memory_space<vmem>>, vector<1x2x256xf32>
    %502 = vector.shape_cast %501 : vector<1x2x256xf32> to vector<2x256xf32>
    %503 = arith.mulf %500, %502 : vector<2x256xf32>
    %504 = arith.addf %494, %503 : vector<2x256xf32>
    %c30_i32_267 = arith.constant 30 : i32
    %505 = tpu.dynamic_rotate %442 by %c30_i32_267 dim 1 : vector<2x256xf32>, i32 -> vector<2x256xf32>
    %c12_268 = arith.constant 12 : index
    %c0_269 = arith.constant 0 : index
    %c0_270 = arith.constant 0 : index
    %506 = vector.load %arg6[%c12_268, %c0_269, %c0_270] : memref<49x2x256xf32, #tpu.memory_space<vmem>>, vector<1x2x256xf32>
    %507 = vector.shape_cast %506 : vector<1x2x256xf32> to vector<2x256xf32>
    %508 = arith.mulf %505, %507 : vector<2x256xf32>
    %509 = arith.addf %499, %508 : vector<2x256xf32>
    %c29_i32_271 = arith.constant 29 : i32
    %510 = tpu.dynamic_rotate %442 by %c29_i32_271 dim 1 : vector<2x256xf32>, i32 -> vector<2x256xf32>
    %c13_272 = arith.constant 13 : index
    %c0_273 = arith.constant 0 : index
    %c0_274 = arith.constant 0 : index
    %511 = vector.load %arg6[%c13_272, %c0_273, %c0_274] : memref<49x2x256xf32, #tpu.memory_space<vmem>>, vector<1x2x256xf32>
    %512 = vector.shape_cast %511 : vector<1x2x256xf32> to vector<2x256xf32>
    %513 = arith.mulf %510, %512 : vector<2x256xf32>
    %514 = arith.addf %504, %513 : vector<2x256xf32>
    %c19_i32_275 = arith.constant 19 : i32
    %515 = tpu.dynamic_rotate %442 by %c19_i32_275 dim 1 : vector<2x256xf32>, i32 -> vector<2x256xf32>
    %c14_276 = arith.constant 14 : index
    %c0_277 = arith.constant 0 : index
    %c0_278 = arith.constant 0 : index
    %516 = vector.load %arg6[%c14_276, %c0_277, %c0_278] : memref<49x2x256xf32, #tpu.memory_space<vmem>>, vector<1x2x256xf32>
    %517 = vector.shape_cast %516 : vector<1x2x256xf32> to vector<2x256xf32>
    %518 = arith.mulf %515, %517 : vector<2x256xf32>
    %519 = arith.addf %509, %518 : vector<2x256xf32>
    %c18_i32_279 = arith.constant 18 : i32
    %520 = tpu.dynamic_rotate %442 by %c18_i32_279 dim 1 : vector<2x256xf32>, i32 -> vector<2x256xf32>
    %c15_280 = arith.constant 15 : index
    %c0_281 = arith.constant 0 : index
    %c0_282 = arith.constant 0 : index
    %521 = vector.load %arg6[%c15_280, %c0_281, %c0_282] : memref<49x2x256xf32, #tpu.memory_space<vmem>>, vector<1x2x256xf32>
    %522 = vector.shape_cast %521 : vector<1x2x256xf32> to vector<2x256xf32>
    %523 = arith.mulf %520, %522 : vector<2x256xf32>
    %524 = arith.addf %514, %523 : vector<2x256xf32>
    %c17_i32_283 = arith.constant 17 : i32
    %525 = tpu.dynamic_rotate %442 by %c17_i32_283 dim 1 : vector<2x256xf32>, i32 -> vector<2x256xf32>
    %c16_284 = arith.constant 16 : index
    %c0_285 = arith.constant 0 : index
    %c0_286 = arith.constant 0 : index
    %526 = vector.load %arg6[%c16_284, %c0_285, %c0_286] : memref<49x2x256xf32, #tpu.memory_space<vmem>>, vector<1x2x256xf32>
    %527 = vector.shape_cast %526 : vector<1x2x256xf32> to vector<2x256xf32>
    %528 = arith.mulf %525, %527 : vector<2x256xf32>
    %529 = arith.addf %519, %528 : vector<2x256xf32>
    %c16_i32_287 = arith.constant 16 : i32
    %530 = tpu.dynamic_rotate %442 by %c16_i32_287 dim 1 : vector<2x256xf32>, i32 -> vector<2x256xf32>
    %c17_288 = arith.constant 17 : index
    %c0_289 = arith.constant 0 : index
    %c0_290 = arith.constant 0 : index
    %531 = vector.load %arg6[%c17_288, %c0_289, %c0_290] : memref<49x2x256xf32, #tpu.memory_space<vmem>>, vector<1x2x256xf32>
    %532 = vector.shape_cast %531 : vector<1x2x256xf32> to vector<2x256xf32>
    %533 = arith.mulf %530, %532 : vector<2x256xf32>
    %534 = arith.addf %524, %533 : vector<2x256xf32>
    %c15_i32_291 = arith.constant 15 : i32
    %535 = tpu.dynamic_rotate %442 by %c15_i32_291 dim 1 : vector<2x256xf32>, i32 -> vector<2x256xf32>
    %c18_292 = arith.constant 18 : index
    %c0_293 = arith.constant 0 : index
    %c0_294 = arith.constant 0 : index
    %536 = vector.load %arg6[%c18_292, %c0_293, %c0_294] : memref<49x2x256xf32, #tpu.memory_space<vmem>>, vector<1x2x256xf32>
    %537 = vector.shape_cast %536 : vector<1x2x256xf32> to vector<2x256xf32>
    %538 = arith.mulf %535, %537 : vector<2x256xf32>
    %539 = arith.addf %529, %538 : vector<2x256xf32>
    %c14_i32_295 = arith.constant 14 : i32
    %540 = tpu.dynamic_rotate %442 by %c14_i32_295 dim 1 : vector<2x256xf32>, i32 -> vector<2x256xf32>
    %c19_296 = arith.constant 19 : index
    %c0_297 = arith.constant 0 : index
    %c0_298 = arith.constant 0 : index
    %541 = vector.load %arg6[%c19_296, %c0_297, %c0_298] : memref<49x2x256xf32, #tpu.memory_space<vmem>>, vector<1x2x256xf32>
    %542 = vector.shape_cast %541 : vector<1x2x256xf32> to vector<2x256xf32>
    %543 = arith.mulf %540, %542 : vector<2x256xf32>
    %544 = arith.addf %534, %543 : vector<2x256xf32>
    %c13_i32_299 = arith.constant 13 : i32
    %545 = tpu.dynamic_rotate %442 by %c13_i32_299 dim 1 : vector<2x256xf32>, i32 -> vector<2x256xf32>
    %c20_300 = arith.constant 20 : index
    %c0_301 = arith.constant 0 : index
    %c0_302 = arith.constant 0 : index
    %546 = vector.load %arg6[%c20_300, %c0_301, %c0_302] : memref<49x2x256xf32, #tpu.memory_space<vmem>>, vector<1x2x256xf32>
    %547 = vector.shape_cast %546 : vector<1x2x256xf32> to vector<2x256xf32>
    %548 = arith.mulf %545, %547 : vector<2x256xf32>
    %549 = arith.addf %539, %548 : vector<2x256xf32>
    %c3_i32_303 = arith.constant 3 : i32
    %550 = tpu.dynamic_rotate %442 by %c3_i32_303 dim 1 : vector<2x256xf32>, i32 -> vector<2x256xf32>
    %c21_304 = arith.constant 21 : index
    %c0_305 = arith.constant 0 : index
    %c0_306 = arith.constant 0 : index
    %551 = vector.load %arg6[%c21_304, %c0_305, %c0_306] : memref<49x2x256xf32, #tpu.memory_space<vmem>>, vector<1x2x256xf32>
    %552 = vector.shape_cast %551 : vector<1x2x256xf32> to vector<2x256xf32>
    %553 = arith.mulf %550, %552 : vector<2x256xf32>
    %554 = arith.addf %544, %553 : vector<2x256xf32>
    %c2_i32_307 = arith.constant 2 : i32
    %555 = tpu.dynamic_rotate %442 by %c2_i32_307 dim 1 : vector<2x256xf32>, i32 -> vector<2x256xf32>
    %c22_308 = arith.constant 22 : index
    %c0_309 = arith.constant 0 : index
    %c0_310 = arith.constant 0 : index
    %556 = vector.load %arg6[%c22_308, %c0_309, %c0_310] : memref<49x2x256xf32, #tpu.memory_space<vmem>>, vector<1x2x256xf32>
    %557 = vector.shape_cast %556 : vector<1x2x256xf32> to vector<2x256xf32>
    %558 = arith.mulf %555, %557 : vector<2x256xf32>
    %559 = arith.addf %549, %558 : vector<2x256xf32>
    %c1_i32_311 = arith.constant 1 : i32
    %560 = tpu.dynamic_rotate %442 by %c1_i32_311 dim 1 : vector<2x256xf32>, i32 -> vector<2x256xf32>
    %c23_312 = arith.constant 23 : index
    %c0_313 = arith.constant 0 : index
    %c0_314 = arith.constant 0 : index
    %561 = vector.load %arg6[%c23_312, %c0_313, %c0_314] : memref<49x2x256xf32, #tpu.memory_space<vmem>>, vector<1x2x256xf32>
    %562 = vector.shape_cast %561 : vector<1x2x256xf32> to vector<2x256xf32>
    %563 = arith.mulf %560, %562 : vector<2x256xf32>
    %564 = arith.addf %554, %563 : vector<2x256xf32>
    %c24_315 = arith.constant 24 : index
    %c0_316 = arith.constant 0 : index
    %c0_317 = arith.constant 0 : index
    %565 = vector.load %arg6[%c24_315, %c0_316, %c0_317] : memref<49x2x256xf32, #tpu.memory_space<vmem>>, vector<1x2x256xf32>
    %566 = vector.shape_cast %565 : vector<1x2x256xf32> to vector<2x256xf32>
    %567 = arith.mulf %442, %566 : vector<2x256xf32>
    %568 = arith.addf %559, %567 : vector<2x256xf32>
    %c255_i32_318 = arith.constant 255 : i32
    %569 = tpu.dynamic_rotate %442 by %c255_i32_318 dim 1 : vector<2x256xf32>, i32 -> vector<2x256xf32>
    %c25_319 = arith.constant 25 : index
    %c0_320 = arith.constant 0 : index
    %c0_321 = arith.constant 0 : index
    %570 = vector.load %arg6[%c25_319, %c0_320, %c0_321] : memref<49x2x256xf32, #tpu.memory_space<vmem>>, vector<1x2x256xf32>
    %571 = vector.shape_cast %570 : vector<1x2x256xf32> to vector<2x256xf32>
    %572 = arith.mulf %569, %571 : vector<2x256xf32>
    %573 = arith.addf %564, %572 : vector<2x256xf32>
    %c254_i32_322 = arith.constant 254 : i32
    %574 = tpu.dynamic_rotate %442 by %c254_i32_322 dim 1 : vector<2x256xf32>, i32 -> vector<2x256xf32>
    %c26_323 = arith.constant 26 : index
    %c0_324 = arith.constant 0 : index
    %c0_325 = arith.constant 0 : index
    %575 = vector.load %arg6[%c26_323, %c0_324, %c0_325] : memref<49x2x256xf32, #tpu.memory_space<vmem>>, vector<1x2x256xf32>
    %576 = vector.shape_cast %575 : vector<1x2x256xf32> to vector<2x256xf32>
    %577 = arith.mulf %574, %576 : vector<2x256xf32>
    %578 = arith.addf %568, %577 : vector<2x256xf32>
    %c253_i32_326 = arith.constant 253 : i32
    %579 = tpu.dynamic_rotate %442 by %c253_i32_326 dim 1 : vector<2x256xf32>, i32 -> vector<2x256xf32>
    %c27_327 = arith.constant 27 : index
    %c0_328 = arith.constant 0 : index
    %c0_329 = arith.constant 0 : index
    %580 = vector.load %arg6[%c27_327, %c0_328, %c0_329] : memref<49x2x256xf32, #tpu.memory_space<vmem>>, vector<1x2x256xf32>
    %581 = vector.shape_cast %580 : vector<1x2x256xf32> to vector<2x256xf32>
    %582 = arith.mulf %579, %581 : vector<2x256xf32>
    %583 = arith.addf %573, %582 : vector<2x256xf32>
    %c243_i32_330 = arith.constant 243 : i32
    %584 = tpu.dynamic_rotate %442 by %c243_i32_330 dim 1 : vector<2x256xf32>, i32 -> vector<2x256xf32>
    %c28_331 = arith.constant 28 : index
    %c0_332 = arith.constant 0 : index
    %c0_333 = arith.constant 0 : index
    %585 = vector.load %arg6[%c28_331, %c0_332, %c0_333] : memref<49x2x256xf32, #tpu.memory_space<vmem>>, vector<1x2x256xf32>
    %586 = vector.shape_cast %585 : vector<1x2x256xf32> to vector<2x256xf32>
    %587 = arith.mulf %584, %586 : vector<2x256xf32>
    %588 = arith.addf %578, %587 : vector<2x256xf32>
    %c242_i32_334 = arith.constant 242 : i32
    %589 = tpu.dynamic_rotate %442 by %c242_i32_334 dim 1 : vector<2x256xf32>, i32 -> vector<2x256xf32>
    %c29_335 = arith.constant 29 : index
    %c0_336 = arith.constant 0 : index
    %c0_337 = arith.constant 0 : index
    %590 = vector.load %arg6[%c29_335, %c0_336, %c0_337] : memref<49x2x256xf32, #tpu.memory_space<vmem>>, vector<1x2x256xf32>
    %591 = vector.shape_cast %590 : vector<1x2x256xf32> to vector<2x256xf32>
    %592 = arith.mulf %589, %591 : vector<2x256xf32>
    %593 = arith.addf %583, %592 : vector<2x256xf32>
    %c241_i32_338 = arith.constant 241 : i32
    %594 = tpu.dynamic_rotate %442 by %c241_i32_338 dim 1 : vector<2x256xf32>, i32 -> vector<2x256xf32>
    %c30_339 = arith.constant 30 : index
    %c0_340 = arith.constant 0 : index
    %c0_341 = arith.constant 0 : index
    %595 = vector.load %arg6[%c30_339, %c0_340, %c0_341] : memref<49x2x256xf32, #tpu.memory_space<vmem>>, vector<1x2x256xf32>
    %596 = vector.shape_cast %595 : vector<1x2x256xf32> to vector<2x256xf32>
    %597 = arith.mulf %594, %596 : vector<2x256xf32>
    %598 = arith.addf %588, %597 : vector<2x256xf32>
    %c240_i32_342 = arith.constant 240 : i32
    %599 = tpu.dynamic_rotate %442 by %c240_i32_342 dim 1 : vector<2x256xf32>, i32 -> vector<2x256xf32>
    %c31_343 = arith.constant 31 : index
    %c0_344 = arith.constant 0 : index
    %c0_345 = arith.constant 0 : index
    %600 = vector.load %arg6[%c31_343, %c0_344, %c0_345] : memref<49x2x256xf32, #tpu.memory_space<vmem>>, vector<1x2x256xf32>
    %601 = vector.shape_cast %600 : vector<1x2x256xf32> to vector<2x256xf32>
    %602 = arith.mulf %599, %601 : vector<2x256xf32>
    %603 = arith.addf %593, %602 : vector<2x256xf32>
    %c239_i32_346 = arith.constant 239 : i32
    %604 = tpu.dynamic_rotate %442 by %c239_i32_346 dim 1 : vector<2x256xf32>, i32 -> vector<2x256xf32>
    %c32_347 = arith.constant 32 : index
    %c0_348 = arith.constant 0 : index
    %c0_349 = arith.constant 0 : index
    %605 = vector.load %arg6[%c32_347, %c0_348, %c0_349] : memref<49x2x256xf32, #tpu.memory_space<vmem>>, vector<1x2x256xf32>
    %606 = vector.shape_cast %605 : vector<1x2x256xf32> to vector<2x256xf32>
    %607 = arith.mulf %604, %606 : vector<2x256xf32>
    %608 = arith.addf %598, %607 : vector<2x256xf32>
    %c238_i32_350 = arith.constant 238 : i32
    %609 = tpu.dynamic_rotate %442 by %c238_i32_350 dim 1 : vector<2x256xf32>, i32 -> vector<2x256xf32>
    %c33_351 = arith.constant 33 : index
    %c0_352 = arith.constant 0 : index
    %c0_353 = arith.constant 0 : index
    %610 = vector.load %arg6[%c33_351, %c0_352, %c0_353] : memref<49x2x256xf32, #tpu.memory_space<vmem>>, vector<1x2x256xf32>
    %611 = vector.shape_cast %610 : vector<1x2x256xf32> to vector<2x256xf32>
    %612 = arith.mulf %609, %611 : vector<2x256xf32>
    %613 = arith.addf %603, %612 : vector<2x256xf32>
    %c237_i32_354 = arith.constant 237 : i32
    %614 = tpu.dynamic_rotate %442 by %c237_i32_354 dim 1 : vector<2x256xf32>, i32 -> vector<2x256xf32>
    %c34_355 = arith.constant 34 : index
    %c0_356 = arith.constant 0 : index
    %c0_357 = arith.constant 0 : index
    %615 = vector.load %arg6[%c34_355, %c0_356, %c0_357] : memref<49x2x256xf32, #tpu.memory_space<vmem>>, vector<1x2x256xf32>
    %616 = vector.shape_cast %615 : vector<1x2x256xf32> to vector<2x256xf32>
    %617 = arith.mulf %614, %616 : vector<2x256xf32>
    %618 = arith.addf %608, %617 : vector<2x256xf32>
    %c227_i32_358 = arith.constant 227 : i32
    %619 = tpu.dynamic_rotate %442 by %c227_i32_358 dim 1 : vector<2x256xf32>, i32 -> vector<2x256xf32>
    %c35_359 = arith.constant 35 : index
    %c0_360 = arith.constant 0 : index
    %c0_361 = arith.constant 0 : index
    %620 = vector.load %arg6[%c35_359, %c0_360, %c0_361] : memref<49x2x256xf32, #tpu.memory_space<vmem>>, vector<1x2x256xf32>
    %621 = vector.shape_cast %620 : vector<1x2x256xf32> to vector<2x256xf32>
    %622 = arith.mulf %619, %621 : vector<2x256xf32>
    %623 = arith.addf %613, %622 : vector<2x256xf32>
    %c226_i32_362 = arith.constant 226 : i32
    %624 = tpu.dynamic_rotate %442 by %c226_i32_362 dim 1 : vector<2x256xf32>, i32 -> vector<2x256xf32>
    %c36_363 = arith.constant 36 : index
    %c0_364 = arith.constant 0 : index
    %c0_365 = arith.constant 0 : index
    %625 = vector.load %arg6[%c36_363, %c0_364, %c0_365] : memref<49x2x256xf32, #tpu.memory_space<vmem>>, vector<1x2x256xf32>
    %626 = vector.shape_cast %625 : vector<1x2x256xf32> to vector<2x256xf32>
    %627 = arith.mulf %624, %626 : vector<2x256xf32>
    %628 = arith.addf %618, %627 : vector<2x256xf32>
    %c225_i32_366 = arith.constant 225 : i32
    %629 = tpu.dynamic_rotate %442 by %c225_i32_366 dim 1 : vector<2x256xf32>, i32 -> vector<2x256xf32>
    %c37_367 = arith.constant 37 : index
    %c0_368 = arith.constant 0 : index
    %c0_369 = arith.constant 0 : index
    %630 = vector.load %arg6[%c37_367, %c0_368, %c0_369] : memref<49x2x256xf32, #tpu.memory_space<vmem>>, vector<1x2x256xf32>
    %631 = vector.shape_cast %630 : vector<1x2x256xf32> to vector<2x256xf32>
    %632 = arith.mulf %629, %631 : vector<2x256xf32>
    %633 = arith.addf %623, %632 : vector<2x256xf32>
    %c224_i32_370 = arith.constant 224 : i32
    %634 = tpu.dynamic_rotate %442 by %c224_i32_370 dim 1 : vector<2x256xf32>, i32 -> vector<2x256xf32>
    %c38_371 = arith.constant 38 : index
    %c0_372 = arith.constant 0 : index
    %c0_373 = arith.constant 0 : index
    %635 = vector.load %arg6[%c38_371, %c0_372, %c0_373] : memref<49x2x256xf32, #tpu.memory_space<vmem>>, vector<1x2x256xf32>
    %636 = vector.shape_cast %635 : vector<1x2x256xf32> to vector<2x256xf32>
    %637 = arith.mulf %634, %636 : vector<2x256xf32>
    %638 = arith.addf %628, %637 : vector<2x256xf32>
    %c223_i32_374 = arith.constant 223 : i32
    %639 = tpu.dynamic_rotate %442 by %c223_i32_374 dim 1 : vector<2x256xf32>, i32 -> vector<2x256xf32>
    %c39_375 = arith.constant 39 : index
    %c0_376 = arith.constant 0 : index
    %c0_377 = arith.constant 0 : index
    %640 = vector.load %arg6[%c39_375, %c0_376, %c0_377] : memref<49x2x256xf32, #tpu.memory_space<vmem>>, vector<1x2x256xf32>
    %641 = vector.shape_cast %640 : vector<1x2x256xf32> to vector<2x256xf32>
    %642 = arith.mulf %639, %641 : vector<2x256xf32>
    %643 = arith.addf %633, %642 : vector<2x256xf32>
    %c222_i32_378 = arith.constant 222 : i32
    %644 = tpu.dynamic_rotate %442 by %c222_i32_378 dim 1 : vector<2x256xf32>, i32 -> vector<2x256xf32>
    %c40_379 = arith.constant 40 : index
    %c0_380 = arith.constant 0 : index
    %c0_381 = arith.constant 0 : index
    %645 = vector.load %arg6[%c40_379, %c0_380, %c0_381] : memref<49x2x256xf32, #tpu.memory_space<vmem>>, vector<1x2x256xf32>
    %646 = vector.shape_cast %645 : vector<1x2x256xf32> to vector<2x256xf32>
    %647 = arith.mulf %644, %646 : vector<2x256xf32>
    %648 = arith.addf %638, %647 : vector<2x256xf32>
    %c221_i32_382 = arith.constant 221 : i32
    %649 = tpu.dynamic_rotate %442 by %c221_i32_382 dim 1 : vector<2x256xf32>, i32 -> vector<2x256xf32>
    %c41_383 = arith.constant 41 : index
    %c0_384 = arith.constant 0 : index
    %c0_385 = arith.constant 0 : index
    %650 = vector.load %arg6[%c41_383, %c0_384, %c0_385] : memref<49x2x256xf32, #tpu.memory_space<vmem>>, vector<1x2x256xf32>
    %651 = vector.shape_cast %650 : vector<1x2x256xf32> to vector<2x256xf32>
    %652 = arith.mulf %649, %651 : vector<2x256xf32>
    %653 = arith.addf %643, %652 : vector<2x256xf32>
    %c211_i32_386 = arith.constant 211 : i32
    %654 = tpu.dynamic_rotate %442 by %c211_i32_386 dim 1 : vector<2x256xf32>, i32 -> vector<2x256xf32>
    %c42_387 = arith.constant 42 : index
    %c0_388 = arith.constant 0 : index
    %c0_389 = arith.constant 0 : index
    %655 = vector.load %arg6[%c42_387, %c0_388, %c0_389] : memref<49x2x256xf32, #tpu.memory_space<vmem>>, vector<1x2x256xf32>
    %656 = vector.shape_cast %655 : vector<1x2x256xf32> to vector<2x256xf32>
    %657 = arith.mulf %654, %656 : vector<2x256xf32>
    %658 = arith.addf %648, %657 : vector<2x256xf32>
    %c210_i32_390 = arith.constant 210 : i32
    %659 = tpu.dynamic_rotate %442 by %c210_i32_390 dim 1 : vector<2x256xf32>, i32 -> vector<2x256xf32>
    %c43_391 = arith.constant 43 : index
    %c0_392 = arith.constant 0 : index
    %c0_393 = arith.constant 0 : index
    %660 = vector.load %arg6[%c43_391, %c0_392, %c0_393] : memref<49x2x256xf32, #tpu.memory_space<vmem>>, vector<1x2x256xf32>
    %661 = vector.shape_cast %660 : vector<1x2x256xf32> to vector<2x256xf32>
    %662 = arith.mulf %659, %661 : vector<2x256xf32>
    %663 = arith.addf %653, %662 : vector<2x256xf32>
    %c209_i32_394 = arith.constant 209 : i32
    %664 = tpu.dynamic_rotate %442 by %c209_i32_394 dim 1 : vector<2x256xf32>, i32 -> vector<2x256xf32>
    %c44_395 = arith.constant 44 : index
    %c0_396 = arith.constant 0 : index
    %c0_397 = arith.constant 0 : index
    %665 = vector.load %arg6[%c44_395, %c0_396, %c0_397] : memref<49x2x256xf32, #tpu.memory_space<vmem>>, vector<1x2x256xf32>
    %666 = vector.shape_cast %665 : vector<1x2x256xf32> to vector<2x256xf32>
    %667 = arith.mulf %664, %666 : vector<2x256xf32>
    %668 = arith.addf %658, %667 : vector<2x256xf32>
    %c208_i32_398 = arith.constant 208 : i32
    %669 = tpu.dynamic_rotate %442 by %c208_i32_398 dim 1 : vector<2x256xf32>, i32 -> vector<2x256xf32>
    %c45_399 = arith.constant 45 : index
    %c0_400 = arith.constant 0 : index
    %c0_401 = arith.constant 0 : index
    %670 = vector.load %arg6[%c45_399, %c0_400, %c0_401] : memref<49x2x256xf32, #tpu.memory_space<vmem>>, vector<1x2x256xf32>
    %671 = vector.shape_cast %670 : vector<1x2x256xf32> to vector<2x256xf32>
    %672 = arith.mulf %669, %671 : vector<2x256xf32>
    %673 = arith.addf %663, %672 : vector<2x256xf32>
    %c207_i32_402 = arith.constant 207 : i32
    %674 = tpu.dynamic_rotate %442 by %c207_i32_402 dim 1 : vector<2x256xf32>, i32 -> vector<2x256xf32>
    %c46_403 = arith.constant 46 : index
    %c0_404 = arith.constant 0 : index
    %c0_405 = arith.constant 0 : index
    %675 = vector.load %arg6[%c46_403, %c0_404, %c0_405] : memref<49x2x256xf32, #tpu.memory_space<vmem>>, vector<1x2x256xf32>
    %676 = vector.shape_cast %675 : vector<1x2x256xf32> to vector<2x256xf32>
    %677 = arith.mulf %674, %676 : vector<2x256xf32>
    %678 = arith.addf %668, %677 : vector<2x256xf32>
    %c206_i32_406 = arith.constant 206 : i32
    %679 = tpu.dynamic_rotate %442 by %c206_i32_406 dim 1 : vector<2x256xf32>, i32 -> vector<2x256xf32>
    %c47_407 = arith.constant 47 : index
    %c0_408 = arith.constant 0 : index
    %c0_409 = arith.constant 0 : index
    %680 = vector.load %arg6[%c47_407, %c0_408, %c0_409] : memref<49x2x256xf32, #tpu.memory_space<vmem>>, vector<1x2x256xf32>
    %681 = vector.shape_cast %680 : vector<1x2x256xf32> to vector<2x256xf32>
    %682 = arith.mulf %679, %681 : vector<2x256xf32>
    %683 = arith.addf %673, %682 : vector<2x256xf32>
    %c205_i32_410 = arith.constant 205 : i32
    %684 = tpu.dynamic_rotate %442 by %c205_i32_410 dim 1 : vector<2x256xf32>, i32 -> vector<2x256xf32>
    %c48_411 = arith.constant 48 : index
    %c0_412 = arith.constant 0 : index
    %c0_413 = arith.constant 0 : index
    %685 = vector.load %arg6[%c48_411, %c0_412, %c0_413] : memref<49x2x256xf32, #tpu.memory_space<vmem>>, vector<1x2x256xf32>
    %686 = vector.shape_cast %685 : vector<1x2x256xf32> to vector<2x256xf32>
    %687 = arith.mulf %684, %686 : vector<2x256xf32>
    %688 = arith.addf %678, %687 : vector<2x256xf32>
    %689 = arith.addf %688, %683 : vector<2x256xf32>
    %cst_414 = arith.constant dense<0.000000e+00> : vector<256xf32>
    %690 = vector.multi_reduction <add>, %689, %cst_414 [0] : vector<2x256xf32> to vector<256xf32>
    %691 = vector.shape_cast %690 : vector<256xf32> to vector<1x256xf32>
    %692 = arith.negf %691 : vector<1x256xf32>
    %693 = math.exp %692 : vector<1x256xf32>
    %cst_415 = arith.constant 1.000000e+00 : f32
    %694 = vector.broadcast %cst_415 : f32 to vector<1x256xf32>
    %695 = arith.addf %694, %693 : vector<1x256xf32>
    %696 = arith.divf %694, %695 : vector<1x256xf32>
    %697 = vector.broadcast %696 : vector<1x256xf32> to vector<16x256xf32>
    %698 = arith.mulf %426, %697 : vector<16x256xf32>
    %c0_416 = arith.constant 0 : index
    %c0_417 = arith.constant 0 : index
    %c256 = arith.constant 256 : index
    %699 = vector.load %arg8[%c0_416, %c0_417, %c256] : memref<1x32x512xf32, #tpu.memory_space<vmem>>, vector<1x16x256xf32>
    %700 = vector.shape_cast %699 : vector<1x16x256xf32> to vector<16x256xf32>
    %701 = vector.shape_cast %698 : vector<16x256xf32> to vector<1x16x256xf32>
    tpu.vector_store %arg8[%c0_416, %c0_417, %c256], %701 {strides = array<i32>} : memref<1x32x512xf32, #tpu.memory_space<vmem>>, vector<1x16x256xf32>,
    %702 = vector.broadcast %696 : vector<1x256xf32> to vector<16x256xf32>
    %703 = arith.mulf %429, %702 : vector<16x256xf32>
    %c0_418 = arith.constant 0 : index
    %c16_419 = arith.constant 16 : index
    %c256_420 = arith.constant 256 : index
    %704 = vector.load %arg8[%c0_418, %c16_419, %c256_420] : memref<1x32x512xf32, #tpu.memory_space<vmem>>, vector<1x16x256xf32>
    %705 = vector.shape_cast %704 : vector<1x16x256xf32> to vector<16x256xf32>
    %706 = vector.shape_cast %703 : vector<16x256xf32> to vector<1x16x256xf32>
    tpu.vector_store %arg8[%c0_418, %c16_419, %c256_420], %706 {strides = array<i32>} : memref<1x32x512xf32, #tpu.memory_space<vmem>>, vector<1x16x256xf32>,
    return
  }
  func.func @transform_0(%arg0: i32) -> (i32, i32, i32) {
    %c0_i32 = arith.constant 0 : i32
    %c0_i32_0 = arith.constant 0 : i32
    %c0_i32_1 = arith.constant 0 : i32
    return %arg0, %c0_i32, %c0_i32_0 : i32, i32, i32
  }
  func.func @transform_1(%arg0: i32) -> (i32, i32, i32) {
    %c0_i32 = arith.constant 0 : i32
    %c0_i32_0 = arith.constant 0 : i32
    %c0_i32_1 = arith.constant 0 : i32
    %c0_i32_2 = arith.constant 0 : i32
    return %c0_i32, %c0_i32_0, %c0_i32_1 : i32, i32, i32
  }
  func.func @transform_2(%arg0: i32) -> (i32, i32) {
    %c0_i32 = arith.constant 0 : i32
    %c0_i32_0 = arith.constant 0 : i32
    %c0_i32_1 = arith.constant 0 : i32
    return %c0_i32, %c0_i32_0 : i32, i32
  }
  func.func @transform_3(%arg0: i32) -> (i32, i32) {
    %c0_i32 = arith.constant 0 : i32
    %c0_i32_0 = arith.constant 0 : i32
    %c0_i32_1 = arith.constant 0 : i32
    return %c0_i32, %c0_i32_0 : i32, i32
  }
  func.func @transform_4(%arg0: i32) -> (i32, i32, i32) {
    %c0_i32 = arith.constant 0 : i32
    %c0_i32_0 = arith.constant 0 : i32
    %c0_i32_1 = arith.constant 0 : i32
    %c0_i32_2 = arith.constant 0 : i32
    return %c0_i32, %c0_i32_0, %c0_i32_1 : i32, i32, i32
  }
  func.func @transform_5(%arg0: i32) -> (i32, i32, i32) {
    %c0_i32 = arith.constant 0 : i32
    %c0_i32_0 = arith.constant 0 : i32
    %c0_i32_1 = arith.constant 0 : i32
    %c0_i32_2 = arith.constant 0 : i32
    return %c0_i32, %c0_i32_0, %c0_i32_1 : i32, i32, i32
  }
  func.func @transform_6(%arg0: i32) -> (i32, i32) {
    %c0_i32 = arith.constant 0 : i32
    %c0_i32_0 = arith.constant 0 : i32
    %c0_i32_1 = arith.constant 0 : i32
    return %c0_i32, %c0_i32_0 : i32, i32
  }
  func.func @transform_7(%arg0: i32) -> (i32, i32, i32) {
    %c0_i32 = arith.constant 0 : i32
    %c0_i32_0 = arith.constant 0 : i32
    %c0_i32_1 = arith.constant 0 : i32
    return %arg0, %c0_i32, %c0_i32_0 : i32, i32, i32
  }
}

</mosaic_0001>

<llo_original>
// kernel: tpu_custom_call.1
$region0: #{tpu_custom_call.1}
  #allocation0 [shape = 'u32[]', space=smem, size = 0x4, offset = 0x4, fixed_abs, tag = 'smem constant byte address 0x4 - core index']
  #allocation1 [shape = 'u32[144,128]{1,0:T(1,128)}', space=vmem, size = 0x12000, scoped, tag = 'internal scratch']
  %s0 = inlined_call_operand.hbm [shape: f32[1,32,512], index: 0, kind: input, shape index: {}]
  %s1 = inlined_call_operand.hbm [shape: f32[9,16,16], index: 1, kind: input, shape index: {}]
  %s2 = inlined_call_operand.vmem [shape: f32[2,32], index: 2, kind: input, shape index: {}]
  %s3 = inlined_call_operand.vmem [shape: f32[32,2], index: 3, kind: input, shape index: {}]
  %s4 = inlined_call_operand.vmem [shape: f32[9,1,512], index: 4, kind: input, shape index: {}]
  %s5 = inlined_call_operand.hbm [shape: f32[49,2,256], index: 5, kind: input, shape index: {}]
  %s6 = inlined_call_operand.vmem [shape: f32[1,256], index: 6, kind: input, shape index: {}]
  %s7 = inlined_call_operand.hbm [shape: f32[1,32,512], index: 7, kind: output, shape index: {}]
  %s8 = sld [smem:[#allocation0]]
  $region50: #{tpu_custom_call.1} parent=0
    _
  %s10 = ssub.s32 1, %s8
  %s11 = scalar_select 0, %s10, %s8
  $region1: #{tpu_custom_call.1} parent=0
    #allocation2 [shape = 'u8[65536]{0}', space=vmem, size = 0x10000, scoped, tag = 'input window, operand 0, single buffered']
    #allocation3 [shape = 's32[1]{0}', space=sflag, size = 0x4, scoped, tag = 'scoped memory for tpu_custom_call.1']
    #allocation4 [shape = 's32[1]{0}', space=sflag, size = 0x4, scoped, tag = 'scoped memory for tpu_custom_call.1']
    #allocation5 [shape = 'u8[73728]{0}', space=vmem, size = 0x12000, scoped, tag = 'input window, operand 1, single buffered']
    #allocation6 [shape = 's32[1]{0}', space=sflag, size = 0x4, scoped, tag = 'scoped memory for tpu_custom_call.1']
    #allocation7 [shape = 'u8[100352]{0}', space=vmem, size = 0x18800, scoped, tag = 'input window, operand 5, single buffered']
    #allocation8 [shape = 'u8[65536]{0}', space=vmem, size = 0x10000, scoped, tag = 'output window, operand 0, single buffered']
    %12 = vsyncpa [#allocation3], 0
    %13 = vsyncpa [#allocation6], 0
    %14 = vsyncpa [#allocation4], 0
    // Predicated region
    $region2: #{tpu_custom_call.1} parent=1 // pred_check
      _
    $region3: #{tpu_custom_call.1} parent=1 // pred_check_branch
      %16 = sbr.rel (0) target = $region5
    $region4: #{tpu_custom_call.1} parent=1 // pred_region
      %s18 = ssub.s32 2048, 2048
      %19 = vsyncadd [#allocation3], %s18
      %s20 = sshll.u32 [#allocation2], 4
      %s21 = int_to_ptr.vmem [resolvable:$true] %s20
      %26 = dma.hbm_to_vmem [thread:$0]  %s0, 2048, %s21, [#allocation3], 512, 512, 32
    $region5: #{tpu_custom_call.1} parent=1 // pred_fallthru
      _
    // Predicated region
    $region6: #{tpu_custom_call.1} parent=1 // pred_check
      _
    $region7: #{tpu_custom_call.1} parent=1 // pred_check_branch
      %28 = sbr.rel (0) target = $region9
    $region8: #{tpu_custom_call.1} parent=1 // pred_region
      %s30 = ssub.s32 2304, 2304
      %31 = vsyncadd [#allocation6], %s30
      %s32 = sshll.u32 [#allocation5], 4
      %s33 = int_to_ptr.vmem [resolvable:$true] %s32
      %38 = dma.hbm_to_vmem [thread:$0]  %s1, 2304, %s33, [#allocation6], 128, 128, 8
    $region9: #{tpu_custom_call.1} parent=1 // pred_fallthru
      _
    // Predicated region
    $region10: #{tpu_custom_call.1} parent=1 // pred_check
      _
    $region11: #{tpu_custom_call.1} parent=1 // pred_check_branch
      %40 = sbr.rel (0) target = $region13
    $region12: #{tpu_custom_call.1} parent=1 // pred_region
      _
    $region13: #{tpu_custom_call.1} parent=1 // pred_fallthru
      _
    // Predicated region
    $region14: #{tpu_custom_call.1} parent=1 // pred_check
      _
    $region15: #{tpu_custom_call.1} parent=1 // pred_check_branch
      %42 = sbr.rel (0) target = $region17
    $region16: #{tpu_custom_call.1} parent=1 // pred_region
      _
    $region17: #{tpu_custom_call.1} parent=1 // pred_fallthru
      _
    // Predicated region
    $region18: #{tpu_custom_call.1} parent=1 // pred_check
      _
    $region19: #{tpu_custom_call.1} parent=1 // pred_check_branch
      %44 = sbr.rel (0) target = $region21
    $region20: #{tpu_custom_call.1} parent=1 // pred_region
      _
    $region21: #{tpu_custom_call.1} parent=1 // pred_fallthru
      _
    // Predicated region
    $region22: #{tpu_custom_call.1} parent=1 // pred_check
      _
    $region23: #{tpu_custom_call.1} parent=1 // pred_check_branch
      %46 = sbr.rel (0) target = $region25
    $region24: #{tpu_custom_call.1} parent=1 // pred_region
      %s48 = ssub.s32 3136, 3136
      %49 = vsyncadd [#allocation6], %s48
      %s50 = sshll.u32 [#allocation7], 4
      %s51 = int_to_ptr.vmem [resolvable:$true] %s50
      %56 = dma.hbm_to_vmem [thread:$0]  %s5, 3136, %s51, [#allocation6], 64, 64, 4
    $region25: #{tpu_custom_call.1} parent=1 // pred_fallthru
      _
    // Predicated region
    $region26: #{tpu_custom_call.1} parent=1 // pred_check
      _
    $region27: #{tpu_custom_call.1} parent=1 // pred_check_branch
      %58 = sbr.rel (0) target = $region29
    $region28: #{tpu_custom_call.1} parent=1 // pred_region
      _
    $region29: #{tpu_custom_call.1} parent=1 // pred_fallthru
      _
    // Predicated region
    $region30: #{tpu_custom_call.1} parent=1 // pred_check
      _
    $region31: #{tpu_custom_call.1} parent=1 // pred_check_branch
      %60 = sbr.rel (0) target = $region33
    $region32: #{tpu_custom_call.1} parent=1 // pred_region
      %61 = dma.done [#allocation3], 2048
    $region33: #{tpu_custom_call.1} parent=1 // pred_fallthru
      _
    // Predicated region
    $region34: #{tpu_custom_call.1} parent=1 // pred_check
      _
    $region35: #{tpu_custom_call.1} parent=1 // pred_check_branch
      %63 = sbr.rel (0) target = $region37
    $region36: #{tpu_custom_call.1} parent=1 // pred_region
      %64 = dma.done [#allocation6], 2304
    $region37: #{tpu_custom_call.1} parent=1 // pred_fallthru
      _
    // Predicated region
    $region38: #{tpu_custom_call.1} parent=1 // pred_check
      _
    $region39: #{tpu_custom_call.1} parent=1 // pred_check_branch
      %66 = sbr.rel (0) target = $region41
    $region40: #{tpu_custom_call.1} parent=1 // pred_region
      %67 = dma.done [#allocation6], 3136
    $region41: #{tpu_custom_call.1} parent=1 // pred_fallthru
      _
    %v68 = vld [vmem:[#allocation2] sm:$0xff]
    %v69 = vld [vmem:[#allocation2 + $0x8] sm:$0xff]
    %v70 = vld [vmem:[#allocation2 + $0x10] sm:$0xff]
    %v71 = vld [vmem:[#allocation2 + $0x18] sm:$0xff]
    %v72 = vld [vmem:[#allocation2 + $0x20] sm:$0xff]
    %v73 = vld [vmem:[#allocation2 + $0x28] sm:$0xff]
    %v74 = vld [vmem:[#allocation2 + $0x30] sm:$0xff]
    %v75 = vld [vmem:[#allocation2 + $0x38] sm:$0xff]
    %v76 = vld [vmem:[#allocation2 + $0x40] sm:$0xff]
    %v77 = vld [vmem:[#allocation2 + $0x48] sm:$0xff]
    %v78 = vld [vmem:[#allocation2 + $0x50] sm:$0xff]
    %v79 = vld [vmem:[#allocation2 + $0x58] sm:$0xff]
    %v80 = vld [vmem:[#allocation2 + $0x60] sm:$0xff]
    %v81 = vld [vmem:[#allocation2 + $0x68] sm:$0xff]
    %v82 = vld [vmem:[#allocation2 + $0x70] sm:$0xff]
    %v83 = vld [vmem:[#allocation2 + $0x78] sm:$0xff]
    %84 = vrot.lane.b32.xlu0 %v68, 17
    %v85 = vpop.permute.xlu0 %84
    %86 = vrot.lane.b32.xlu0 %v72, 17
    %v87 = vpop.permute.xlu0 %86
    %88 = vrot.lane.b32.xlu0 %v69, 17
    %v89 = vpop.permute.xlu0 %88
    %90 = vrot.lane.b32.xlu0 %v73, 17
    %v91 = vpop.permute.xlu0 %90
    %92 = vrot.lane.b32.xlu0 %v70, 17
    %v93 = vpop.permute.xlu0 %92
    %94 = vrot.lane.b32.xlu0 %v74, 17
    %v95 = vpop.permute.xlu0 %94
    %96 = vrot.lane.b32.xlu0 %v71, 17
    %v97 = vpop.permute.xlu0 %96
    %98 = vrot.lane.b32.xlu0 %v75, 17
    %v99 = vpop.permute.xlu0 %98
    %v100 = vlaneseq
    %v101 = vand.u32 %v100, 127
    %vm102 = vcmp.lt.s32.totalorder %v101, 17
    %v103 = vsel %vm102, %v93, %v97
    %v104 = vsel %vm102, %v95, %v99
    %v105 = vsel %vm102, %v89, %v93
    %v106 = vsel %vm102, %v91, %v95
    %v107 = vsel %vm102, %v85, %v89
    %v108 = vsel %vm102, %v87, %v91
    %v109 = vsel %vm102, %v97, %v85
    %v110 = vsel %vm102, %v99, %v87
    %v111 = vld [vmem:[%s4] sm:$0xf]
    %v113 = vlaneseq
    %v114 = vshrl.u32 %v113, 7
    %v115 = vsub.s32 0, %v114
    %v116 = vrot.slane %v111, %v115
    %v117 = vlaneseq
    %v118 = vshrl.u32 %v117, 7
    %v119 = vsub.s32 1, %v118
    %v120 = vrot.slane %v111, %v119
    %v121 = vlaneseq
    %v122 = vshrl.u32 %v121, 7
    %v123 = vsub.s32 2, %v122
    %v124 = vrot.slane %v111, %v123
    %v125 = vlaneseq
    %v126 = vshrl.u32 %v125, 7
    %v127 = vsub.s32 3, %v126
    %v128 = vrot.slane %v111, %v127
    %v133 = vmul.f32 %v109, %v116
    %v134 = vmul.f32 %v107, %v120
    %v135 = vmul.f32 %v105, %v124
    %v136 = vmul.f32 %v103, %v128
    %v137 = vmul.f32 %v110, %v116
    %v138 = vmul.f32 %v108, %v120
    %v139 = vmul.f32 %v106, %v124
    %v140 = vmul.f32 %v104, %v128
    %v141 = vld [vmem:[#allocation5] sm:$0xff]
    %v142 = vld [vmem:[#allocation5 + $0x8] sm:$0xff]
    %143 = vrot.lane.b32.xlu0 %v68, 16
    %v144 = vpop.permute.xlu0 %143
    %145 = vrot.lane.b32.xlu0 %v72, 16
    %v146 = vpop.permute.xlu0 %145
    %147 = vrot.lane.b32.xlu0 %v69, 16
    %v148 = vpop.permute.xlu0 %147
    %149 = vrot.lane.b32.xlu0 %v73, 16
    %v150 = vpop.permute.xlu0 %149
    %151 = vrot.lane.b32.xlu0 %v70, 16
    %v152 = vpop.permute.xlu0 %151
    %153 = vrot.lane.b32.xlu0 %v74, 16
    %v154 = vpop.permute.xlu0 %153
    %155 = vrot.lane.b32.xlu0 %v71, 16
    %v156 = vpop.permute.xlu0 %155
    %157 = vrot.lane.b32.xlu0 %v75, 16
    %v158 = vpop.permute.xlu0 %157
    %vm159 = vcmp.lt.s32.totalorder %v101, 16
    %v160 = vsel %vm159, %v152, %v156
    %v161 = vsel %vm159, %v154, %v158
    %v162 = vsel %vm159, %v148, %v152
    %v163 = vsel %vm159, %v150, %v154
    %v164 = vsel %vm159, %v144, %v148
    %v165 = vsel %vm159, %v146, %v150
    %v166 = vsel %vm159, %v156, %v144
    %v167 = vsel %vm159, %v158, %v146
    %s168 = scalar_lea.vmem %s4, 4
    %v169 = vld [vmem:[%s168] sm:$0xf]
    %v171 = vlaneseq
    %v172 = vshrl.u32 %v171, 7
    %v173 = vsub.s32 0, %v172
    %v174 = vrot.slane %v169, %v173
    %v175 = vlaneseq
    %v176 = vshrl.u32 %v175, 7
    %v177 = vsub.s32 1, %v176
    %v178 = vrot.slane %v169, %v177
    %v179 = vlaneseq
    %v180 = vshrl.u32 %v179, 7
    %v181 = vsub.s32 2, %v180
    %v182 = vrot.slane %v169, %v181
    %v183 = vlaneseq
    %v184 = vshrl.u32 %v183, 7
    %v185 = vsub.s32 3, %v184
    %v186 = vrot.slane %v169, %v185
    %v191 = vmul.f32 %v166, %v174
    %v192 = vmul.f32 %v164, %v178
    %v193 = vmul.f32 %v162, %v182
    %v194 = vmul.f32 %v160, %v186
    %v195 = vmul.f32 %v167, %v174
    %v196 = vmul.f32 %v165, %v178
    %v197 = vmul.f32 %v163, %v182
    %v198 = vmul.f32 %v161, %v186
    %s199 = scalar_lea.vmem [#allocation5], 16
    %v200 = vld [vmem:[%s199] sm:$0xff]
    %v201 = vld [vmem:[%s199 + $0x8] sm:$0xff]
    %202 = vrot.lane.b32.xlu0 %v68, 15
    %v203 = vpop.permute.xlu0 %202
    %204 = vrot.lane.b32.xlu0 %v72, 15
    %v205 = vpop.permute.xlu0 %204
    %206 = vrot.lane.b32.xlu0 %v69, 15
    %v207 = vpop.permute.xlu0 %206
    %208 = vrot.lane.b32.xlu0 %v73, 15
    %v209 = vpop.permute.xlu0 %208
    %210 = vrot.lane.b32.xlu0 %v70, 15
    %v211 = vpop.permute.xlu0 %210
    %212 = vrot.lane.b32.xlu0 %v74, 15
    %v213 = vpop.permute.xlu0 %212
    %214 = vrot.lane.b32.xlu0 %v71, 15
    %v215 = vpop.permute.xlu0 %214
    %216 = vrot.lane.b32.xlu0 %v75, 15
    %v217 = vpop.permute.xlu0 %216
    %vm218 = vcmp.lt.s32.totalorder %v101, 15
    %v219 = vsel %vm218, %v211, %v215
    %v220 = vsel %vm218, %v213, %v217
    %v221 = vsel %vm218, %v207, %v211
    %v222 = vsel %vm218, %v209, %v213
    %v223 = vsel %vm218, %v203, %v207
    %v224 = vsel %vm218, %v205, %v209
    %v225 = vsel %vm218, %v215, %v203
    %v226 = vsel %vm218, %v217, %v205
    %s227 = scalar_lea.vmem %s4, 8
    %v228 = vld [vmem:[%s227] sm:$0xf]
    %v230 = vlaneseq
    %v231 = vshrl.u32 %v230, 7
    %v232 = vsub.s32 0, %v231
    %v233 = vrot.slane %v228, %v232
    %v234 = vlaneseq
    %v235 = vshrl.u32 %v234, 7
    %v236 = vsub.s32 1, %v235
    %v237 = vrot.slane %v228, %v236
    %v238 = vlaneseq
    %v239 = vshrl.u32 %v238, 7
    %v240 = vsub.s32 2, %v239
    %v241 = vrot.slane %v228, %v240
    %v242 = vlaneseq
    %v243 = vshrl.u32 %v242, 7
    %v244 = vsub.s32 3, %v243
    %v245 = vrot.slane %v228, %v244
    %v250 = vmul.f32 %v225, %v233
    %v251 = vmul.f32 %v223, %v237
    %v252 = vmul.f32 %v221, %v241
    %v253 = vmul.f32 %v219, %v245
    %v254 = vmul.f32 %v226, %v233
    %v255 = vmul.f32 %v224, %v237
    %v256 = vmul.f32 %v222, %v241
    %v257 = vmul.f32 %v220, %v245
    %s258 = scalar_lea.vmem [#allocation5], 32
    %v259 = vld [vmem:[%s258] sm:$0xff]
    %v260 = vld [vmem:[%s258 + $0x8] sm:$0xff]
    %vm261 = vcmask 130048
    %v263 = vsel %vm261, %v259, 0
    %v266 = vsel %vm261, %v260, 0
    %268 = vmatprep.subr.mxu0 %v251
    %269 = vmatpush1.msra.mxu0 %v250
    %270 = vmatprep.subr.mxu0 %v255
    %271 = vmatpush1.msra.mxu0 %v254
    %272 = vmatprep.subr.mxu0 0.0
    %273 = vmatpush1.msra.mxu0 0.0
    %274 = vmatprep.subr.mxu0 0.0
    %275 = vmatpush1.msra.mxu0 0.0
    %276 = vmatprep.subr.mxu0 0.0
    %277 = vmatpush1.msra.mxu0 0.0
    %278 = vmatprep.subr.mxu0 0.0
    %279 = vmatpush1.msra.mxu0 0.0
    %280 = vmatprep.subr.mxu0 0.0
    %281 = vmatpush1.msra.mxu0 0.0
    %282 = vmatprep.subr.mxu0 0.0
    %283 = vmatpush1.msra.mxu0 0.0
    %284 = vmatprep.subr.mxu0 0.0
    %285 = vmatpush1.msra.mxu0 0.0
    %286 = vmatprep.subr.mxu0 0.0
    %287 = vmatpush1.msra.mxu0 0.0
    %288 = vmatprep.subr.mxu0 0.0
    %289 = vmatpush1.msra.mxu0 0.0
    %290 = vmatprep.subr.mxu0 0.0
    %291 = vmatpush1.msra.mxu0 0.0
    %292 = vmatprep.subr.mxu0 0.0
    %293 = vmatpush1.msra.mxu0 0.0
    %294 = vmatprep.subr.mxu0 0.0
    %295 = vmatpush1.msra.mxu0 0.0
    %296 = vmatprep.subr.mxu0 0.0
    %297 = vmatpush1.msra.mxu0 0.0
    %298 = vmatprep.subr.mxu0 0.0
    %299 = vmatpush1.msra.mxu0 0.0
    %300 = vmatprep.subr.mxu0 0.0
    %301 = vmatpush1.msra.mxu0 0.0
    %302 = vmatprep.subr.mxu0 0.0
    %303 = vmatpush1.msra.mxu0 0.0
    %304 = vmatprep.subr.mxu0 0.0
    %305 = vmatpush1.msra.mxu0 0.0
    %306 = vmatprep.subr.mxu0 0.0
    %307 = vmatpush1.msra.mxu0 0.0
    %308 = vmatprep.subr.mxu0 0.0
    %309 = vmatpush1.msra.mxu0 0.0
    %310 = vmatprep.subr.mxu0 0.0
    %311 = vmatpush1.msra.mxu0 0.0
    %312 = vmatprep.subr.mxu0 0.0
    %313 = vmatpush1.msra.mxu0 0.0
    %314 = vmatprep.subr.mxu0 0.0
    %315 = vmatpush1.msra.mxu0 0.0
    %316 = vmatprep.subr.mxu0 0.0
    %317 = vmatpush1.msra.mxu0 0.0
    %318 = vmatprep.subr.mxu0 0.0
    %319 = vmatpush1.msra.mxu0 0.0
    %320 = vmatprep.subr.mxu0 0.0
    %321 = vmatpush1.msra.mxu0 0.0
    %322 = vmatprep.subr.mxu0 0.0
    %323 = vmatpush1.msra.mxu0 0.0
    %324 = vmatprep.subr.mxu0 0.0
    %325 = vmatpush1.msra.mxu0 0.0
    %326 = vmatprep.subr.mxu0 0.0
    %327 = vmatpush1.msra.mxu0 0.0
    %328 = vmatprep.subr.mxu0 0.0
    %329 = vmatpush1.msra.mxu0 0.0
    %330 = vmatprep.subr.mxu0 0.0
    %331 = vmatpush1.msra.mxu0 0.0
    %332 = vmatprep.mubr.f32.mxu0 0.0
    %333 = vmatmul.mubr.f32.gmra.mrb[0].mxu0 %v263
    %v334 = vpop.f32.mrb[0].mxu0
    %v335 = vadd.f32 0.0, %v334
    %v336 = vpop.f32.mrb[0].mxu0
    %v337 = vadd.f32 0.0, %v336
    %338 = vmatprep.mubr.f32.mxu0 0.0
    %339 = vmatmul.mubr.f32.gmra.mrb[0].mxu0 %v266
    %v340 = vpop.f32.mrb[0].mxu0
    %v341 = vadd.f32 0.0, %v340
    %v342 = vpop.f32.mrb[0].mxu0
    %v343 = vadd.f32 0.0, %v342
    %344 = vdwg.mxu0
    %345 = vmatprep.subr.mxu0 %v253
    %346 = vmatpush1.msra.mxu0 %v252
    %347 = vmatprep.subr.mxu0 %v257
    %348 = vmatpush1.msra.mxu0 %v256
    %349 = vmatprep.subr.mxu0 0.0
    %350 = vmatpush1.msra.mxu0 0.0
    %351 = vmatprep.subr.mxu0 0.0
    %352 = vmatpush1.msra.mxu0 0.0
    %353 = vmatprep.subr.mxu0 0.0
    %354 = vmatpush1.msra.mxu0 0.0
    %355 = vmatprep.subr.mxu0 0.0
    %356 = vmatpush1.msra.mxu0 0.0
    %357 = vmatprep.subr.mxu0 0.0
    %358 = vmatpush1.msra.mxu0 0.0
    %359 = vmatprep.subr.mxu0 0.0
    %360 = vmatpush1.msra.mxu0 0.0
    %361 = vmatprep.subr.mxu0 0.0
    %362 = vmatpush1.msra.mxu0 0.0
    %363 = vmatprep.subr.mxu0 0.0
    %364 = vmatpush1.msra.mxu0 0.0
    %365 = vmatprep.subr.mxu0 0.0
    %366 = vmatpush1.msra.mxu0 0.0
    %367 = vmatprep.subr.mxu0 0.0
    %368 = vmatpush1.msra.mxu0 0.0
    %369 = vmatprep.subr.mxu0 0.0
    %370 = vmatpush1.msra.mxu0 0.0
    %371 = vmatprep.subr.mxu0 0.0
    %372 = vmatpush1.msra.mxu0 0.0
    %373 = vmatprep.subr.mxu0 0.0
    %374 = vmatpush1.msra.mxu0 0.0
    %375 = vmatprep.subr.mxu0 0.0
    %376 = vmatpush1.msra.mxu0 0.0
    %377 = vmatprep.subr.mxu0 0.0
    %378 = vmatpush1.msra.mxu0 0.0
    %379 = vmatprep.subr.mxu0 0.0
    %380 = vmatpush1.msra.mxu0 0.0
    %381 = vmatprep.subr.mxu0 0.0
    %382 = vmatpush1.msra.mxu0 0.0
    %383 = vmatprep.subr.mxu0 0.0
    %384 = vmatpush1.msra.mxu0 0.0
    %385 = vmatprep.subr.mxu0 0.0
    %386 = vmatpush1.msra.mxu0 0.0
    %387 = vmatprep.subr.mxu0 0.0
    %388 = vmatpush1.msra.mxu0 0.0
    %389 = vmatprep.subr.mxu0 0.0
    %390 = vmatpush1.msra.mxu0 0.0
    %391 = vmatprep.subr.mxu0 0.0
    %392 = vmatpush1.msra.mxu0 0.0
    %393 = vmatprep.subr.mxu0 0.0
    %394 = vmatpush1.msra.mxu0 0.0
    %395 = vmatprep.subr.mxu0 0.0
    %396 = vmatpush1.msra.mxu0 0.0
    %397 = vmatprep.subr.mxu0 0.0
    %398 = vmatpush1.msra.mxu0 0.0
    %399 = vmatprep.subr.mxu0 0.0
    %400 = vmatpush1.msra.mxu0 0.0
    %401 = vmatprep.subr.mxu0 0.0
    %402 = vmatpush1.msra.mxu0 0.0
    %403 = vmatprep.subr.mxu0 0.0
    %404 = vmatpush1.msra.mxu0 0.0
    %405 = vmatprep.subr.mxu0 0.0
    %406 = vmatpush1.msra.mxu0 0.0
    %407 = vmatprep.subr.mxu0 0.0
    %408 = vmatpush1.msra.mxu0 0.0
    %409 = vmatprep.mubr.f32.mxu0 0.0
    %410 = vmatmul.mubr.f32.gmra.mrb[0].mxu0 %v263
    %v411 = vpop.f32.mrb[0].mxu0
    %v412 = vadd.f32 0.0, %v411
    %v413 = vpop.f32.mrb[0].mxu0
    %v414 = vadd.f32 0.0, %v413
    %415 = vmatprep.mubr.f32.mxu0 0.0
    %416 = vmatmul.mubr.f32.gmra.mrb[0].mxu0 %v266
    %v417 = vpop.f32.mrb[0].mxu0
    %v418 = vadd.f32 0.0, %v417
    %v419 = vpop.f32.mrb[0].mxu0
    %v420 = vadd.f32 0.0, %v419
    %421 = vdwg.mxu0
    %v423 = vsel %vm261, %v141, 0
    %v426 = vsel %vm261, %v142, 0
    %428 = vmatprep.subr.mxu0 %v134
    %429 = vmatpush1.msra.mxu0 %v133
    %430 = vmatprep.subr.mxu0 %v138
    %431 = vmatpush1.msra.mxu0 %v137
    %432 = vmatprep.subr.mxu0 0.0
    %433 = vmatpush1.msra.mxu0 0.0
    %434 = vmatprep.subr.mxu0 0.0
    %435 = vmatpush1.msra.mxu0 0.0
    %436 = vmatprep.subr.mxu0 0.0
    %437 = vmatpush1.msra.mxu0 0.0
    %438 = vmatprep.subr.mxu0 0.0
    %439 = vmatpush1.msra.mxu0 0.0
    %440 = vmatprep.subr.mxu0 0.0
    %441 = vmatpush1.msra.mxu0 0.0
    %442 = vmatprep.subr.mxu0 0.0
    %443 = vmatpush1.msra.mxu0 0.0
    %444 = vmatprep.subr.mxu0 0.0
    %445 = vmatpush1.msra.mxu0 0.0
    %446 = vmatprep.subr.mxu0 0.0
    %447 = vmatpush1.msra.mxu0 0.0
    %448 = vmatprep.subr.mxu0 0.0
    %449 = vmatpush1.msra.mxu0 0.0
    %450 = vmatprep.subr.mxu0 0.0
    %451 = vmatpush1.msra.mxu0 0.0
    %452 = vmatprep.subr.mxu0 0.0
    %453 = vmatpush1.msra.mxu0 0.0
    %454 = vmatprep.subr.mxu0 0.0
    %455 = vmatpush1.msra.mxu0 0.0
    %456 = vmatprep.subr.mxu0 0.0
    %457 = vmatpush1.msra.mxu0 0.0
    %458 = vmatprep.subr.mxu0 0.0
    %459 = vmatpush1.msra.mxu0 0.0
    %460 = vmatprep.subr.mxu0 0.0
    %461 = vmatpush1.msra.mxu0 0.0
    %462 = vmatprep.subr.mxu0 0.0
    %463 = vmatpush1.msra.mxu0 0.0
    %464 = vmatprep.subr.mxu0 0.0
    %465 = vmatpush1.msra.mxu0 0.0
    %466 = vmatprep.subr.mxu0 0.0
    %467 = vmatpush1.msra.mxu0 0.0
    %468 = vmatprep.subr.mxu0 0.0
    %469 = vmatpush1.msra.mxu0 0.0
    %470 = vmatprep.subr.mxu0 0.0
    %471 = vmatpush1.msra.mxu0 0.0
    %472 = vmatprep.subr.mxu0 0.0
    %473 = vmatpush1.msra.mxu0 0.0
    %474 = vmatprep.subr.mxu0 0.0
    %475 = vmatpush1.msra.mxu0 0.0
    %476 = vmatprep.subr.mxu0 0.0
    %477 = vmatpush1.msra.mxu0 0.0
    %478 = vmatprep.subr.mxu0 0.0
    %479 = vmatpush1.msra.mxu0 0.0
    %480 = vmatprep.subr.mxu0 0.0
    %481 = vmatpush1.msra.mxu0 0.0
    %482 = vmatprep.subr.mxu0 0.0
    %483 = vmatpush1.msra.mxu0 0.0
    %484 = vmatprep.subr.mxu0 0.0
    %485 = vmatpush1.msra.mxu0 0.0
    %486 = vmatprep.subr.mxu0 0.0
    %487 = vmatpush1.msra.mxu0 0.0
    %488 = vmatprep.subr.mxu0 0.0
    %489 = vmatpush1.msra.mxu0 0.0
    %490 = vmatprep.subr.mxu0 0.0
    %491 = vmatpush1.msra.mxu0 0.0
    %492 = vmatprep.mubr.f32.mxu0 0.0
    %493 = vmatmul.mubr.f32.gmra.mrb[0].mxu0 %v423
    %v494 = vpop.f32.mrb[0].mxu0
    %v495 = vadd.f32 %v335, %v494
    %v496 = vpop.f32.mrb[0].mxu0
    %v497 = vadd.f32 %v337, %v496
    %498 = vmatprep.mubr.f32.mxu0 0.0
    %499 = vmatmul.mubr.f32.gmra.mrb[0].mxu0 %v426
    %v500 = vpop.f32.mrb[0].mxu0
    %v501 = vadd.f32 %v341, %v500
    %v502 = vpop.f32.mrb[0].mxu0
    %v503 = vadd.f32 %v343, %v502
    %504 = vdwg.mxu0
    %505 = vmatprep.subr.mxu0 %v136
    %506 = vmatpush1.msra.mxu0 %v135
    %507 = vmatprep.subr.mxu0 %v140
    %508 = vmatpush1.msra.mxu0 %v139
    %509 = vmatprep.subr.mxu0 0.0
    %510 = vmatpush1.msra.mxu0 0.0
    %511 = vmatprep.subr.mxu0 0.0
    %512 = vmatpush1.msra.mxu0 0.0
    %513 = vmatprep.subr.mxu0 0.0
    %514 = vmatpush1.msra.mxu0 0.0
    %515 = vmatprep.subr.mxu0 0.0
    %516 = vmatpush1.msra.mxu0 0.0
    %517 = vmatprep.subr.mxu0 0.0
    %518 = vmatpush1.msra.mxu0 0.0
    %519 = vmatprep.subr.mxu0 0.0
    %520 = vmatpush1.msra.mxu0 0.0
    %521 = vmatprep.subr.mxu0 0.0
    %522 = vmatpush1.msra.mxu0 0.0
    %523 = vmatprep.subr.mxu0 0.0
    %524 = vmatpush1.msra.mxu0 0.0
    %525 = vmatprep.subr.mxu0 0.0
    %526 = vmatpush1.msra.mxu0 0.0
    %527 = vmatprep.subr.mxu0 0.0
    %528 = vmatpush1.msra.mxu0 0.0
    %529 = vmatprep.subr.mxu0 0.0
    %530 = vmatpush1.msra.mxu0 0.0
    %531 = vmatprep.subr.mxu0 0.0
    %532 = vmatpush1.msra.mxu0 0.0
    %533 = vmatprep.subr.mxu0 0.0
    %534 = vmatpush1.msra.mxu0 0.0
    %535 = vmatprep.subr.mxu0 0.0
    %536 = vmatpush1.msra.mxu0 0.0
    %537 = vmatprep.subr.mxu0 0.0
    %538 = vmatpush1.msra.mxu0 0.0
    %539 = vmatprep.subr.mxu0 0.0
    %540 = vmatpush1.msra.mxu0 0.0
    %541 = vmatprep.subr.mxu0 0.0
    %542 = vmatpush1.msra.mxu0 0.0
    %543 = vmatprep.subr.mxu0 0.0
    %544 = vmatpush1.msra.mxu0 0.0
    %545 = vmatprep.subr.mxu0 0.0
    %546 = vmatpush1.msra.mxu0 0.0
    %547 = vmatprep.subr.mxu0 0.0
    %548 = vmatpush1.msra.mxu0 0.0
    %549 = vmatprep.subr.mxu0 0.0
    %550 = vmatpush1.msra.mxu0 0.0
    %551 = vmatprep.subr.mxu0 0.0
    %552 = vmatpush1.msra.mxu0 0.0
    %553 = vmatprep.subr.mxu0 0.0
    %554 = vmatpush1.msra.mxu0 0.0
    %555 = vmatprep.subr.mxu0 0.0
    %556 = vmatpush1.msra.mxu0 0.0
    %557 = vmatprep.subr.mxu0 0.0
    %558 = vmatpush1.msra.mxu0 0.0
    %559 = vmatprep.subr.mxu0 0.0
    %560 = vmatpush1.msra.mxu0 0.0
    %561 = vmatprep.subr.mxu0 0.0
    %562 = vmatpush1.msra.mxu0 0.0
    %563 = vmatprep.subr.mxu0 0.0
    %564 = vmatpush1.msra.mxu0 0.0
    %565 = vmatprep.subr.mxu0 0.0
    %566 = vmatpush1.msra.mxu0 0.0
    %567 = vmatprep.subr.mxu0 0.0
    %568 = vmatpush1.msra.mxu0 0.0
    %569 = vmatprep.mubr.f32.mxu0 0.0
    %570 = vmatmul.mubr.f32.gmra.mrb[0].mxu0 %v423
    %v571 = vpop.f32.mrb[0].mxu0
    %v572 = vadd.f32 %v412, %v571
    %v573 = vpop.f32.mrb[0].mxu0
    %v574 = vadd.f32 %v414, %v573
    %575 = vmatprep.mubr.f32.mxu0 0.0
    %576 = vmatmul.mubr.f32.gmra.mrb[0].mxu0 %v426
    %v577 = vpop.f32.mrb[0].mxu0
    %v578 = vadd.f32 %v418, %v577
    %v579 = vpop.f32.mrb[0].mxu0
    %v580 = vadd.f32 %v420, %v579
    %581 = vdwg.mxu0
    %582 = vrot.lane.b32.xlu0 %v68, 1
    %v583 = vpop.permute.xlu0 %582
    %584 = vrot.lane.b32.xlu0 %v72, 1
    %v585 = vpop.permute.xlu0 %584
    %586 = vrot.lane.b32.xlu0 %v69, 1
    %v587 = vpop.permute.xlu0 %586
    %588 = vrot.lane.b32.xlu0 %v73, 1
    %v589 = vpop.permute.xlu0 %588
    %590 = vrot.lane.b32.xlu0 %v70, 1
    %v591 = vpop.permute.xlu0 %590
    %592 = vrot.lane.b32.xlu0 %v74, 1
    %v593 = vpop.permute.xlu0 %592
    %594 = vrot.lane.b32.xlu0 %v71, 1
    %v595 = vpop.permute.xlu0 %594
    %596 = vrot.lane.b32.xlu0 %v75, 1
    %v597 = vpop.permute.xlu0 %596
    %vm598 = vcmp.lt.s32.totalorder %v101, 1
    %v599 = vsel %vm598, %v591, %v595
    %v600 = vsel %vm598, %v593, %v597
    %v601 = vsel %vm598, %v587, %v591
    %v602 = vsel %vm598, %v589, %v593
    %v603 = vsel %vm598, %v583, %v587
    %v604 = vsel %vm598, %v585, %v589
    %v605 = vsel %vm598, %v595, %v583
    %v606 = vsel %vm598, %v597, %v585
    %s607 = scalar_lea.vmem %s4, 12
    %v608 = vld [vmem:[%s607] sm:$0xf]
    %v610 = vlaneseq
    %v611 = vshrl.u32 %v610, 7
    %v612 = vsub.s32 0, %v611
    %v613 = vrot.slane %v608, %v612
    %v614 = vlaneseq
    %v615 = vshrl.u32 %v614, 7
    %v616 = vsub.s32 1, %v615
    %v617 = vrot.slane %v608, %v616
    %v618 = vlaneseq
    %v619 = vshrl.u32 %v618, 7
    %v620 = vsub.s32 2, %v619
    %v621 = vrot.slane %v608, %v620
    %v622 = vlaneseq
    %v623 = vshrl.u32 %v622, 7
    %v624 = vsub.s32 3, %v623
    %v625 = vrot.slane %v608, %v624
    %v630 = vmul.f32 %v605, %v613
    %v631 = vmul.f32 %v603, %v617
    %v632 = vmul.f32 %v601, %v621
    %v633 = vmul.f32 %v599, %v625
    %v634 = vmul.f32 %v606, %v613
    %v635 = vmul.f32 %v604, %v617
    %v636 = vmul.f32 %v602, %v621
    %v637 = vmul.f32 %v600, %v625
    %s638 = scalar_lea.vmem [#allocation5], 48
    %v639 = vld [vmem:[%s638] sm:$0xff]
    %v640 = vld [vmem:[%s638 + $0x8] sm:$0xff]
    %v642 = vsel %vm261, %v639, 0
    %v645 = vsel %vm261, %v640, 0
    %647 = vmatprep.subr.mxu0 %v631
    %648 = vmatpush1.msra.mxu0 %v630
    %649 = vmatprep.subr.mxu0 %v635
    %650 = vmatpush1.msra.mxu0 %v634
    %651 = vmatprep.subr.mxu0 0.0
    %652 = vmatpush1.msra.mxu0 0.0
    %653 = vmatprep.subr.mxu0 0.0
    %654 = vmatpush1.msra.mxu0 0.0
    %655 = vmatprep.subr.mxu0 0.0
    %656 = vmatpush1.msra.mxu0 0.0
    %657 = vmatprep.subr.mxu0 0.0
    %658 = vmatpush1.msra.mxu0 0.0
    %659 = vmatprep.subr.mxu0 0.0
    %660 = vmatpush1.msra.mxu0 0.0
    %661 = vmatprep.subr.mxu0 0.0
    %662 = vmatpush1.msra.mxu0 0.0
    %663 = vmatprep.subr.mxu0 0.0
    %664 = vmatpush1.msra.mxu0 0.0
    %665 = vmatprep.subr.mxu0 0.0
    %666 = vmatpush1.msra.mxu0 0.0
    %667 = vmatprep.subr.mxu0 0.0
    %668 = vmatpush1.msra.mxu0 0.0
    %669 = vmatprep.subr.mxu0 0.0
    %670 = vmatpush1.msra.mxu0 0.0
    %671 = vmatprep.subr.mxu0 0.0
    %672 = vmatpush1.msra.mxu0 0.0
    %673 = vmatprep.subr.mxu0 0.0
    %674 = vmatpush1.msra.mxu0 0.0
    %675 = vmatprep.subr.mxu0 0.0
    %676 = vmatpush1.msra.mxu0 0.0
    %677 = vmatprep.subr.mxu0 0.0
    %678 = vmatpush1.msra.mxu0 0.0
    %679 = vmatprep.subr.mxu0 0.0
    %680 = vmatpush1.msra.mxu0 0.0
    %681 = vmatprep.subr.mxu0 0.0
    %682 = vmatpush1.msra.mxu0 0.0
    %683 = vmatprep.subr.mxu0 0.0
    %684 = vmatpush1.msra.mxu0 0.0
    %685 = vmatprep.subr.mxu0 0.0
    %686 = vmatpush1.msra.mxu0 0.0
    %687 = vmatprep.subr.mxu0 0.0
    %688 = vmatpush1.msra.mxu0 0.0
    %689 = vmatprep.subr.mxu0 0.0
    %690 = vmatpush1.msra.mxu0 0.0
    %691 = vmatprep.subr.mxu0 0.0
    %692 = vmatpush1.msra.mxu0 0.0
    %693 = vmatprep.subr.mxu0 0.0
    %694 = vmatpush1.msra.mxu0 0.0
    %695 = vmatprep.subr.mxu0 0.0
    %696 = vmatpush1.msra.mxu0 0.0
    %697 = vmatprep.subr.mxu0 0.0
    %698 = vmatpush1.msra.mxu0 0.0
    %699 = vmatprep.subr.mxu0 0.0
    %700 = vmatpush1.msra.mxu0 0.0
    %701 = vmatprep.subr.mxu0 0.0
    %702 = vmatpush1.msra.mxu0 0.0
    %703 = vmatprep.subr.mxu0 0.0
    %704 = vmatpush1.msra.mxu0 0.0
    %705 = vmatprep.subr.mxu0 0.0
    %706 = vmatpush1.msra.mxu0 0.0
    %707 = vmatprep.subr.mxu0 0.0
    %708 = vmatpush1.msra.mxu0 0.0
    %709 = vmatprep.subr.mxu0 0.0
    %710 = vmatpush1.msra.mxu0 0.0
    %711 = vmatprep.mubr.f32.mxu0 0.0
    %712 = vmatmul.mubr.f32.gmra.mrb[0].mxu0 %v642
    %v713 = vpop.f32.mrb[0].mxu0
    %v714 = vadd.f32 0.0, %v713
    %v715 = vpop.f32.mrb[0].mxu0
    %v716 = vadd.f32 0.0, %v715
    %717 = vmatprep.mubr.f32.mxu0 0.0
    %718 = vmatmul.mubr.f32.gmra.mrb[0].mxu0 %v645
    %v719 = vpop.f32.mrb[0].mxu0
    %v720 = vadd.f32 0.0, %v719
    %v721 = vpop.f32.mrb[0].mxu0
    %v722 = vadd.f32 0.0, %v721
    %723 = vdwg.mxu0
    %724 = vmatprep.subr.mxu0 %v633
    %725 = vmatpush1.msra.mxu0 %v632
    %726 = vmatprep.subr.mxu0 %v637
    %727 = vmatpush1.msra.mxu0 %v636
    %728 = vmatprep.subr.mxu0 0.0
    %729 = vmatpush1.msra.mxu0 0.0
    %730 = vmatprep.subr.mxu0 0.0
    %731 = vmatpush1.msra.mxu0 0.0
    %732 = vmatprep.subr.mxu0 0.0
    %733 = vmatpush1.msra.mxu0 0.0
    %734 = vmatprep.subr.mxu0 0.0
    %735 = vmatpush1.msra.mxu0 0.0
    %736 = vmatprep.subr.mxu0 0.0
    %737 = vmatpush1.msra.mxu0 0.0
    %738 = vmatprep.subr.mxu0 0.0
    %739 = vmatpush1.msra.mxu0 0.0
    %740 = vmatprep.subr.mxu0 0.0
    %741 = vmatpush1.msra.mxu0 0.0
    %742 = vmatprep.subr.mxu0 0.0
    %743 = vmatpush1.msra.mxu0 0.0
    %744 = vmatprep.subr.mxu0 0.0
    %745 = vmatpush1.msra.mxu0 0.0
    %746 = vmatprep.subr.mxu0 0.0
    %747 = vmatpush1.msra.mxu0 0.0
    %748 = vmatprep.subr.mxu0 0.0
    %749 = vmatpush1.msra.mxu0 0.0
    %750 = vmatprep.subr.mxu0 0.0
    %751 = vmatpush1.msra.mxu0 0.0
    %752 = vmatprep.subr.mxu0 0.0
    %753 = vmatpush1.msra.mxu0 0.0
    %754 = vmatprep.subr.mxu0 0.0
    %755 = vmatpush1.msra.mxu0 0.0
    %756 = vmatprep.subr.mxu0 0.0
    %757 = vmatpush1.msra.mxu0 0.0
    %758 = vmatprep.subr.mxu0 0.0
    %759 = vmatpush1.msra.mxu0 0.0
    %760 = vmatprep.subr.mxu0 0.0
    %761 = vmatpush1.msra.mxu0 0.0
    %762 = vmatprep.subr.mxu0 0.0
    %763 = vmatpush1.msra.mxu0 0.0
    %764 = vmatprep.subr.mxu0 0.0
    %765 = vmatpush1.msra.mxu0 0.0
    %766 = vmatprep.subr.mxu0 0.0
    %767 = vmatpush1.msra.mxu0 0.0
    %768 = vmatprep.subr.mxu0 0.0
    %769 = vmatpush1.msra.mxu0 0.0
    %770 = vmatprep.subr.mxu0 0.0
    %771 = vmatpush1.msra.mxu0 0.0
    %772 = vmatprep.subr.mxu0 0.0
    %773 = vmatpush1.msra.mxu0 0.0
    %774 = vmatprep.subr.mxu0 0.0
    %775 = vmatpush1.msra.mxu0 0.0
    %776 = vmatprep.subr.mxu0 0.0
    %777 = vmatpush1.msra.mxu0 0.0
    %778 = vmatprep.subr.mxu0 0.0
    %779 = vmatpush1.msra.mxu0 0.0
    %780 = vmatprep.subr.mxu0 0.0
    %781 = vmatpush1.msra.mxu0 0.0
    %782 = vmatprep.subr.mxu0 0.0
    %783 = vmatpush1.msra.mxu0 0.0
    %784 = vmatprep.subr.mxu0 0.0
    %785 = vmatpush1.msra.mxu0 0.0
    %786 = vmatprep.subr.mxu0 0.0
    %787 = vmatpush1.msra.mxu0 0.0
    %788 = vmatprep.mubr.f32.mxu0 0.0
    %789 = vmatmul.mubr.f32.gmra.mrb[0].mxu0 %v642
    %v790 = vpop.f32.mrb[0].mxu0
    %v791 = vadd.f32 0.0, %v790
    %v792 = vpop.f32.mrb[0].mxu0
    %v793 = vadd.f32 0.0, %v792
    %794 = vmatprep.mubr.f32.mxu0 0.0
    %795 = vmatmul.mubr.f32.gmra.mrb[0].mxu0 %v645
    %v796 = vpop.f32.mrb[0].mxu0
    %v797 = vadd.f32 0.0, %v796
    %v798 = vpop.f32.mrb[0].mxu0
    %v799 = vadd.f32 0.0, %v798
    %800 = vdwg.mxu0
    %v802 = vsel %vm261, %v200, 0
    %v805 = vsel %vm261, %v201, 0
    %807 = vmatprep.subr.mxu0 %v192
    %808 = vmatpush1.msra.mxu0 %v191
    %809 = vmatprep.subr.mxu0 %v196
    %810 = vmatpush1.msra.mxu0 %v195
    %811 = vmatprep.subr.mxu0 0.0
    %812 = vmatpush1.msra.mxu0 0.0
    %813 = vmatprep.subr.mxu0 0.0
    %814 = vmatpush1.msra.mxu0 0.0
    %815 = vmatprep.subr.mxu0 0.0
    %816 = vmatpush1.msra.mxu0 0.0
    %817 = vmatprep.subr.mxu0 0.0
    %818 = vmatpush1.msra.mxu0 0.0
    %819 = vmatprep.subr.mxu0 0.0
    %820 = vmatpush1.msra.mxu0 0.0
    %821 = vmatprep.subr.mxu0 0.0
    %822 = vmatpush1.msra.mxu0 0.0
    %823 = vmatprep.subr.mxu0 0.0
    %824 = vmatpush1.msra.mxu0 0.0
    %825 = vmatprep.subr.mxu0 0.0
    %826 = vmatpush1.msra.mxu0 0.0
    %827 = vmatprep.subr.mxu0 0.0
    %828 = vmatpush1.msra.mxu0 0.0
    %829 = vmatprep.subr.mxu0 0.0
    %830 = vmatpush1.msra.mxu0 0.0
    %831 = vmatprep.subr.mxu0 0.0
    %832 = vmatpush1.msra.mxu0 0.0
    %833 = vmatprep.subr.mxu0 0.0
    %834 = vmatpush1.msra.mxu0 0.0
    %835 = vmatprep.subr.mxu0 0.0
    %836 = vmatpush1.msra.mxu0 0.0
    %837 = vmatprep.subr.mxu0 0.0
    %838 = vmatpush1.msra.mxu0 0.0
    %839 = vmatprep.subr.mxu0 0.0
    %840 = vmatpush1.msra.mxu0 0.0
    %841 = vmatprep.subr.mxu0 0.0
    %842 = vmatpush1.msra.mxu0 0.0
    %843 = vmatprep.subr.mxu0 0.0
    %844 = vmatpush1.msra.mxu0 0.0
    %845 = vmatprep.subr.mxu0 0.0
    %846 = vmatpush1.msra.mxu0 0.0
    %847 = vmatprep.subr.mxu0 0.0
    %848 = vmatpush1.msra.mxu0 0.0
    %849 = vmatprep.subr.mxu0 0.0
    %850 = vmatpush1.msra.mxu0 0.0
    %851 = vmatprep.subr.mxu0 0.0
    %852 = vmatpush1.msra.mxu0 0.0
    %853 = vmatprep.subr.mxu0 0.0
    %854 = vmatpush1.msra.mxu0 0.0
    %855 = vmatprep.subr.mxu0 0.0
    %856 = vmatpush1.msra.mxu0 0.0
    %857 = vmatprep.subr.mxu0 0.0
    %858 = vmatpush1.msra.mxu0 0.0
    %859 = vmatprep.subr.mxu0 0.0
    %860 = vmatpush1.msra.mxu0 0.0
    %861 = vmatprep.subr.mxu0 0.0
    %862 = vmatpush1.msra.mxu0 0.0
    %863 = vmatprep.subr.mxu0 0.0
    %864 = vmatpush1.msra.mxu0 0.0
    %865 = vmatprep.subr.mxu0 0.0
    %866 = vmatpush1.msra.mxu0 0.0
    %867 = vmatprep.subr.mxu0 0.0
    %868 = vmatpush1.msra.mxu0 0.0
    %869 = vmatprep.subr.mxu0 0.0
    %870 = vmatpush1.msra.mxu0 0.0
    %871 = vmatprep.mubr.f32.mxu0 0.0
    %872 = vmatmul.mubr.f32.gmra.mrb[0].mxu0 %v802
    %v873 = vpop.f32.mrb[0].mxu0
    %v874 = vadd.f32 %v714, %v873
    %v875 = vpop.f32.mrb[0].mxu0
    %v876 = vadd.f32 %v716, %v875
    %877 = vmatprep.mubr.f32.mxu0 0.0
    %878 = vmatmul.mubr.f32.gmra.mrb[0].mxu0 %v805
    %v879 = vpop.f32.mrb[0].mxu0
    %v880 = vadd.f32 %v720, %v879
    %v881 = vpop.f32.mrb[0].mxu0
    %v882 = vadd.f32 %v722, %v881
    %883 = vdwg.mxu0
    %884 = vmatprep.subr.mxu0 %v194
    %885 = vmatpush1.msra.mxu0 %v193
    %886 = vmatprep.subr.mxu0 %v198
    %887 = vmatpush1.msra.mxu0 %v197
    %888 = vmatprep.subr.mxu0 0.0
    %889 = vmatpush1.msra.mxu0 0.0
    %890 = vmatprep.subr.mxu0 0.0
    %891 = vmatpush1.msra.mxu0 0.0
    %892 = vmatprep.subr.mxu0 0.0
    %893 = vmatpush1.msra.mxu0 0.0
    %894 = vmatprep.subr.mxu0 0.0
    %895 = vmatpush1.msra.mxu0 0.0
    %896 = vmatprep.subr.mxu0 0.0
    %897 = vmatpush1.msra.mxu0 0.0
    %898 = vmatprep.subr.mxu0 0.0
    %899 = vmatpush1.msra.mxu0 0.0
    %900 = vmatprep.subr.mxu0 0.0
    %901 = vmatpush1.msra.mxu0 0.0
    %902 = vmatprep.subr.mxu0 0.0
    %903 = vmatpush1.msra.mxu0 0.0
    %904 = vmatprep.subr.mxu0 0.0
    %905 = vmatpush1.msra.mxu0 0.0
    %906 = vmatprep.subr.mxu0 0.0
    %907 = vmatpush1.msra.mxu0 0.0
    %908 = vmatprep.subr.mxu0 0.0
    %909 = vmatpush1.msra.mxu0 0.0
    %910 = vmatprep.subr.mxu0 0.0
    %911 = vmatpush1.msra.mxu0 0.0
    %912 = vmatprep.subr.mxu0 0.0
    %913 = vmatpush1.msra.mxu0 0.0
    %914 = vmatprep.subr.mxu0 0.0
    %915 = vmatpush1.msra.mxu0 0.0
    %916 = vmatprep.subr.mxu0 0.0
    %917 = vmatpush1.msra.mxu0 0.0
    %918 = vmatprep.subr.mxu0 0.0
    %919 = vmatpush1.msra.mxu0 0.0
    %920 = vmatprep.subr.mxu0 0.0
    %921 = vmatpush1.msra.mxu0 0.0
    %922 = vmatprep.subr.mxu0 0.0
    %923 = vmatpush1.msra.mxu0 0.0
    %924 = vmatprep.subr.mxu0 0.0
    %925 = vmatpush1.msra.mxu0 0.0
    %926 = vmatprep.subr.mxu0 0.0
    %927 = vmatpush1.msra.mxu0 0.0
    %928 = vmatprep.subr.mxu0 0.0
    %929 = vmatpush1.msra.mxu0 0.0
    %930 = vmatprep.subr.mxu0 0.0
    %931 = vmatpush1.msra.mxu0 0.0
    %932 = vmatprep.subr.mxu0 0.0
    %933 = vmatpush1.msra.mxu0 0.0
    %934 = vmatprep.subr.mxu0 0.0
    %935 = vmatpush1.msra.mxu0 0.0
    %936 = vmatprep.subr.mxu0 0.0
    %937 = vmatpush1.msra.mxu0 0.0
    %938 = vmatprep.subr.mxu0 0.0
    %939 = vmatpush1.msra.mxu0 0.0
    %940 = vmatprep.subr.mxu0 0.0
    %941 = vmatpush1.msra.mxu0 0.0
    %942 = vmatprep.subr.mxu0 0.0
    %943 = vmatpush1.msra.mxu0 0.0
    %944 = vmatprep.subr.mxu0 0.0
    %945 = vmatpush1.msra.mxu0 0.0
    %946 = vmatprep.subr.mxu0 0.0
    %947 = vmatpush1.msra.mxu0 0.0
    %948 = vmatprep.mubr.f32.mxu0 0.0
    %949 = vmatmul.mubr.f32.gmra.mrb[0].mxu0 %v802
    %v950 = vpop.f32.mrb[0].mxu0
    %v951 = vadd.f32 %v791, %v950
    %v952 = vpop.f32.mrb[0].mxu0
    %v953 = vadd.f32 %v793, %v952
    %954 = vmatprep.mubr.f32.mxu0 0.0
    %955 = vmatmul.mubr.f32.gmra.mrb[0].mxu0 %v805
    %v956 = vpop.f32.mrb[0].mxu0
    %v957 = vadd.f32 %v797, %v956
    %v958 = vpop.f32.mrb[0].mxu0
    %v959 = vadd.f32 %v799, %v958
    %960 = vdwg.mxu0
    %s961 = scalar_lea.vmem [#allocation5], 64
    %v962 = vld [vmem:[%s961] sm:$0xff]
    %v963 = vld [vmem:[%s961 + $0x8] sm:$0xff]
    %v965 = vsel %vm261, %v962, 0
    %v968 = vsel %vm261, %v963, 0
    %970 = vmatprep.subr.mxu0 %v69
    %971 = vmatpush1.msra.mxu0 %v68
    %972 = vmatprep.subr.mxu0 %v73
    %973 = vmatpush1.msra.mxu0 %v72
    %974 = vmatprep.subr.mxu0 0.0
    %975 = vmatpush1.msra.mxu0 0.0
    %976 = vmatprep.subr.mxu0 0.0
    %977 = vmatpush1.msra.mxu0 0.0
    %978 = vmatprep.subr.mxu0 0.0
    %979 = vmatpush1.msra.mxu0 0.0
    %980 = vmatprep.subr.mxu0 0.0
    %981 = vmatpush1.msra.mxu0 0.0
    %982 = vmatprep.subr.mxu0 0.0
    %983 = vmatpush1.msra.mxu0 0.0
    %984 = vmatprep.subr.mxu0 0.0
    %985 = vmatpush1.msra.mxu0 0.0
    %986 = vmatprep.subr.mxu0 0.0
    %987 = vmatpush1.msra.mxu0 0.0
    %988 = vmatprep.subr.mxu0 0.0
    %989 = vmatpush1.msra.mxu0 0.0
    %990 = vmatprep.subr.mxu0 0.0
    %991 = vmatpush1.msra.mxu0 0.0
    %992 = vmatprep.subr.mxu0 0.0
    %993 = vmatpush1.msra.mxu0 0.0
    %994 = vmatprep.subr.mxu0 0.0
    %995 = vmatpush1.msra.mxu0 0.0
    %996 = vmatprep.subr.mxu0 0.0
    %997 = vmatpush1.msra.mxu0 0.0
    %998 = vmatprep.subr.mxu0 0.0
    %999 = vmatpush1.msra.mxu0 0.0
    %1000 = vmatprep.subr.mxu0 0.0
    %1001 = vmatpush1.msra.mxu0 0.0
    %1002 = vmatprep.subr.mxu0 0.0
    %1003 = vmatpush1.msra.mxu0 0.0
    %1004 = vmatprep.subr.mxu0 0.0
    %1005 = vmatpush1.msra.mxu0 0.0
    %1006 = vmatprep.subr.mxu0 0.0
    %1007 = vmatpush1.msra.mxu0 0.0
    %1008 = vmatprep.subr.mxu0 0.0
    %1009 = vmatpush1.msra.mxu0 0.0
    %1010 = vmatprep.subr.mxu0 0.0
    %1011 = vmatpush1.msra.mxu0 0.0
    %1012 = vmatprep.subr.mxu0 0.0
    %1013 = vmatpush1.msra.mxu0 0.0
    %1014 = vmatprep.subr.mxu0 0.0
    %1015 = vmatpush1.msra.mxu0 0.0
    %1016 = vmatprep.subr.mxu0 0.0
    %1017 = vmatpush1.msra.mxu0 0.0
    %1018 = vmatprep.subr.mxu0 0.0
    %1019 = vmatpush1.msra.mxu0 0.0
    %1020 = vmatprep.subr.mxu0 0.0
    %1021 = vmatpush1.msra.mxu0 0.0
    %1022 = vmatprep.subr.mxu0 0.0
    %1023 = vmatpush1.msra.mxu0 0.0
    %1024 = vmatprep.subr.mxu0 0.0
    %1025 = vmatpush1.msra.mxu0 0.0
    %1026 = vmatprep.subr.mxu0 0.0
    %1027 = vmatpush1.msra.mxu0 0.0
    %1028 = vmatprep.subr.mxu0 0.0
    %1029 = vmatpush1.msra.mxu0 0.0
    %1030 = vmatprep.subr.mxu0 0.0
    %1031 = vmatpush1.msra.mxu0 0.0
    %1032 = vmatprep.subr.mxu0 0.0
    %1033 = vmatpush1.msra.mxu0 0.0
    %1034 = vmatprep.mubr.f32.mxu0 0.0
    %1035 = vmatmul.mubr.f32.gmra.mrb[0].mxu0 %v965
    %v1036 = vpop.f32.mrb[0].mxu0
    %v1037 = vadd.f32 0.0, %v1036
    %v1038 = vpop.f32.mrb[0].mxu0
    %v1039 = vadd.f32 0.0, %v1038
    %1040 = vmatprep.mubr.f32.mxu0 0.0
    %1041 = vmatmul.mubr.f32.gmra.mrb[0].mxu0 %v968
    %v1042 = vpop.f32.mrb[0].mxu0
    %v1043 = vadd.f32 0.0, %v1042
    %v1044 = vpop.f32.mrb[0].mxu0
    %v1045 = vadd.f32 0.0, %v1044
    %1046 = vdwg.mxu0
    %1047 = vmatprep.subr.mxu0 %v71
    %1048 = vmatpush1.msra.mxu0 %v70
    %1049 = vmatprep.subr.mxu0 %v75
    %1050 = vmatpush1.msra.mxu0 %v74
    %1051 = vmatprep.subr.mxu0 0.0
    %1052 = vmatpush1.msra.mxu0 0.0
    %1053 = vmatprep.subr.mxu0 0.0
    %1054 = vmatpush1.msra.mxu0 0.0
    %1055 = vmatprep.subr.mxu0 0.0
    %1056 = vmatpush1.msra.mxu0 0.0
    %1057 = vmatprep.subr.mxu0 0.0
    %1058 = vmatpush1.msra.mxu0 0.0
    %1059 = vmatprep.subr.mxu0 0.0
    %1060 = vmatpush1.msra.mxu0 0.0
    %1061 = vmatprep.subr.mxu0 0.0
    %1062 = vmatpush1.msra.mxu0 0.0
    %1063 = vmatprep.subr.mxu0 0.0
    %1064 = vmatpush1.msra.mxu0 0.0
    %1065 = vmatprep.subr.mxu0 0.0
    %1066 = vmatpush1.msra.mxu0 0.0
    %1067 = vmatprep.subr.mxu0 0.0
    %1068 = vmatpush1.msra.mxu0 0.0
    %1069 = vmatprep.subr.mxu0 0.0
    %1070 = vmatpush1.msra.mxu0 0.0
    %1071 = vmatprep.subr.mxu0 0.0
    %1072 = vmatpush1.msra.mxu0 0.0
    %1073 = vmatprep.subr.mxu0 0.0
    %1074 = vmatpush1.msra.mxu0 0.0
    %1075 = vmatprep.subr.mxu0 0.0
    %1076 = vmatpush1.msra.mxu0 0.0
    %1077 = vmatprep.subr.mxu0 0.0
    %1078 = vmatpush1.msra.mxu0 0.0
    %1079 = vmatprep.subr.mxu0 0.0
    %1080 = vmatpush1.msra.mxu0 0.0
    %1081 = vmatprep.subr.mxu0 0.0
    %1082 = vmatpush1.msra.mxu0 0.0
    %1083 = vmatprep.subr.mxu0 0.0
    %1084 = vmatpush1.msra.mxu0 0.0
    %1085 = vmatprep.subr.mxu0 0.0
    %1086 = vmatpush1.msra.mxu0 0.0
    %1087 = vmatprep.subr.mxu0 0.0
    %1088 = vmatpush1.msra.mxu0 0.0
    %1089 = vmatprep.subr.mxu0 0.0
    %1090 = vmatpush1.msra.mxu0 0.0
    %1091 = vmatprep.subr.mxu0 0.0
    %1092 = vmatpush1.msra.mxu0 0.0
    %1093 = vmatprep.subr.mxu0 0.0
    %1094 = vmatpush1.msra.mxu0 0.0
    %1095 = vmatprep.subr.mxu0 0.0
    %1096 = vmatpush1.msra.mxu0 0.0
    %1097 = vmatprep.subr.mxu0 0.0
    %1098 = vmatpush1.msra.mxu0 0.0
    %1099 = vmatprep.subr.mxu0 0.0
    %1100 = vmatpush1.msra.mxu0 0.0
    %1101 = vmatprep.subr.mxu0 0.0
    %1102 = vmatpush1.msra.mxu0 0.0
    %1103 = vmatprep.subr.mxu0 0.0
    %1104 = vmatpush1.msra.mxu0 0.0
    %1105 = vmatprep.subr.mxu0 0.0
    %1106 = vmatpush1.msra.mxu0 0.0
    %1107 = vmatprep.subr.mxu0 0.0
    %1108 = vmatpush1.msra.mxu0 0.0
    %1109 = vmatprep.subr.mxu0 0.0
    %1110 = vmatpush1.msra.mxu0 0.0
    %1111 = vmatprep.mubr.f32.mxu0 0.0
    %1112 = vmatmul.mubr.f32.gmra.mrb[0].mxu0 %v965
    %v1113 = vpop.f32.mrb[0].mxu0
    %v1114 = vadd.f32 0.0, %v1113
    %v1115 = vpop.f32.mrb[0].mxu0
    %v1116 = vadd.f32 0.0, %v1115
    %1117 = vmatprep.mubr.f32.mxu0 0.0
    %1118 = vmatmul.mubr.f32.gmra.mrb[0].mxu0 %v968
    %v1119 = vpop.f32.mrb[0].mxu0
    %v1120 = vadd.f32 0.0, %v1119
    %v1121 = vpop.f32.mrb[0].mxu0
    %v1122 = vadd.f32 0.0, %v1121
    %1123 = vdwg.mxu0
    %v1124 = vadd.f32 %v495, %v1037
    %v1125 = vadd.f32 %v497, %v1039
    %v1126 = vadd.f32 %v572, %v1114
    %v1127 = vadd.f32 %v574, %v1116
    %v1128 = vadd.f32 %v501, %v1043
    %v1129 = vadd.f32 %v503, %v1045
    %v1130 = vadd.f32 %v578, %v1120
    %v1131 = vadd.f32 %v580, %v1122
    %1132 = vrot.lane.b32.xlu0 %v68, 127
    %v1133 = vpop.permute.xlu0 %1132
    %1134 = vrot.lane.b32.xlu0 %v72, 127
    %v1135 = vpop.permute.xlu0 %1134
    %1136 = vrot.lane.b32.xlu0 %v69, 127
    %v1137 = vpop.permute.xlu0 %1136
    %1138 = vrot.lane.b32.xlu0 %v73, 127
    %v1139 = vpop.permute.xlu0 %1138
    %1140 = vrot.lane.b32.xlu0 %v70, 127
    %v1141 = vpop.permute.xlu0 %1140
    %1142 = vrot.lane.b32.xlu0 %v74, 127
    %v1143 = vpop.permute.xlu0 %1142
    %1144 = vrot.lane.b32.xlu0 %v71, 127
    %v1145 = vpop.permute.xlu0 %1144
    %1146 = vrot.lane.b32.xlu0 %v75, 127
    %v1147 = vpop.permute.xlu0 %1146
    %vm1148 = vcmp.lt.s32.totalorder %v101, 127
    %v1149 = vsel %vm1148, %v1141, %v1145
    %v1150 = vsel %vm1148, %v1143, %v1147
    %v1151 = vsel %vm1148, %v1137, %v1141
    %v1152 = vsel %vm1148, %v1139, %v1143
    %v1153 = vsel %vm1148, %v1133, %v1137
    %v1154 = vsel %vm1148, %v1135, %v1139
    %v1155 = vsel %vm1148, %v1145, %v1133
    %v1156 = vsel %vm1148, %v1147, %v1135
    %s1157 = scalar_lea.vmem %s4, 20
    %v1158 = vld [vmem:[%s1157] sm:$0xf]
    %v1160 = vlaneseq
    %v1161 = vshrl.u32 %v1160, 7
    %v1162 = vsub.s32 0, %v1161
    %v1163 = vrot.slane %v1158, %v1162
    %v1164 = vlaneseq
    %v1165 = vshrl.u32 %v1164, 7
    %v1166 = vsub.s32 1, %v1165
    %v1167 = vrot.slane %v1158, %v1166
    %v1168 = vlaneseq
    %v1169 = vshrl.u32 %v1168, 7
    %v1170 = vsub.s32 2, %v1169
    %v1171 = vrot.slane %v1158, %v1170
    %v1172 = vlaneseq
    %v1173 = vshrl.u32 %v1172, 7
    %v1174 = vsub.s32 3, %v1173
    %v1175 = vrot.slane %v1158, %v1174
    %v1180 = vmul.f32 %v1153, %v1163
    %v1181 = vmul.f32 %v1151, %v1167
    %v1182 = vmul.f32 %v1149, %v1171
    %v1183 = vmul.f32 %v1155, %v1175
    %v1184 = vmul.f32 %v1154, %v1163
    %v1185 = vmul.f32 %v1152, %v1167
    %v1186 = vmul.f32 %v1150, %v1171
    %v1187 = vmul.f32 %v1156, %v1175
    %s1188 = scalar_lea.vmem [#allocation5], 80
    %v1189 = vld [vmem:[%s1188] sm:$0xff]
    %v1190 = vld [vmem:[%s1188 + $0x8] sm:$0xff]
    %v1192 = vsel %vm261, %v1189, 0
    %v1195 = vsel %vm261, %v1190, 0
    %1197 = vmatprep.subr.mxu0 %v1181
    %1198 = vmatpush1.msra.mxu0 %v1180
    %1199 = vmatprep.subr.mxu0 %v1185
    %1200 = vmatpush1.msra.mxu0 %v1184
    %1201 = vmatprep.subr.mxu0 0.0
    %1202 = vmatpush1.msra.mxu0 0.0
    %1203 = vmatprep.subr.mxu0 0.0
    %1204 = vmatpush1.msra.mxu0 0.0
    %1205 = vmatprep.subr.mxu0 0.0
    %1206 = vmatpush1.msra.mxu0 0.0
    %1207 = vmatprep.subr.mxu0 0.0
    %1208 = vmatpush1.msra.mxu0 0.0
    %1209 = vmatprep.subr.mxu0 0.0
    %1210 = vmatpush1.msra.mxu0 0.0
    %1211 = vmatprep.subr.mxu0 0.0
    %1212 = vmatpush1.msra.mxu0 0.0
    %1213 = vmatprep.subr.mxu0 0.0
    %1214 = vmatpush1.msra.mxu0 0.0
    %1215 = vmatprep.subr.mxu0 0.0
    %1216 = vmatpush1.msra.mxu0 0.0
    %1217 = vmatprep.subr.mxu0 0.0
    %1218 = vmatpush1.msra.mxu0 0.0
    %1219 = vmatprep.subr.mxu0 0.0
    %1220 = vmatpush1.msra.mxu0 0.0
    %1221 = vmatprep.subr.mxu0 0.0
    %1222 = vmatpush1.msra.mxu0 0.0
    %1223 = vmatprep.subr.mxu0 0.0
    %1224 = vmatpush1.msra.mxu0 0.0
    %1225 = vmatprep.subr.mxu0 0.0
    %1226 = vmatpush1.msra.mxu0 0.0
    %1227 = vmatprep.subr.mxu0 0.0
    %1228 = vmatpush1.msra.mxu0 0.0
    %1229 = vmatprep.subr.mxu0 0.0
    %1230 = vmatpush1.msra.mxu0 0.0
    %1231 = vmatprep.subr.mxu0 0.0
    %1232 = vmatpush1.msra.mxu0 0.0
    %1233 = vmatprep.subr.mxu0 0.0
    %1234 = vmatpush1.msra.mxu0 0.0
    %1235 = vmatprep.subr.mxu0 0.0
    %1236 = vmatpush1.msra.mxu0 0.0
    %1237 = vmatprep.subr.mxu0 0.0
    %1238 = vmatpush1.msra.mxu0 0.0
    %1239 = vmatprep.subr.mxu0 0.0
    %1240 = vmatpush1.msra.mxu0 0.0
    %1241 = vmatprep.subr.mxu0 0.0
    %1242 = vmatpush1.msra.mxu0 0.0
    %1243 = vmatprep.subr.mxu0 0.0
    %1244 = vmatpush1.msra.mxu0 0.0
    %1245 = vmatprep.subr.mxu0 0.0
    %1246 = vmatpush1.msra.mxu0 0.0
    %1247 = vmatprep.subr.mxu0 0.0
    %1248 = vmatpush1.msra.mxu0 0.0
    %1249 = vmatprep.subr.mxu0 0.0
    %1250 = vmatpush1.msra.mxu0 0.0
    %1251 = vmatprep.subr.mxu0 0.0
    %1252 = vmatpush1.msra.mxu0 0.0
    %1253 = vmatprep.subr.mxu0 0.0
    %1254 = vmatpush1.msra.mxu0 0.0
    %1255 = vmatprep.subr.mxu0 0.0
    %1256 = vmatpush1.msra.mxu0 0.0
    %1257 = vmatprep.subr.mxu0 0.0
    %1258 = vmatpush1.msra.mxu0 0.0
    %1259 = vmatprep.subr.mxu0 0.0
    %1260 = vmatpush1.msra.mxu0 0.0
    %1261 = vmatprep.mubr.f32.mxu0 0.0
    %1262 = vmatmul.mubr.f32.gmra.mrb[0].mxu0 %v1192
    %v1263 = vpop.f32.mrb[0].mxu0
    %v1264 = vadd.f32 0.0, %v1263
    %v1265 = vpop.f32.mrb[0].mxu0
    %v1266 = vadd.f32 0.0, %v1265
    %1267 = vmatprep.mubr.f32.mxu0 0.0
    %1268 = vmatmul.mubr.f32.gmra.mrb[0].mxu0 %v1195
    %v1269 = vpop.f32.mrb[0].mxu0
    %v1270 = vadd.f32 0.0, %v1269
    %v1271 = vpop.f32.mrb[0].mxu0
    %v1272 = vadd.f32 0.0, %v1271
    %1273 = vdwg.mxu0
    %1274 = vmatprep.subr.mxu0 %v1183
    %1275 = vmatpush1.msra.mxu0 %v1182
    %1276 = vmatprep.subr.mxu0 %v1187
    %1277 = vmatpush1.msra.mxu0 %v1186
    %1278 = vmatprep.subr.mxu0 0.0
    %1279 = vmatpush1.msra.mxu0 0.0
    %1280 = vmatprep.subr.mxu0 0.0
    %1281 = vmatpush1.msra.mxu0 0.0
    %1282 = vmatprep.subr.mxu0 0.0
    %1283 = vmatpush1.msra.mxu0 0.0
    %1284 = vmatprep.subr.mxu0 0.0
    %1285 = vmatpush1.msra.mxu0 0.0
    %1286 = vmatprep.subr.mxu0 0.0
    %1287 = vmatpush1.msra.mxu0 0.0
    %1288 = vmatprep.subr.mxu0 0.0
    %1289 = vmatpush1.msra.mxu0 0.0
    %1290 = vmatprep.subr.mxu0 0.0
    %1291 = vmatpush1.msra.mxu0 0.0
    %1292 = vmatprep.subr.mxu0 0.0
    %1293 = vmatpush1.msra.mxu0 0.0
    %1294 = vmatprep.subr.mxu0 0.0
    %1295 = vmatpush1.msra.mxu0 0.0
    %1296 = vmatprep.subr.mxu0 0.0
    %1297 = vmatpush1.msra.mxu0 0.0
    %1298 = vmatprep.subr.mxu0 0.0
    %1299 = vmatpush1.msra.mxu0 0.0
    %1300 = vmatprep.subr.mxu0 0.0
    %1301 = vmatpush1.msra.mxu0 0.0
    %1302 = vmatprep.subr.mxu0 0.0
    %1303 = vmatpush1.msra.mxu0 0.0
    %1304 = vmatprep.subr.mxu0 0.0
    %1305 = vmatpush1.msra.mxu0 0.0
    %1306 = vmatprep.subr.mxu0 0.0
    %1307 = vmatpush1.msra.mxu0 0.0
    %1308 = vmatprep.subr.mxu0 0.0
    %1309 = vmatpush1.msra.mxu0 0.0
    %1310 = vmatprep.subr.mxu0 0.0
    %1311 = vmatpush1.msra.mxu0 0.0
    %1312 = vmatprep.subr.mxu0 0.0
    %1313 = vmatpush1.msra.mxu0 0.0
    %1314 = vmatprep.subr.mxu0 0.0
    %1315 = vmatpush1.msra.mxu0 0.0
    %1316 = vmatprep.subr.mxu0 0.0
    %1317 = vmatpush1.msra.mxu0 0.0
    %1318 = vmatprep.subr.mxu0 0.0
    %1319 = vmatpush1.msra.mxu0 0.0
    %1320 = vmatprep.subr.mxu0 0.0
    %1321 = vmatpush1.msra.mxu0 0.0
    %1322 = vmatprep.subr.mxu0 0.0
    %1323 = vmatpush1.msra.mxu0 0.0
    %1324 = vmatprep.subr.mxu0 0.0
    %1325 = vmatpush1.msra.mxu0 0.0
    %1326 = vmatprep.subr.mxu0 0.0
    %1327 = vmatpush1.msra.mxu0 0.0
    %1328 = vmatprep.subr.mxu0 0.0
    %1329 = vmatpush1.msra.mxu0 0.0
    %1330 = vmatprep.subr.mxu0 0.0
    %1331 = vmatpush1.msra.mxu0 0.0
    %1332 = vmatprep.subr.mxu0 0.0
    %1333 = vmatpush1.msra.mxu0 0.0
    %1334 = vmatprep.subr.mxu0 0.0
    %1335 = vmatpush1.msra.mxu0 0.0
    %1336 = vmatprep.subr.mxu0 0.0
    %1337 = vmatpush1.msra.mxu0 0.0
    %1338 = vmatprep.mubr.f32.mxu0 0.0
    %1339 = vmatmul.mubr.f32.gmra.mrb[0].mxu0 %v1192
    %v1340 = vpop.f32.mrb[0].mxu0
    %v1341 = vadd.f32 0.0, %v1340
    %v1342 = vpop.f32.mrb[0].mxu0
    %v1343 = vadd.f32 0.0, %v1342
    %1344 = vmatprep.mubr.f32.mxu0 0.0
    %1345 = vmatmul.mubr.f32.gmra.mrb[0].mxu0 %v1195
    %v1346 = vpop.f32.mrb[0].mxu0
    %v1347 = vadd.f32 0.0, %v1346
    %v1348 = vpop.f32.mrb[0].mxu0
    %v1349 = vadd.f32 0.0, %v1348
    %1350 = vdwg.mxu0
    %v1351 = vadd.f32 %v874, %v1264
    %v1352 = vadd.f32 %v876, %v1266
    %v1353 = vadd.f32 %v951, %v1341
    %v1354 = vadd.f32 %v953, %v1343
    %v1355 = vadd.f32 %v880, %v1270
    %v1356 = vadd.f32 %v882, %v1272
    %v1357 = vadd.f32 %v957, %v1347
    %v1358 = vadd.f32 %v959, %v1349
    %1359 = vrot.lane.b32.xlu0 %v68, 113
    %v1360 = vpop.permute.xlu0 %1359
    %1361 = vrot.lane.b32.xlu0 %v72, 113
    %v1362 = vpop.permute.xlu0 %1361
    %1363 = vrot.lane.b32.xlu0 %v69, 113
    %v1364 = vpop.permute.xlu0 %1363
    %1365 = vrot.lane.b32.xlu0 %v73, 113
    %v1366 = vpop.permute.xlu0 %1365
    %1367 = vrot.lane.b32.xlu0 %v70, 113
    %v1368 = vpop.permute.xlu0 %1367
    %1369 = vrot.lane.b32.xlu0 %v74, 113
    %v1370 = vpop.permute.xlu0 %1369
    %1371 = vrot.lane.b32.xlu0 %v71, 113
    %v1372 = vpop.permute.xlu0 %1371
    %1373 = vrot.lane.b32.xlu0 %v75, 113
    %v1374 = vpop.permute.xlu0 %1373
    %vm1375 = vcmp.lt.s32.totalorder %v101, 113
    %v1376 = vsel %vm1375, %v1368, %v1372
    %v1377 = vsel %vm1375, %v1370, %v1374
    %v1378 = vsel %vm1375, %v1364, %v1368
    %v1379 = vsel %vm1375, %v1366, %v1370
    %v1380 = vsel %vm1375, %v1360, %v1364
    %v1381 = vsel %vm1375, %v1362, %v1366
    %v1382 = vsel %vm1375, %v1372, %v1360
    %v1383 = vsel %vm1375, %v1374, %v1362
    %s1384 = scalar_lea.vmem %s4, 24
    %v1385 = vld [vmem:[%s1384] sm:$0xf]
    %v1387 = vlaneseq
    %v1388 = vshrl.u32 %v1387, 7
    %v1389 = vsub.s32 0, %v1388
    %v1390 = vrot.slane %v1385, %v1389
    %v1391 = vlaneseq
    %v1392 = vshrl.u32 %v1391, 7
    %v1393 = vsub.s32 1, %v1392
    %v1394 = vrot.slane %v1385, %v1393
    %v1395 = vlaneseq
    %v1396 = vshrl.u32 %v1395, 7
    %v1397 = vsub.s32 2, %v1396
    %v1398 = vrot.slane %v1385, %v1397
    %v1399 = vlaneseq
    %v1400 = vshrl.u32 %v1399, 7
    %v1401 = vsub.s32 3, %v1400
    %v1402 = vrot.slane %v1385, %v1401
    %v1407 = vmul.f32 %v1380, %v1390
    %v1408 = vmul.f32 %v1378, %v1394
    %v1409 = vmul.f32 %v1376, %v1398
    %v1410 = vmul.f32 %v1382, %v1402
    %v1411 = vmul.f32 %v1381, %v1390
    %v1412 = vmul.f32 %v1379, %v1394
    %v1413 = vmul.f32 %v1377, %v1398
    %v1414 = vmul.f32 %v1383, %v1402
    %s1415 = scalar_lea.vmem [#allocation5], 96
    %v1416 = vld [vmem:[%s1415] sm:$0xff]
    %v1417 = vld [vmem:[%s1415 + $0x8] sm:$0xff]
    %v1419 = vsel %vm261, %v1416, 0
    %v1422 = vsel %vm261, %v1417, 0
    %1424 = vmatprep.subr.mxu0 %v1408
    %1425 = vmatpush1.msra.mxu0 %v1407
    %1426 = vmatprep.subr.mxu0 %v1412
    %1427 = vmatpush1.msra.mxu0 %v1411
    %1428 = vmatprep.subr.mxu0 0.0
    %1429 = vmatpush1.msra.mxu0 0.0
    %1430 = vmatprep.subr.mxu0 0.0
    %1431 = vmatpush1.msra.mxu0 0.0
    %1432 = vmatprep.subr.mxu0 0.0
    %1433 = vmatpush1.msra.mxu0 0.0
    %1434 = vmatprep.subr.mxu0 0.0
    %1435 = vmatpush1.msra.mxu0 0.0
    %1436 = vmatprep.subr.mxu0 0.0
    %1437 = vmatpush1.msra.mxu0 0.0
    %1438 = vmatprep.subr.mxu0 0.0
    %1439 = vmatpush1.msra.mxu0 0.0
    %1440 = vmatprep.subr.mxu0 0.0
    %1441 = vmatpush1.msra.mxu0 0.0
    %1442 = vmatprep.subr.mxu0 0.0
    %1443 = vmatpush1.msra.mxu0 0.0
    %1444 = vmatprep.subr.mxu0 0.0
    %1445 = vmatpush1.msra.mxu0 0.0
    %1446 = vmatprep.subr.mxu0 0.0
    %1447 = vmatpush1.msra.mxu0 0.0
    %1448 = vmatprep.subr.mxu0 0.0
    %1449 = vmatpush1.msra.mxu0 0.0
    %1450 = vmatprep.subr.mxu0 0.0
    %1451 = vmatpush1.msra.mxu0 0.0
    %1452 = vmatprep.subr.mxu0 0.0
    %1453 = vmatpush1.msra.mxu0 0.0
    %1454 = vmatprep.subr.mxu0 0.0
    %1455 = vmatpush1.msra.mxu0 0.0
    %1456 = vmatprep.subr.mxu0 0.0
    %1457 = vmatpush1.msra.mxu0 0.0
    %1458 = vmatprep.subr.mxu0 0.0
    %1459 = vmatpush1.msra.mxu0 0.0
    %1460 = vmatprep.subr.mxu0 0.0
    %1461 = vmatpush1.msra.mxu0 0.0
    %1462 = vmatprep.subr.mxu0 0.0
    %1463 = vmatpush1.msra.mxu0 0.0
    %1464 = vmatprep.subr.mxu0 0.0
    %1465 = vmatpush1.msra.mxu0 0.0
    %1466 = vmatprep.subr.mxu0 0.0
    %1467 = vmatpush1.msra.mxu0 0.0
    %1468 = vmatprep.subr.mxu0 0.0
    %1469 = vmatpush1.msra.mxu0 0.0
    %1470 = vmatprep.subr.mxu0 0.0
    %1471 = vmatpush1.msra.mxu0 0.0
    %1472 = vmatprep.subr.mxu0 0.0
    %1473 = vmatpush1.msra.mxu0 0.0
    %1474 = vmatprep.subr.mxu0 0.0
    %1475 = vmatpush1.msra.mxu0 0.0
    %1476 = vmatprep.subr.mxu0 0.0
    %1477 = vmatpush1.msra.mxu0 0.0
    %1478 = vmatprep.subr.mxu0 0.0
    %1479 = vmatpush1.msra.mxu0 0.0
    %1480 = vmatprep.subr.mxu0 0.0
    %1481 = vmatpush1.msra.mxu0 0.0
    %1482 = vmatprep.subr.mxu0 0.0
    %1483 = vmatpush1.msra.mxu0 0.0
    %1484 = vmatprep.subr.mxu0 0.0
    %1485 = vmatpush1.msra.mxu0 0.0
    %1486 = vmatprep.subr.mxu0 0.0
    %1487 = vmatpush1.msra.mxu0 0.0
    %1488 = vmatprep.mubr.f32.mxu0 0.0
    %1489 = vmatmul.mubr.f32.gmra.mrb[0].mxu0 %v1419
    %v1490 = vpop.f32.mrb[0].mxu0
    %v1491 = vadd.f32 0.0, %v1490
    %v1492 = vpop.f32.mrb[0].mxu0
    %v1493 = vadd.f32 0.0, %v1492
    %1494 = vmatprep.mubr.f32.mxu0 0.0
    %1495 = vmatmul.mubr.f32.gmra.mrb[0].mxu0 %v1422
    %v1496 = vpop.f32.mrb[0].mxu0
    %v1497 = vadd.f32 0.0, %v1496
    %v1498 = vpop.f32.mrb[0].mxu0
    %v1499 = vadd.f32 0.0, %v1498
    %1500 = vdwg.mxu0
    %1501 = vmatprep.subr.mxu0 %v1410
    %1502 = vmatpush1.msra.mxu0 %v1409
    %1503 = vmatprep.subr.mxu0 %v1414
    %1504 = vmatpush1.msra.mxu0 %v1413
    %1505 = vmatprep.subr.mxu0 0.0
    %1506 = vmatpush1.msra.mxu0 0.0
    %1507 = vmatprep.subr.mxu0 0.0
    %1508 = vmatpush1.msra.mxu0 0.0
    %1509 = vmatprep.subr.mxu0 0.0
    %1510 = vmatpush1.msra.mxu0 0.0
    %1511 = vmatprep.subr.mxu0 0.0
    %1512 = vmatpush1.msra.mxu0 0.0
    %1513 = vmatprep.subr.mxu0 0.0
    %1514 = vmatpush1.msra.mxu0 0.0
    %1515 = vmatprep.subr.mxu0 0.0
    %1516 = vmatpush1.msra.mxu0 0.0
    %1517 = vmatprep.subr.mxu0 0.0
    %1518 = vmatpush1.msra.mxu0 0.0
    %1519 = vmatprep.subr.mxu0 0.0
    %1520 = vmatpush1.msra.mxu0 0.0
    %1521 = vmatprep.subr.mxu0 0.0
    %1522 = vmatpush1.msra.mxu0 0.0
    %1523 = vmatprep.subr.mxu0 0.0
    %1524 = vmatpush1.msra.mxu0 0.0
    %1525 = vmatprep.subr.mxu0 0.0
    %1526 = vmatpush1.msra.mxu0 0.0
    %1527 = vmatprep.subr.mxu0 0.0
    %1528 = vmatpush1.msra.mxu0 0.0
    %1529 = vmatprep.subr.mxu0 0.0
    %1530 = vmatpush1.msra.mxu0 0.0
    %1531 = vmatprep.subr.mxu0 0.0
    %1532 = vmatpush1.msra.mxu0 0.0
    %1533 = vmatprep.subr.mxu0 0.0
    %1534 = vmatpush1.msra.mxu0 0.0
    %1535 = vmatprep.subr.mxu0 0.0
    %1536 = vmatpush1.msra.mxu0 0.0
    %1537 = vmatprep.subr.mxu0 0.0
    %1538 = vmatpush1.msra.mxu0 0.0
    %1539 = vmatprep.subr.mxu0 0.0
    %1540 = vmatpush1.msra.mxu0 0.0
    %1541 = vmatprep.subr.mxu0 0.0
    %1542 = vmatpush1.msra.mxu0 0.0
    %1543 = vmatprep.subr.mxu0 0.0
    %1544 = vmatpush1.msra.mxu0 0.0
    %1545 = vmatprep.subr.mxu0 0.0
    %1546 = vmatpush1.msra.mxu0 0.0
    %1547 = vmatprep.subr.mxu0 0.0
    %1548 = vmatpush1.msra.mxu0 0.0
    %1549 = vmatprep.subr.mxu0 0.0
    %1550 = vmatpush1.msra.mxu0 0.0
    %1551 = vmatprep.subr.mxu0 0.0
    %1552 = vmatpush1.msra.mxu0 0.0
    %1553 = vmatprep.subr.mxu0 0.0
    %1554 = vmatpush1.msra.mxu0 0.0
    %1555 = vmatprep.subr.mxu0 0.0
    %1556 = vmatpush1.msra.mxu0 0.0
    %1557 = vmatprep.subr.mxu0 0.0
    %1558 = vmatpush1.msra.mxu0 0.0
    %1559 = vmatprep.subr.mxu0 0.0
    %1560 = vmatpush1.msra.mxu0 0.0
    %1561 = vmatprep.subr.mxu0 0.0
    %1562 = vmatpush1.msra.mxu0 0.0
    %1563 = vmatprep.subr.mxu0 0.0
    %1564 = vmatpush1.msra.mxu0 0.0
    %1565 = vmatprep.mubr.f32.mxu0 0.0
    %1566 = vmatmul.mubr.f32.gmra.mrb[0].mxu0 %v1419
    %v1567 = vpop.f32.mrb[0].mxu0
    %v1568 = vadd.f32 0.0, %v1567
    %v1569 = vpop.f32.mrb[0].mxu0
    %v1570 = vadd.f32 0.0, %v1569
    %1571 = vmatprep.mubr.f32.mxu0 0.0
    %1572 = vmatmul.mubr.f32.gmra.mrb[0].mxu0 %v1422
    %v1573 = vpop.f32.mrb[0].mxu0
    %v1574 = vadd.f32 0.0, %v1573
    %v1575 = vpop.f32.mrb[0].mxu0
    %v1576 = vadd.f32 0.0, %v1575
    %1577 = vdwg.mxu0
    %v1578 = vadd.f32 %v1124, %v1491
    %v1579 = vadd.f32 %v1125, %v1493
    %v1580 = vadd.f32 %v1126, %v1568
    %v1581 = vadd.f32 %v1127, %v1570
    %v1582 = vadd.f32 %v1128, %v1497
    %v1583 = vadd.f32 %v1129, %v1499
    %v1584 = vadd.f32 %v1130, %v1574
    %v1585 = vadd.f32 %v1131, %v1576
    %1586 = vrot.lane.b32.xlu0 %v68, 112
    %v1587 = vpop.permute.xlu0 %1586
    %1588 = vrot.lane.b32.xlu0 %v72, 112
    %v1589 = vpop.permute.xlu0 %1588
    %1590 = vrot.lane.b32.xlu0 %v69, 112
    %v1591 = vpop.permute.xlu0 %1590
    %1592 = vrot.lane.b32.xlu0 %v73, 112
    %v1593 = vpop.permute.xlu0 %1592
    %1594 = vrot.lane.b32.xlu0 %v70, 112
    %v1595 = vpop.permute.xlu0 %1594
    %1596 = vrot.lane.b32.xlu0 %v74, 112
    %v1597 = vpop.permute.xlu0 %1596
    %1598 = vrot.lane.b32.xlu0 %v71, 112
    %v1599 = vpop.permute.xlu0 %1598
    %1600 = vrot.lane.b32.xlu0 %v75, 112
    %v1601 = vpop.permute.xlu0 %1600
    %vm1602 = vcmp.lt.s32.totalorder %v101, 112
    %v1603 = vsel %vm1602, %v1595, %v1599
    %v1604 = vsel %vm1602, %v1597, %v1601
    %v1605 = vsel %vm1602, %v1591, %v1595
    %v1606 = vsel %vm1602, %v1593, %v1597
    %v1607 = vsel %vm1602, %v1587, %v1591
    %v1608 = vsel %vm1602, %v1589, %v1593
    %v1609 = vsel %vm1602, %v1599, %v1587
    %v1610 = vsel %vm1602, %v1601, %v1589
    %s1611 = scalar_lea.vmem %s4, 28
    %v1612 = vld [vmem:[%s1611] sm:$0xf]
    %v1614 = vlaneseq
    %v1615 = vshrl.u32 %v1614, 7
    %v1616 = vsub.s32 0, %v1615
    %v1617 = vrot.slane %v1612, %v1616
    %v1618 = vlaneseq
    %v1619 = vshrl.u32 %v1618, 7
    %v1620 = vsub.s32 1, %v1619
    %v1621 = vrot.slane %v1612, %v1620
    %v1622 = vlaneseq
    %v1623 = vshrl.u32 %v1622, 7
    %v1624 = vsub.s32 2, %v1623
    %v1625 = vrot.slane %v1612, %v1624
    %v1626 = vlaneseq
    %v1627 = vshrl.u32 %v1626, 7
    %v1628 = vsub.s32 3, %v1627
    %v1629 = vrot.slane %v1612, %v1628
    %v1634 = vmul.f32 %v1607, %v1617
    %v1635 = vmul.f32 %v1605, %v1621
    %v1636 = vmul.f32 %v1603, %v1625
    %v1637 = vmul.f32 %v1609, %v1629
    %v1638 = vmul.f32 %v1608, %v1617
    %v1639 = vmul.f32 %v1606, %v1621
    %v1640 = vmul.f32 %v1604, %v1625
    %v1641 = vmul.f32 %v1610, %v1629
    %s1642 = scalar_lea.vmem [#allocation5], 112
    %v1643 = vld [vmem:[%s1642] sm:$0xff]
    %v1644 = vld [vmem:[%s1642 + $0x8] sm:$0xff]
    %v1646 = vsel %vm261, %v1643, 0
    %v1649 = vsel %vm261, %v1644, 0
    %1651 = vmatprep.subr.mxu0 %v1635
    %1652 = vmatpush1.msra.mxu0 %v1634
    %1653 = vmatprep.subr.mxu0 %v1639
    %1654 = vmatpush1.msra.mxu0 %v1638
    %1655 = vmatprep.subr.mxu0 0.0
    %1656 = vmatpush1.msra.mxu0 0.0
    %1657 = vmatprep.subr.mxu0 0.0
    %1658 = vmatpush1.msra.mxu0 0.0
    %1659 = vmatprep.subr.mxu0 0.0
    %1660 = vmatpush1.msra.mxu0 0.0
    %1661 = vmatprep.subr.mxu0 0.0
    %1662 = vmatpush1.msra.mxu0 0.0
    %1663 = vmatprep.subr.mxu0 0.0
    %1664 = vmatpush1.msra.mxu0 0.0
    %1665 = vmatprep.subr.mxu0 0.0
    %1666 = vmatpush1.msra.mxu0 0.0
    %1667 = vmatprep.subr.mxu0 0.0
    %1668 = vmatpush1.msra.mxu0 0.0
    %1669 = vmatprep.subr.mxu0 0.0
    %1670 = vmatpush1.msra.mxu0 0.0
    %1671 = vmatprep.subr.mxu0 0.0
    %1672 = vmatpush1.msra.mxu0 0.0
    %1673 = vmatprep.subr.mxu0 0.0
    %1674 = vmatpush1.msra.mxu0 0.0
    %1675 = vmatprep.subr.mxu0 0.0
    %1676 = vmatpush1.msra.mxu0 0.0
    %1677 = vmatprep.subr.mxu0 0.0
    %1678 = vmatpush1.msra.mxu0 0.0
    %1679 = vmatprep.subr.mxu0 0.0
    %1680 = vmatpush1.msra.mxu0 0.0
    %1681 = vmatprep.subr.mxu0 0.0
    %1682 = vmatpush1.msra.mxu0 0.0
    %1683 = vmatprep.subr.mxu0 0.0
    %1684 = vmatpush1.msra.mxu0 0.0
    %1685 = vmatprep.subr.mxu0 0.0
    %1686 = vmatpush1.msra.mxu0 0.0
    %1687 = vmatprep.subr.mxu0 0.0
    %1688 = vmatpush1.msra.mxu0 0.0
    %1689 = vmatprep.subr.mxu0 0.0
    %1690 = vmatpush1.msra.mxu0 0.0
    %1691 = vmatprep.subr.mxu0 0.0
    %1692 = vmatpush1.msra.mxu0 0.0
    %1693 = vmatprep.subr.mxu0 0.0
    %1694 = vmatpush1.msra.mxu0 0.0
    %1695 = vmatprep.subr.mxu0 0.0
    %1696 = vmatpush1.msra.mxu0 0.0
    %1697 = vmatprep.subr.mxu0 0.0
    %1698 = vmatpush1.msra.mxu0 0.0
    %1699 = vmatprep.subr.mxu0 0.0
    %1700 = vmatpush1.msra.mxu0 0.0
    %1701 = vmatprep.subr.mxu0 0.0
    %1702 = vmatpush1.msra.mxu0 0.0
    %1703 = vmatprep.subr.mxu0 0.0
    %1704 = vmatpush1.msra.mxu0 0.0
    %1705 = vmatprep.subr.mxu0 0.0
    %1706 = vmatpush1.msra.mxu0 0.0
    %1707 = vmatprep.subr.mxu0 0.0
    %1708 = vmatpush1.msra.mxu0 0.0
    %1709 = vmatprep.subr.mxu0 0.0
    %1710 = vmatpush1.msra.mxu0 0.0
    %1711 = vmatprep.subr.mxu0 0.0
    %1712 = vmatpush1.msra.mxu0 0.0
    %1713 = vmatprep.subr.mxu0 0.0
    %1714 = vmatpush1.msra.mxu0 0.0
    %1715 = vmatprep.mubr.f32.mxu0 0.0
    %1716 = vmatmul.mubr.f32.gmra.mrb[0].mxu0 %v1646
    %v1717 = vpop.f32.mrb[0].mxu0
    %v1718 = vadd.f32 0.0, %v1717
    %v1719 = vpop.f32.mrb[0].mxu0
    %v1720 = vadd.f32 0.0, %v1719
    %1721 = vmatprep.mubr.f32.mxu0 0.0
    %1722 = vmatmul.mubr.f32.gmra.mrb[0].mxu0 %v1649
    %v1723 = vpop.f32.mrb[0].mxu0
    %v1724 = vadd.f32 0.0, %v1723
    %v1725 = vpop.f32.mrb[0].mxu0
    %v1726 = vadd.f32 0.0, %v1725
    %1727 = vdwg.mxu0
    %1728 = vmatprep.subr.mxu0 %v1637
    %1729 = vmatpush1.msra.mxu0 %v1636
    %1730 = vmatprep.subr.mxu0 %v1641
    %1731 = vmatpush1.msra.mxu0 %v1640
    %1732 = vmatprep.subr.mxu0 0.0
    %1733 = vmatpush1.msra.mxu0 0.0
    %1734 = vmatprep.subr.mxu0 0.0
    %1735 = vmatpush1.msra.mxu0 0.0
    %1736 = vmatprep.subr.mxu0 0.0
    %1737 = vmatpush1.msra.mxu0 0.0
    %1738 = vmatprep.subr.mxu0 0.0
    %1739 = vmatpush1.msra.mxu0 0.0
    %1740 = vmatprep.subr.mxu0 0.0
    %1741 = vmatpush1.msra.mxu0 0.0
    %1742 = vmatprep.subr.mxu0 0.0
    %1743 = vmatpush1.msra.mxu0 0.0
    %1744 = vmatprep.subr.mxu0 0.0
    %1745 = vmatpush1.msra.mxu0 0.0
    %1746 = vmatprep.subr.mxu0 0.0
    %1747 = vmatpush1.msra.mxu0 0.0
    %1748 = vmatprep.subr.mxu0 0.0
    %1749 = vmatpush1.msra.mxu0 0.0
    %1750 = vmatprep.subr.mxu0 0.0
    %1751 = vmatpush1.msra.mxu0 0.0
    %1752 = vmatprep.subr.mxu0 0.0
    %1753 = vmatpush1.msra.mxu0 0.0
    %1754 = vmatprep.subr.mxu0 0.0
    %1755 = vmatpush1.msra.mxu0 0.0
    %1756 = vmatprep.subr.mxu0 0.0
    %1757 = vmatpush1.msra.mxu0 0.0
    %1758 = vmatprep.subr.mxu0 0.0
    %1759 = vmatpush1.msra.mxu0 0.0
    %1760 = vmatprep.subr.mxu0 0.0
    %1761 = vmatpush1.msra.mxu0 0.0
    %1762 = vmatprep.subr.mxu0 0.0
    %1763 = vmatpush1.msra.mxu0 0.0
    %1764 = vmatprep.subr.mxu0 0.0
    %1765 = vmatpush1.msra.mxu0 0.0
    %1766 = vmatprep.subr.mxu0 0.0
    %1767 = vmatpush1.msra.mxu0 0.0
    %1768 = vmatprep.subr.mxu0 0.0
    %1769 = vmatpush1.msra.mxu0 0.0
    %1770 = vmatprep.subr.mxu0 0.0
    %1771 = vmatpush1.msra.mxu0 0.0
    %1772 = vmatprep.subr.mxu0 0.0
    %1773 = vmatpush1.msra.mxu0 0.0
    %1774 = vmatprep.subr.mxu0 0.0
    %1775 = vmatpush1.msra.mxu0 0.0
    %1776 = vmatprep.subr.mxu0 0.0
    %1777 = vmatpush1.msra.mxu0 0.0
    %1778 = vmatprep.subr.mxu0 0.0
    %1779 = vmatpush1.msra.mxu0 0.0
    %1780 = vmatprep.subr.mxu0 0.0
    %1781 = vmatpush1.msra.mxu0 0.0
    %1782 = vmatprep.subr.mxu0 0.0
    %1783 = vmatpush1.msra.mxu0 0.0
    %1784 = vmatprep.subr.mxu0 0.0
    %1785 = vmatpush1.msra.mxu0 0.0
    %1786 = vmatprep.subr.mxu0 0.0
    %1787 = vmatpush1.msra.mxu0 0.0
    %1788 = vmatprep.subr.mxu0 0.0
    %1789 = vmatpush1.msra.mxu0 0.0
    %1790 = vmatprep.subr.mxu0 0.0
    %1791 = vmatpush1.msra.mxu0 0.0
    %1792 = vmatprep.mubr.f32.mxu0 0.0
    %1793 = vmatmul.mubr.f32.gmra.mrb[0].mxu0 %v1646
    %v1794 = vpop.f32.mrb[0].mxu0
    %v1795 = vadd.f32 0.0, %v1794
    %v1796 = vpop.f32.mrb[0].mxu0
    %v1797 = vadd.f32 0.0, %v1796
    %1798 = vmatprep.mubr.f32.mxu0 0.0
    %1799 = vmatmul.mubr.f32.gmra.mrb[0].mxu0 %v1649
    %v1800 = vpop.f32.mrb[0].mxu0
    %v1801 = vadd.f32 0.0, %v1800
    %v1802 = vpop.f32.mrb[0].mxu0
    %v1803 = vadd.f32 0.0, %v1802
    %1804 = vdwg.mxu0
    %v1805 = vadd.f32 %v1351, %v1718
    %v1806 = vadd.f32 %v1352, %v1720
    %v1807 = vadd.f32 %v1353, %v1795
    %v1808 = vadd.f32 %v1354, %v1797
    %v1809 = vadd.f32 %v1355, %v1724
    %v1810 = vadd.f32 %v1356, %v1726
    %v1811 = vadd.f32 %v1357, %v1801
    %v1812 = vadd.f32 %v1358, %v1803
    %1813 = vrot.lane.b32.xlu0 %v68, 111
    %v1814 = vpop.permute.xlu0 %1813
    %1815 = vrot.lane.b32.xlu0 %v72, 111
    %v1816 = vpop.permute.xlu0 %1815
    %1817 = vrot.lane.b32.xlu0 %v69, 111
    %v1818 = vpop.permute.xlu0 %1817
    %1819 = vrot.lane.b32.xlu0 %v73, 111
    %v1820 = vpop.permute.xlu0 %1819
    %1821 = vrot.lane.b32.xlu0 %v70, 111
    %v1822 = vpop.permute.xlu0 %1821
    %1823 = vrot.lane.b32.xlu0 %v74, 111
    %v1824 = vpop.permute.xlu0 %1823
    %1825 = vrot.lane.b32.xlu0 %v71, 111
    %v1826 = vpop.permute.xlu0 %1825
    %1827 = vrot.lane.b32.xlu0 %v75, 111
    %v1828 = vpop.permute.xlu0 %1827
    %vm1829 = vcmp.lt.s32.totalorder %v101, 111
    %v1830 = vsel %vm1829, %v1822, %v1826
    %v1831 = vsel %vm1829, %v1824, %v1828
    %v1832 = vsel %vm1829, %v1818, %v1822
    %v1833 = vsel %vm1829, %v1820, %v1824
    %v1834 = vsel %vm1829, %v1814, %v1818
    %v1835 = vsel %vm1829, %v1816, %v1820
    %v1836 = vsel %vm1829, %v1826, %v1814
    %v1837 = vsel %vm1829, %v1828, %v1816
    %s1838 = scalar_lea.vmem %s4, 32
    %v1839 = vld [vmem:[%s1838] sm:$0xf]
    %v1841 = vlaneseq
    %v1842 = vshrl.u32 %v1841, 7
    %v1843 = vsub.s32 0, %v1842
    %v1844 = vrot.slane %v1839, %v1843
    %v1845 = vlaneseq
    %v1846 = vshrl.u32 %v1845, 7
    %v1847 = vsub.s32 1, %v1846
    %v1848 = vrot.slane %v1839, %v1847
    %v1849 = vlaneseq
    %v1850 = vshrl.u32 %v1849, 7
    %v1851 = vsub.s32 2, %v1850
    %v1852 = vrot.slane %v1839, %v1851
    %v1853 = vlaneseq
    %v1854 = vshrl.u32 %v1853, 7
    %v1855 = vsub.s32 3, %v1854
    %v1856 = vrot.slane %v1839, %v1855
    %v1861 = vmul.f32 %v1834, %v1844
    %v1862 = vmul.f32 %v1832, %v1848
    %v1863 = vmul.f32 %v1830, %v1852
    %v1864 = vmul.f32 %v1836, %v1856
    %v1865 = vmul.f32 %v1835, %v1844
    %v1866 = vmul.f32 %v1833, %v1848
    %v1867 = vmul.f32 %v1831, %v1852
    %v1868 = vmul.f32 %v1837, %v1856
    %s1869 = scalar_lea.vmem [#allocation5], 128
    %v1870 = vld [vmem:[%s1869] sm:$0xff]
    %v1871 = vld [vmem:[%s1869 + $0x8] sm:$0xff]
    %v1873 = vsel %vm261, %v1870, 0
    %v1876 = vsel %vm261, %v1871, 0
    %1878 = vmatprep.subr.mxu0 %v1862
    %1879 = vmatpush1.msra.mxu0 %v1861
    %1880 = vmatprep.subr.mxu0 %v1866
    %1881 = vmatpush1.msra.mxu0 %v1865
    %1882 = vmatprep.subr.mxu0 0.0
    %1883 = vmatpush1.msra.mxu0 0.0
    %1884 = vmatprep.subr.mxu0 0.0
    %1885 = vmatpush1.msra.mxu0 0.0
    %1886 = vmatprep.subr.mxu0 0.0
    %1887 = vmatpush1.msra.mxu0 0.0
    %1888 = vmatprep.subr.mxu0 0.0
    %1889 = vmatpush1.msra.mxu0 0.0
    %1890 = vmatprep.subr.mxu0 0.0
    %1891 = vmatpush1.msra.mxu0 0.0
    %1892 = vmatprep.subr.mxu0 0.0
    %1893 = vmatpush1.msra.mxu0 0.0
    %1894 = vmatprep.subr.mxu0 0.0
    %1895 = vmatpush1.msra.mxu0 0.0
    %1896 = vmatprep.subr.mxu0 0.0
    %1897 = vmatpush1.msra.mxu0 0.0
    %1898 = vmatprep.subr.mxu0 0.0
    %1899 = vmatpush1.msra.mxu0 0.0
    %1900 = vmatprep.subr.mxu0 0.0
    %1901 = vmatpush1.msra.mxu0 0.0
    %1902 = vmatprep.subr.mxu0 0.0
    %1903 = vmatpush1.msra.mxu0 0.0
    %1904 = vmatprep.subr.mxu0 0.0
    %1905 = vmatpush1.msra.mxu0 0.0
    %1906 = vmatprep.subr.mxu0 0.0
    %1907 = vmatpush1.msra.mxu0 0.0
    %1908 = vmatprep.subr.mxu0 0.0
    %1909 = vmatpush1.msra.mxu0 0.0
    %1910 = vmatprep.subr.mxu0 0.0
    %1911 = vmatpush1.msra.mxu0 0.0
    %1912 = vmatprep.subr.mxu0 0.0
    %1913 = vmatpush1.msra.mxu0 0.0
    %1914 = vmatprep.subr.mxu0 0.0
    %1915 = vmatpush1.msra.mxu0 0.0
    %1916 = vmatprep.subr.mxu0 0.0
    %1917 = vmatpush1.msra.mxu0 0.0
    %1918 = vmatprep.subr.mxu0 0.0
    %1919 = vmatpush1.msra.mxu0 0.0
    %1920 = vmatprep.subr.mxu0 0.0
    %1921 = vmatpush1.msra.mxu0 0.0
    %1922 = vmatprep.subr.mxu0 0.0
    %1923 = vmatpush1.msra.mxu0 0.0
    %1924 = vmatprep.subr.mxu0 0.0
    %1925 = vmatpush1.msra.mxu0 0.0
    %1926 = vmatprep.subr.mxu0 0.0
    %1927 = vmatpush1.msra.mxu0 0.0
    %1928 = vmatprep.subr.mxu0 0.0
    %1929 = vmatpush1.msra.mxu0 0.0
    %1930 = vmatprep.subr.mxu0 0.0
    %1931 = vmatpush1.msra.mxu0 0.0
    %1932 = vmatprep.subr.mxu0 0.0
    %1933 = vmatpush1.msra.mxu0 0.0
    %1934 = vmatprep.subr.mxu0 0.0
    %1935 = vmatpush1.msra.mxu0 0.0
    %1936 = vmatprep.subr.mxu0 0.0
    %1937 = vmatpush1.msra.mxu0 0.0
    %1938 = vmatprep.subr.mxu0 0.0
    %1939 = vmatpush1.msra.mxu0 0.0
    %1940 = vmatprep.subr.mxu0 0.0
    %1941 = vmatpush1.msra.mxu0 0.0
    %1942 = vmatprep.mubr.f32.mxu0 0.0
    %1943 = vmatmul.mubr.f32.gmra.mrb[0].mxu0 %v1873
    %v1944 = vpop.f32.mrb[0].mxu0
    %v1945 = vadd.f32 0.0, %v1944
    %v1946 = vpop.f32.mrb[0].mxu0
    %v1947 = vadd.f32 0.0, %v1946
    %1948 = vmatprep.mubr.f32.mxu0 0.0
    %1949 = vmatmul.mubr.f32.gmra.mrb[0].mxu0 %v1876
    %v1950 = vpop.f32.mrb[0].mxu0
    %v1951 = vadd.f32 0.0, %v1950
    %v1952 = vpop.f32.mrb[0].mxu0
    %v1953 = vadd.f32 0.0, %v1952
    %1954 = vdwg.mxu0
    %1955 = vmatprep.subr.mxu0 %v1864
    %1956 = vmatpush1.msra.mxu0 %v1863
    %1957 = vmatprep.subr.mxu0 %v1868
    %1958 = vmatpush1.msra.mxu0 %v1867
    %1959 = vmatprep.subr.mxu0 0.0
    %1960 = vmatpush1.msra.mxu0 0.0
    %1961 = vmatprep.subr.mxu0 0.0
    %1962 = vmatpush1.msra.mxu0 0.0
    %1963 = vmatprep.subr.mxu0 0.0
    %1964 = vmatpush1.msra.mxu0 0.0
    %1965 = vmatprep.subr.mxu0 0.0
    %1966 = vmatpush1.msra.mxu0 0.0
    %1967 = vmatprep.subr.mxu0 0.0
    %1968 = vmatpush1.msra.mxu0 0.0
    %1969 = vmatprep.subr.mxu0 0.0
    %1970 = vmatpush1.msra.mxu0 0.0
    %1971 = vmatprep.subr.mxu0 0.0
    %1972 = vmatpush1.msra.mxu0 0.0
    %1973 = vmatprep.subr.mxu0 0.0
    %1974 = vmatpush1.msra.mxu0 0.0
    %1975 = vmatprep.subr.mxu0 0.0
    %1976 = vmatpush1.msra.mxu0 0.0
    %1977 = vmatprep.subr.mxu0 0.0
    %1978 = vmatpush1.msra.mxu0 0.0
    %1979 = vmatprep.subr.mxu0 0.0
    %1980 = vmatpush1.msra.mxu0 0.0
    %1981 = vmatprep.subr.mxu0 0.0
    %1982 = vmatpush1.msra.mxu0 0.0
    %1983 = vmatprep.subr.mxu0 0.0
    %1984 = vmatpush1.msra.mxu0 0.0
    %1985 = vmatprep.subr.mxu0 0.0
    %1986 = vmatpush1.msra.mxu0 0.0
    %1987 = vmatprep.subr.mxu0 0.0
    %1988 = vmatpush1.msra.mxu0 0.0
    %1989 = vmatprep.subr.mxu0 0.0
    %1990 = vmatpush1.msra.mxu0 0.0
    %1991 = vmatprep.subr.mxu0 0.0
    %1992 = vmatpush1.msra.mxu0 0.0
    %1993 = vmatprep.subr.mxu0 0.0
    %1994 = vmatpush1.msra.mxu0 0.0
    %1995 = vmatprep.subr.mxu0 0.0
    %1996 = vmatpush1.msra.mxu0 0.0
    %1997 = vmatprep.subr.mxu0 0.0
    %1998 = vmatpush1.msra.mxu0 0.0
    %1999 = vmatprep.subr.mxu0 0.0
    %2000 = vmatpush1.msra.mxu0 0.0
    %2001 = vmatprep.subr.mxu0 0.0
    %2002 = vmatpush1.msra.mxu0 0.0
    %2003 = vmatprep.subr.mxu0 0.0
    %2004 = vmatpush1.msra.mxu0 0.0
    %2005 = vmatprep.subr.mxu0 0.0
    %2006 = vmatpush1.msra.mxu0 0.0
    %2007 = vmatprep.subr.mxu0 0.0
    %2008 = vmatpush1.msra.mxu0 0.0
    %2009 = vmatprep.subr.mxu0 0.0
    %2010 = vmatpush1.msra.mxu0 0.0
    %2011 = vmatprep.subr.mxu0 0.0
    %2012 = vmatpush1.msra.mxu0 0.0
    %2013 = vmatprep.subr.mxu0 0.0
    %2014 = vmatpush1.msra.mxu0 0.0
    %2015 = vmatprep.subr.mxu0 0.0
    %2016 = vmatpush1.msra.mxu0 0.0
    %2017 = vmatprep.subr.mxu0 0.0
    %2018 = vmatpush1.msra.mxu0 0.0
    %2019 = vmatprep.mubr.f32.mxu0 0.0
    %2020 = vmatmul.mubr.f32.gmra.mrb[0].mxu0 %v1873
    %v2021 = vpop.f32.mrb[0].mxu0
    %v2022 = vadd.f32 0.0, %v2021
    %v2023 = vpop.f32.mrb[0].mxu0
    %v2024 = vadd.f32 0.0, %v2023
    %2025 = vmatprep.mubr.f32.mxu0 0.0
    %2026 = vmatmul.mubr.f32.gmra.mrb[0].mxu0 %v1876
    %v2027 = vpop.f32.mrb[0].mxu0
    %v2028 = vadd.f32 0.0, %v2027
    %v2029 = vpop.f32.mrb[0].mxu0
    %v2030 = vadd.f32 0.0, %v2029
    %2031 = vdwg.mxu0
    %v2032 = vadd.f32 %v1578, %v1945
    %v2033 = vadd.f32 %v1579, %v1947
    %v2034 = vadd.f32 %v1580, %v2022
    %v2035 = vadd.f32 %v1581, %v2024
    %v2036 = vadd.f32 %v1582, %v1951
    %v2037 = vadd.f32 %v1583, %v1953
    %v2038 = vadd.f32 %v1584, %v2028
    %v2039 = vadd.f32 %v1585, %v2030
    %v2040 = vadd.f32 %v2032, %v1805
    %v2041 = vadd.f32 %v2033, %v1806
    %v2042 = vadd.f32 %v2034, %v1807
    %v2043 = vadd.f32 %v2035, %v1808
    %v2044 = vadd.f32 %v2036, %v1809
    %v2045 = vadd.f32 %v2037, %v1810
    %v2046 = vadd.f32 %v2038, %v1811
    %v2047 = vadd.f32 %v2039, %v1812
    %v2048 = vld [vmem:[%s2] sm:$0x3]
    %v2049 = vld [vmem:[%s3] sm:$0xff]
    %v2050 = vld [vmem:[%s3 + $0x8] sm:$0xff]
    %v2051 = vld [vmem:[%s3 + $0x10] sm:$0xff]
    %v2052 = vld [vmem:[%s3 + $0x18] sm:$0xff]
    %v2053 = vadd.f32 %v2040, %v2041
    %2054 = vadd.xlane.f32.xlu0 %v2053
    %v2055 = vpop.xlane.xlu0 %2054
    %v2056 = vadd.f32 %v2044, %v2045
    %2057 = vadd.xlane.f32.xlu0 %v2056
    %v2058 = vpop.xlane.xlu0 %2057
    %v2059 = vadd.f32 %v76, %v77
    %2060 = vadd.xlane.f32.xlu0 %v2059
    %v2061 = vpop.xlane.xlu0 %2060
    %v2062 = vadd.f32 %v80, %v81
    %2063 = vadd.xlane.f32.xlu0 %v2062
    %v2064 = vpop.xlane.xlu0 %2063
    %v2065 = vmul.f32 %v2055, 0.00390625
    %v2066 = vmul.f32 %v2058, 0.00390625
    %v2067 = vmul.f32 %v2061, 0.00390625
    %v2068 = vmul.f32 %v2064, 0.00390625
    %v2069 = vmax.f32 %v2040, %v2041
    %2070 = vmax.xlane.f32.xlu0 %v2069
    %v2071 = vpop.xlane.xlu0 %2070
    %v2072 = vmax.f32 %v2044, %v2045
    %2073 = vmax.xlane.f32.xlu0 %v2072
    %v2074 = vpop.xlane.xlu0 %2073
    %v2075 = vmax.f32 %v76, %v77
    %2076 = vmax.xlane.f32.xlu0 %v2075
    %v2077 = vpop.xlane.xlu0 %2076
    %v2078 = vmax.f32 %v80, %v81
    %2079 = vmax.xlane.f32.xlu0 %v2078
    %v2080 = vpop.xlane.xlu0 %2079
    %vm2081 = vcmask 261120
    %v2083 = vsel %vm2081, %v2048, 0
    %2085 = vmatprep.subr.mxu0 0.0
    %2086 = vmatpush1.msra.mxu0 %v2065
    %2087 = vmatprep.subr.mxu0 0.0
    %2088 = vmatpush1.msra.mxu0 %v2066
    %2089 = vmatprep.subr.mxu0 0.0
    %2090 = vmatpush1.msra.mxu0 %v2067
    %2091 = vmatprep.subr.mxu0 0.0
    %2092 = vmatpush1.msra.mxu0 %v2068
    %2093 = vmatprep.subr.mxu0 0.0
    %2094 = vmatpush1.msra.mxu0 0.0
    %2095 = vmatprep.subr.mxu0 0.0
    %2096 = vmatpush1.msra.mxu0 0.0
    %2097 = vmatprep.subr.mxu0 0.0
    %2098 = vmatpush1.msra.mxu0 0.0
    %2099 = vmatprep.subr.mxu0 0.0
    %2100 = vmatpush1.msra.mxu0 0.0
    %2101 = vmatprep.subr.mxu0 0.0
    %2102 = vmatpush1.msra.mxu0 0.0
    %2103 = vmatprep.subr.mxu0 0.0
    %2104 = vmatpush1.msra.mxu0 0.0
    %2105 = vmatprep.subr.mxu0 0.0
    %2106 = vmatpush1.msra.mxu0 0.0
    %2107 = vmatprep.subr.mxu0 0.0
    %2108 = vmatpush1.msra.mxu0 0.0
    %2109 = vmatprep.subr.mxu0 0.0
    %2110 = vmatpush1.msra.mxu0 0.0
    %2111 = vmatprep.subr.mxu0 0.0
    %2112 = vmatpush1.msra.mxu0 0.0
    %2113 = vmatprep.subr.mxu0 0.0
    %2114 = vmatpush1.msra.mxu0 0.0
    %2115 = vmatprep.subr.mxu0 0.0
    %2116 = vmatpush1.msra.mxu0 0.0
    %2117 = vmatprep.subr.mxu0 0.0
    %2118 = vmatpush1.msra.mxu0 0.0
    %2119 = vmatprep.subr.mxu0 0.0
    %2120 = vmatpush1.msra.mxu0 0.0
    %2121 = vmatprep.subr.mxu0 0.0
    %2122 = vmatpush1.msra.mxu0 0.0
    %2123 = vmatprep.subr.mxu0 0.0
    %2124 = vmatpush1.msra.mxu0 0.0
    %2125 = vmatprep.subr.mxu0 0.0
    %2126 = vmatpush1.msra.mxu0 0.0
    %2127 = vmatprep.subr.mxu0 0.0
    %2128 = vmatpush1.msra.mxu0 0.0
    %2129 = vmatprep.subr.mxu0 0.0
    %2130 = vmatpush1.msra.mxu0 0.0
    %2131 = vmatprep.subr.mxu0 0.0
    %2132 = vmatpush1.msra.mxu0 0.0
    %2133 = vmatprep.subr.mxu0 0.0
    %2134 = vmatpush1.msra.mxu0 0.0
    %2135 = vmatprep.subr.mxu0 0.0
    %2136 = vmatpush1.msra.mxu0 0.0
    %2137 = vmatprep.subr.mxu0 0.0
    %2138 = vmatpush1.msra.mxu0 0.0
    %2139 = vmatprep.subr.mxu0 0.0
    %2140 = vmatpush1.msra.mxu0 0.0
    %2141 = vmatprep.subr.mxu0 0.0
    %2142 = vmatpush1.msra.mxu0 0.0
    %2143 = vmatprep.subr.mxu0 0.0
    %2144 = vmatpush1.msra.mxu0 0.0
    %2145 = vmatprep.subr.mxu0 0.0
    %2146 = vmatpush1.msra.mxu0 0.0
    %2147 = vmatprep.subr.mxu0 0.0
    %2148 = vmatpush1.msra.mxu0 0.0
    %2149 = vmatprep.mubr.f32.mxu0 0.0
    %2150 = vmatmul.mubr.f32.gmra.mrb[0].mxu0 %v2083
    %v2151 = vpop.f32.mrb[0].mxu0
    %v2152 = vadd.f32 0.0, %v2151
    %v2153 = vpop.f32.mrb[0].mxu0
    %2154 = vdwg.mxu0
    %v2155 = vmax.f32 %v2152, 0.0
    %2156 = vmatprep.subr.mxu0 0.0
    %2157 = vmatpush1.msra.mxu0 %v2071
    %2158 = vmatprep.subr.mxu0 0.0
    %2159 = vmatpush1.msra.mxu0 %v2074
    %2160 = vmatprep.subr.mxu0 0.0
    %2161 = vmatpush1.msra.mxu0 %v2077
    %2162 = vmatprep.subr.mxu0 0.0
    %2163 = vmatpush1.msra.mxu0 %v2080
    %2164 = vmatprep.subr.mxu0 0.0
    %2165 = vmatpush1.msra.mxu0 0.0
    %2166 = vmatprep.subr.mxu0 0.0
    %2167 = vmatpush1.msra.mxu0 0.0
    %2168 = vmatprep.subr.mxu0 0.0
    %2169 = vmatpush1.msra.mxu0 0.0
    %2170 = vmatprep.subr.mxu0 0.0
    %2171 = vmatpush1.msra.mxu0 0.0
    %2172 = vmatprep.subr.mxu0 0.0
    %2173 = vmatpush1.msra.mxu0 0.0
    %2174 = vmatprep.subr.mxu0 0.0
    %2175 = vmatpush1.msra.mxu0 0.0
    %2176 = vmatprep.subr.mxu0 0.0
    %2177 = vmatpush1.msra.mxu0 0.0
    %2178 = vmatprep.subr.mxu0 0.0
    %2179 = vmatpush1.msra.mxu0 0.0
    %2180 = vmatprep.subr.mxu0 0.0
    %2181 = vmatpush1.msra.mxu0 0.0
    %2182 = vmatprep.subr.mxu0 0.0
    %2183 = vmatpush1.msra.mxu0 0.0
    %2184 = vmatprep.subr.mxu0 0.0
    %2185 = vmatpush1.msra.mxu0 0.0
    %2186 = vmatprep.subr.mxu0 0.0
    %2187 = vmatpush1.msra.mxu0 0.0
    %2188 = vmatprep.subr.mxu0 0.0
    %2189 = vmatpush1.msra.mxu0 0.0
    %2190 = vmatprep.subr.mxu0 0.0
    %2191 = vmatpush1.msra.mxu0 0.0
    %2192 = vmatprep.subr.mxu0 0.0
    %2193 = vmatpush1.msra.mxu0 0.0
    %2194 = vmatprep.subr.mxu0 0.0
    %2195 = vmatpush1.msra.mxu0 0.0
    %2196 = vmatprep.subr.mxu0 0.0
    %2197 = vmatpush1.msra.mxu0 0.0
    %2198 = vmatprep.subr.mxu0 0.0
    %2199 = vmatpush1.msra.mxu0 0.0
    %2200 = vmatprep.subr.mxu0 0.0
    %2201 = vmatpush1.msra.mxu0 0.0
    %2202 = vmatprep.subr.mxu0 0.0
    %2203 = vmatpush1.msra.mxu0 0.0
    %2204 = vmatprep.subr.mxu0 0.0
    %2205 = vmatpush1.msra.mxu0 0.0
    %2206 = vmatprep.subr.mxu0 0.0
    %2207 = vmatpush1.msra.mxu0 0.0
    %2208 = vmatprep.subr.mxu0 0.0
    %2209 = vmatpush1.msra.mxu0 0.0
    %2210 = vmatprep.subr.mxu0 0.0
    %2211 = vmatpush1.msra.mxu0 0.0
    %2212 = vmatprep.subr.mxu0 0.0
    %2213 = vmatpush1.msra.mxu0 0.0
    %2214 = vmatprep.subr.mxu0 0.0
    %2215 = vmatpush1.msra.mxu0 0.0
    %2216 = vmatprep.subr.mxu0 0.0
    %2217 = vmatpush1.msra.mxu0 0.0
    %2218 = vmatprep.subr.mxu0 0.0
    %2219 = vmatpush1.msra.mxu0 0.0
    %2220 = vmatprep.mubr.f32.mxu0 0.0
    %2221 = vmatmul.mubr.f32.gmra.mrb[0].mxu0 %v2083
    %v2222 = vpop.f32.mrb[0].mxu0
    %v2223 = vadd.f32 0.0, %v2222
    %v2224 = vpop.f32.mrb[0].mxu0
    %2225 = vdwg.mxu0
    %v2226 = vmax.f32 %v2223, 0.0
    %vm2227 = vcmask 15360
    %v2229 = vsel %vm2227, %v2049, 0
    %v2232 = vsel %vm2227, %v2050, 0
    %v2235 = vsel %vm2227, %v2051, 0
    %v2238 = vsel %vm2227, %v2052, 0
    %vm2240 = vcmask 1041408
    %v2242 = vsel %vm2240, %v2226, 0
    %2244 = vmatprep.subr.mxu0 0.0
    %2245 = vmatpush1.msra.mxu0 %v2242
    %2246 = vmatprep.subr.mxu0 0.0
    %2247 = vmatpush1.msra.mxu0 0.0
    %2248 = vmatprep.subr.mxu0 0.0
    %2249 = vmatpush1.msra.mxu0 0.0
    %2250 = vmatprep.subr.mxu0 0.0
    %2251 = vmatpush1.msra.mxu0 0.0
    %2252 = vmatprep.subr.mxu0 0.0
    %2253 = vmatpush1.msra.mxu0 0.0
    %2254 = vmatprep.subr.mxu0 0.0
    %2255 = vmatpush1.msra.mxu0 0.0
    %2256 = vmatprep.subr.mxu0 0.0
    %2257 = vmatpush1.msra.mxu0 0.0
    %2258 = vmatprep.subr.mxu0 0.0
    %2259 = vmatpush1.msra.mxu0 0.0
    %2260 = vmatprep.subr.mxu0 0.0
    %2261 = vmatpush1.msra.mxu0 0.0
    %2262 = vmatprep.subr.mxu0 0.0
    %2263 = vmatpush1.msra.mxu0 0.0
    %2264 = vmatprep.subr.mxu0 0.0
    %2265 = vmatpush1.msra.mxu0 0.0
    %2266 = vmatprep.subr.mxu0 0.0
    %2267 = vmatpush1.msra.mxu0 0.0
    %2268 = vmatprep.subr.mxu0 0.0
    %2269 = vmatpush1.msra.mxu0 0.0
    %2270 = vmatprep.subr.mxu0 0.0
    %2271 = vmatpush1.msra.mxu0 0.0
    %2272 = vmatprep.subr.mxu0 0.0
    %2273 = vmatpush1.msra.mxu0 0.0
    %2274 = vmatprep.subr.mxu0 0.0
    %2275 = vmatpush1.msra.mxu0 0.0
    %2276 = vmatprep.subr.mxu0 0.0
    %2277 = vmatpush1.msra.mxu0 0.0
    %2278 = vmatprep.subr.mxu0 0.0
    %2279 = vmatpush1.msra.mxu0 0.0
    %2280 = vmatprep.subr.mxu0 0.0
    %2281 = vmatpush1.msra.mxu0 0.0
    %2282 = vmatprep.subr.mxu0 0.0
    %2283 = vmatpush1.msra.mxu0 0.0
    %2284 = vmatprep.subr.mxu0 0.0
    %2285 = vmatpush1.msra.mxu0 0.0
    %2286 = vmatprep.subr.mxu0 0.0
    %2287 = vmatpush1.msra.mxu0 0.0
    %2288 = vmatprep.subr.mxu0 0.0
    %2289 = vmatpush1.msra.mxu0 0.0
    %2290 = vmatprep.subr.mxu0 0.0
    %2291 = vmatpush1.msra.mxu0 0.0
    %2292 = vmatprep.subr.mxu0 0.0
    %2293 = vmatpush1.msra.mxu0 0.0
    %2294 = vmatprep.subr.mxu0 0.0
    %2295 = vmatpush1.msra.mxu0 0.0
    %2296 = vmatprep.subr.mxu0 0.0
    %2297 = vmatpush1.msra.mxu0 0.0
    %2298 = vmatprep.subr.mxu0 0.0
    %2299 = vmatpush1.msra.mxu0 0.0
    %2300 = vmatprep.subr.mxu0 0.0
    %2301 = vmatpush1.msra.mxu0 0.0
    %2302 = vmatprep.subr.mxu0 0.0
    %2303 = vmatpush1.msra.mxu0 0.0
    %2304 = vmatprep.subr.mxu0 0.0
    %2305 = vmatpush1.msra.mxu0 0.0
    %2306 = vmatprep.subr.mxu0 0.0
    %2307 = vmatpush1.msra.mxu0 0.0
    %2308 = vmatprep.mubr.f32.mxu0 0.0
    %2309 = vmatmul.mubr.f32.gmra.mrb[0].mxu0 %v2229
    %v2310 = vpop.f32.mrb[0].mxu0
    %v2311 = vadd.f32 0.0, %v2310
    %v2312 = vpop.f32.mrb[0].mxu0
    %2313 = vmatprep.mubr.f32.mxu0 0.0
    %2314 = vmatmul.mubr.f32.gmra.mrb[0].mxu0 %v2232
    %v2315 = vpop.f32.mrb[0].mxu0
    %v2316 = vadd.f32 0.0, %v2315
    %v2317 = vpop.f32.mrb[0].mxu0
    %2318 = vmatprep.mubr.f32.mxu0 0.0
    %2319 = vmatmul.mubr.f32.gmra.mrb[0].mxu0 %v2235
    %v2320 = vpop.f32.mrb[0].mxu0
    %v2321 = vadd.f32 0.0, %v2320
    %v2322 = vpop.f32.mrb[0].mxu0
    %2323 = vmatprep.mubr.f32.mxu0 0.0
    %2324 = vmatmul.mubr.f32.gmra.mrb[0].mxu0 %v2238
    %v2325 = vpop.f32.mrb[0].mxu0
    %v2326 = vadd.f32 0.0, %v2325
    %v2327 = vpop.f32.mrb[0].mxu0
    %2328 = vdwg.mxu0
    %v2330 = vsel %vm2240, %v2155, 0
    %2332 = vmatprep.subr.mxu0 0.0
    %2333 = vmatpush1.msra.mxu0 %v2330
    %2334 = vmatprep.subr.mxu0 0.0
    %2335 = vmatpush1.msra.mxu0 0.0
    %2336 = vmatprep.subr.mxu0 0.0
    %2337 = vmatpush1.msra.mxu0 0.0
    %2338 = vmatprep.subr.mxu0 0.0
    %2339 = vmatpush1.msra.mxu0 0.0
    %2340 = vmatprep.subr.mxu0 0.0
    %2341 = vmatpush1.msra.mxu0 0.0
    %2342 = vmatprep.subr.mxu0 0.0
    %2343 = vmatpush1.msra.mxu0 0.0
    %2344 = vmatprep.subr.mxu0 0.0
    %2345 = vmatpush1.msra.mxu0 0.0
    %2346 = vmatprep.subr.mxu0 0.0
    %2347 = vmatpush1.msra.mxu0 0.0
    %2348 = vmatprep.subr.mxu0 0.0
    %2349 = vmatpush1.msra.mxu0 0.0
    %2350 = vmatprep.subr.mxu0 0.0
    %2351 = vmatpush1.msra.mxu0 0.0
    %2352 = vmatprep.subr.mxu0 0.0
    %2353 = vmatpush1.msra.mxu0 0.0
    %2354 = vmatprep.subr.mxu0 0.0
    %2355 = vmatpush1.msra.mxu0 0.0
    %2356 = vmatprep.subr.mxu0 0.0
    %2357 = vmatpush1.msra.mxu0 0.0
    %2358 = vmatprep.subr.mxu0 0.0
    %2359 = vmatpush1.msra.mxu0 0.0
    %2360 = vmatprep.subr.mxu0 0.0
    %2361 = vmatpush1.msra.mxu0 0.0
    %2362 = vmatprep.subr.mxu0 0.0
    %2363 = vmatpush1.msra.mxu0 0.0
    %2364 = vmatprep.subr.mxu0 0.0
    %2365 = vmatpush1.msra.mxu0 0.0
    %2366 = vmatprep.subr.mxu0 0.0
    %2367 = vmatpush1.msra.mxu0 0.0
    %2368 = vmatprep.subr.mxu0 0.0
    %2369 = vmatpush1.msra.mxu0 0.0
    %2370 = vmatprep.subr.mxu0 0.0
    %2371 = vmatpush1.msra.mxu0 0.0
    %2372 = vmatprep.subr.mxu0 0.0
    %2373 = vmatpush1.msra.mxu0 0.0
    %2374 = vmatprep.subr.mxu0 0.0
    %2375 = vmatpush1.msra.mxu0 0.0
    %2376 = vmatprep.subr.mxu0 0.0
    %2377 = vmatpush1.msra.mxu0 0.0
    %2378 = vmatprep.subr.mxu0 0.0
    %2379 = vmatpush1.msra.mxu0 0.0
    %2380 = vmatprep.subr.mxu0 0.0
    %2381 = vmatpush1.msra.mxu0 0.0
    %2382 = vmatprep.subr.mxu0 0.0
    %2383 = vmatpush1.msra.mxu0 0.0
    %2384 = vmatprep.subr.mxu0 0.0
    %2385 = vmatpush1.msra.mxu0 0.0
    %2386 = vmatprep.subr.mxu0 0.0
    %2387 = vmatpush1.msra.mxu0 0.0
    %2388 = vmatprep.subr.mxu0 0.0
    %2389 = vmatpush1.msra.mxu0 0.0
    %2390 = vmatprep.subr.mxu0 0.0
    %2391 = vmatpush1.msra.mxu0 0.0
    %2392 = vmatprep.subr.mxu0 0.0
    %2393 = vmatpush1.msra.mxu0 0.0
    %2394 = vmatprep.subr.mxu0 0.0
    %2395 = vmatpush1.msra.mxu0 0.0
    %2396 = vmatprep.mubr.f32.mxu0 0.0
    %2397 = vmatmul.mubr.f32.gmra.mrb[0].mxu0 %v2229
    %v2398 = vpop.f32.mrb[0].mxu0
    %v2399 = vadd.f32 %v2311, %v2398
    %v2400 = vpop.f32.mrb[0].mxu0
    %2401 = vmatprep.mubr.f32.mxu0 0.0
    %2402 = vmatmul.mubr.f32.gmra.mrb[0].mxu0 %v2232
    %v2403 = vpop.f32.mrb[0].mxu0
    %v2404 = vadd.f32 %v2316, %v2403
    %v2405 = vpop.f32.mrb[0].mxu0
    %2406 = vmatprep.mubr.f32.mxu0 0.0
    %2407 = vmatmul.mubr.f32.gmra.mrb[0].mxu0 %v2235
    %v2408 = vpop.f32.mrb[0].mxu0
    %v2409 = vadd.f32 %v2321, %v2408
    %v2410 = vpop.f32.mrb[0].mxu0
    %2411 = vmatprep.mubr.f32.mxu0 0.0
    %2412 = vmatmul.mubr.f32.gmra.mrb[0].mxu0 %v2238
    %v2413 = vpop.f32.mrb[0].mxu0
    %v2414 = vadd.f32 %v2326, %v2413
    %v2415 = vpop.f32.mrb[0].mxu0
    %2416 = vdwg.mxu0
    %v2417 = vxor.u32 %v2399, 2147483648
    %v2418 = vxor.u32 %v2404, 2147483648
    %v2419 = vxor.u32 %v2409, 2147483648
    %v2420 = vxor.u32 %v2414, 2147483648
    %v2421 = vmul.f32 %v2417, 1.442695
    %v2422 = vpow.pop %v2421
    %v2423 = vmul.f32 %v2418, 1.442695
    %v2424 = vpow.pop %v2423
    %v2425 = vmul.f32 %v2419, 1.442695
    %v2426 = vpow.pop %v2425
    %v2427 = vmul.f32 %v2420, 1.442695
    %v2428 = vpow.pop %v2427
    %v2429 = vadd.f32 %v2422, 1.0
    %v2430 = vadd.f32 %v2424, 1.0
    %v2431 = vadd.f32 %v2426, 1.0
    %v2432 = vadd.f32 %v2428, 1.0
    %v2433 = vrcp.pop %v2429
    %v2434 = vmul.f32 1.0, %v2433
    %v2435 = vrcp.pop %v2430
    %v2436 = vmul.f32 1.0, %v2435
    %v2437 = vrcp.pop %v2431
    %v2438 = vmul.f32 1.0, %v2437
    %v2439 = vrcp.pop %v2432
    %v2440 = vmul.f32 1.0, %v2439
    %2442 = vset.pattern.permute.xlu0 0
    %2443 = vperm.xlu0 %2442, %v2434
    %v2444 = vpop.permute.xlu0 %2443
    %2447 = vset.pattern.permute.xlu0 0
    %2448 = vperm.xlu0 %2447, %v2436
    %v2449 = vpop.permute.xlu0 %2448
    %v2451 = vmul.f32 %v2040, %v2444
    %v2452 = vmul.f32 %v2041, %v2444
    %v2453 = vmul.f32 %v2044, %v2449
    %v2454 = vmul.f32 %v2045, %v2449
    %2456 = vset.pattern.permute.xlu0 0
    %2457 = vperm.xlu0 %2456, %v2438
    %v2458 = vpop.permute.xlu0 %2457
    %2461 = vset.pattern.permute.xlu0 0
    %2462 = vperm.xlu0 %2461, %v2440
    %v2463 = vpop.permute.xlu0 %2462
    %v2465 = vmul.f32 %v76, %v2458
    %v2466 = vmul.f32 %v77, %v2458
    %v2467 = vmul.f32 %v80, %v2463
    %v2468 = vmul.f32 %v81, %v2463
    %v2469 = vadd.f32 %v2451, %v2453
    %v2470 = vrot.slane %v2469, 4
    %v2471 = vadd.f32 %v2469, %v2470
    %v2472 = vrot.slane %v2471, 2
    %v2473 = vadd.f32 %v2471, %v2472
    %v2474 = vrot.slane %v2473, 1
    %v2475 = vadd.f32 %v2473, %v2474
    %v2476 = vadd.f32 %v2452, %v2454
    %v2477 = vrot.slane %v2476, 4
    %v2478 = vadd.f32 %v2476, %v2477
    %v2479 = vrot.slane %v2478, 2
    %v2480 = vadd.f32 %v2478, %v2479
    %v2481 = vrot.slane %v2480, 1
    %v2482 = vadd.f32 %v2480, %v2481
    %v2483 = vadd.f32 %v2465, %v2467
    %v2484 = vrot.slane %v2483, 4
    %v2485 = vadd.f32 %v2483, %v2484
    %v2486 = vrot.slane %v2485, 2
    %v2487 = vadd.f32 %v2485, %v2486
    %v2488 = vrot.slane %v2487, 1
    %v2489 = vadd.f32 %v2487, %v2488
    %v2490 = vadd.f32 %v2466, %v2468
    %v2491 = vrot.slane %v2490, 4
    %v2492 = vadd.f32 %v2490, %v2491
    %v2493 = vrot.slane %v2492, 2
    %v2494 = vadd.f32 %v2492, %v2493
    %v2495 = vrot.slane %v2494, 1
    %v2496 = vadd.f32 %v2494, %v2495
    %v2497 = vadd.f32 %v2475, %v2489
    %v2498 = vadd.f32 %v2482, %v2496
    %v2499 = vmul.f32 %v2497, 0.03125
    %v2500 = vmul.f32 %v2498, 0.03125
    %v2501 = vmax.f32 %v2451, %v2453
    %v2502 = vrot.slane %v2501, 4
    %v2503 = vmax.f32 %v2501, %v2502
    %v2504 = vrot.slane %v2503, 2
    %v2505 = vmax.f32 %v2503, %v2504
    %v2506 = vrot.slane %v2505, 1
    %v2507 = vmax.f32 %v2505, %v2506
    %v2508 = vmax.f32 %v2452, %v2454
    %v2509 = vrot.slane %v2508, 4
    %v2510 = vmax.f32 %v2508, %v2509
    %v2511 = vrot.slane %v2510, 2
    %v2512 = vmax.f32 %v2510, %v2511
    %v2513 = vrot.slane %v2512, 1
    %v2514 = vmax.f32 %v2512, %v2513
    %v2515 = vmax.f32 %v2465, %v2467
    %v2516 = vrot.slane %v2515, 4
    %v2517 = vmax.f32 %v2515, %v2516
    %v2518 = vrot.slane %v2517, 2
    %v2519 = vmax.f32 %v2517, %v2518
    %v2520 = vrot.slane %v2519, 1
    %v2521 = vmax.f32 %v2519, %v2520
    %v2522 = vmax.f32 %v2466, %v2468
    %v2523 = vrot.slane %v2522, 4
    %v2524 = vmax.f32 %v2522, %v2523
    %v2525 = vrot.slane %v2524, 2
    %v2526 = vmax.f32 %v2524, %v2525
    %v2527 = vrot.slane %v2526, 1
    %v2528 = vmax.f32 %v2526, %v2527
    %v2529 = vmax.f32 %v2507, %v2521
    %v2530 = vmax.f32 %v2514, %v2528
    %vm2531 = vcmask 1040384
    %v2532 = vsel %vm2531, %v2499, %v2529
    %v2533 = vsel %vm2531, %v2500, %v2530
    %2534 = vrot.lane.b32.xlu0 %v2532, 51
    %v2535 = vpop.permute.xlu0 %2534
    %2536 = vrot.lane.b32.xlu0 %v2533, 51
    %v2537 = vpop.permute.xlu0 %2536
    %vm2538 = vcmp.lt.s32.totalorder %v101, 51
    %v2539 = vsel %vm2538, %v2535, %v2537
    %v2540 = vsel %vm2538, %v2537, %v2535
    %v2541 = vld [vmem:[#allocation7] sm:$0xf]
    %v2544 = vunpack.c.l.s4 1983009808
    %v2545 = vunpack.c.0.s8 %v2544
    %v2546 = vlaneseq
    %v2547 = vshrl.u32 %v2546, 7
    %v2548 = vsub.s32 %v2545, %v2547
    %v2549 = vrot.slane %v2541, %v2548
    %v2550 = vcombine.high %v2549, %v2549
    %v2553 = vmul.f32 %v2540, %v2549
    %v2554 = vmul.f32 %v2539, %v2550
    %v2555 = vadd.f32 %v2553, 0.0
    %v2556 = vadd.f32 %v2554, 0.0
    %2557 = vrot.lane.b32.xlu0 %v2532, 50
    %v2558 = vpop.permute.xlu0 %2557
    %2559 = vrot.lane.b32.xlu0 %v2533, 50
    %v2560 = vpop.permute.xlu0 %2559
    %vm2561 = vcmp.lt.s32.totalorder %v101, 50
    %v2562 = vsel %vm2561, %v2558, %v2560
    %v2563 = vsel %vm2561, %v2560, %v2558
    %s2564 = scalar_lea.vmem [#allocation7], 4
    %v2565 = vld [vmem:[%s2564] sm:$0xf]
    %v2568 = vunpack.c.l.s4 1983009808
    %v2569 = vunpack.c.0.s8 %v2568
    %v2570 = vlaneseq
    %v2571 = vshrl.u32 %v2570, 7
    %v2572 = vsub.s32 %v2569, %v2571
    %v2573 = vrot.slane %v2565, %v2572
    %v2574 = vcombine.high %v2573, %v2573
    %v2577 = vmul.f32 %v2563, %v2573
    %v2578 = vmul.f32 %v2562, %v2574
    %v2579 = vadd.f32 %v2577, 0.0
    %v2580 = vadd.f32 %v2578, 0.0
    %2581 = vrot.lane.b32.xlu0 %v2532, 49
    %v2582 = vpop.permute.xlu0 %2581
    %2583 = vrot.lane.b32.xlu0 %v2533, 49
    %v2584 = vpop.permute.xlu0 %2583
    %vm2585 = vcmp.lt.s32.totalorder %v101, 49
    %v2586 = vsel %vm2585, %v2582, %v2584
    %v2587 = vsel %vm2585, %v2584, %v2582
    %s2588 = scalar_lea.vmem [#allocation7], 8
    %v2589 = vld [vmem:[%s2588] sm:$0xf]
    %v2592 = vunpack.c.l.s4 1983009808
    %v2593 = vunpack.c.0.s8 %v2592
    %v2594 = vlaneseq
    %v2595 = vshrl.u32 %v2594, 7
    %v2596 = vsub.s32 %v2593, %v2595
    %v2597 = vrot.slane %v2589, %v2596
    %v2598 = vcombine.high %v2597, %v2597
    %v2601 = vmul.f32 %v2587, %v2597
    %v2602 = vmul.f32 %v2586, %v2598
    %v2603 = vadd.f32 %v2555, %v2601
    %v2604 = vadd.f32 %v2556, %v2602
    %2605 = vrot.lane.b32.xlu0 %v2532, 48
    %v2606 = vpop.permute.xlu0 %2605
    %2607 = vrot.lane.b32.xlu0 %v2533, 48
    %v2608 = vpop.permute.xlu0 %2607
    %vm2609 = vcmp.lt.s32.totalorder %v101, 48
    %v2610 = vsel %vm2609, %v2606, %v2608
    %v2611 = vsel %vm2609, %v2608, %v2606
    %s2612 = scalar_lea.vmem [#allocation7], 12
    %v2613 = vld [vmem:[%s2612] sm:$0xf]
    %v2616 = vunpack.c.l.s4 1983009808
    %v2617 = vunpack.c.0.s8 %v2616
    %v2618 = vlaneseq
    %v2619 = vshrl.u32 %v2618, 7
    %v2620 = vsub.s32 %v2617, %v2619
    %v2621 = vrot.slane %v2613, %v2620
    %v2622 = vcombine.high %v2621, %v2621
    %v2625 = vmul.f32 %v2611, %v2621
    %v2626 = vmul.f32 %v2610, %v2622
    %v2627 = vadd.f32 %v2579, %v2625
    %v2628 = vadd.f32 %v2580, %v2626
    %2629 = vrot.lane.b32.xlu0 %v2532, 47
    %v2630 = vpop.permute.xlu0 %2629
    %2631 = vrot.lane.b32.xlu0 %v2533, 47
    %v2632 = vpop.permute.xlu0 %2631
    %vm2633 = vcmp.lt.s32.totalorder %v101, 47
    %v2634 = vsel %vm2633, %v2630, %v2632
    %v2635 = vsel %vm2633, %v2632, %v2630
    %s2636 = scalar_lea.vmem [#allocation7], 16
    %v2637 = vld [vmem:[%s2636] sm:$0xf]
    %v2640 = vunpack.c.l.s4 1983009808
    %v2641 = vunpack.c.0.s8 %v2640
    %v2642 = vlaneseq
    %v2643 = vshrl.u32 %v2642, 7
    %v2644 = vsub.s32 %v2641, %v2643
    %v2645 = vrot.slane %v2637, %v2644
    %v2646 = vcombine.high %v2645, %v2645
    %v2649 = vmul.f32 %v2635, %v2645
    %v2650 = vmul.f32 %v2634, %v2646
    %v2651 = vadd.f32 %v2603, %v2649
    %v2652 = vadd.f32 %v2604, %v2650
    %2653 = vrot.lane.b32.xlu0 %v2532, 46
    %v2654 = vpop.permute.xlu0 %2653
    %2655 = vrot.lane.b32.xlu0 %v2533, 46
    %v2656 = vpop.permute.xlu0 %2655
    %vm2657 = vcmp.lt.s32.totalorder %v101, 46
    %v2658 = vsel %vm2657, %v2654, %v2656
    %v2659 = vsel %vm2657, %v2656, %v2654
    %s2660 = scalar_lea.vmem [#allocation7], 20
    %v2661 = vld [vmem:[%s2660] sm:$0xf]
    %v2664 = vunpack.c.l.s4 1983009808
    %v2665 = vunpack.c.0.s8 %v2664
    %v2666 = vlaneseq
    %v2667 = vshrl.u32 %v2666, 7
    %v2668 = vsub.s32 %v2665, %v2667
    %v2669 = vrot.slane %v2661, %v2668
    %v2670 = vcombine.high %v2669, %v2669
    %v2673 = vmul.f32 %v2659, %v2669
    %v2674 = vmul.f32 %v2658, %v2670
    %v2675 = vadd.f32 %v2627, %v2673
    %v2676 = vadd.f32 %v2628, %v2674
    %2677 = vrot.lane.b32.xlu0 %v2532, 45
    %v2678 = vpop.permute.xlu0 %2677
    %2679 = vrot.lane.b32.xlu0 %v2533, 45
    %v2680 = vpop.permute.xlu0 %2679
    %vm2681 = vcmp.lt.s32.totalorder %v101, 45
    %v2682 = vsel %vm2681, %v2678, %v2680
    %v2683 = vsel %vm2681, %v2680, %v2678
    %s2684 = scalar_lea.vmem [#allocation7], 24
    %v2685 = vld [vmem:[%s2684] sm:$0xf]
    %v2688 = vunpack.c.l.s4 1983009808
    %v2689 = vunpack.c.0.s8 %v2688
    %v2690 = vlaneseq
    %v2691 = vshrl.u32 %v2690, 7
    %v2692 = vsub.s32 %v2689, %v2691
    %v2693 = vrot.slane %v2685, %v2692
    %v2694 = vcombine.high %v2693, %v2693
    %v2697 = vmul.f32 %v2683, %v2693
    %v2698 = vmul.f32 %v2682, %v2694
    %v2699 = vadd.f32 %v2651, %v2697
    %v2700 = vadd.f32 %v2652, %v2698
    %2701 = vrot.lane.b32.xlu0 %v2532, 35
    %v2702 = vpop.permute.xlu0 %2701
    %2703 = vrot.lane.b32.xlu0 %v2533, 35
    %v2704 = vpop.permute.xlu0 %2703
    %vm2705 = vcmp.lt.s32.totalorder %v101, 35
    %v2706 = vsel %vm2705, %v2702, %v2704
    %v2707 = vsel %vm2705, %v2704, %v2702
    %s2708 = scalar_lea.vmem [#allocation7], 28
    %v2709 = vld [vmem:[%s2708] sm:$0xf]
    %v2712 = vunpack.c.l.s4 1983009808
    %v2713 = vunpack.c.0.s8 %v2712
    %v2714 = vlaneseq
    %v2715 = vshrl.u32 %v2714, 7
    %v2716 = vsub.s32 %v2713, %v2715
    %v2717 = vrot.slane %v2709, %v2716
    %v2718 = vcombine.high %v2717, %v2717
    %v2721 = vmul.f32 %v2707, %v2717
    %v2722 = vmul.f32 %v2706, %v2718
    %v2723 = vadd.f32 %v2675, %v2721
    %v2724 = vadd.f32 %v2676, %v2722
    %2725 = vrot.lane.b32.xlu0 %v2532, 34
    %v2726 = vpop.permute.xlu0 %2725
    %2727 = vrot.lane.b32.xlu0 %v2533, 34
    %v2728 = vpop.permute.xlu0 %2727
    %vm2729 = vcmp.lt.s32.totalorder %v101, 34
    %v2730 = vsel %vm2729, %v2726, %v2728
    %v2731 = vsel %vm2729, %v2728, %v2726
    %s2732 = scalar_lea.vmem [#allocation7], 32
    %v2733 = vld [vmem:[%s2732] sm:$0xf]
    %v2736 = vunpack.c.l.s4 1983009808
    %v2737 = vunpack.c.0.s8 %v2736
    %v2738 = vlaneseq
    %v2739 = vshrl.u32 %v2738, 7
    %v2740 = vsub.s32 %v2737, %v2739
    %v2741 = vrot.slane %v2733, %v2740
    %v2742 = vcombine.high %v2741, %v2741
    %v2745 = vmul.f32 %v2731, %v2741
    %v2746 = vmul.f32 %v2730, %v2742
    %v2747 = vadd.f32 %v2699, %v2745
    %v2748 = vadd.f32 %v2700, %v2746
    %2749 = vrot.lane.b32.xlu0 %v2532, 33
    %v2750 = vpop.permute.xlu0 %2749
    %2751 = vrot.lane.b32.xlu0 %v2533, 33
    %v2752 = vpop.permute.xlu0 %2751
    %vm2753 = vcmp.lt.s32.totalorder %v101, 33
    %v2754 = vsel %vm2753, %v2750, %v2752
    %v2755 = vsel %vm2753, %v2752, %v2750
    %s2756 = scalar_lea.vmem [#allocation7], 36
    %v2757 = vld [vmem:[%s2756] sm:$0xf]
    %v2760 = vunpack.c.l.s4 1983009808
    %v2761 = vunpack.c.0.s8 %v2760
    %v2762 = vlaneseq
    %v2763 = vshrl.u32 %v2762, 7
    %v2764 = vsub.s32 %v2761, %v2763
    %v2765 = vrot.slane %v2757, %v2764
    %v2766 = vcombine.high %v2765, %v2765
    %v2769 = vmul.f32 %v2755, %v2765
    %v2770 = vmul.f32 %v2754, %v2766
    %v2771 = vadd.f32 %v2723, %v2769
    %v2772 = vadd.f32 %v2724, %v2770
    %2773 = vrot.lane.b32.xlu0 %v2532, 32
    %v2774 = vpop.permute.xlu0 %2773
    %2775 = vrot.lane.b32.xlu0 %v2533, 32
    %v2776 = vpop.permute.xlu0 %2775
    %vm2777 = vcmp.lt.s32.totalorder %v101, 32
    %v2778 = vsel %vm2777, %v2774, %v2776
    %v2779 = vsel %vm2777, %v2776, %v2774
    %s2780 = scalar_lea.vmem [#allocation7], 40
    %v2781 = vld [vmem:[%s2780] sm:$0xf]
    %v2784 = vunpack.c.l.s4 1983009808
    %v2785 = vunpack.c.0.s8 %v2784
    %v2786 = vlaneseq
    %v2787 = vshrl.u32 %v2786, 7
    %v2788 = vsub.s32 %v2785, %v2787
    %v2789 = vrot.slane %v2781, %v2788
    %v2790 = vcombine.high %v2789, %v2789
    %v2793 = vmul.f32 %v2779, %v2789
    %v2794 = vmul.f32 %v2778, %v2790
    %v2795 = vadd.f32 %v2747, %v2793
    %v2796 = vadd.f32 %v2748, %v2794
    %2797 = vrot.lane.b32.xlu0 %v2532, 31
    %v2798 = vpop.permute.xlu0 %2797
    %2799 = vrot.lane.b32.xlu0 %v2533, 31
    %v2800 = vpop.permute.xlu0 %2799
    %vm2801 = vcmp.lt.s32.totalorder %v101, 31
    %v2802 = vsel %vm2801, %v2798, %v2800
    %v2803 = vsel %vm2801, %v2800, %v2798
    %s2804 = scalar_lea.vmem [#allocation7], 44
    %v2805 = vld [vmem:[%s2804] sm:$0xf]
    %v2808 = vunpack.c.l.s4 1983009808
    %v2809 = vunpack.c.0.s8 %v2808
    %v2810 = vlaneseq
    %v2811 = vshrl.u32 %v2810, 7
    %v2812 = vsub.s32 %v2809, %v2811
    %v2813 = vrot.slane %v2805, %v2812
    %v2814 = vcombine.high %v2813, %v2813
    %v2817 = vmul.f32 %v2803, %v2813
    %v2818 = vmul.f32 %v2802, %v2814
    %v2819 = vadd.f32 %v2771, %v2817
    %v2820 = vadd.f32 %v2772, %v2818
    %2821 = vrot.lane.b32.xlu0 %v2532, 30
    %v2822 = vpop.permute.xlu0 %2821
    %2823 = vrot.lane.b32.xlu0 %v2533, 30
    %v2824 = vpop.permute.xlu0 %2823
    %vm2825 = vcmp.lt.s32.totalorder %v101, 30
    %v2826 = vsel %vm2825, %v2822, %v2824
    %v2827 = vsel %vm2825, %v2824, %v2822
    %s2828 = scalar_lea.vmem [#allocation7], 48
    %v2829 = vld [vmem:[%s2828] sm:$0xf]
    %v2832 = vunpack.c.l.s4 1983009808
    %v2833 = vunpack.c.0.s8 %v2832
    %v2834 = vlaneseq
    %v2835 = vshrl.u32 %v2834, 7
    %v2836 = vsub.s32 %v2833, %v2835
    %v2837 = vrot.slane %v2829, %v2836
    %v2838 = vcombine.high %v2837, %v2837
    %v2841 = vmul.f32 %v2827, %v2837
    %v2842 = vmul.f32 %v2826, %v2838
    %v2843 = vadd.f32 %v2795, %v2841
    %v2844 = vadd.f32 %v2796, %v2842
    %2845 = vrot.lane.b32.xlu0 %v2532, 29
    %v2846 = vpop.permute.xlu0 %2845
    %2847 = vrot.lane.b32.xlu0 %v2533, 29
    %v2848 = vpop.permute.xlu0 %2847
    %vm2849 = vcmp.lt.s32.totalorder %v101, 29
    %v2850 = vsel %vm2849, %v2846, %v2848
    %v2851 = vsel %vm2849, %v2848, %v2846
    %s2852 = scalar_lea.vmem [#allocation7], 52
    %v2853 = vld [vmem:[%s2852] sm:$0xf]
    %v2856 = vunpack.c.l.s4 1983009808
    %v2857 = vunpack.c.0.s8 %v2856
    %v2858 = vlaneseq
    %v2859 = vshrl.u32 %v2858, 7
    %v2860 = vsub.s32 %v2857, %v2859
    %v2861 = vrot.slane %v2853, %v2860
    %v2862 = vcombine.high %v2861, %v2861
    %v2865 = vmul.f32 %v2851, %v2861
    %v2866 = vmul.f32 %v2850, %v2862
    %v2867 = vadd.f32 %v2819, %v2865
    %v2868 = vadd.f32 %v2820, %v2866
    %2869 = vrot.lane.b32.xlu0 %v2532, 19
    %v2870 = vpop.permute.xlu0 %2869
    %2871 = vrot.lane.b32.xlu0 %v2533, 19
    %v2872 = vpop.permute.xlu0 %2871
    %vm2873 = vcmp.lt.s32.totalorder %v101, 19
    %v2874 = vsel %vm2873, %v2870, %v2872
    %v2875 = vsel %vm2873, %v2872, %v2870
    %s2876 = scalar_lea.vmem [#allocation7], 56
    %v2877 = vld [vmem:[%s2876] sm:$0xf]
    %v2880 = vunpack.c.l.s4 1983009808
    %v2881 = vunpack.c.0.s8 %v2880
    %v2882 = vlaneseq
    %v2883 = vshrl.u32 %v2882, 7
    %v2884 = vsub.s32 %v2881, %v2883
    %v2885 = vrot.slane %v2877, %v2884
    %v2886 = vcombine.high %v2885, %v2885
    %v2889 = vmul.f32 %v2875, %v2885
    %v2890 = vmul.f32 %v2874, %v2886
    %v2891 = vadd.f32 %v2843, %v2889
    %v2892 = vadd.f32 %v2844, %v2890
    %2893 = vrot.lane.b32.xlu0 %v2532, 18
    %v2894 = vpop.permute.xlu0 %2893
    %2895 = vrot.lane.b32.xlu0 %v2533, 18
    %v2896 = vpop.permute.xlu0 %2895
    %vm2897 = vcmp.lt.s32.totalorder %v101, 18
    %v2898 = vsel %vm2897, %v2894, %v2896
    %v2899 = vsel %vm2897, %v2896, %v2894
    %s2900 = scalar_lea.vmem [#allocation7], 60
    %v2901 = vld [vmem:[%s2900] sm:$0xf]
    %v2904 = vunpack.c.l.s4 1983009808
    %v2905 = vunpack.c.0.s8 %v2904
    %v2906 = vlaneseq
    %v2907 = vshrl.u32 %v2906, 7
    %v2908 = vsub.s32 %v2905, %v2907
    %v2909 = vrot.slane %v2901, %v2908
    %v2910 = vcombine.high %v2909, %v2909
    %v2913 = vmul.f32 %v2899, %v2909
    %v2914 = vmul.f32 %v2898, %v2910
    %v2915 = vadd.f32 %v2867, %v2913
    %v2916 = vadd.f32 %v2868, %v2914
    %2917 = vrot.lane.b32.xlu0 %v2532, 17
    %v2918 = vpop.permute.xlu0 %2917
    %2919 = vrot.lane.b32.xlu0 %v2533, 17
    %v2920 = vpop.permute.xlu0 %2919
    %v2921 = vsel %vm102, %v2918, %v2920
    %v2922 = vsel %vm102, %v2920, %v2918
    %s2923 = scalar_lea.vmem [#allocation7], 64
    %v2924 = vld [vmem:[%s2923] sm:$0xf]
    %v2927 = vunpack.c.l.s4 1983009808
    %v2928 = vunpack.c.0.s8 %v2927
    %v2929 = vlaneseq
    %v2930 = vshrl.u32 %v2929, 7
    %v2931 = vsub.s32 %v2928, %v2930
    %v2932 = vrot.slane %v2924, %v2931
    %v2933 = vcombine.high %v2932, %v2932
    %v2936 = vmul.f32 %v2922, %v2932
    %v2937 = vmul.f32 %v2921, %v2933
    %v2938 = vadd.f32 %v2891, %v2936
    %v2939 = vadd.f32 %v2892, %v2937
    %2940 = vrot.lane.b32.xlu0 %v2532, 16
    %v2941 = vpop.permute.xlu0 %2940
    %2942 = vrot.lane.b32.xlu0 %v2533, 16
    %v2943 = vpop.permute.xlu0 %2942
    %v2944 = vsel %vm159, %v2941, %v2943
    %v2945 = vsel %vm159, %v2943, %v2941
    %s2946 = scalar_lea.vmem [#allocation7], 68
    %v2947 = vld [vmem:[%s2946] sm:$0xf]
    %v2950 = vunpack.c.l.s4 1983009808
    %v2951 = vunpack.c.0.s8 %v2950
    %v2952 = vlaneseq
    %v2953 = vshrl.u32 %v2952, 7
    %v2954 = vsub.s32 %v2951, %v2953
    %v2955 = vrot.slane %v2947, %v2954
    %v2956 = vcombine.high %v2955, %v2955
    %v2959 = vmul.f32 %v2945, %v2955
    %v2960 = vmul.f32 %v2944, %v2956
    %v2961 = vadd.f32 %v2915, %v2959
    %v2962 = vadd.f32 %v2916, %v2960
    %2963 = vrot.lane.b32.xlu0 %v2532, 15
    %v2964 = vpop.permute.xlu0 %2963
    %2965 = vrot.lane.b32.xlu0 %v2533, 15
    %v2966 = vpop.permute.xlu0 %2965
    %v2967 = vsel %vm218, %v2964, %v2966
    %v2968 = vsel %vm218, %v2966, %v2964
    %s2969 = scalar_lea.vmem [#allocation7], 72
    %v2970 = vld [vmem:[%s2969] sm:$0xf]
    %v2973 = vunpack.c.l.s4 1983009808
    %v2974 = vunpack.c.0.s8 %v2973
    %v2975 = vlaneseq
    %v2976 = vshrl.u32 %v2975, 7
    %v2977 = vsub.s32 %v2974, %v2976
    %v2978 = vrot.slane %v2970, %v2977
    %v2979 = vcombine.high %v2978, %v2978
    %v2982 = vmul.f32 %v2968, %v2978
    %v2983 = vmul.f32 %v2967, %v2979
    %v2984 = vadd.f32 %v2938, %v2982
    %v2985 = vadd.f32 %v2939, %v2983
    %2986 = vrot.lane.b32.xlu0 %v2532, 14
    %v2987 = vpop.permute.xlu0 %2986
    %2988 = vrot.lane.b32.xlu0 %v2533, 14
    %v2989 = vpop.permute.xlu0 %2988
    %vm2990 = vcmp.lt.s32.totalorder %v101, 14
    %v2991 = vsel %vm2990, %v2987, %v2989
    %v2992 = vsel %vm2990, %v2989, %v2987
    %s2993 = scalar_lea.vmem [#allocation7], 76
    %v2994 = vld [vmem:[%s2993] sm:$0xf]
    %v2997 = vunpack.c.l.s4 1983009808
    %v2998 = vunpack.c.0.s8 %v2997
    %v2999 = vlaneseq
    %v3000 = vshrl.u32 %v2999, 7
    %v3001 = vsub.s32 %v2998, %v3000
    %v3002 = vrot.slane %v2994, %v3001
    %v3003 = vcombine.high %v3002, %v3002
    %v3006 = vmul.f32 %v2992, %v3002
    %v3007 = vmul.f32 %v2991, %v3003
    %v3008 = vadd.f32 %v2961, %v3006
    %v3009 = vadd.f32 %v2962, %v3007
    %3010 = vrot.lane.b32.xlu0 %v2532, 13
    %v3011 = vpop.permute.xlu0 %3010
    %3012 = vrot.lane.b32.xlu0 %v2533, 13
    %v3013 = vpop.permute.xlu0 %3012
    %vm3014 = vcmp.lt.s32.totalorder %v101, 13
    %v3015 = vsel %vm3014, %v3011, %v3013
    %v3016 = vsel %vm3014, %v3013, %v3011
    %s3017 = scalar_lea.vmem [#allocation7], 80
    %v3018 = vld [vmem:[%s3017] sm:$0xf]
    %v3021 = vunpack.c.l.s4 1983009808
    %v3022 = vunpack.c.0.s8 %v3021
    %v3023 = vlaneseq
    %v3024 = vshrl.u32 %v3023, 7
    %v3025 = vsub.s32 %v3022, %v3024
    %v3026 = vrot.slane %v3018, %v3025
    %v3027 = vcombine.high %v3026, %v3026
    %v3030 = vmul.f32 %v3016, %v3026
    %v3031 = vmul.f32 %v3015, %v3027
    %v3032 = vadd.f32 %v2984, %v3030
    %v3033 = vadd.f32 %v2985, %v3031
    %3034 = vrot.lane.b32.xlu0 %v2532, 3
    %v3035 = vpop.permute.xlu0 %3034
    %3036 = vrot.lane.b32.xlu0 %v2533, 3
    %v3037 = vpop.permute.xlu0 %3036
    %vm3038 = vcmp.lt.s32.totalorder %v101, 3
    %v3039 = vsel %vm3038, %v3035, %v3037
    %v3040 = vsel %vm3038, %v3037, %v3035
    %s3041 = scalar_lea.vmem [#allocation7], 84
    %v3042 = vld [vmem:[%s3041] sm:$0xf]
    %v3045 = vunpack.c.l.s4 1983009808
    %v3046 = vunpack.c.0.s8 %v3045
    %v3047 = vlaneseq
    %v3048 = vshrl.u32 %v3047, 7
    %v3049 = vsub.s32 %v3046, %v3048
    %v3050 = vrot.slane %v3042, %v3049
    %v3051 = vcombine.high %v3050, %v3050
    %v3054 = vmul.f32 %v3040, %v3050
    %v3055 = vmul.f32 %v3039, %v3051
    %v3056 = vadd.f32 %v3008, %v3054
    %v3057 = vadd.f32 %v3009, %v3055
    %3058 = vrot.lane.b32.xlu0 %v2532, 2
    %v3059 = vpop.permute.xlu0 %3058
    %3060 = vrot.lane.b32.xlu0 %v2533, 2
    %v3061 = vpop.permute.xlu0 %3060
    %vm3062 = vcmp.lt.s32.totalorder %v101, 2
    %v3063 = vsel %vm3062, %v3059, %v3061
    %v3064 = vsel %vm3062, %v3061, %v3059
    %s3065 = scalar_lea.vmem [#allocation7], 88
    %v3066 = vld [vmem:[%s3065] sm:$0xf]
    %v3069 = vunpack.c.l.s4 1983009808
    %v3070 = vunpack.c.0.s8 %v3069
    %v3071 = vlaneseq
    %v3072 = vshrl.u32 %v3071, 7
    %v3073 = vsub.s32 %v3070, %v3072
    %v3074 = vrot.slane %v3066, %v3073
    %v3075 = vcombine.high %v3074, %v3074
    %v3078 = vmul.f32 %v3064, %v3074
    %v3079 = vmul.f32 %v3063, %v3075
    %v3080 = vadd.f32 %v3032, %v3078
    %v3081 = vadd.f32 %v3033, %v3079
    %3082 = vrot.lane.b32.xlu0 %v2532, 1
    %v3083 = vpop.permute.xlu0 %3082
    %3084 = vrot.lane.b32.xlu0 %v2533, 1
    %v3085 = vpop.permute.xlu0 %3084
    %v3086 = vsel %vm598, %v3083, %v3085
    %v3087 = vsel %vm598, %v3085, %v3083
    %s3088 = scalar_lea.vmem [#allocation7], 92
    %v3089 = vld [vmem:[%s3088] sm:$0xf]
    %v3092 = vunpack.c.l.s4 1983009808
    %v3093 = vunpack.c.0.s8 %v3092
    %v3094 = vlaneseq
    %v3095 = vshrl.u32 %v3094, 7
    %v3096 = vsub.s32 %v3093, %v3095
    %v3097 = vrot.slane %v3089, %v3096
    %v3098 = vcombine.high %v3097, %v3097
    %v3101 = vmul.f32 %v3087, %v3097
    %v3102 = vmul.f32 %v3086, %v3098
    %v3103 = vadd.f32 %v3056, %v3101
    %v3104 = vadd.f32 %v3057, %v3102
    %s3105 = scalar_lea.vmem [#allocation7], 96
    %v3106 = vld [vmem:[%s3105] sm:$0xf]
    %v3109 = vunpack.c.l.s4 1983009808
    %v3110 = vunpack.c.0.s8 %v3109
    %v3111 = vlaneseq
    %v3112 = vshrl.u32 %v3111, 7
    %v3113 = vsub.s32 %v3110, %v3112
    %v3114 = vrot.slane %v3106, %v3113
    %v3115 = vcombine.high %v3114, %v3114
    %v3118 = vmul.f32 %v2532, %v3114
    %v3119 = vmul.f32 %v2533, %v3115
    %v3120 = vadd.f32 %v3080, %v3118
    %v3121 = vadd.f32 %v3081, %v3119
    %3122 = vrot.lane.b32.xlu0 %v2532, 127
    %v3123 = vpop.permute.xlu0 %3122
    %3124 = vrot.lane.b32.xlu0 %v2533, 127
    %v3125 = vpop.permute.xlu0 %3124
    %v3126 = vsel %vm1148, %v3123, %v3125
    %v3127 = vsel %vm1148, %v3125, %v3123
    %s3128 = scalar_lea.vmem [#allocation7], 100
    %v3129 = vld [vmem:[%s3128] sm:$0xf]
    %v3132 = vunpack.c.l.s4 1983009808
    %v3133 = vunpack.c.0.s8 %v3132
    %v3134 = vlaneseq
    %v3135 = vshrl.u32 %v3134, 7
    %v3136 = vsub.s32 %v3133, %v3135
    %v3137 = vrot.slane %v3129, %v3136
    %v3138 = vcombine.high %v3137, %v3137
    %v3141 = vmul.f32 %v3126, %v3137
    %v3142 = vmul.f32 %v3127, %v3138
    %v3143 = vadd.f32 %v3103, %v3141
    %v3144 = vadd.f32 %v3104, %v3142
    %3145 = vrot.lane.b32.xlu0 %v2532, 126
    %v3146 = vpop.permute.xlu0 %3145
    %3147 = vrot.lane.b32.xlu0 %v2533, 126
    %v3148 = vpop.permute.xlu0 %3147
    %vm3149 = vcmp.lt.s32.totalorder %v101, 126
    %v3150 = vsel %vm3149, %v3146, %v3148
    %v3151 = vsel %vm3149, %v3148, %v3146
    %s3152 = scalar_lea.vmem [#allocation7], 104
    %v3153 = vld [vmem:[%s3152] sm:$0xf]
    %v3156 = vunpack.c.l.s4 1983009808
    %v3157 = vunpack.c.0.s8 %v3156
    %v3158 = vlaneseq
    %v3159 = vshrl.u32 %v3158, 7
    %v3160 = vsub.s32 %v3157, %v3159
    %v3161 = vrot.slane %v3153, %v3160
    %v3162 = vcombine.high %v3161, %v3161
    %v3165 = vmul.f32 %v3150, %v3161
    %v3166 = vmul.f32 %v3151, %v3162
    %v3167 = vadd.f32 %v3120, %v3165
    %v3168 = vadd.f32 %v3121, %v3166
    %3169 = vrot.lane.b32.xlu0 %v2532, 125
    %v3170 = vpop.permute.xlu0 %3169
    %3171 = vrot.lane.b32.xlu0 %v2533, 125
    %v3172 = vpop.permute.xlu0 %3171
    %vm3173 = vcmp.lt.s32.totalorder %v101, 125
    %v3174 = vsel %vm3173, %v3170, %v3172
    %v3175 = vsel %vm3173, %v3172, %v3170
    %s3176 = scalar_lea.vmem [#allocation7], 108
    %v3177 = vld [vmem:[%s3176] sm:$0xf]
    %v3180 = vunpack.c.l.s4 1983009808
    %v3181 = vunpack.c.0.s8 %v3180
    %v3182 = vlaneseq
    %v3183 = vshrl.u32 %v3182, 7
    %v3184 = vsub.s32 %v3181, %v3183
    %v3185 = vrot.slane %v3177, %v3184
    %v3186 = vcombine.high %v3185, %v3185
    %v3189 = vmul.f32 %v3174, %v3185
    %v3190 = vmul.f32 %v3175, %v3186
    %v3191 = vadd.f32 %v3143, %v3189
    %v3192 = vadd.f32 %v3144, %v3190
    %3193 = vrot.lane.b32.xlu0 %v2532, 115
    %v3194 = vpop.permute.xlu0 %3193
    %3195 = vrot.lane.b32.xlu0 %v2533, 115
    %v3196 = vpop.permute.xlu0 %3195
    %vm3197 = vcmp.lt.s32.totalorder %v101, 115
    %v3198 = vsel %vm3197, %v3194, %v3196
    %v3199 = vsel %vm3197, %v3196, %v3194
    %s3200 = scalar_lea.vmem [#allocation7], 112
    %v3201 = vld [vmem:[%s3200] sm:$0xf]
    %v3204 = vunpack.c.l.s4 1983009808
    %v3205 = vunpack.c.0.s8 %v3204
    %v3206 = vlaneseq
    %v3207 = vshrl.u32 %v3206, 7
    %v3208 = vsub.s32 %v3205, %v3207
    %v3209 = vrot.slane %v3201, %v3208
    %v3210 = vcombine.high %v3209, %v3209
    %v3213 = vmul.f32 %v3198, %v3209
    %v3214 = vmul.f32 %v3199, %v3210
    %v3215 = vadd.f32 %v3167, %v3213
    %v3216 = vadd.f32 %v3168, %v3214
    %3217 = vrot.lane.b32.xlu0 %v2532, 114
    %v3218 = vpop.permute.xlu0 %3217
    %3219 = vrot.lane.b32.xlu0 %v2533, 114
    %v3220 = vpop.permute.xlu0 %3219
    %vm3221 = vcmp.lt.s32.totalorder %v101, 114
    %v3222 = vsel %vm3221, %v3218, %v3220
    %v3223 = vsel %vm3221, %v3220, %v3218
    %s3224 = scalar_lea.vmem [#allocation7], 116
    %v3225 = vld [vmem:[%s3224] sm:$0xf]
    %v3228 = vunpack.c.l.s4 1983009808
    %v3229 = vunpack.c.0.s8 %v3228
    %v3230 = vlaneseq
    %v3231 = vshrl.u32 %v3230, 7
    %v3232 = vsub.s32 %v3229, %v3231
    %v3233 = vrot.slane %v3225, %v3232
    %v3234 = vcombine.high %v3233, %v3233
    %v3237 = vmul.f32 %v3222, %v3233
    %v3238 = vmul.f32 %v3223, %v3234
    %v3239 = vadd.f32 %v3191, %v3237
    %v3240 = vadd.f32 %v3192, %v3238
    %3241 = vrot.lane.b32.xlu0 %v2532, 113
    %v3242 = vpop.permute.xlu0 %3241
    %3243 = vrot.lane.b32.xlu0 %v2533, 113
    %v3244 = vpop.permute.xlu0 %3243
    %v3245 = vsel %vm1375, %v3242, %v3244
    %v3246 = vsel %vm1375, %v3244, %v3242
    %s3247 = scalar_lea.vmem [#allocation7], 120
    %v3248 = vld [vmem:[%s3247] sm:$0xf]
    %v3251 = vunpack.c.l.s4 1983009808
    %v3252 = vunpack.c.0.s8 %v3251
    %v3253 = vlaneseq
    %v3254 = vshrl.u32 %v3253, 7
    %v3255 = vsub.s32 %v3252, %v3254
    %v3256 = vrot.slane %v3248, %v3255
    %v3257 = vcombine.high %v3256, %v3256
    %v3260 = vmul.f32 %v3245, %v3256
    %v3261 = vmul.f32 %v3246, %v3257
    %v3262 = vadd.f32 %v3215, %v3260
    %v3263 = vadd.f32 %v3216, %v3261
    %3264 = vrot.lane.b32.xlu0 %v2532, 112
    %v3265 = vpop.permute.xlu0 %3264
    %3266 = vrot.lane.b32.xlu0 %v2533, 112
    %v3267 = vpop.permute.xlu0 %3266
    %v3268 = vsel %vm1602, %v3265, %v3267
    %v3269 = vsel %vm1602, %v3267, %v3265
    %s3270 = scalar_lea.vmem [#allocation7], 124
    %v3271 = vld [vmem:[%s3270] sm:$0xf]
    %v3274 = vunpack.c.l.s4 1983009808
    %v3275 = vunpack.c.0.s8 %v3274
    %v3276 = vlaneseq
    %v3277 = vshrl.u32 %v3276, 7
    %v3278 = vsub.s32 %v3275, %v3277
    %v3279 = vrot.slane %v3271, %v3278
    %v3280 = vcombine.high %v3279, %v3279
    %v3283 = vmul.f32 %v3268, %v3279
    %v3284 = vmul.f32 %v3269, %v3280
    %v3285 = vadd.f32 %v3239, %v3283
    %v3286 = vadd.f32 %v3240, %v3284
    %3287 = vrot.lane.b32.xlu0 %v2532, 111
    %v3288 = vpop.permute.xlu0 %3287
    %3289 = vrot.lane.b32.xlu0 %v2533, 111
    %v3290 = vpop.permute.xlu0 %3289
    %v3291 = vsel %vm1829, %v3288, %v3290
    %v3292 = vsel %vm1829, %v3290, %v3288
    %s3293 = scalar_lea.vmem [#allocation7], 128
    %v3294 = vld [vmem:[%s3293] sm:$0xf]
    %v3297 = vunpack.c.l.s4 1983009808
    %v3298 = vunpack.c.0.s8 %v3297
    %v3299 = vlaneseq
    %v3300 = vshrl.u32 %v3299, 7
    %v3301 = vsub.s32 %v3298, %v3300
    %v3302 = vrot.slane %v3294, %v3301
    %v3303 = vcombine.high %v3302, %v3302
    %v3306 = vmul.f32 %v3291, %v3302
    %v3307 = vmul.f32 %v3292, %v3303
    %v3308 = vadd.f32 %v3262, %v3306
    %v3309 = vadd.f32 %v3263, %v3307
    %3310 = vrot.lane.b32.xlu0 %v2532, 110
    %v3311 = vpop.permute.xlu0 %3310
    %3312 = vrot.lane.b32.xlu0 %v2533, 110
    %v3313 = vpop.permute.xlu0 %3312
    %vm3314 = vcmp.lt.s32.totalorder %v101, 110
    %v3315 = vsel %vm3314, %v3311, %v3313
    %v3316 = vsel %vm3314, %v3313, %v3311
    %s3317 = scalar_lea.vmem [#allocation7], 132
    %v3318 = vld [vmem:[%s3317] sm:$0xf]
    %v3321 = vunpack.c.l.s4 1983009808
    %v3322 = vunpack.c.0.s8 %v3321
    %v3323 = vlaneseq
    %v3324 = vshrl.u32 %v3323, 7
    %v3325 = vsub.s32 %v3322, %v3324
    %v3326 = vrot.slane %v3318, %v3325
    %v3327 = vcombine.high %v3326, %v3326
    %v3330 = vmul.f32 %v3315, %v3326
    %v3331 = vmul.f32 %v3316, %v3327
    %v3332 = vadd.f32 %v3285, %v3330
    %v3333 = vadd.f32 %v3286, %v3331
    %3334 = vrot.lane.b32.xlu0 %v2532, 109
    %v3335 = vpop.permute.xlu0 %3334
    %3336 = vrot.lane.b32.xlu0 %v2533, 109
    %v3337 = vpop.permute.xlu0 %3336
    %vm3338 = vcmp.lt.s32.totalorder %v101, 109
    %v3339 = vsel %vm3338, %v3335, %v3337
    %v3340 = vsel %vm3338, %v3337, %v3335
    %s3341 = scalar_lea.vmem [#allocation7], 136
    %v3342 = vld [vmem:[%s3341] sm:$0xf]
    %v3345 = vunpack.c.l.s4 1983009808
    %v3346 = vunpack.c.0.s8 %v3345
    %v3347 = vlaneseq
    %v3348 = vshrl.u32 %v3347, 7
    %v3349 = vsub.s32 %v3346, %v3348
    %v3350 = vrot.slane %v3342, %v3349
    %v3351 = vcombine.high %v3350, %v3350
    %v3354 = vmul.f32 %v3339, %v3350
    %v3355 = vmul.f32 %v3340, %v3351
    %v3356 = vadd.f32 %v3308, %v3354
    %v3357 = vadd.f32 %v3309, %v3355
    %3358 = vrot.lane.b32.xlu0 %v2532, 99
    %v3359 = vpop.permute.xlu0 %3358
    %3360 = vrot.lane.b32.xlu0 %v2533, 99
    %v3361 = vpop.permute.xlu0 %3360
    %vm3362 = vcmp.lt.s32.totalorder %v101, 99
    %v3363 = vsel %vm3362, %v3359, %v3361
    %v3364 = vsel %vm3362, %v3361, %v3359
    %s3365 = scalar_lea.vmem [#allocation7], 140
    %v3366 = vld [vmem:[%s3365] sm:$0xf]
    %v3369 = vunpack.c.l.s4 1983009808
    %v3370 = vunpack.c.0.s8 %v3369
    %v3371 = vlaneseq
    %v3372 = vshrl.u32 %v3371, 7
    %v3373 = vsub.s32 %v3370, %v3372
    %v3374 = vrot.slane %v3366, %v3373
    %v3375 = vcombine.high %v3374, %v3374
    %v3378 = vmul.f32 %v3363, %v3374
    %v3379 = vmul.f32 %v3364, %v3375
    %v3380 = vadd.f32 %v3332, %v3378
    %v3381 = vadd.f32 %v3333, %v3379
    %3382 = vrot.lane.b32.xlu0 %v2532, 98
    %v3383 = vpop.permute.xlu0 %3382
    %3384 = vrot.lane.b32.xlu0 %v2533, 98
    %v3385 = vpop.permute.xlu0 %3384
    %vm3386 = vcmp.lt.s32.totalorder %v101, 98
    %v3387 = vsel %vm3386, %v3383, %v3385
    %v3388 = vsel %vm3386, %v3385, %v3383
    %s3389 = scalar_lea.vmem [#allocation7], 144
    %v3390 = vld [vmem:[%s3389] sm:$0xf]
    %v3393 = vunpack.c.l.s4 1983009808
    %v3394 = vunpack.c.0.s8 %v3393
    %v3395 = vlaneseq
    %v3396 = vshrl.u32 %v3395, 7
    %v3397 = vsub.s32 %v3394, %v3396
    %v3398 = vrot.slane %v3390, %v3397
    %v3399 = vcombine.high %v3398, %v3398
    %v3402 = vmul.f32 %v3387, %v3398
    %v3403 = vmul.f32 %v3388, %v3399
    %v3404 = vadd.f32 %v3356, %v3402
    %v3405 = vadd.f32 %v3357, %v3403
    %3406 = vrot.lane.b32.xlu0 %v2532, 97
    %v3407 = vpop.permute.xlu0 %3406
    %3408 = vrot.lane.b32.xlu0 %v2533, 97
    %v3409 = vpop.permute.xlu0 %3408
    %vm3410 = vcmp.lt.s32.totalorder %v101, 97
    %v3411 = vsel %vm3410, %v3407, %v3409
    %v3412 = vsel %vm3410, %v3409, %v3407
    %s3413 = scalar_lea.vmem [#allocation7], 148
    %v3414 = vld [vmem:[%s3413] sm:$0xf]
    %v3417 = vunpack.c.l.s4 1983009808
    %v3418 = vunpack.c.0.s8 %v3417
    %v3419 = vlaneseq
    %v3420 = vshrl.u32 %v3419, 7
    %v3421 = vsub.s32 %v3418, %v3420
    %v3422 = vrot.slane %v3414, %v3421
    %v3423 = vcombine.high %v3422, %v3422
    %v3426 = vmul.f32 %v3411, %v3422
    %v3427 = vmul.f32 %v3412, %v3423
    %v3428 = vadd.f32 %v3380, %v3426
    %v3429 = vadd.f32 %v3381, %v3427
    %3430 = vrot.lane.b32.xlu0 %v2532, 96
    %v3431 = vpop.permute.xlu0 %3430
    %3432 = vrot.lane.b32.xlu0 %v2533, 96
    %v3433 = vpop.permute.xlu0 %3432
    %vm3434 = vcmp.lt.s32.totalorder %v101, 96
    %v3435 = vsel %vm3434, %v3431, %v3433
    %v3436 = vsel %vm3434, %v3433, %v3431
    %s3437 = scalar_lea.vmem [#allocation7], 152
    %v3438 = vld [vmem:[%s3437] sm:$0xf]
    %v3441 = vunpack.c.l.s4 1983009808
    %v3442 = vunpack.c.0.s8 %v3441
    %v3443 = vlaneseq
    %v3444 = vshrl.u32 %v3443, 7
    %v3445 = vsub.s32 %v3442, %v3444
    %v3446 = vrot.slane %v3438, %v3445
    %v3447 = vcombine.high %v3446, %v3446
    %v3450 = vmul.f32 %v3435, %v3446
    %v3451 = vmul.f32 %v3436, %v3447
    %v3452 = vadd.f32 %v3404, %v3450
    %v3453 = vadd.f32 %v3405, %v3451
    %3454 = vrot.lane.b32.xlu0 %v2532, 95
    %v3455 = vpop.permute.xlu0 %3454
    %3456 = vrot.lane.b32.xlu0 %v2533, 95
    %v3457 = vpop.permute.xlu0 %3456
    %vm3458 = vcmp.lt.s32.totalorder %v101, 95
    %v3459 = vsel %vm3458, %v3455, %v3457
    %v3460 = vsel %vm3458, %v3457, %v3455
    %s3461 = scalar_lea.vmem [#allocation7], 156
    %v3462 = vld [vmem:[%s3461] sm:$0xf]
    %v3465 = vunpack.c.l.s4 1983009808
    %v3466 = vunpack.c.0.s8 %v3465
    %v3467 = vlaneseq
    %v3468 = vshrl.u32 %v3467, 7
    %v3469 = vsub.s32 %v3466, %v3468
    %v3470 = vrot.slane %v3462, %v3469
    %v3471 = vcombine.high %v3470, %v3470
    %v3474 = vmul.f32 %v3459, %v3470
    %v3475 = vmul.f32 %v3460, %v3471
    %v3476 = vadd.f32 %v3428, %v3474
    %v3477 = vadd.f32 %v3429, %v3475
    %3478 = vrot.lane.b32.xlu0 %v2532, 94
    %v3479 = vpop.permute.xlu0 %3478
    %3480 = vrot.lane.b32.xlu0 %v2533, 94
    %v3481 = vpop.permute.xlu0 %3480
    %vm3482 = vcmp.lt.s32.totalorder %v101, 94
    %v3483 = vsel %vm3482, %v3479, %v3481
    %v3484 = vsel %vm3482, %v3481, %v3479
    %s3485 = scalar_lea.vmem [#allocation7], 160
    %v3486 = vld [vmem:[%s3485] sm:$0xf]
    %v3489 = vunpack.c.l.s4 1983009808
    %v3490 = vunpack.c.0.s8 %v3489
    %v3491 = vlaneseq
    %v3492 = vshrl.u32 %v3491, 7
    %v3493 = vsub.s32 %v3490, %v3492
    %v3494 = vrot.slane %v3486, %v3493
    %v3495 = vcombine.high %v3494, %v3494
    %v3498 = vmul.f32 %v3483, %v3494
    %v3499 = vmul.f32 %v3484, %v3495
    %v3500 = vadd.f32 %v3452, %v3498
    %v3501 = vadd.f32 %v3453, %v3499
    %3502 = vrot.lane.b32.xlu0 %v2532, 93
    %v3503 = vpop.permute.xlu0 %3502
    %3504 = vrot.lane.b32.xlu0 %v2533, 93
    %v3505 = vpop.permute.xlu0 %3504
    %vm3506 = vcmp.lt.s32.totalorder %v101, 93
    %v3507 = vsel %vm3506, %v3503, %v3505
    %v3508 = vsel %vm3506, %v3505, %v3503
    %s3509 = scalar_lea.vmem [#allocation7], 164
    %v3510 = vld [vmem:[%s3509] sm:$0xf]
    %v3513 = vunpack.c.l.s4 1983009808
    %v3514 = vunpack.c.0.s8 %v3513
    %v3515 = vlaneseq
    %v3516 = vshrl.u32 %v3515, 7
    %v3517 = vsub.s32 %v3514, %v3516
    %v3518 = vrot.slane %v3510, %v3517
    %v3519 = vcombine.high %v3518, %v3518
    %v3522 = vmul.f32 %v3507, %v3518
    %v3523 = vmul.f32 %v3508, %v3519
    %v3524 = vadd.f32 %v3476, %v3522
    %v3525 = vadd.f32 %v3477, %v3523
    %3526 = vrot.lane.b32.xlu0 %v2532, 83
    %v3527 = vpop.permute.xlu0 %3526
    %3528 = vrot.lane.b32.xlu0 %v2533, 83
    %v3529 = vpop.permute.xlu0 %3528
    %vm3530 = vcmp.lt.s32.totalorder %v101, 83
    %v3531 = vsel %vm3530, %v3527, %v3529
    %v3532 = vsel %vm3530, %v3529, %v3527
    %s3533 = scalar_lea.vmem [#allocation7], 168
    %v3534 = vld [vmem:[%s3533] sm:$0xf]
    %v3537 = vunpack.c.l.s4 1983009808
    %v3538 = vunpack.c.0.s8 %v3537
    %v3539 = vlaneseq
    %v3540 = vshrl.u32 %v3539, 7
    %v3541 = vsub.s32 %v3538, %v3540
    %v3542 = vrot.slane %v3534, %v3541
    %v3543 = vcombine.high %v3542, %v3542
    %v3546 = vmul.f32 %v3531, %v3542
    %v3547 = vmul.f32 %v3532, %v3543
    %v3548 = vadd.f32 %v3500, %v3546
    %v3549 = vadd.f32 %v3501, %v3547
    %3550 = vrot.lane.b32.xlu0 %v2532, 82
    %v3551 = vpop.permute.xlu0 %3550
    %3552 = vrot.lane.b32.xlu0 %v2533, 82
    %v3553 = vpop.permute.xlu0 %3552
    %vm3554 = vcmp.lt.s32.totalorder %v101, 82
    %v3555 = vsel %vm3554, %v3551, %v3553
    %v3556 = vsel %vm3554, %v3553, %v3551
    %s3557 = scalar_lea.vmem [#allocation7], 172
    %v3558 = vld [vmem:[%s3557] sm:$0xf]
    %v3561 = vunpack.c.l.s4 1983009808
    %v3562 = vunpack.c.0.s8 %v3561
    %v3563 = vlaneseq
    %v3564 = vshrl.u32 %v3563, 7
    %v3565 = vsub.s32 %v3562, %v3564
    %v3566 = vrot.slane %v3558, %v3565
    %v3567 = vcombine.high %v3566, %v3566
    %v3570 = vmul.f32 %v3555, %v3566
    %v3571 = vmul.f32 %v3556, %v3567
    %v3572 = vadd.f32 %v3524, %v3570
    %v3573 = vadd.f32 %v3525, %v3571
    %3574 = vrot.lane.b32.xlu0 %v2532, 81
    %v3575 = vpop.permute.xlu0 %3574
    %3576 = vrot.lane.b32.xlu0 %v2533, 81
    %v3577 = vpop.permute.xlu0 %3576
    %vm3578 = vcmp.lt.s32.totalorder %v101, 81
    %v3579 = vsel %vm3578, %v3575, %v3577
    %v3580 = vsel %vm3578, %v3577, %v3575
    %s3581 = scalar_lea.vmem [#allocation7], 176
    %v3582 = vld [vmem:[%s3581] sm:$0xf]
    %v3585 = vunpack.c.l.s4 1983009808
    %v3586 = vunpack.c.0.s8 %v3585
    %v3587 = vlaneseq
    %v3588 = vshrl.u32 %v3587, 7
    %v3589 = vsub.s32 %v3586, %v3588
    %v3590 = vrot.slane %v3582, %v3589
    %v3591 = vcombine.high %v3590, %v3590
    %v3594 = vmul.f32 %v3579, %v3590
    %v3595 = vmul.f32 %v3580, %v3591
    %v3596 = vadd.f32 %v3548, %v3594
    %v3597 = vadd.f32 %v3549, %v3595
    %3598 = vrot.lane.b32.xlu0 %v2532, 80
    %v3599 = vpop.permute.xlu0 %3598
    %3600 = vrot.lane.b32.xlu0 %v2533, 80
    %v3601 = vpop.permute.xlu0 %3600
    %vm3602 = vcmp.lt.s32.totalorder %v101, 80
    %v3603 = vsel %vm3602, %v3599, %v3601
    %v3604 = vsel %vm3602, %v3601, %v3599
    %s3605 = scalar_lea.vmem [#allocation7], 180
    %v3606 = vld [vmem:[%s3605] sm:$0xf]
    %v3609 = vunpack.c.l.s4 1983009808
    %v3610 = vunpack.c.0.s8 %v3609
    %v3611 = vlaneseq
    %v3612 = vshrl.u32 %v3611, 7
    %v3613 = vsub.s32 %v3610, %v3612
    %v3614 = vrot.slane %v3606, %v3613
    %v3615 = vcombine.high %v3614, %v3614
    %v3618 = vmul.f32 %v3603, %v3614
    %v3619 = vmul.f32 %v3604, %v3615
    %v3620 = vadd.f32 %v3572, %v3618
    %v3621 = vadd.f32 %v3573, %v3619
    %3622 = vrot.lane.b32.xlu0 %v2532, 79
    %v3623 = vpop.permute.xlu0 %3622
    %3624 = vrot.lane.b32.xlu0 %v2533, 79
    %v3625 = vpop.permute.xlu0 %3624
    %vm3626 = vcmp.lt.s32.totalorder %v101, 79
    %v3627 = vsel %vm3626, %v3623, %v3625
    %v3628 = vsel %vm3626, %v3625, %v3623
    %s3629 = scalar_lea.vmem [#allocation7], 184
    %v3630 = vld [vmem:[%s3629] sm:$0xf]
    %v3633 = vunpack.c.l.s4 1983009808
    %v3634 = vunpack.c.0.s8 %v3633
    %v3635 = vlaneseq
    %v3636 = vshrl.u32 %v3635, 7
    %v3637 = vsub.s32 %v3634, %v3636
    %v3638 = vrot.slane %v3630, %v3637
    %v3639 = vcombine.high %v3638, %v3638
    %v3642 = vmul.f32 %v3627, %v3638
    %v3643 = vmul.f32 %v3628, %v3639
    %v3644 = vadd.f32 %v3596, %v3642
    %v3645 = vadd.f32 %v3597, %v3643
    %3646 = vrot.lane.b32.xlu0 %v2532, 78
    %v3647 = vpop.permute.xlu0 %3646
    %3648 = vrot.lane.b32.xlu0 %v2533, 78
    %v3649 = vpop.permute.xlu0 %3648
    %vm3650 = vcmp.lt.s32.totalorder %v101, 78
    %v3651 = vsel %vm3650, %v3647, %v3649
    %v3652 = vsel %vm3650, %v3649, %v3647
    %s3653 = scalar_lea.vmem [#allocation7], 188
    %v3654 = vld [vmem:[%s3653] sm:$0xf]
    %v3657 = vunpack.c.l.s4 1983009808
    %v3658 = vunpack.c.0.s8 %v3657
    %v3659 = vlaneseq
    %v3660 = vshrl.u32 %v3659, 7
    %v3661 = vsub.s32 %v3658, %v3660
    %v3662 = vrot.slane %v3654, %v3661
    %v3663 = vcombine.high %v3662, %v3662
    %v3666 = vmul.f32 %v3651, %v3662
    %v3667 = vmul.f32 %v3652, %v3663
    %v3668 = vadd.f32 %v3620, %v3666
    %v3669 = vadd.f32 %v3621, %v3667
    %3670 = vrot.lane.b32.xlu0 %v2532, 77
    %v3671 = vpop.permute.xlu0 %3670
    %3672 = vrot.lane.b32.xlu0 %v2533, 77
    %v3673 = vpop.permute.xlu0 %3672
    %vm3674 = vcmp.lt.s32.totalorder %v101, 77
    %v3675 = vsel %vm3674, %v3671, %v3673
    %v3676 = vsel %vm3674, %v3673, %v3671
    %s3677 = scalar_lea.vmem [#allocation7], 192
    %v3678 = vld [vmem:[%s3677] sm:$0xf]
    %v3681 = vunpack.c.l.s4 1983009808
    %v3682 = vunpack.c.0.s8 %v3681
    %v3683 = vlaneseq
    %v3684 = vshrl.u32 %v3683, 7
    %v3685 = vsub.s32 %v3682, %v3684
    %v3686 = vrot.slane %v3678, %v3685
    %v3687 = vcombine.high %v3686, %v3686
    %v3690 = vmul.f32 %v3675, %v3686
    %v3691 = vmul.f32 %v3676, %v3687
    %v3692 = vadd.f32 %v3644, %v3690
    %v3693 = vadd.f32 %v3645, %v3691
    %v3694 = vadd.f32 %v3692, %v3668
    %v3695 = vadd.f32 %v3693, %v3669
    %v3696 = vsel %vm2240, %v3694, 0.0
    %v3697 = vrot.slane %v3696, 4
    %v3698 = vadd.f32 %v3696, %v3697
    %v3699 = vrot.slane %v3698, 2
    %v3700 = vadd.f32 %v3698, %v3699
    %v3701 = vrot.slane %v3700, 1
    %v3702 = vadd.f32 %v3700, %v3701
    %v3703 = vsel %vm2240, %v3695, 0.0
    %v3704 = vrot.slane %v3703, 4
    %v3705 = vadd.f32 %v3703, %v3704
    %v3706 = vrot.slane %v3705, 2
    %v3707 = vadd.f32 %v3705, %v3706
    %v3708 = vrot.slane %v3707, 1
    %v3709 = vadd.f32 %v3707, %v3708
    %v3710 = vxor.u32 %v3702, 2147483648
    %v3711 = vxor.u32 %v3709, 2147483648
    %v3712 = vmul.f32 %v3710, 1.442695
    %v3713 = vpow.pop %v3712
    %v3714 = vmul.f32 %v3711, 1.442695
    %v3715 = vpow.pop %v3714
    %v3716 = vadd.f32 %v3713, 1.0
    %v3717 = vadd.f32 %v3715, 1.0
    %v3718 = vrcp.pop %v3716
    %v3719 = vmul.f32 1.0, %v3718
    %v3720 = vrcp.pop %v3717
    %v3721 = vmul.f32 1.0, %v3720
    %v3722 = vmul.f32 %v2451, %v3719
    %v3723 = vmul.f32 %v2452, %v3721
    %v3724 = vmul.f32 %v2453, %v3719
    %v3725 = vmul.f32 %v2454, %v3721
    %3726 = vst [vmem:[#allocation8] sm:$0xff] %v3722
    %3727 = vst [vmem:[#allocation8 + $0x8] sm:$0xff] %v3723
    %3728 = vst [vmem:[#allocation8 + $0x20] sm:$0xff] %v3724
    %3729 = vst [vmem:[#allocation8 + $0x28] sm:$0xff] %v3725
    %v3730 = vmul.f32 %v2465, %v3719
    %v3731 = vmul.f32 %v2466, %v3721
    %v3732 = vmul.f32 %v2467, %v3719
    %v3733 = vmul.f32 %v2468, %v3721
    %3734 = vst [vmem:[#allocation8 + $0x40] sm:$0xff] %v3730
    %3735 = vst [vmem:[#allocation8 + $0x48] sm:$0xff] %v3731
    %3736 = vst [vmem:[#allocation8 + $0x60] sm:$0xff] %v3732
    %3737 = vst [vmem:[#allocation8 + $0x68] sm:$0xff] %v3733
    %v3738 = vadd.f32 %v2042, %v2043
    %3739 = vadd.xlane.f32.xlu0 %v3738
    %v3740 = vpop.xlane.xlu0 %3739
    %v3741 = vadd.f32 %v2046, %v2047
    %3742 = vadd.xlane.f32.xlu0 %v3741
    %v3743 = vpop.xlane.xlu0 %3742
    %v3744 = vadd.f32 %v78, %v79
    %3745 = vadd.xlane.f32.xlu0 %v3744
    %v3746 = vpop.xlane.xlu0 %3745
    %v3747 = vadd.f32 %v82, %v83
    %3748 = vadd.xlane.f32.xlu0 %v3747
    %v3749 = vpop.xlane.xlu0 %3748
    %v3750 = vmul.f32 %v3740, 0.00390625
    %v3751 = vmul.f32 %v3743, 0.00390625
    %v3752 = vmul.f32 %v3746, 0.00390625
    %v3753 = vmul.f32 %v3749, 0.00390625
    %v3754 = vmax.f32 %v2042, %v2043
    %3755 = vmax.xlane.f32.xlu0 %v3754
    %v3756 = vpop.xlane.xlu0 %3755
    %v3757 = vmax.f32 %v2046, %v2047
    %3758 = vmax.xlane.f32.xlu0 %v3757
    %v3759 = vpop.xlane.xlu0 %3758
    %v3760 = vmax.f32 %v78, %v79
    %3761 = vmax.xlane.f32.xlu0 %v3760
    %v3762 = vpop.xlane.xlu0 %3761
    %v3763 = vmax.f32 %v82, %v83
    %3764 = vmax.xlane.f32.xlu0 %v3763
    %v3765 = vpop.xlane.xlu0 %3764
    %3766 = vmatprep.subr.mxu0 0.0
    %3767 = vmatpush1.msra.mxu0 %v3750
    %3768 = vmatprep.subr.mxu0 0.0
    %3769 = vmatpush1.msra.mxu0 %v3751
    %3770 = vmatprep.subr.mxu0 0.0
    %3771 = vmatpush1.msra.mxu0 %v3752
    %3772 = vmatprep.subr.mxu0 0.0
    %3773 = vmatpush1.msra.mxu0 %v3753
    %3774 = vmatprep.subr.mxu0 0.0
    %3775 = vmatpush1.msra.mxu0 0.0
    %3776 = vmatprep.subr.mxu0 0.0
    %3777 = vmatpush1.msra.mxu0 0.0
    %3778 = vmatprep.subr.mxu0 0.0
    %3779 = vmatpush1.msra.mxu0 0.0
    %3780 = vmatprep.subr.mxu0 0.0
    %3781 = vmatpush1.msra.mxu0 0.0
    %3782 = vmatprep.subr.mxu0 0.0
    %3783 = vmatpush1.msra.mxu0 0.0
    %3784 = vmatprep.subr.mxu0 0.0
    %3785 = vmatpush1.msra.mxu0 0.0
    %3786 = vmatprep.subr.mxu0 0.0
    %3787 = vmatpush1.msra.mxu0 0.0
    %3788 = vmatprep.subr.mxu0 0.0
    %3789 = vmatpush1.msra.mxu0 0.0
    %3790 = vmatprep.subr.mxu0 0.0
    %3791 = vmatpush1.msra.mxu0 0.0
    %3792 = vmatprep.subr.mxu0 0.0
    %3793 = vmatpush1.msra.mxu0 0.0
    %3794 = vmatprep.subr.mxu0 0.0
    %3795 = vmatpush1.msra.mxu0 0.0
    %3796 = vmatprep.subr.mxu0 0.0
    %3797 = vmatpush1.msra.mxu0 0.0
    %3798 = vmatprep.subr.mxu0 0.0
    %3799 = vmatpush1.msra.mxu0 0.0
    %3800 = vmatprep.subr.mxu0 0.0
    %3801 = vmatpush1.msra.mxu0 0.0
    %3802 = vmatprep.subr.mxu0 0.0
    %3803 = vmatpush1.msra.mxu0 0.0
    %3804 = vmatprep.subr.mxu0 0.0
    %3805 = vmatpush1.msra.mxu0 0.0
    %3806 = vmatprep.subr.mxu0 0.0
    %3807 = vmatpush1.msra.mxu0 0.0
    %3808 = vmatprep.subr.mxu0 0.0
    %3809 = vmatpush1.msra.mxu0 0.0
    %3810 = vmatprep.subr.mxu0 0.0
    %3811 = vmatpush1.msra.mxu0 0.0
    %3812 = vmatprep.subr.mxu0 0.0
    %3813 = vmatpush1.msra.mxu0 0.0
    %3814 = vmatprep.subr.mxu0 0.0
    %3815 = vmatpush1.msra.mxu0 0.0
    %3816 = vmatprep.subr.mxu0 0.0
    %3817 = vmatpush1.msra.mxu0 0.0
    %3818 = vmatprep.subr.mxu0 0.0
    %3819 = vmatpush1.msra.mxu0 0.0
    %3820 = vmatprep.subr.mxu0 0.0
    %3821 = vmatpush1.msra.mxu0 0.0
    %3822 = vmatprep.subr.mxu0 0.0
    %3823 = vmatpush1.msra.mxu0 0.0
    %3824 = vmatprep.subr.mxu0 0.0
    %3825 = vmatpush1.msra.mxu0 0.0
    %3826 = vmatprep.subr.mxu0 0.0
    %3827 = vmatpush1.msra.mxu0 0.0
    %3828 = vmatprep.subr.mxu0 0.0
    %3829 = vmatpush1.msra.mxu0 0.0
    %3830 = vmatprep.mubr.f32.mxu0 0.0
    %3831 = vmatmul.mubr.f32.gmra.mrb[0].mxu0 %v2083
    %v3832 = vpop.f32.mrb[0].mxu0
    %v3833 = vadd.f32 0.0, %v3832
    %v3834 = vpop.f32.mrb[0].mxu0
    %3835 = vdwg.mxu0
    %v3836 = vmax.f32 %v3833, 0.0
    %3837 = vmatprep.subr.mxu0 0.0
    %3838 = vmatpush1.msra.mxu0 %v3756
    %3839 = vmatprep.subr.mxu0 0.0
    %3840 = vmatpush1.msra.mxu0 %v3759
    %3841 = vmatprep.subr.mxu0 0.0
    %3842 = vmatpush1.msra.mxu0 %v3762
    %3843 = vmatprep.subr.mxu0 0.0
    %3844 = vmatpush1.msra.mxu0 %v3765
    %3845 = vmatprep.subr.mxu0 0.0
    %3846 = vmatpush1.msra.mxu0 0.0
    %3847 = vmatprep.subr.mxu0 0.0
    %3848 = vmatpush1.msra.mxu0 0.0
    %3849 = vmatprep.subr.mxu0 0.0
    %3850 = vmatpush1.msra.mxu0 0.0
    %3851 = vmatprep.subr.mxu0 0.0
    %3852 = vmatpush1.msra.mxu0 0.0
    %3853 = vmatprep.subr.mxu0 0.0
    %3854 = vmatpush1.msra.mxu0 0.0
    %3855 = vmatprep.subr.mxu0 0.0
    %3856 = vmatpush1.msra.mxu0 0.0
    %3857 = vmatprep.subr.mxu0 0.0
    %3858 = vmatpush1.msra.mxu0 0.0
    %3859 = vmatprep.subr.mxu0 0.0
    %3860 = vmatpush1.msra.mxu0 0.0
    %3861 = vmatprep.subr.mxu0 0.0
    %3862 = vmatpush1.msra.mxu0 0.0
    %3863 = vmatprep.subr.mxu0 0.0
    %3864 = vmatpush1.msra.mxu0 0.0
    %3865 = vmatprep.subr.mxu0 0.0
    %3866 = vmatpush1.msra.mxu0 0.0
    %3867 = vmatprep.subr.mxu0 0.0
    %3868 = vmatpush1.msra.mxu0 0.0
    %3869 = vmatprep.subr.mxu0 0.0
    %3870 = vmatpush1.msra.mxu0 0.0
    %3871 = vmatprep.subr.mxu0 0.0
    %3872 = vmatpush1.msra.mxu0 0.0
    %3873 = vmatprep.subr.mxu0 0.0
    %3874 = vmatpush1.msra.mxu0 0.0
    %3875 = vmatprep.subr.mxu0 0.0
    %3876 = vmatpush1.msra.mxu0 0.0
    %3877 = vmatprep.subr.mxu0 0.0
    %3878 = vmatpush1.msra.mxu0 0.0
    %3879 = vmatprep.subr.mxu0 0.0
    %3880 = vmatpush1.msra.mxu0 0.0
    %3881 = vmatprep.subr.mxu0 0.0
    %3882 = vmatpush1.msra.mxu0 0.0
    %3883 = vmatprep.subr.mxu0 0.0
    %3884 = vmatpush1.msra.mxu0 0.0
    %3885 = vmatprep.subr.mxu0 0.0
    %3886 = vmatpush1.msra.mxu0 0.0
    %3887 = vmatprep.subr.mxu0 0.0
    %3888 = vmatpush1.msra.mxu0 0.0
    %3889 = vmatprep.subr.mxu0 0.0
    %3890 = vmatpush1.msra.mxu0 0.0
    %3891 = vmatprep.subr.mxu0 0.0
    %3892 = vmatpush1.msra.mxu0 0.0
    %3893 = vmatprep.subr.mxu0 0.0
    %3894 = vmatpush1.msra.mxu0 0.0
    %3895 = vmatprep.subr.mxu0 0.0
    %3896 = vmatpush1.msra.mxu0 0.0
    %3897 = vmatprep.subr.mxu0 0.0
    %3898 = vmatpush1.msra.mxu0 0.0
    %3899 = vmatprep.subr.mxu0 0.0
    %3900 = vmatpush1.msra.mxu0 0.0
    %3901 = vmatprep.mubr.f32.mxu0 0.0
    %3902 = vmatmul.mubr.f32.gmra.mrb[0].mxu0 %v2083
    %v3903 = vpop.f32.mrb[0].mxu0
    %v3904 = vadd.f32 0.0, %v3903
    %v3905 = vpop.f32.mrb[0].mxu0
    %3906 = vdwg.mxu0
    %v3907 = vmax.f32 %v3904, 0.0
    %v3909 = vsel %vm2240, %v3907, 0
    %3911 = vmatprep.subr.mxu0 0.0
    %3912 = vmatpush1.msra.mxu0 %v3909
    %3913 = vmatprep.subr.mxu0 0.0
    %3914 = vmatpush1.msra.mxu0 0.0
    %3915 = vmatprep.subr.mxu0 0.0
    %3916 = vmatpush1.msra.mxu0 0.0
    %3917 = vmatprep.subr.mxu0 0.0
    %3918 = vmatpush1.msra.mxu0 0.0
    %3919 = vmatprep.subr.mxu0 0.0
    %3920 = vmatpush1.msra.mxu0 0.0
    %3921 = vmatprep.subr.mxu0 0.0
    %3922 = vmatpush1.msra.mxu0 0.0
    %3923 = vmatprep.subr.mxu0 0.0
    %3924 = vmatpush1.msra.mxu0 0.0
    %3925 = vmatprep.subr.mxu0 0.0
    %3926 = vmatpush1.msra.mxu0 0.0
    %3927 = vmatprep.subr.mxu0 0.0
    %3928 = vmatpush1.msra.mxu0 0.0
    %3929 = vmatprep.subr.mxu0 0.0
    %3930 = vmatpush1.msra.mxu0 0.0
    %3931 = vmatprep.subr.mxu0 0.0
    %3932 = vmatpush1.msra.mxu0 0.0
    %3933 = vmatprep.subr.mxu0 0.0
    %3934 = vmatpush1.msra.mxu0 0.0
    %3935 = vmatprep.subr.mxu0 0.0
    %3936 = vmatpush1.msra.mxu0 0.0
    %3937 = vmatprep.subr.mxu0 0.0
    %3938 = vmatpush1.msra.mxu0 0.0
    %3939 = vmatprep.subr.mxu0 0.0
    %3940 = vmatpush1.msra.mxu0 0.0
    %3941 = vmatprep.subr.mxu0 0.0
    %3942 = vmatpush1.msra.mxu0 0.0
    %3943 = vmatprep.subr.mxu0 0.0
    %3944 = vmatpush1.msra.mxu0 0.0
    %3945 = vmatprep.subr.mxu0 0.0
    %3946 = vmatpush1.msra.mxu0 0.0
    %3947 = vmatprep.subr.mxu0 0.0
    %3948 = vmatpush1.msra.mxu0 0.0
    %3949 = vmatprep.subr.mxu0 0.0
    %3950 = vmatpush1.msra.mxu0 0.0
    %3951 = vmatprep.subr.mxu0 0.0
    %3952 = vmatpush1.msra.mxu0 0.0
    %3953 = vmatprep.subr.mxu0 0.0
    %3954 = vmatpush1.msra.mxu0 0.0
    %3955 = vmatprep.subr.mxu0 0.0
    %3956 = vmatpush1.msra.mxu0 0.0
    %3957 = vmatprep.subr.mxu0 0.0
    %3958 = vmatpush1.msra.mxu0 0.0
    %3959 = vmatprep.subr.mxu0 0.0
    %3960 = vmatpush1.msra.mxu0 0.0
    %3961 = vmatprep.subr.mxu0 0.0
    %3962 = vmatpush1.msra.mxu0 0.0
    %3963 = vmatprep.subr.mxu0 0.0
    %3964 = vmatpush1.msra.mxu0 0.0
    %3965 = vmatprep.subr.mxu0 0.0
    %3966 = vmatpush1.msra.mxu0 0.0
    %3967 = vmatprep.subr.mxu0 0.0
    %3968 = vmatpush1.msra.mxu0 0.0
    %3969 = vmatprep.subr.mxu0 0.0
    %3970 = vmatpush1.msra.mxu0 0.0
    %3971 = vmatprep.subr.mxu0 0.0
    %3972 = vmatpush1.msra.mxu0 0.0
    %3973 = vmatprep.subr.mxu0 0.0
    %3974 = vmatpush1.msra.mxu0 0.0
    %3975 = vmatprep.mubr.f32.mxu0 0.0
    %3976 = vmatmul.mubr.f32.gmra.mrb[0].mxu0 %v2229
    %v3977 = vpop.f32.mrb[0].mxu0
    %v3978 = vadd.f32 0.0, %v3977
    %v3979 = vpop.f32.mrb[0].mxu0
    %3980 = vmatprep.mubr.f32.mxu0 0.0
    %3981 = vmatmul.mubr.f32.gmra.mrb[0].mxu0 %v2232
    %v3982 = vpop.f32.mrb[0].mxu0
    %v3983 = vadd.f32 0.0, %v3982
    %v3984 = vpop.f32.mrb[0].mxu0
    %3985 = vmatprep.mubr.f32.mxu0 0.0
    %3986 = vmatmul.mubr.f32.gmra.mrb[0].mxu0 %v2235
    %v3987 = vpop.f32.mrb[0].mxu0
    %v3988 = vadd.f32 0.0, %v3987
    %v3989 = vpop.f32.mrb[0].mxu0
    %3990 = vmatprep.mubr.f32.mxu0 0.0
    %3991 = vmatmul.mubr.f32.gmra.mrb[0].mxu0 %v2238
    %v3992 = vpop.f32.mrb[0].mxu0
    %v3993 = vadd.f32 0.0, %v3992
    %v3994 = vpop.f32.mrb[0].mxu0
    %3995 = vdwg.mxu0
    %v3997 = vsel %vm2240, %v3836, 0
    %3999 = vmatprep.subr.mxu0 0.0
    %4000 = vmatpush1.msra.mxu0 %v3997
    %4001 = vmatprep.subr.mxu0 0.0
    %4002 = vmatpush1.msra.mxu0 0.0
    %4003 = vmatprep.subr.mxu0 0.0
    %4004 = vmatpush1.msra.mxu0 0.0
    %4005 = vmatprep.subr.mxu0 0.0
    %4006 = vmatpush1.msra.mxu0 0.0
    %4007 = vmatprep.subr.mxu0 0.0
    %4008 = vmatpush1.msra.mxu0 0.0
    %4009 = vmatprep.subr.mxu0 0.0
    %4010 = vmatpush1.msra.mxu0 0.0
    %4011 = vmatprep.subr.mxu0 0.0
    %4012 = vmatpush1.msra.mxu0 0.0
    %4013 = vmatprep.subr.mxu0 0.0
    %4014 = vmatpush1.msra.mxu0 0.0
    %4015 = vmatprep.subr.mxu0 0.0
    %4016 = vmatpush1.msra.mxu0 0.0
    %4017 = vmatprep.subr.mxu0 0.0
    %4018 = vmatpush1.msra.mxu0 0.0
    %4019 = vmatprep.subr.mxu0 0.0
    %4020 = vmatpush1.msra.mxu0 0.0
    %4021 = vmatprep.subr.mxu0 0.0
    %4022 = vmatpush1.msra.mxu0 0.0
    %4023 = vmatprep.subr.mxu0 0.0
    %4024 = vmatpush1.msra.mxu0 0.0
    %4025 = vmatprep.subr.mxu0 0.0
    %4026 = vmatpush1.msra.mxu0 0.0
    %4027 = vmatprep.subr.mxu0 0.0
    %4028 = vmatpush1.msra.mxu0 0.0
    %4029 = vmatprep.subr.mxu0 0.0
    %4030 = vmatpush1.msra.mxu0 0.0
    %4031 = vmatprep.subr.mxu0 0.0
    %4032 = vmatpush1.msra.mxu0 0.0
    %4033 = vmatprep.subr.mxu0 0.0
    %4034 = vmatpush1.msra.mxu0 0.0
    %4035 = vmatprep.subr.mxu0 0.0
    %4036 = vmatpush1.msra.mxu0 0.0
    %4037 = vmatprep.subr.mxu0 0.0
    %4038 = vmatpush1.msra.mxu0 0.0
    %4039 = vmatprep.subr.mxu0 0.0
    %4040 = vmatpush1.msra.mxu0 0.0
    %4041 = vmatprep.subr.mxu0 0.0
    %4042 = vmatpush1.msra.mxu0 0.0
    %4043 = vmatprep.subr.mxu0 0.0
    %4044 = vmatpush1.msra.mxu0 0.0
    %4045 = vmatprep.subr.mxu0 0.0
    %4046 = vmatpush1.msra.mxu0 0.0
    %4047 = vmatprep.subr.mxu0 0.0
    %4048 = vmatpush1.msra.mxu0 0.0
    %4049 = vmatprep.subr.mxu0 0.0
    %4050 = vmatpush1.msra.mxu0 0.0
    %4051 = vmatprep.subr.mxu0 0.0
    %4052 = vmatpush1.msra.mxu0 0.0
    %4053 = vmatprep.subr.mxu0 0.0
    %4054 = vmatpush1.msra.mxu0 0.0
    %4055 = vmatprep.subr.mxu0 0.0
    %4056 = vmatpush1.msra.mxu0 0.0
    %4057 = vmatprep.subr.mxu0 0.0
    %4058 = vmatpush1.msra.mxu0 0.0
    %4059 = vmatprep.subr.mxu0 0.0
    %4060 = vmatpush1.msra.mxu0 0.0
    %4061 = vmatprep.subr.mxu0 0.0
    %4062 = vmatpush1.msra.mxu0 0.0
    %4063 = vmatprep.mubr.f32.mxu0 0.0
    %4064 = vmatmul.mubr.f32.gmra.mrb[0].mxu0 %v2229
    %v4065 = vpop.f32.mrb[0].mxu0
    %v4066 = vadd.f32 %v3978, %v4065
    %v4067 = vpop.f32.mrb[0].mxu0
    %4068 = vmatprep.mubr.f32.mxu0 0.0
    %4069 = vmatmul.mubr.f32.gmra.mrb[0].mxu0 %v2232
    %v4070 = vpop.f32.mrb[0].mxu0
    %v4071 = vadd.f32 %v3983, %v4070
    %v4072 = vpop.f32.mrb[0].mxu0
    %4073 = vmatprep.mubr.f32.mxu0 0.0
    %4074 = vmatmul.mubr.f32.gmra.mrb[0].mxu0 %v2235
    %v4075 = vpop.f32.mrb[0].mxu0
    %v4076 = vadd.f32 %v3988, %v4075
    %v4077 = vpop.f32.mrb[0].mxu0
    %4078 = vmatprep.mubr.f32.mxu0 0.0
    %4079 = vmatmul.mubr.f32.gmra.mrb[0].mxu0 %v2238
    %v4080 = vpop.f32.mrb[0].mxu0
    %v4081 = vadd.f32 %v3993, %v4080
    %v4082 = vpop.f32.mrb[0].mxu0
    %4083 = vdwg.mxu0
    %v4084 = vxor.u32 %v4066, 2147483648
    %v4085 = vxor.u32 %v4071, 2147483648
    %v4086 = vxor.u32 %v4076, 2147483648
    %v4087 = vxor.u32 %v4081, 2147483648
    %v4088 = vmul.f32 %v4084, 1.442695
    %v4089 = vpow.pop %v4088
    %v4090 = vmul.f32 %v4085, 1.442695
    %v4091 = vpow.pop %v4090
    %v4092 = vmul.f32 %v4086, 1.442695
    %v4093 = vpow.pop %v4092
    %v4094 = vmul.f32 %v4087, 1.442695
    %v4095 = vpow.pop %v4094
    %v4096 = vadd.f32 %v4089, 1.0
    %v4097 = vadd.f32 %v4091, 1.0
    %v4098 = vadd.f32 %v4093, 1.0
    %v4099 = vadd.f32 %v4095, 1.0
    %v4100 = vrcp.pop %v4096
    %v4101 = vmul.f32 1.0, %v4100
    %v4102 = vrcp.pop %v4097
    %v4103 = vmul.f32 1.0, %v4102
    %v4104 = vrcp.pop %v4098
    %v4105 = vmul.f32 1.0, %v4104
    %v4106 = vrcp.pop %v4099
    %v4107 = vmul.f32 1.0, %v4106
    %4109 = vset.pattern.permute.xlu0 0
    %4110 = vperm.xlu0 %4109, %v4101
    %v4111 = vpop.permute.xlu0 %4110
    %4114 = vset.pattern.permute.xlu0 0
    %4115 = vperm.xlu0 %4114, %v4103
    %v4116 = vpop.permute.xlu0 %4115
    %v4118 = vmul.f32 %v2042, %v4111
    %v4119 = vmul.f32 %v2043, %v4111
    %v4120 = vmul.f32 %v2046, %v4116
    %v4121 = vmul.f32 %v2047, %v4116
    %4123 = vset.pattern.permute.xlu0 0
    %4124 = vperm.xlu0 %4123, %v4105
    %v4125 = vpop.permute.xlu0 %4124
    %4128 = vset.pattern.permute.xlu0 0
    %4129 = vperm.xlu0 %4128, %v4107
    %v4130 = vpop.permute.xlu0 %4129
    %v4132 = vmul.f32 %v78, %v4125
    %v4133 = vmul.f32 %v79, %v4125
    %v4134 = vmul.f32 %v82, %v4130
    %v4135 = vmul.f32 %v83, %v4130
    %v4136 = vadd.f32 %v4118, %v4120
    %v4137 = vrot.slane %v4136, 4
    %v4138 = vadd.f32 %v4136, %v4137
    %v4139 = vrot.slane %v4138, 2
    %v4140 = vadd.f32 %v4138, %v4139
    %v4141 = vrot.slane %v4140, 1
    %v4142 = vadd.f32 %v4140, %v4141
    %v4143 = vadd.f32 %v4119, %v4121
    %v4144 = vrot.slane %v4143, 4
    %v4145 = vadd.f32 %v4143, %v4144
    %v4146 = vrot.slane %v4145, 2
    %v4147 = vadd.f32 %v4145, %v4146
    %v4148 = vrot.slane %v4147, 1
    %v4149 = vadd.f32 %v4147, %v4148
    %v4150 = vadd.f32 %v4132, %v4134
    %v4151 = vrot.slane %v4150, 4
    %v4152 = vadd.f32 %v4150, %v4151
    %v4153 = vrot.slane %v4152, 2
    %v4154 = vadd.f32 %v4152, %v4153
    %v4155 = vrot.slane %v4154, 1
    %v4156 = vadd.f32 %v4154, %v4155
    %v4157 = vadd.f32 %v4133, %v4135
    %v4158 = vrot.slane %v4157, 4
    %v4159 = vadd.f32 %v4157, %v4158
    %v4160 = vrot.slane %v4159, 2
    %v4161 = vadd.f32 %v4159, %v4160
    %v4162 = vrot.slane %v4161, 1
    %v4163 = vadd.f32 %v4161, %v4162
    %v4164 = vadd.f32 %v4142, %v4156
    %v4165 = vadd.f32 %v4149, %v4163
    %v4166 = vmul.f32 %v4164, 0.03125
    %v4167 = vmul.f32 %v4165, 0.03125
    %v4168 = vmax.f32 %v4118, %v4120
    %v4169 = vrot.slane %v4168, 4
    %v4170 = vmax.f32 %v4168, %v4169
    %v4171 = vrot.slane %v4170, 2
    %v4172 = vmax.f32 %v4170, %v4171
    %v4173 = vrot.slane %v4172, 1
    %v4174 = vmax.f32 %v4172, %v4173
    %v4175 = vmax.f32 %v4119, %v4121
    %v4176 = vrot.slane %v4175, 4
    %v4177 = vmax.f32 %v4175, %v4176
    %v4178 = vrot.slane %v4177, 2
    %v4179 = vmax.f32 %v4177, %v4178
    %v4180 = vrot.slane %v4179, 1
    %v4181 = vmax.f32 %v4179, %v4180
    %v4182 = vmax.f32 %v4132, %v4134
    %v4183 = vrot.slane %v4182, 4
    %v4184 = vmax.f32 %v4182, %v4183
    %v4185 = vrot.slane %v4184, 2
    %v4186 = vmax.f32 %v4184, %v4185
    %v4187 = vrot.slane %v4186, 1
    %v4188 = vmax.f32 %v4186, %v4187
    %v4189 = vmax.f32 %v4133, %v4135
    %v4190 = vrot.slane %v4189, 4
    %v4191 = vmax.f32 %v4189, %v4190
    %v4192 = vrot.slane %v4191, 2
    %v4193 = vmax.f32 %v4191, %v4192
    %v4194 = vrot.slane %v4193, 1
    %v4195 = vmax.f32 %v4193, %v4194
    %v4196 = vmax.f32 %v4174, %v4188
    %v4197 = vmax.f32 %v4181, %v4195
    %v4198 = vsel %vm2531, %v4166, %v4196
    %v4199 = vsel %vm2531, %v4167, %v4197
    %4200 = vrot.lane.b32.xlu0 %v4198, 51
    %v4201 = vpop.permute.xlu0 %4200
    %4202 = vrot.lane.b32.xlu0 %v4199, 51
    %v4203 = vpop.permute.xlu0 %4202
    %v4204 = vsel %vm2538, %v4201, %v4203
    %v4205 = vsel %vm2538, %v4203, %v4201
    %v4206 = vld [vmem:[#allocation7] sm:$0xf]
    %v4209 = vunpack.c.l.s4 1983009808
    %v4210 = vunpack.c.0.s8 %v4209
    %v4211 = vlaneseq
    %v4212 = vshrl.u32 %v4211, 7
    %v4213 = vsub.s32 %v4210, %v4212
    %v4214 = vrot.slane %v4206, %v4213
    %v4215 = vcombine.high %v4214, %v4214
    %v4218 = vmul.f32 %v4205, %v4214
    %v4219 = vmul.f32 %v4204, %v4215
    %v4220 = vadd.f32 %v4218, 0.0
    %v4221 = vadd.f32 %v4219, 0.0
    %4222 = vrot.lane.b32.xlu0 %v4198, 50
    %v4223 = vpop.permute.xlu0 %4222
    %4224 = vrot.lane.b32.xlu0 %v4199, 50
    %v4225 = vpop.permute.xlu0 %4224
    %v4226 = vsel %vm2561, %v4223, %v4225
    %v4227 = vsel %vm2561, %v4225, %v4223
    %v4228 = vld [vmem:[%s2564] sm:$0xf]
    %v4231 = vunpack.c.l.s4 1983009808
    %v4232 = vunpack.c.0.s8 %v4231
    %v4233 = vlaneseq
    %v4234 = vshrl.u32 %v4233, 7
    %v4235 = vsub.s32 %v4232, %v4234
    %v4236 = vrot.slane %v4228, %v4235
    %v4237 = vcombine.high %v4236, %v4236
    %v4240 = vmul.f32 %v4227, %v4236
    %v4241 = vmul.f32 %v4226, %v4237
    %v4242 = vadd.f32 %v4240, 0.0
    %v4243 = vadd.f32 %v4241, 0.0
    %4244 = vrot.lane.b32.xlu0 %v4198, 49
    %v4245 = vpop.permute.xlu0 %4244
    %4246 = vrot.lane.b32.xlu0 %v4199, 49
    %v4247 = vpop.permute.xlu0 %4246
    %v4248 = vsel %vm2585, %v4245, %v4247
    %v4249 = vsel %vm2585, %v4247, %v4245
    %v4250 = vld [vmem:[%s2588] sm:$0xf]
    %v4253 = vunpack.c.l.s4 1983009808
    %v4254 = vunpack.c.0.s8 %v4253
    %v4255 = vlaneseq
    %v4256 = vshrl.u32 %v4255, 7
    %v4257 = vsub.s32 %v4254, %v4256
    %v4258 = vrot.slane %v4250, %v4257
    %v4259 = vcombine.high %v4258, %v4258
    %v4262 = vmul.f32 %v4249, %v4258
    %v4263 = vmul.f32 %v4248, %v4259
    %v4264 = vadd.f32 %v4220, %v4262
    %v4265 = vadd.f32 %v4221, %v4263
    %4266 = vrot.lane.b32.xlu0 %v4198, 48
    %v4267 = vpop.permute.xlu0 %4266
    %4268 = vrot.lane.b32.xlu0 %v4199, 48
    %v4269 = vpop.permute.xlu0 %4268
    %v4270 = vsel %vm2609, %v4267, %v4269
    %v4271 = vsel %vm2609, %v4269, %v4267
    %v4272 = vld [vmem:[%s2612] sm:$0xf]
    %v4275 = vunpack.c.l.s4 1983009808
    %v4276 = vunpack.c.0.s8 %v4275
    %v4277 = vlaneseq
    %v4278 = vshrl.u32 %v4277, 7
    %v4279 = vsub.s32 %v4276, %v4278
    %v4280 = vrot.slane %v4272, %v4279
    %v4281 = vcombine.high %v4280, %v4280
    %v4284 = vmul.f32 %v4271, %v4280
    %v4285 = vmul.f32 %v4270, %v4281
    %v4286 = vadd.f32 %v4242, %v4284
    %v4287 = vadd.f32 %v4243, %v4285
    %4288 = vrot.lane.b32.xlu0 %v4198, 47
    %v4289 = vpop.permute.xlu0 %4288
    %4290 = vrot.lane.b32.xlu0 %v4199, 47
    %v4291 = vpop.permute.xlu0 %4290
    %v4292 = vsel %vm2633, %v4289, %v4291
    %v4293 = vsel %vm2633, %v4291, %v4289
    %v4294 = vld [vmem:[%s2636] sm:$0xf]
    %v4297 = vunpack.c.l.s4 1983009808
    %v4298 = vunpack.c.0.s8 %v4297
    %v4299 = vlaneseq
    %v4300 = vshrl.u32 %v4299, 7
    %v4301 = vsub.s32 %v4298, %v4300
    %v4302 = vrot.slane %v4294, %v4301
    %v4303 = vcombine.high %v4302, %v4302
    %v4306 = vmul.f32 %v4293, %v4302
    %v4307 = vmul.f32 %v4292, %v4303
    %v4308 = vadd.f32 %v4264, %v4306
    %v4309 = vadd.f32 %v4265, %v4307
    %4310 = vrot.lane.b32.xlu0 %v4198, 46
    %v4311 = vpop.permute.xlu0 %4310
    %4312 = vrot.lane.b32.xlu0 %v4199, 46
    %v4313 = vpop.permute.xlu0 %4312
    %v4314 = vsel %vm2657, %v4311, %v4313
    %v4315 = vsel %vm2657, %v4313, %v4311
    %v4316 = vld [vmem:[%s2660] sm:$0xf]
    %v4319 = vunpack.c.l.s4 1983009808
    %v4320 = vunpack.c.0.s8 %v4319
    %v4321 = vlaneseq
    %v4322 = vshrl.u32 %v4321, 7
    %v4323 = vsub.s32 %v4320, %v4322
    %v4324 = vrot.slane %v4316, %v4323
    %v4325 = vcombine.high %v4324, %v4324
    %v4328 = vmul.f32 %v4315, %v4324
    %v4329 = vmul.f32 %v4314, %v4325
    %v4330 = vadd.f32 %v4286, %v4328
    %v4331 = vadd.f32 %v4287, %v4329
    %4332 = vrot.lane.b32.xlu0 %v4198, 45
    %v4333 = vpop.permute.xlu0 %4332
    %4334 = vrot.lane.b32.xlu0 %v4199, 45
    %v4335 = vpop.permute.xlu0 %4334
    %v4336 = vsel %vm2681, %v4333, %v4335
    %v4337 = vsel %vm2681, %v4335, %v4333
    %v4338 = vld [vmem:[%s2684] sm:$0xf]
    %v4341 = vunpack.c.l.s4 1983009808
    %v4342 = vunpack.c.0.s8 %v4341
    %v4343 = vlaneseq
    %v4344 = vshrl.u32 %v4343, 7
    %v4345 = vsub.s32 %v4342, %v4344
    %v4346 = vrot.slane %v4338, %v4345
    %v4347 = vcombine.high %v4346, %v4346
    %v4350 = vmul.f32 %v4337, %v4346
    %v4351 = vmul.f32 %v4336, %v4347
    %v4352 = vadd.f32 %v4308, %v4350
    %v4353 = vadd.f32 %v4309, %v4351
    %4354 = vrot.lane.b32.xlu0 %v4198, 35
    %v4355 = vpop.permute.xlu0 %4354
    %4356 = vrot.lane.b32.xlu0 %v4199, 35
    %v4357 = vpop.permute.xlu0 %4356
    %v4358 = vsel %vm2705, %v4355, %v4357
    %v4359 = vsel %vm2705, %v4357, %v4355
    %v4360 = vld [vmem:[%s2708] sm:$0xf]
    %v4363 = vunpack.c.l.s4 1983009808
    %v4364 = vunpack.c.0.s8 %v4363
    %v4365 = vlaneseq
    %v4366 = vshrl.u32 %v4365, 7
    %v4367 = vsub.s32 %v4364, %v4366
    %v4368 = vrot.slane %v4360, %v4367
    %v4369 = vcombine.high %v4368, %v4368
    %v4372 = vmul.f32 %v4359, %v4368
    %v4373 = vmul.f32 %v4358, %v4369
    %v4374 = vadd.f32 %v4330, %v4372
    %v4375 = vadd.f32 %v4331, %v4373
    %4376 = vrot.lane.b32.xlu0 %v4198, 34
    %v4377 = vpop.permute.xlu0 %4376
    %4378 = vrot.lane.b32.xlu0 %v4199, 34
    %v4379 = vpop.permute.xlu0 %4378
    %v4380 = vsel %vm2729, %v4377, %v4379
    %v4381 = vsel %vm2729, %v4379, %v4377
    %v4382 = vld [vmem:[%s2732] sm:$0xf]
    %v4385 = vunpack.c.l.s4 1983009808
    %v4386 = vunpack.c.0.s8 %v4385
    %v4387 = vlaneseq
    %v4388 = vshrl.u32 %v4387, 7
    %v4389 = vsub.s32 %v4386, %v4388
    %v4390 = vrot.slane %v4382, %v4389
    %v4391 = vcombine.high %v4390, %v4390
    %v4394 = vmul.f32 %v4381, %v4390
    %v4395 = vmul.f32 %v4380, %v4391
    %v4396 = vadd.f32 %v4352, %v4394
    %v4397 = vadd.f32 %v4353, %v4395
    %4398 = vrot.lane.b32.xlu0 %v4198, 33
    %v4399 = vpop.permute.xlu0 %4398
    %4400 = vrot.lane.b32.xlu0 %v4199, 33
    %v4401 = vpop.permute.xlu0 %4400
    %v4402 = vsel %vm2753, %v4399, %v4401
    %v4403 = vsel %vm2753, %v4401, %v4399
    %v4404 = vld [vmem:[%s2756] sm:$0xf]
    %v4407 = vunpack.c.l.s4 1983009808
    %v4408 = vunpack.c.0.s8 %v4407
    %v4409 = vlaneseq
    %v4410 = vshrl.u32 %v4409, 7
    %v4411 = vsub.s32 %v4408, %v4410
    %v4412 = vrot.slane %v4404, %v4411
    %v4413 = vcombine.high %v4412, %v4412
    %v4416 = vmul.f32 %v4403, %v4412
    %v4417 = vmul.f32 %v4402, %v4413
    %v4418 = vadd.f32 %v4374, %v4416
    %v4419 = vadd.f32 %v4375, %v4417
    %4420 = vrot.lane.b32.xlu0 %v4198, 32
    %v4421 = vpop.permute.xlu0 %4420
    %4422 = vrot.lane.b32.xlu0 %v4199, 32
    %v4423 = vpop.permute.xlu0 %4422
    %v4424 = vsel %vm2777, %v4421, %v4423
    %v4425 = vsel %vm2777, %v4423, %v4421
    %v4426 = vld [vmem:[%s2780] sm:$0xf]
    %v4429 = vunpack.c.l.s4 1983009808
    %v4430 = vunpack.c.0.s8 %v4429
    %v4431 = vlaneseq
    %v4432 = vshrl.u32 %v4431, 7
    %v4433 = vsub.s32 %v4430, %v4432
    %v4434 = vrot.slane %v4426, %v4433
    %v4435 = vcombine.high %v4434, %v4434
    %v4438 = vmul.f32 %v4425, %v4434
    %v4439 = vmul.f32 %v4424, %v4435
    %v4440 = vadd.f32 %v4396, %v4438
    %v4441 = vadd.f32 %v4397, %v4439
    %4442 = vrot.lane.b32.xlu0 %v4198, 31
    %v4443 = vpop.permute.xlu0 %4442
    %4444 = vrot.lane.b32.xlu0 %v4199, 31
    %v4445 = vpop.permute.xlu0 %4444
    %v4446 = vsel %vm2801, %v4443, %v4445
    %v4447 = vsel %vm2801, %v4445, %v4443
    %v4448 = vld [vmem:[%s2804] sm:$0xf]
    %v4451 = vunpack.c.l.s4 1983009808
    %v4452 = vunpack.c.0.s8 %v4451
    %v4453 = vlaneseq
    %v4454 = vshrl.u32 %v4453, 7
    %v4455 = vsub.s32 %v4452, %v4454
    %v4456 = vrot.slane %v4448, %v4455
    %v4457 = vcombine.high %v4456, %v4456
    %v4460 = vmul.f32 %v4447, %v4456
    %v4461 = vmul.f32 %v4446, %v4457
    %v4462 = vadd.f32 %v4418, %v4460
    %v4463 = vadd.f32 %v4419, %v4461
    %4464 = vrot.lane.b32.xlu0 %v4198, 30
    %v4465 = vpop.permute.xlu0 %4464
    %4466 = vrot.lane.b32.xlu0 %v4199, 30
    %v4467 = vpop.permute.xlu0 %4466
    %v4468 = vsel %vm2825, %v4465, %v4467
    %v4469 = vsel %vm2825, %v4467, %v4465
    %v4470 = vld [vmem:[%s2828] sm:$0xf]
    %v4473 = vunpack.c.l.s4 1983009808
    %v4474 = vunpack.c.0.s8 %v4473
    %v4475 = vlaneseq
    %v4476 = vshrl.u32 %v4475, 7
    %v4477 = vsub.s32 %v4474, %v4476
    %v4478 = vrot.slane %v4470, %v4477
    %v4479 = vcombine.high %v4478, %v4478
    %v4482 = vmul.f32 %v4469, %v4478
    %v4483 = vmul.f32 %v4468, %v4479
    %v4484 = vadd.f32 %v4440, %v4482
    %v4485 = vadd.f32 %v4441, %v4483
    %4486 = vrot.lane.b32.xlu0 %v4198, 29
    %v4487 = vpop.permute.xlu0 %4486
    %4488 = vrot.lane.b32.xlu0 %v4199, 29
    %v4489 = vpop.permute.xlu0 %4488
    %v4490 = vsel %vm2849, %v4487, %v4489
    %v4491 = vsel %vm2849, %v4489, %v4487
    %v4492 = vld [vmem:[%s2852] sm:$0xf]
    %v4495 = vunpack.c.l.s4 1983009808
    %v4496 = vunpack.c.0.s8 %v4495
    %v4497 = vlaneseq
    %v4498 = vshrl.u32 %v4497, 7
    %v4499 = vsub.s32 %v4496, %v4498
    %v4500 = vrot.slane %v4492, %v4499
    %v4501 = vcombine.high %v4500, %v4500
    %v4504 = vmul.f32 %v4491, %v4500
    %v4505 = vmul.f32 %v4490, %v4501
    %v4506 = vadd.f32 %v4462, %v4504
    %v4507 = vadd.f32 %v4463, %v4505
    %4508 = vrot.lane.b32.xlu0 %v4198, 19
    %v4509 = vpop.permute.xlu0 %4508
    %4510 = vrot.lane.b32.xlu0 %v4199, 19
    %v4511 = vpop.permute.xlu0 %4510
    %v4512 = vsel %vm2873, %v4509, %v4511
    %v4513 = vsel %vm2873, %v4511, %v4509
    %v4514 = vld [vmem:[%s2876] sm:$0xf]
    %v4517 = vunpack.c.l.s4 1983009808
    %v4518 = vunpack.c.0.s8 %v4517
    %v4519 = vlaneseq
    %v4520 = vshrl.u32 %v4519, 7
    %v4521 = vsub.s32 %v4518, %v4520
    %v4522 = vrot.slane %v4514, %v4521
    %v4523 = vcombine.high %v4522, %v4522
    %v4526 = vmul.f32 %v4513, %v4522
    %v4527 = vmul.f32 %v4512, %v4523
    %v4528 = vadd.f32 %v4484, %v4526
    %v4529 = vadd.f32 %v4485, %v4527
    %4530 = vrot.lane.b32.xlu0 %v4198, 18
    %v4531 = vpop.permute.xlu0 %4530
    %4532 = vrot.lane.b32.xlu0 %v4199, 18
    %v4533 = vpop.permute.xlu0 %4532
    %v4534 = vsel %vm2897, %v4531, %v4533
    %v4535 = vsel %vm2897, %v4533, %v4531
    %v4536 = vld [vmem:[%s2900] sm:$0xf]
    %v4539 = vunpack.c.l.s4 1983009808
    %v4540 = vunpack.c.0.s8 %v4539
    %v4541 = vlaneseq
    %v4542 = vshrl.u32 %v4541, 7
    %v4543 = vsub.s32 %v4540, %v4542
    %v4544 = vrot.slane %v4536, %v4543
    %v4545 = vcombine.high %v4544, %v4544
    %v4548 = vmul.f32 %v4535, %v4544
    %v4549 = vmul.f32 %v4534, %v4545
    %v4550 = vadd.f32 %v4506, %v4548
    %v4551 = vadd.f32 %v4507, %v4549
    %4552 = vrot.lane.b32.xlu0 %v4198, 17
    %v4553 = vpop.permute.xlu0 %4552
    %4554 = vrot.lane.b32.xlu0 %v4199, 17
    %v4555 = vpop.permute.xlu0 %4554
    %v4556 = vsel %vm102, %v4553, %v4555
    %v4557 = vsel %vm102, %v4555, %v4553
    %v4558 = vld [vmem:[%s2923] sm:$0xf]
    %v4561 = vunpack.c.l.s4 1983009808
    %v4562 = vunpack.c.0.s8 %v4561
    %v4563 = vlaneseq
    %v4564 = vshrl.u32 %v4563, 7
    %v4565 = vsub.s32 %v4562, %v4564
    %v4566 = vrot.slane %v4558, %v4565
    %v4567 = vcombine.high %v4566, %v4566
    %v4570 = vmul.f32 %v4557, %v4566
    %v4571 = vmul.f32 %v4556, %v4567
    %v4572 = vadd.f32 %v4528, %v4570
    %v4573 = vadd.f32 %v4529, %v4571
    %4574 = vrot.lane.b32.xlu0 %v4198, 16
    %v4575 = vpop.permute.xlu0 %4574
    %4576 = vrot.lane.b32.xlu0 %v4199, 16
    %v4577 = vpop.permute.xlu0 %4576
    %v4578 = vsel %vm159, %v4575, %v4577
    %v4579 = vsel %vm159, %v4577, %v4575
    %v4580 = vld [vmem:[%s2946] sm:$0xf]
    %v4583 = vunpack.c.l.s4 1983009808
    %v4584 = vunpack.c.0.s8 %v4583
    %v4585 = vlaneseq
    %v4586 = vshrl.u32 %v4585, 7
    %v4587 = vsub.s32 %v4584, %v4586
    %v4588 = vrot.slane %v4580, %v4587
    %v4589 = vcombine.high %v4588, %v4588
    %v4592 = vmul.f32 %v4579, %v4588
    %v4593 = vmul.f32 %v4578, %v4589
    %v4594 = vadd.f32 %v4550, %v4592
    %v4595 = vadd.f32 %v4551, %v4593
    %4596 = vrot.lane.b32.xlu0 %v4198, 15
    %v4597 = vpop.permute.xlu0 %4596
    %4598 = vrot.lane.b32.xlu0 %v4199, 15
    %v4599 = vpop.permute.xlu0 %4598
    %v4600 = vsel %vm218, %v4597, %v4599
    %v4601 = vsel %vm218, %v4599, %v4597
    %v4602 = vld [vmem:[%s2969] sm:$0xf]
    %v4605 = vunpack.c.l.s4 1983009808
    %v4606 = vunpack.c.0.s8 %v4605
    %v4607 = vlaneseq
    %v4608 = vshrl.u32 %v4607, 7
    %v4609 = vsub.s32 %v4606, %v4608
    %v4610 = vrot.slane %v4602, %v4609
    %v4611 = vcombine.high %v4610, %v4610
    %v4614 = vmul.f32 %v4601, %v4610
    %v4615 = vmul.f32 %v4600, %v4611
    %v4616 = vadd.f32 %v4572, %v4614
    %v4617 = vadd.f32 %v4573, %v4615
    %4618 = vrot.lane.b32.xlu0 %v4198, 14
    %v4619 = vpop.permute.xlu0 %4618
    %4620 = vrot.lane.b32.xlu0 %v4199, 14
    %v4621 = vpop.permute.xlu0 %4620
    %v4622 = vsel %vm2990, %v4619, %v4621
    %v4623 = vsel %vm2990, %v4621, %v4619
    %v4624 = vld [vmem:[%s2993] sm:$0xf]
    %v4627 = vunpack.c.l.s4 1983009808
    %v4628 = vunpack.c.0.s8 %v4627
    %v4629 = vlaneseq
    %v4630 = vshrl.u32 %v4629, 7
    %v4631 = vsub.s32 %v4628, %v4630
    %v4632 = vrot.slane %v4624, %v4631
    %v4633 = vcombine.high %v4632, %v4632
    %v4636 = vmul.f32 %v4623, %v4632
    %v4637 = vmul.f32 %v4622, %v4633
    %v4638 = vadd.f32 %v4594, %v4636
    %v4639 = vadd.f32 %v4595, %v4637
    %4640 = vrot.lane.b32.xlu0 %v4198, 13
    %v4641 = vpop.permute.xlu0 %4640
    %4642 = vrot.lane.b32.xlu0 %v4199, 13
    %v4643 = vpop.permute.xlu0 %4642
    %v4644 = vsel %vm3014, %v4641, %v4643
    %v4645 = vsel %vm3014, %v4643, %v4641
    %v4646 = vld [vmem:[%s3017] sm:$0xf]
    %v4649 = vunpack.c.l.s4 1983009808
    %v4650 = vunpack.c.0.s8 %v4649
    %v4651 = vlaneseq
    %v4652 = vshrl.u32 %v4651, 7
    %v4653 = vsub.s32 %v4650, %v4652
    %v4654 = vrot.slane %v4646, %v4653
    %v4655 = vcombine.high %v4654, %v4654
    %v4658 = vmul.f32 %v4645, %v4654
    %v4659 = vmul.f32 %v4644, %v4655
    %v4660 = vadd.f32 %v4616, %v4658
    %v4661 = vadd.f32 %v4617, %v4659
    %4662 = vrot.lane.b32.xlu0 %v4198, 3
    %v4663 = vpop.permute.xlu0 %4662
    %4664 = vrot.lane.b32.xlu0 %v4199, 3
    %v4665 = vpop.permute.xlu0 %4664
    %v4666 = vsel %vm3038, %v4663, %v4665
    %v4667 = vsel %vm3038, %v4665, %v4663
    %v4668 = vld [vmem:[%s3041] sm:$0xf]
    %v4671 = vunpack.c.l.s4 1983009808
    %v4672 = vunpack.c.0.s8 %v4671
    %v4673 = vlaneseq
    %v4674 = vshrl.u32 %v4673, 7
    %v4675 = vsub.s32 %v4672, %v4674
    %v4676 = vrot.slane %v4668, %v4675
    %v4677 = vcombine.high %v4676, %v4676
    %v4680 = vmul.f32 %v4667, %v4676
    %v4681 = vmul.f32 %v4666, %v4677
    %v4682 = vadd.f32 %v4638, %v4680
    %v4683 = vadd.f32 %v4639, %v4681
    %4684 = vrot.lane.b32.xlu0 %v4198, 2
    %v4685 = vpop.permute.xlu0 %4684
    %4686 = vrot.lane.b32.xlu0 %v4199, 2
    %v4687 = vpop.permute.xlu0 %4686
    %v4688 = vsel %vm3062, %v4685, %v4687
    %v4689 = vsel %vm3062, %v4687, %v4685
    %v4690 = vld [vmem:[%s3065] sm:$0xf]
    %v4693 = vunpack.c.l.s4 1983009808
    %v4694 = vunpack.c.0.s8 %v4693
    %v4695 = vlaneseq
    %v4696 = vshrl.u32 %v4695, 7
    %v4697 = vsub.s32 %v4694, %v4696
    %v4698 = vrot.slane %v4690, %v4697
    %v4699 = vcombine.high %v4698, %v4698
    %v4702 = vmul.f32 %v4689, %v4698
    %v4703 = vmul.f32 %v4688, %v4699
    %v4704 = vadd.f32 %v4660, %v4702
    %v4705 = vadd.f32 %v4661, %v4703
    %4706 = vrot.lane.b32.xlu0 %v4198, 1
    %v4707 = vpop.permute.xlu0 %4706
    %4708 = vrot.lane.b32.xlu0 %v4199, 1
    %v4709 = vpop.permute.xlu0 %4708
    %v4710 = vsel %vm598, %v4707, %v4709
    %v4711 = vsel %vm598, %v4709, %v4707
    %v4712 = vld [vmem:[%s3088] sm:$0xf]
    %v4715 = vunpack.c.l.s4 1983009808
    %v4716 = vunpack.c.0.s8 %v4715
    %v4717 = vlaneseq
    %v4718 = vshrl.u32 %v4717, 7
    %v4719 = vsub.s32 %v4716, %v4718
    %v4720 = vrot.slane %v4712, %v4719
    %v4721 = vcombine.high %v4720, %v4720
    %v4724 = vmul.f32 %v4711, %v4720
    %v4725 = vmul.f32 %v4710, %v4721
    %v4726 = vadd.f32 %v4682, %v4724
    %v4727 = vadd.f32 %v4683, %v4725
    %v4728 = vld [vmem:[%s3105] sm:$0xf]
    %v4731 = vunpack.c.l.s4 1983009808
    %v4732 = vunpack.c.0.s8 %v4731
    %v4733 = vlaneseq
    %v4734 = vshrl.u32 %v4733, 7
    %v4735 = vsub.s32 %v4732, %v4734
    %v4736 = vrot.slane %v4728, %v4735
    %v4737 = vcombine.high %v4736, %v4736
    %v4740 = vmul.f32 %v4198, %v4736
    %v4741 = vmul.f32 %v4199, %v4737
    %v4742 = vadd.f32 %v4704, %v4740
    %v4743 = vadd.f32 %v4705, %v4741
    %4744 = vrot.lane.b32.xlu0 %v4198, 127
    %v4745 = vpop.permute.xlu0 %4744
    %4746 = vrot.lane.b32.xlu0 %v4199, 127
    %v4747 = vpop.permute.xlu0 %4746
    %v4748 = vsel %vm1148, %v4745, %v4747
    %v4749 = vsel %vm1148, %v4747, %v4745
    %v4750 = vld [vmem:[%s3128] sm:$0xf]
    %v4753 = vunpack.c.l.s4 1983009808
    %v4754 = vunpack.c.0.s8 %v4753
    %v4755 = vlaneseq
    %v4756 = vshrl.u32 %v4755, 7
    %v4757 = vsub.s32 %v4754, %v4756
    %v4758 = vrot.slane %v4750, %v4757
    %v4759 = vcombine.high %v4758, %v4758
    %v4762 = vmul.f32 %v4748, %v4758
    %v4763 = vmul.f32 %v4749, %v4759
    %v4764 = vadd.f32 %v4726, %v4762
    %v4765 = vadd.f32 %v4727, %v4763
    %4766 = vrot.lane.b32.xlu0 %v4198, 126
    %v4767 = vpop.permute.xlu0 %4766
    %4768 = vrot.lane.b32.xlu0 %v4199, 126
    %v4769 = vpop.permute.xlu0 %4768
    %v4770 = vsel %vm3149, %v4767, %v4769
    %v4771 = vsel %vm3149, %v4769, %v4767
    %v4772 = vld [vmem:[%s3152] sm:$0xf]
    %v4775 = vunpack.c.l.s4 1983009808
    %v4776 = vunpack.c.0.s8 %v4775
    %v4777 = vlaneseq
    %v4778 = vshrl.u32 %v4777, 7
    %v4779 = vsub.s32 %v4776, %v4778
    %v4780 = vrot.slane %v4772, %v4779
    %v4781 = vcombine.high %v4780, %v4780
    %v4784 = vmul.f32 %v4770, %v4780
    %v4785 = vmul.f32 %v4771, %v4781
    %v4786 = vadd.f32 %v4742, %v4784
    %v4787 = vadd.f32 %v4743, %v4785
    %4788 = vrot.lane.b32.xlu0 %v4198, 125
    %v4789 = vpop.permute.xlu0 %4788
    %4790 = vrot.lane.b32.xlu0 %v4199, 125
    %v4791 = vpop.permute.xlu0 %4790
    %v4792 = vsel %vm3173, %v4789, %v4791
    %v4793 = vsel %vm3173, %v4791, %v4789
    %v4794 = vld [vmem:[%s3176] sm:$0xf]
    %v4797 = vunpack.c.l.s4 1983009808
    %v4798 = vunpack.c.0.s8 %v4797
    %v4799 = vlaneseq
    %v4800 = vshrl.u32 %v4799, 7
    %v4801 = vsub.s32 %v4798, %v4800
    %v4802 = vrot.slane %v4794, %v4801
    %v4803 = vcombine.high %v4802, %v4802
    %v4806 = vmul.f32 %v4792, %v4802
    %v4807 = vmul.f32 %v4793, %v4803
    %v4808 = vadd.f32 %v4764, %v4806
    %v4809 = vadd.f32 %v4765, %v4807
    %4810 = vrot.lane.b32.xlu0 %v4198, 115
    %v4811 = vpop.permute.xlu0 %4810
    %4812 = vrot.lane.b32.xlu0 %v4199, 115
    %v4813 = vpop.permute.xlu0 %4812
    %v4814 = vsel %vm3197, %v4811, %v4813
    %v4815 = vsel %vm3197, %v4813, %v4811
    %v4816 = vld [vmem:[%s3200] sm:$0xf]
    %v4819 = vunpack.c.l.s4 1983009808
    %v4820 = vunpack.c.0.s8 %v4819
    %v4821 = vlaneseq
    %v4822 = vshrl.u32 %v4821, 7
    %v4823 = vsub.s32 %v4820, %v4822
    %v4824 = vrot.slane %v4816, %v4823
    %v4825 = vcombine.high %v4824, %v4824
    %v4828 = vmul.f32 %v4814, %v4824
    %v4829 = vmul.f32 %v4815, %v4825
    %v4830 = vadd.f32 %v4786, %v4828
    %v4831 = vadd.f32 %v4787, %v4829
    %4832 = vrot.lane.b32.xlu0 %v4198, 114
    %v4833 = vpop.permute.xlu0 %4832
    %4834 = vrot.lane.b32.xlu0 %v4199, 114
    %v4835 = vpop.permute.xlu0 %4834
    %v4836 = vsel %vm3221, %v4833, %v4835
    %v4837 = vsel %vm3221, %v4835, %v4833
    %v4838 = vld [vmem:[%s3224] sm:$0xf]
    %v4841 = vunpack.c.l.s4 1983009808
    %v4842 = vunpack.c.0.s8 %v4841
    %v4843 = vlaneseq
    %v4844 = vshrl.u32 %v4843, 7
    %v4845 = vsub.s32 %v4842, %v4844
    %v4846 = vrot.slane %v4838, %v4845
    %v4847 = vcombine.high %v4846, %v4846
    %v4850 = vmul.f32 %v4836, %v4846
    %v4851 = vmul.f32 %v4837, %v4847
    %v4852 = vadd.f32 %v4808, %v4850
    %v4853 = vadd.f32 %v4809, %v4851
    %4854 = vrot.lane.b32.xlu0 %v4198, 113
    %v4855 = vpop.permute.xlu0 %4854
    %4856 = vrot.lane.b32.xlu0 %v4199, 113
    %v4857 = vpop.permute.xlu0 %4856
    %v4858 = vsel %vm1375, %v4855, %v4857
    %v4859 = vsel %vm1375, %v4857, %v4855
    %v4860 = vld [vmem:[%s3247] sm:$0xf]
    %v4863 = vunpack.c.l.s4 1983009808
    %v4864 = vunpack.c.0.s8 %v4863
    %v4865 = vlaneseq
    %v4866 = vshrl.u32 %v4865, 7
    %v4867 = vsub.s32 %v4864, %v4866
    %v4868 = vrot.slane %v4860, %v4867
    %v4869 = vcombine.high %v4868, %v4868
    %v4872 = vmul.f32 %v4858, %v4868
    %v4873 = vmul.f32 %v4859, %v4869
    %v4874 = vadd.f32 %v4830, %v4872
    %v4875 = vadd.f32 %v4831, %v4873
    %4876 = vrot.lane.b32.xlu0 %v4198, 112
    %v4877 = vpop.permute.xlu0 %4876
    %4878 = vrot.lane.b32.xlu0 %v4199, 112
    %v4879 = vpop.permute.xlu0 %4878
    %v4880 = vsel %vm1602, %v4877, %v4879
    %v4881 = vsel %vm1602, %v4879, %v4877
    %v4882 = vld [vmem:[%s3270] sm:$0xf]
    %v4885 = vunpack.c.l.s4 1983009808
    %v4886 = vunpack.c.0.s8 %v4885
    %v4887 = vlaneseq
    %v4888 = vshrl.u32 %v4887, 7
    %v4889 = vsub.s32 %v4886, %v4888
    %v4890 = vrot.slane %v4882, %v4889
    %v4891 = vcombine.high %v4890, %v4890
    %v4894 = vmul.f32 %v4880, %v4890
    %v4895 = vmul.f32 %v4881, %v4891
    %v4896 = vadd.f32 %v4852, %v4894
    %v4897 = vadd.f32 %v4853, %v4895
    %4898 = vrot.lane.b32.xlu0 %v4198, 111
    %v4899 = vpop.permute.xlu0 %4898
    %4900 = vrot.lane.b32.xlu0 %v4199, 111
    %v4901 = vpop.permute.xlu0 %4900
    %v4902 = vsel %vm1829, %v4899, %v4901
    %v4903 = vsel %vm1829, %v4901, %v4899
    %v4904 = vld [vmem:[%s3293] sm:$0xf]
    %v4907 = vunpack.c.l.s4 1983009808
    %v4908 = vunpack.c.0.s8 %v4907
    %v4909 = vlaneseq
    %v4910 = vshrl.u32 %v4909, 7
    %v4911 = vsub.s32 %v4908, %v4910
    %v4912 = vrot.slane %v4904, %v4911
    %v4913 = vcombine.high %v4912, %v4912
    %v4916 = vmul.f32 %v4902, %v4912
    %v4917 = vmul.f32 %v4903, %v4913
    %v4918 = vadd.f32 %v4874, %v4916
    %v4919 = vadd.f32 %v4875, %v4917
    %4920 = vrot.lane.b32.xlu0 %v4198, 110
    %v4921 = vpop.permute.xlu0 %4920
    %4922 = vrot.lane.b32.xlu0 %v4199, 110
    %v4923 = vpop.permute.xlu0 %4922
    %v4924 = vsel %vm3314, %v4921, %v4923
    %v4925 = vsel %vm3314, %v4923, %v4921
    %v4926 = vld [vmem:[%s3317] sm:$0xf]
    %v4929 = vunpack.c.l.s4 1983009808
    %v4930 = vunpack.c.0.s8 %v4929
    %v4931 = vlaneseq
    %v4932 = vshrl.u32 %v4931, 7
    %v4933 = vsub.s32 %v4930, %v4932
    %v4934 = vrot.slane %v4926, %v4933
    %v4935 = vcombine.high %v4934, %v4934
    %v4938 = vmul.f32 %v4924, %v4934
    %v4939 = vmul.f32 %v4925, %v4935
    %v4940 = vadd.f32 %v4896, %v4938
    %v4941 = vadd.f32 %v4897, %v4939
    %4942 = vrot.lane.b32.xlu0 %v4198, 109
    %v4943 = vpop.permute.xlu0 %4942
    %4944 = vrot.lane.b32.xlu0 %v4199, 109
    %v4945 = vpop.permute.xlu0 %4944
    %v4946 = vsel %vm3338, %v4943, %v4945
    %v4947 = vsel %vm3338, %v4945, %v4943
    %v4948 = vld [vmem:[%s3341] sm:$0xf]
    %v4951 = vunpack.c.l.s4 1983009808
    %v4952 = vunpack.c.0.s8 %v4951
    %v4953 = vlaneseq
    %v4954 = vshrl.u32 %v4953, 7
    %v4955 = vsub.s32 %v4952, %v4954
    %v4956 = vrot.slane %v4948, %v4955
    %v4957 = vcombine.high %v4956, %v4956
    %v4960 = vmul.f32 %v4946, %v4956
    %v4961 = vmul.f32 %v4947, %v4957
    %v4962 = vadd.f32 %v4918, %v4960
    %v4963 = vadd.f32 %v4919, %v4961
    %4964 = vrot.lane.b32.xlu0 %v4198, 99
    %v4965 = vpop.permute.xlu0 %4964
    %4966 = vrot.lane.b32.xlu0 %v4199, 99
    %v4967 = vpop.permute.xlu0 %4966
    %v4968 = vsel %vm3362, %v4965, %v4967
    %v4969 = vsel %vm3362, %v4967, %v4965
    %v4970 = vld [vmem:[%s3365] sm:$0xf]
    %v4973 = vunpack.c.l.s4 1983009808
    %v4974 = vunpack.c.0.s8 %v4973
    %v4975 = vlaneseq
    %v4976 = vshrl.u32 %v4975, 7
    %v4977 = vsub.s32 %v4974, %v4976
    %v4978 = vrot.slane %v4970, %v4977
    %v4979 = vcombine.high %v4978, %v4978
    %v4982 = vmul.f32 %v4968, %v4978
    %v4983 = vmul.f32 %v4969, %v4979
    %v4984 = vadd.f32 %v4940, %v4982
    %v4985 = vadd.f32 %v4941, %v4983
    %4986 = vrot.lane.b32.xlu0 %v4198, 98
    %v4987 = vpop.permute.xlu0 %4986
    %4988 = vrot.lane.b32.xlu0 %v4199, 98
    %v4989 = vpop.permute.xlu0 %4988
    %v4990 = vsel %vm3386, %v4987, %v4989
    %v4991 = vsel %vm3386, %v4989, %v4987
    %v4992 = vld [vmem:[%s3389] sm:$0xf]
    %v4995 = vunpack.c.l.s4 1983009808
    %v4996 = vunpack.c.0.s8 %v4995
    %v4997 = vlaneseq
    %v4998 = vshrl.u32 %v4997, 7
    %v4999 = vsub.s32 %v4996, %v4998
    %v5000 = vrot.slane %v4992, %v4999
    %v5001 = vcombine.high %v5000, %v5000
    %v5004 = vmul.f32 %v4990, %v5000
    %v5005 = vmul.f32 %v4991, %v5001
    %v5006 = vadd.f32 %v4962, %v5004
    %v5007 = vadd.f32 %v4963, %v5005
    %5008 = vrot.lane.b32.xlu0 %v4198, 97
    %v5009 = vpop.permute.xlu0 %5008
    %5010 = vrot.lane.b32.xlu0 %v4199, 97
    %v5011 = vpop.permute.xlu0 %5010
    %v5012 = vsel %vm3410, %v5009, %v5011
    %v5013 = vsel %vm3410, %v5011, %v5009
    %v5014 = vld [vmem:[%s3413] sm:$0xf]
    %v5017 = vunpack.c.l.s4 1983009808
    %v5018 = vunpack.c.0.s8 %v5017
    %v5019 = vlaneseq
    %v5020 = vshrl.u32 %v5019, 7
    %v5021 = vsub.s32 %v5018, %v5020
    %v5022 = vrot.slane %v5014, %v5021
    %v5023 = vcombine.high %v5022, %v5022
    %v5026 = vmul.f32 %v5012, %v5022
    %v5027 = vmul.f32 %v5013, %v5023
    %v5028 = vadd.f32 %v4984, %v5026
    %v5029 = vadd.f32 %v4985, %v5027
    %5030 = vrot.lane.b32.xlu0 %v4198, 96
    %v5031 = vpop.permute.xlu0 %5030
    %5032 = vrot.lane.b32.xlu0 %v4199, 96
    %v5033 = vpop.permute.xlu0 %5032
    %v5034 = vsel %vm3434, %v5031, %v5033
    %v5035 = vsel %vm3434, %v5033, %v5031
    %v5036 = vld [vmem:[%s3437] sm:$0xf]
    %v5039 = vunpack.c.l.s4 1983009808
    %v5040 = vunpack.c.0.s8 %v5039
    %v5041 = vlaneseq
    %v5042 = vshrl.u32 %v5041, 7
    %v5043 = vsub.s32 %v5040, %v5042
    %v5044 = vrot.slane %v5036, %v5043
    %v5045 = vcombine.high %v5044, %v5044
    %v5048 = vmul.f32 %v5034, %v5044
    %v5049 = vmul.f32 %v5035, %v5045
    %v5050 = vadd.f32 %v5006, %v5048
    %v5051 = vadd.f32 %v5007, %v5049
    %5052 = vrot.lane.b32.xlu0 %v4198, 95
    %v5053 = vpop.permute.xlu0 %5052
    %5054 = vrot.lane.b32.xlu0 %v4199, 95
    %v5055 = vpop.permute.xlu0 %5054
    %v5056 = vsel %vm3458, %v5053, %v5055
    %v5057 = vsel %vm3458, %v5055, %v5053
    %v5058 = vld [vmem:[%s3461] sm:$0xf]
    %v5061 = vunpack.c.l.s4 1983009808
    %v5062 = vunpack.c.0.s8 %v5061
    %v5063 = vlaneseq
    %v5064 = vshrl.u32 %v5063, 7
    %v5065 = vsub.s32 %v5062, %v5064
    %v5066 = vrot.slane %v5058, %v5065
    %v5067 = vcombine.high %v5066, %v5066
    %v5070 = vmul.f32 %v5056, %v5066
    %v5071 = vmul.f32 %v5057, %v5067
    %v5072 = vadd.f32 %v5028, %v5070
    %v5073 = vadd.f32 %v5029, %v5071
    %5074 = vrot.lane.b32.xlu0 %v4198, 94
    %v5075 = vpop.permute.xlu0 %5074
    %5076 = vrot.lane.b32.xlu0 %v4199, 94
    %v5077 = vpop.permute.xlu0 %5076
    %v5078 = vsel %vm3482, %v5075, %v5077
    %v5079 = vsel %vm3482, %v5077, %v5075
    %v5080 = vld [vmem:[%s3485] sm:$0xf]
    %v5083 = vunpack.c.l.s4 1983009808
    %v5084 = vunpack.c.0.s8 %v5083
    %v5085 = vlaneseq
    %v5086 = vshrl.u32 %v5085, 7
    %v5087 = vsub.s32 %v5084, %v5086
    %v5088 = vrot.slane %v5080, %v5087
    %v5089 = vcombine.high %v5088, %v5088
    %v5092 = vmul.f32 %v5078, %v5088
    %v5093 = vmul.f32 %v5079, %v5089
    %v5094 = vadd.f32 %v5050, %v5092
    %v5095 = vadd.f32 %v5051, %v5093
    %5096 = vrot.lane.b32.xlu0 %v4198, 93
    %v5097 = vpop.permute.xlu0 %5096
    %5098 = vrot.lane.b32.xlu0 %v4199, 93
    %v5099 = vpop.permute.xlu0 %5098
    %v5100 = vsel %vm3506, %v5097, %v5099
    %v5101 = vsel %vm3506, %v5099, %v5097
    %v5102 = vld [vmem:[%s3509] sm:$0xf]
    %v5105 = vunpack.c.l.s4 1983009808
    %v5106 = vunpack.c.0.s8 %v5105
    %v5107 = vlaneseq
    %v5108 = vshrl.u32 %v5107, 7
    %v5109 = vsub.s32 %v5106, %v5108
    %v5110 = vrot.slane %v5102, %v5109
    %v5111 = vcombine.high %v5110, %v5110
    %v5114 = vmul.f32 %v5100, %v5110
    %v5115 = vmul.f32 %v5101, %v5111
    %v5116 = vadd.f32 %v5072, %v5114
    %v5117 = vadd.f32 %v5073, %v5115
    %5118 = vrot.lane.b32.xlu0 %v4198, 83
    %v5119 = vpop.permute.xlu0 %5118
    %5120 = vrot.lane.b32.xlu0 %v4199, 83
    %v5121 = vpop.permute.xlu0 %5120
    %v5122 = vsel %vm3530, %v5119, %v5121
    %v5123 = vsel %vm3530, %v5121, %v5119
    %v5124 = vld [vmem:[%s3533] sm:$0xf]
    %v5127 = vunpack.c.l.s4 1983009808
    %v5128 = vunpack.c.0.s8 %v5127
    %v5129 = vlaneseq
    %v5130 = vshrl.u32 %v5129, 7
    %v5131 = vsub.s32 %v5128, %v5130
    %v5132 = vrot.slane %v5124, %v5131
    %v5133 = vcombine.high %v5132, %v5132
    %v5136 = vmul.f32 %v5122, %v5132
    %v5137 = vmul.f32 %v5123, %v5133
    %v5138 = vadd.f32 %v5094, %v5136
    %v5139 = vadd.f32 %v5095, %v5137
    %5140 = vrot.lane.b32.xlu0 %v4198, 82
    %v5141 = vpop.permute.xlu0 %5140
    %5142 = vrot.lane.b32.xlu0 %v4199, 82
    %v5143 = vpop.permute.xlu0 %5142
    %v5144 = vsel %vm3554, %v5141, %v5143
    %v5145 = vsel %vm3554, %v5143, %v5141
    %v5146 = vld [vmem:[%s3557] sm:$0xf]
    %v5149 = vunpack.c.l.s4 1983009808
    %v5150 = vunpack.c.0.s8 %v5149
    %v5151 = vlaneseq
    %v5152 = vshrl.u32 %v5151, 7
    %v5153 = vsub.s32 %v5150, %v5152
    %v5154 = vrot.slane %v5146, %v5153
    %v5155 = vcombine.high %v5154, %v5154
    %v5158 = vmul.f32 %v5144, %v5154
    %v5159 = vmul.f32 %v5145, %v5155
    %v5160 = vadd.f32 %v5116, %v5158
    %v5161 = vadd.f32 %v5117, %v5159
    %5162 = vrot.lane.b32.xlu0 %v4198, 81
    %v5163 = vpop.permute.xlu0 %5162
    %5164 = vrot.lane.b32.xlu0 %v4199, 81
    %v5165 = vpop.permute.xlu0 %5164
    %v5166 = vsel %vm3578, %v5163, %v5165
    %v5167 = vsel %vm3578, %v5165, %v5163
    %v5168 = vld [vmem:[%s3581] sm:$0xf]
    %v5171 = vunpack.c.l.s4 1983009808
    %v5172 = vunpack.c.0.s8 %v5171
    %v5173 = vlaneseq
    %v5174 = vshrl.u32 %v5173, 7
    %v5175 = vsub.s32 %v5172, %v5174
    %v5176 = vrot.slane %v5168, %v5175
    %v5177 = vcombine.high %v5176, %v5176
    %v5180 = vmul.f32 %v5166, %v5176
    %v5181 = vmul.f32 %v5167, %v5177
    %v5182 = vadd.f32 %v5138, %v5180
    %v5183 = vadd.f32 %v5139, %v5181
    %5184 = vrot.lane.b32.xlu0 %v4198, 80
    %v5185 = vpop.permute.xlu0 %5184
    %5186 = vrot.lane.b32.xlu0 %v4199, 80
    %v5187 = vpop.permute.xlu0 %5186
    %v5188 = vsel %vm3602, %v5185, %v5187
    %v5189 = vsel %vm3602, %v5187, %v5185
    %v5190 = vld [vmem:[%s3605] sm:$0xf]
    %v5193 = vunpack.c.l.s4 1983009808
    %v5194 = vunpack.c.0.s8 %v5193
    %v5195 = vlaneseq
    %v5196 = vshrl.u32 %v5195, 7
    %v5197 = vsub.s32 %v5194, %v5196
    %v5198 = vrot.slane %v5190, %v5197
    %v5199 = vcombine.high %v5198, %v5198
    %v5202 = vmul.f32 %v5188, %v5198
    %v5203 = vmul.f32 %v5189, %v5199
    %v5204 = vadd.f32 %v5160, %v5202
    %v5205 = vadd.f32 %v5161, %v5203
    %5206 = vrot.lane.b32.xlu0 %v4198, 79
    %v5207 = vpop.permute.xlu0 %5206
    %5208 = vrot.lane.b32.xlu0 %v4199, 79
    %v5209 = vpop.permute.xlu0 %5208
    %v5210 = vsel %vm3626, %v5207, %v5209
    %v5211 = vsel %vm3626, %v5209, %v5207
    %v5212 = vld [vmem:[%s3629] sm:$0xf]
    %v5215 = vunpack.c.l.s4 1983009808
    %v5216 = vunpack.c.0.s8 %v5215
    %v5217 = vlaneseq
    %v5218 = vshrl.u32 %v5217, 7
    %v5219 = vsub.s32 %v5216, %v5218
    %v5220 = vrot.slane %v5212, %v5219
    %v5221 = vcombine.high %v5220, %v5220
    %v5224 = vmul.f32 %v5210, %v5220
    %v5225 = vmul.f32 %v5211, %v5221
    %v5226 = vadd.f32 %v5182, %v5224
    %v5227 = vadd.f32 %v5183, %v5225
    %5228 = vrot.lane.b32.xlu0 %v4198, 78
    %v5229 = vpop.permute.xlu0 %5228
    %5230 = vrot.lane.b32.xlu0 %v4199, 78
    %v5231 = vpop.permute.xlu0 %5230
    %v5232 = vsel %vm3650, %v5229, %v5231
    %v5233 = vsel %vm3650, %v5231, %v5229
    %v5234 = vld [vmem:[%s3653] sm:$0xf]
    %v5237 = vunpack.c.l.s4 1983009808
    %v5238 = vunpack.c.0.s8 %v5237
    %v5239 = vlaneseq
    %v5240 = vshrl.u32 %v5239, 7
    %v5241 = vsub.s32 %v5238, %v5240
    %v5242 = vrot.slane %v5234, %v5241
    %v5243 = vcombine.high %v5242, %v5242
    %v5246 = vmul.f32 %v5232, %v5242
    %v5247 = vmul.f32 %v5233, %v5243
    %v5248 = vadd.f32 %v5204, %v5246
    %v5249 = vadd.f32 %v5205, %v5247
    %5250 = vrot.lane.b32.xlu0 %v4198, 77
    %v5251 = vpop.permute.xlu0 %5250
    %5252 = vrot.lane.b32.xlu0 %v4199, 77
    %v5253 = vpop.permute.xlu0 %5252
    %v5254 = vsel %vm3674, %v5251, %v5253
    %v5255 = vsel %vm3674, %v5253, %v5251
    %v5256 = vld [vmem:[%s3677] sm:$0xf]
    %v5259 = vunpack.c.l.s4 1983009808
    %v5260 = vunpack.c.0.s8 %v5259
    %v5261 = vlaneseq
    %v5262 = vshrl.u32 %v5261, 7
    %v5263 = vsub.s32 %v5260, %v5262
    %v5264 = vrot.slane %v5256, %v5263
    %v5265 = vcombine.high %v5264, %v5264
    %v5268 = vmul.f32 %v5254, %v5264
    %v5269 = vmul.f32 %v5255, %v5265
    %v5270 = vadd.f32 %v5226, %v5268
    %v5271 = vadd.f32 %v5227, %v5269
    %v5272 = vadd.f32 %v5270, %v5248
    %v5273 = vadd.f32 %v5271, %v5249
    %v5274 = vsel %vm2240, %v5272, 0.0
    %v5275 = vrot.slane %v5274, 4
    %v5276 = vadd.f32 %v5274, %v5275
    %v5277 = vrot.slane %v5276, 2
    %v5278 = vadd.f32 %v5276, %v5277
    %v5279 = vrot.slane %v5278, 1
    %v5280 = vadd.f32 %v5278, %v5279
    %v5281 = vsel %vm2240, %v5273, 0.0
    %v5282 = vrot.slane %v5281, 4
    %v5283 = vadd.f32 %v5281, %v5282
    %v5284 = vrot.slane %v5283, 2
    %v5285 = vadd.f32 %v5283, %v5284
    %v5286 = vrot.slane %v5285, 1
    %v5287 = vadd.f32 %v5285, %v5286
    %v5288 = vxor.u32 %v5280, 2147483648
    %v5289 = vxor.u32 %v5287, 2147483648
    %v5290 = vmul.f32 %v5288, 1.442695
    %v5291 = vpow.pop %v5290
    %v5292 = vmul.f32 %v5289, 1.442695
    %v5293 = vpow.pop %v5292
    %v5294 = vadd.f32 %v5291, 1.0
    %v5295 = vadd.f32 %v5293, 1.0
    %v5296 = vrcp.pop %v5294
    %v5297 = vmul.f32 1.0, %v5296
    %v5298 = vrcp.pop %v5295
    %v5299 = vmul.f32 1.0, %v5298
    %v5300 = vmul.f32 %v4118, %v5297
    %v5301 = vmul.f32 %v4119, %v5299
    %v5302 = vmul.f32 %v4120, %v5297
    %v5303 = vmul.f32 %v4121, %v5299
    %5304 = vst [vmem:[#allocation8 + $0x10] sm:$0xff] %v5300
    %5305 = vst [vmem:[#allocation8 + $0x18] sm:$0xff] %v5301
    %5306 = vst [vmem:[#allocation8 + $0x30] sm:$0xff] %v5302
    %5307 = vst [vmem:[#allocation8 + $0x38] sm:$0xff] %v5303
    %v5308 = vmul.f32 %v4132, %v5297
    %v5309 = vmul.f32 %v4133, %v5299
    %v5310 = vmul.f32 %v4134, %v5297
    %v5311 = vmul.f32 %v4135, %v5299
    %5312 = vst [vmem:[#allocation8 + $0x50] sm:$0xff] %v5308
    %5313 = vst [vmem:[#allocation8 + $0x58] sm:$0xff] %v5309
    %5314 = vst [vmem:[#allocation8 + $0x70] sm:$0xff] %v5310
    %5315 = vst [vmem:[#allocation8 + $0x78] sm:$0xff] %v5311
    // Predicated region
    $region42: #{tpu_custom_call.1} parent=1 // pred_check
      _
    $region43: #{tpu_custom_call.1} parent=1 // pred_check_branch
      %5317 = sbr.rel (0) target = $region45
    $region44: #{tpu_custom_call.1} parent=1 // pred_region
      %s5319 = ssub.s32 2048, 2048
      %5320 = vsyncadd [#allocation4], %s5319
      %s5321 = sshll.u32 [#allocation8], 4
      %s5322 = int_to_ptr.vmem [resolvable:$true] %s5321
      %5327 = dma.vmem_to_hbm [thread:$0]  %s5322, 2048, %s7, [#allocation4], 512, 512, 32
    $region45: #{tpu_custom_call.1} parent=1 // pred_fallthru
      _
    // Predicated region
    $region46: #{tpu_custom_call.1} parent=1 // pred_check
      _
    $region47: #{tpu_custom_call.1} parent=1 // pred_check_branch
      %5329 = sbr.rel (0) target = $region49
    $region48: #{tpu_custom_call.1} parent=1 // pred_region
      %5330 = dma.done [#allocation4], 2048
    $region49: #{tpu_custom_call.1} parent=1 // pred_fallthru
      _
    %5331 = vsyncpa [#allocation3], 1
    %5332 = vsyncpa [#allocation6], 1
    %5333 = vsyncpa [#allocation4], 1

</llo_original>
